<compile_context>
chip_gen: v5e
topology: v5e:2x2
jax: 0.10.0
libtpu: 0.0.40
codegen_flags: <defaults>
</compile_context>

<pallas_src>
import functools
import math

import jax
import jax.numpy as jnp
from jax import lax
from jax.experimental import pallas as pl
from jax.experimental.pallas import tpu as pltpu

F32 = jnp.float32
BF16 = jnp.bfloat16


# ----------------------------- small helpers -------------------------------

def _ln(x, g, b, eps):
    """TF-style LayerNorm (matches both the custom LayerNorm and nn.LayerNorm)."""
    u = jnp.mean(x, axis=-1, keepdims=True)
    xc = x - u
    s = jnp.mean(xc * xc, axis=-1, keepdims=True)
    return xc * lax.rsqrt(s + eps) * g + b


def _bdot(x, w_ref, b_ref=None):
    """bf16 x bf16 MXU matmul with f32 accumulation (+ optional f32 bias)."""
    y = jnp.dot(x.astype(BF16), w_ref[...], preferred_element_type=F32)
    if b_ref is not None:
        y = y + b_ref[...]
    return y


def _softmax_last(s):
    s = s - jnp.max(s, axis=-1, keepdims=True)
    e = jnp.exp(s)
    return e * pl.reciprocal(jnp.sum(e, axis=-1, keepdims=True), approx=True)


def _bspec_full(shape):
    n = len(shape)
    return pl.BlockSpec(tuple(shape), lambda b, n=n: (0,) * n)


def _bspec_batch(shape):
    n = len(shape)
    return pl.BlockSpec((1,) + tuple(shape[1:]),
                        lambda b, n=n: (b,) + (0,) * (n - 1))


_PAR = pltpu.CompilerParams(dimension_semantics=("parallel",))


# ----------------------------- Pallas kernels ------------------------------

def _input_proj_kernel(x_ref, w_ref, b_ref, o_ref):
    o_ref[0] = _bdot(x_ref[0], w_ref, b_ref)


def input_proj(x, w, b):
    B, Sx, _ = x.shape
    D = w.shape[1]
    return pl.pallas_call(
        _input_proj_kernel,
        out_shape=jax.ShapeDtypeStruct((B, Sx, D), F32),
        grid=(B,),
        in_specs=[_bspec_batch(x.shape), _bspec_full(w.shape), _bspec_full(b.shape)],
        out_specs=_bspec_batch((B, Sx, D)),
        compiler_params=_PAR,
    )(x.astype(F32), w, b)


def _encoder_layer_kernel(x_ref, wqkv_ref, bqkv_ref, wo_ref, bo_ref,
                          g1_ref, bn1_ref, w1_ref, bff1_ref, w2_ref, bff2_ref,
                          g2_ref, bn2_ref, o_ref, *, nhead, eps):
    # Post-norm nn.TransformerEncoderLayer (activation=relu, eval mode), one
    # batch element per grid step; everything stays in VMEM.
    x = x_ref[0]                                         # (S, D) f32
    S, D = x.shape
    Dh = D // nhead
    scale = 1.0 / math.sqrt(Dh)

    qkv = _bdot(x, wqkv_ref, bqkv_ref)                   # (S, 3D)
    q = qkv[:, :D] * scale                               # fold scale into Q
    k = qkv[:, D:2 * D]
    v = qkv[:, 2 * D:]

    heads = []
    for h in range(nhead):                               # static lane slices, no relayout
        lo = h * Dh
        qh = q[:, lo:lo + Dh]
        kh = k[:, lo:lo + Dh]
        vh = v[:, lo:lo + Dh]
        s = lax.dot_general(qh, kh, (((1,), (1,)), ((), ())),
                            preferred_element_type=F32)  # (S, S)
        p = _softmax_last(s)
        heads.append(jnp.dot(p, vh, preferred_element_type=F32))   # (S, Dh)
    att = jnp.concatenate(heads, axis=-1)                # (S, D)
    att = _bdot(att, wo_ref, bo_ref)

    h1 = _ln(x + att, g1_ref[...], bn1_ref[...], eps)

    ff = jnp.maximum(_bdot(h1, w1_ref, bff1_ref), 0.0)   # (S, dim_ff), stays in VMEM
    y2 = _bdot(ff, w2_ref, bff2_ref)
    o_ref[0] = _ln(h1 + y2, g2_ref[...], bn2_ref[...], eps)


def encoder_layer(h, lyr, nhead):
    B, S, D = h.shape
    args = (h,
            lyr["in_proj_w"], lyr["in_proj_b"],
            lyr["out_proj_w"], lyr["out_proj_b"],
            lyr["norm1_g"], lyr["norm1_b"],
            lyr["lin1_w"], lyr["lin1_b"],
            lyr["lin2_w"], lyr["lin2_b"],
            lyr["norm2_g"], lyr["norm2_b"])
    in_specs = [_bspec_batch(h.shape)] + [_bspec_full(a.shape) for a in args[1:]]
    return pl.pallas_call(
        functools.partial(_encoder_layer_kernel, nhead=nhead, eps=1e-5),
        out_shape=jax.ShapeDtypeStruct((B, S, D), F32),
        grid=(B,),
        in_specs=in_specs,
        out_specs=_bspec_batch((B, S, D)),
        compiler_params=_PAR,
    )(*args)


def _num_projection_kernel(pe_ref, attr_ref, rel_ref, off_ref,
                           w3_ref, bw3_ref, uzr_ref, buzr_ref, uh_ref, buh_ref,
                           l1g_ref, l1b_ref,
                           wq_ref, bq_ref, wk_ref, bk_ref, wv_ref, bv_ref,
                           l2g_ref, l2b_ref, o_ref, *, eps):
    # Entire numerical_projection() for one batch element.
    pe = pe_ref[0] + attr_ref[...]                       # power_emb slice (Sp, D)
    Sp, D = pe.shape
    off = off_ref[...]                                   # (P, D) particle offsets
    P = off.shape[0]
    M = Sp * P

    part = (pe[:, None, :] + off[None, :, :]).reshape(M, D)   # ParticleCrusher

    # Packed GRU gate: 3 dots instead of 6.
    wterm = _bdot(rel_ref[...], w3_ref, bw3_ref)         # (1, 3D): [Wz|Wr|Wh]·rel
    uzr = _bdot(part, uzr_ref, buzr_ref)                 # (M, 2D): part·[Uz|Ur]
    z = jax.nn.sigmoid(wterm[:, :D] + uzr[:, :D])
    r = jax.nn.sigmoid(wterm[:, D:2 * D] + uzr[:, D:])
    uh = _bdot(part * r, uh_ref, buh_ref)                # (M, D)
    h_hat = jnp.tanh(wterm[:, 2 * D:] + uh)
    h = (1.0 - z) * part + z * h_hat

    hn = _ln(h, l1g_ref[...], l1b_ref[...], eps)         # projection_layer_norm_1

    # Particle self-attention (SelfAttentionForProjecion) + sum over particles.
    scale = 1.0 / math.sqrt(D)
    q = _bdot(hn, wq_ref, bq_ref) * scale
    k = _bdot(hn, wk_ref, bk_ref)
    v = _bdot(hn, wv_ref, bv_ref)
    q3 = q.reshape(Sp, P, D)
    k3 = k.reshape(Sp, P, D)
    v3 = v.reshape(Sp, P, D)
    s = jnp.einsum("spd,sqd->spq", q3, k3, preferred_element_type=F32)
    prob = _softmax_last(s)
    att = jnp.einsum("spq,sqd->spd", prob, v3, preferred_element_type=F32)
    red = jnp.sum(att, axis=1)                           # .sum(dim=2) -> (Sp, D)

    o_ref[0] = _ln(red, l2g_ref[...], l2b_ref[...], eps)  # numerical_proj_layer_norm


def numerical_projection(params, p_emb, rel_row):
    B, Sp, D = p_emb.shape
    g = params["gate"]
    args = (p_emb, params["attribute_emb"], rel_row, params["off_sets"],
            g["W3"], g["bW3"], g["Uzr"], g["bUzr"], g["Uh"], g["bUh"],
            params["proj_ln1_g"], params["proj_ln1_b"],
            params["proj_q_w"], params["proj_q_b"],
            params["proj_k_w"], params["proj_k_b"],
            params["proj_v_w"], params["proj_v_b"],
            params["num_proj_ln_g"], params["num_proj_ln_b"])
    in_specs = [_bspec_batch(p_emb.shape)] + [_bspec_full(a.shape) for a in args[1:]]
    return pl.pallas_call(
        functools.partial(_num_projection_kernel, eps=1e-12),
        out_shape=jax.ShapeDtypeStruct((B, Sp, D), F32),
        grid=(B,),
        in_specs=in_specs,
        out_specs=_bspec_batch((B, Sp, D)),
        compiler_params=_PAR,
    )(*args)


def _intersection_kernel(e1_ref, e2_ref, wq_ref, bq_ref, lg_ref, lb_ref,
                         w1_ref, b1_ref, w2_ref, b2_ref, o_ref, *, eps):
    # SelfAttention (Q=K=V=query(x)) + LN + GELU-FFN residual + LN + set-sum.
    x = jnp.concatenate([e1_ref[0], e2_ref[0]], axis=0)  # (2*Sp, D)
    D = x.shape[1]
    scale = 1.0 / math.sqrt(D)

    q = _bdot(x, wq_ref, bq_ref)
    s = lax.dot_general(q * scale, q, (((1,), (1,)), ((), ())),
                        preferred_element_type=F32)      # (N, N)
    p = _softmax_last(s)
    att = jnp.dot(p, q, preferred_element_type=F32)
    att = _ln(att, lg_ref[...], lb_ref[...], eps)

    hh = _bdot(att, w1_ref, b1_ref)
    hh = 0.5 * hh * (1.0 + lax.erf(hh * (1.0 / math.sqrt(2.0))))   # exact GELU
    y = _bdot(hh, w2_ref, b2_ref)
    ff = _ln(y + att, lg_ref[...], lb_ref[...], eps)     # same LN params reused (matches ref)

    o_ref[0] = jnp.sum(ff, axis=0, keepdims=True)        # (1, D)


def intersection(params, e1, e2):
    B, Sp, D = e1.shape
    args = (e1, e2,
            params["inter_q_w"], params["inter_q_b"],
            params["inter_ln_g"], params["inter_ln_b"],
            params["inter_ffn1_w"], params["inter_ffn1_b"],
            params["inter_ffn2_w"], params["inter_ffn2_b"])
    in_specs = ([_bspec_batch(e1.shape), _bspec_batch(e2.shape)]
                + [_bspec_full(a.shape) for a in args[2:]])
    out = pl.pallas_call(
        functools.partial(_intersection_kernel, eps=1e-12),
        out_shape=jax.ShapeDtypeStruct((B, 1, D), F32),
        grid=(B,),
        in_specs=in_specs,
        out_specs=_bspec_batch((B, 1, D)),
        compiler_params=_PAR,
    )(*args)
    return out[:, 0, :]                                  # (B, D)


def _final_fc_kernel(a_ref, c_ref, w_ref, b_ref, o_ref):
    o_ref[...] = _bdot(a_ref[...] + c_ref[...], w_ref, b_ref)


def final_fc(out_last, out2, w, b):
    B, _ = out_last.shape
    N = w.shape[1]
    # Tiny (B, output_len) result: fused add+fc in one call; lane-sparse store
    # is unavoidable at N=8 but the kernel is negligible.
    return pl.pallas_call(
        _final_fc_kernel,
        out_shape=jax.ShapeDtypeStruct((B, N), F32),
    )(out_last, out2, w, b)


# ----------------------------- parameters ----------------------------------

def init_params(key, *, input_size, d_model, nhead, num_layers, output_len,
                vocab_size, dim_ff=2048, num_particles=2):
    keys = iter(jax.random.split(key, 512))
    D = d_model

    def w_(in_dim, out_dim):
        # stored transposed (in, out), bf16 for the MXU / halved HBM traffic
        w = jax.random.normal(next(keys), (out_dim, in_dim), F32) * 0.05
        return w.T.astype(BF16)

    def b_(out_dim):
        return (jax.random.normal(next(keys), (out_dim,), F32) * 0.05).reshape(1, out_dim)

    def ln_(dim):
        g = 1.0 + 0.05 * jax.random.normal(next(keys), (dim,), F32)
        b = 0.05 * jax.random.normal(next(keys), (dim,), F32)
        return g.reshape(1, dim), b.reshape(1, dim)

    proj_ln1_g, proj_ln1_b = ln_(D)
    num_proj_ln_g, num_proj_ln_b = ln_(D)
    inter_ln_g, inter_ln_b = ln_(D)

    params = {
        "input_proj_w": w_(input_size, D), "input_proj_b": b_(D),
        "fc_w": w_(D, output_len), "fc_b": b_(output_len),
        "encoder_emb": jax.random.normal(next(keys), (vocab_size, D), F32) * 0.05,
        "num_op_emb": jax.random.normal(next(keys), (2, D), F32) * 0.05,
        "attribute_emb": jax.random.normal(next(keys), (1, D), F32) * 0.05,
        "off_sets": jax.random.normal(next(keys), (num_particles, D), F32) * 0.05,
        "proj_ln1_g": proj_ln1_g, "proj_ln1_b": proj_ln1_b,
        "num_proj_ln_g": num_proj_ln_g, "num_proj_ln_b": num_proj_ln_b,
        "inter_ln_g": inter_ln_g, "inter_ln_b": inter_ln_b,
        "proj_q_w": w_(D, D), "proj_q_b": b_(D),
        "proj_k_w": w_(D, D), "proj_k_b": b_(D),
        "proj_v_w": w_(D, D), "proj_v_b": b_(D),
        "inter_q_w": w_(D, D), "inter_q_b": b_(D),
        "inter_ffn1_w": w_(D, D), "inter_ffn1_b": b_(D),
        "inter_ffn2_w": w_(D, D), "inter_ffn2_b": b_(D),
        # Packed GRU gate: [Wz|Wr|Wh] (D,3D), [Uz|Ur] (D,2D), Uh (D,D).
        "gate": {
            "W3": w_(D, 3 * D), "bW3": b_(3 * D),
            "Uzr": w_(D, 2 * D), "bUzr": b_(2 * D),
            "Uh": w_(D, D), "bUh": b_(D),
        },
        "layers": [],
    }
    for _ in range(num_layers):
        n1g, n1b = ln_(D)
        n2g, n2b = ln_(D)
        params["layers"].append({
            "in_proj_w": w_(D, 3 * D), "in_proj_b": b_(3 * D),   # packed q/k/v
            "out_proj_w": w_(D, D), "out_proj_b": b_(D),
            "lin1_w": w_(D, dim_ff), "lin1_b": b_(dim_ff),       # PyTorch default dim_feedforward
            "lin2_w": w_(dim_ff, D), "lin2_b": b_(D),
            "norm1_g": n1g, "norm1_b": n1b,
            "norm2_g": n2g, "norm2_b": n2b,
        })
    return params


# ----------------------------- forward pass ---------------------------------

def logical_transformer_forward(params, x, p_ids, *, nhead):
    # Trunk kept batch-major (B, S, D): equivalent to PyTorch's seq-first
    # convention, and out[-1] == h[:, -1, :].
    h = input_proj(x, params["input_proj_w"], params["input_proj_b"])   # (B, Sx, D)
    for lyr in params["layers"]:
        h = encoder_layer(h, lyr, nhead)
    out_last = h[:, -1, :]                                              # (B, D)

    # TODO(synk): embedding gathers (encoder / op / attribute) are left to XLA.
    p_emb = jnp.take(params["encoder_emb"], p_ids, axis=0)              # (B, Sp, D)

    # small_ids == 0 everywhere, big_ids == 1 everywhere -> single shared
    # relation row per call (attribute add is fused into the kernel).
    proj1 = numerical_projection(params, p_emb, params["num_op_emb"][0:1])
    proj2 = numerical_projection(params, p_emb, params["num_op_emb"][1:2])
    out2 = intersection(params, proj1, proj2)                           # (B, D)

    return final_fc(out_last, out2, params["fc_w"], params["fc_b"])     # (B, output_len)


# ----------------------------- demo -----------------------------------------

if __name__ == "__main__":
    input_size, d_model, nhead, num_layers, output_len = 16, 32, 4, 2, 8
    B, Sx, Sp, vocab = 2, 8, 4, 10

    key = jax.random.PRNGKey(0)
    pkey, xkey, idkey = jax.random.split(key, 3)
    params = init_params(pkey, input_size=input_size, d_model=d_model, nhead=nhead,
                         num_layers=num_layers, output_len=output_len, vocab_size=vocab)

    x = jax.random.normal(xkey, (B, Sx, input_size), F32)
    p_ids = jax.random.randint(idkey, (B, Sp), 0, vocab, dtype=jnp.int32)

    fwd = jax.jit(functools.partial(logical_transformer_forward, nhead=nhead))
    out = fwd(params, x, p_ids)
    out = jax.block_until_ready(out)
    assert out.shape == (B, output_len)
    assert bool(jnp.all(jnp.isfinite(out)))
    print("KERNEL_OK")
</pallas_src>

<mosaic_0001>
module attributes {stable_mosaic.version = 11 : i64} {
  func.func @_encoder_layer_kernel(%arg0: i32, %arg1: memref<1x8x32xf32, #tpu.memory_space<vmem>>, %arg2: memref<32x96xbf16, #tpu.memory_space<vmem>>, %arg3: memref<1x96xf32, #tpu.memory_space<vmem>>, %arg4: memref<32x32xbf16, #tpu.memory_space<vmem>>, %arg5: memref<1x32xf32, #tpu.memory_space<vmem>>, %arg6: memref<1x32xf32, #tpu.memory_space<vmem>>, %arg7: memref<1x32xf32, #tpu.memory_space<vmem>>, %arg8: memref<32x2048xbf16, #tpu.memory_space<vmem>>, %arg9: memref<1x2048xf32, #tpu.memory_space<vmem>>, %arg10: memref<2048x32xbf16, #tpu.memory_space<vmem>>, %arg11: memref<1x32xf32, #tpu.memory_space<vmem>>, %arg12: memref<1x32xf32, #tpu.memory_space<vmem>>, %arg13: memref<1x32xf32, #tpu.memory_space<vmem>>, %arg14: memref<1x8x32xf32, #tpu.memory_space<vmem>>) attributes {dimension_semantics = [#tpu.dimension_semantics<parallel>], iteration_bounds = array<i64: 2>, scalar_prefetch = 0 : i64, scratch_operands = 0 : i64, tpu.core_type = #tpu.core_type<tc>, window_params = [{transform_indices = @transform_0, window_bounds = array<i64: 1, 8, 32>}, {pipeline_mode = #tpu.pipeline_mode<synchronous>, transform_indices = @transform_1, window_bounds = array<i64: 32, 96>}, {pipeline_mode = #tpu.pipeline_mode<synchronous>, transform_indices = @transform_2, window_bounds = array<i64: 1, 96>}, {pipeline_mode = #tpu.pipeline_mode<synchronous>, transform_indices = @transform_3, window_bounds = array<i64: 32, 32>}, {pipeline_mode = #tpu.pipeline_mode<synchronous>, transform_indices = @transform_4, window_bounds = array<i64: 1, 32>}, {pipeline_mode = #tpu.pipeline_mode<synchronous>, transform_indices = @transform_5, window_bounds = array<i64: 1, 32>}, {pipeline_mode = #tpu.pipeline_mode<synchronous>, transform_indices = @transform_6, window_bounds = array<i64: 1, 32>}, {pipeline_mode = #tpu.pipeline_mode<synchronous>, transform_indices = @transform_7, window_bounds = array<i64: 32, 2048>}, {pipeline_mode = #tpu.pipeline_mode<synchronous>, transform_indices = @transform_8, window_bounds = array<i64: 1, 2048>}, {pipeline_mode = #tpu.pipeline_mode<synchronous>, transform_indices = @transform_9, window_bounds = array<i64: 2048, 32>}, {pipeline_mode = #tpu.pipeline_mode<synchronous>, transform_indices = @transform_10, window_bounds = array<i64: 1, 32>}, {pipeline_mode = #tpu.pipeline_mode<synchronous>, transform_indices = @transform_11, window_bounds = array<i64: 1, 32>}, {pipeline_mode = #tpu.pipeline_mode<synchronous>, transform_indices = @transform_12, window_bounds = array<i64: 1, 32>}, {transform_indices = @transform_13, window_bounds = array<i64: 1, 8, 32>}]} {
    %c0 = arith.constant 0 : index
    %c0_0 = arith.constant 0 : index
    %c0_1 = arith.constant 0 : index
    %0 = vector.load %arg1[%c0, %c0_0, %c0_1] : memref<1x8x32xf32, #tpu.memory_space<vmem>>, vector<1x8x32xf32>
    %1 = vector.shape_cast %0 : vector<1x8x32xf32> to vector<8x32xf32>
    %2 = arith.truncf %1 : vector<8x32xf32> to vector<8x32xbf16>
    %c0_2 = arith.constant 0 : index
    %c0_3 = arith.constant 0 : index
    %3 = vector.load %arg2[%c0_2, %c0_3] : memref<32x96xbf16, #tpu.memory_space<vmem>>, vector<32x96xbf16>
    %cst = arith.constant dense<0.000000e+00> : vector<8x96xf32>
    %4 = tpu.matmul %2, %3, %cst {dimension_numbers = #tpu.dot_dimension_numbers<[1], [0], [0], [1], [0, 0, 1, 1], [], []>} : vector<8x32xbf16>, vector<32x96xbf16>, vector<8x96xf32> -> vector<8x96xf32>
    %c0_4 = arith.constant 0 : index
    %c0_5 = arith.constant 0 : index
    %5 = vector.load %arg3[%c0_4, %c0_5] : memref<1x96xf32, #tpu.memory_space<vmem>>, vector<1x96xf32>
    %6 = vector.broadcast %5 : vector<1x96xf32> to vector<8x96xf32>
    %7 = arith.addf %4, %6 : vector<8x96xf32>
    %8 = vector.extract_strided_slice %7 {offsets = [0, 0], sizes = [8, 32], strides = [1, 1]} : vector<8x96xf32> to vector<8x32xf32>
    %cst_6 = arith.constant 0.353553385 : f32
    %9 = vector.broadcast %cst_6 : f32 to vector<8x32xf32>
    %10 = arith.mulf %8, %9 : vector<8x32xf32>
    %11 = vector.extract_strided_slice %7 {offsets = [0, 32], sizes = [8, 32], strides = [1, 1]} : vector<8x96xf32> to vector<8x32xf32>
    %12 = vector.extract_strided_slice %7 {offsets = [0, 64], sizes = [8, 32], strides = [1, 1]} : vector<8x96xf32> to vector<8x32xf32>
    %13 = vector.extract_strided_slice %10 {offsets = [0, 0], sizes = [8, 8], strides = [1, 1]} : vector<8x32xf32> to vector<8x8xf32>
    %14 = vector.extract_strided_slice %11 {offsets = [0, 0], sizes = [8, 8], strides = [1, 1]} : vector<8x32xf32> to vector<8x8xf32>
    %15 = vector.extract_strided_slice %12 {offsets = [0, 0], sizes = [8, 8], strides = [1, 1]} : vector<8x32xf32> to vector<8x8xf32>
    %cst_7 = arith.constant dense<0.000000e+00> : vector<8x8xf32>
    %16 = tpu.matmul %13, %14, %cst_7 {dimension_numbers = #tpu.dot_dimension_numbers<[1], [1], [0], [0], [0, 0, 1, 0], [], []>} : vector<8x8xf32>, vector<8x8xf32>, vector<8x8xf32> -> vector<8x8xf32>
    %cst_8 = arith.constant dense<0xFF800000> : vector<8xf32>
    %17 = vector.multi_reduction <maximumf>, %16, %cst_8 [1] : vector<8x8xf32> to vector<8xf32>
    %18 = vector.shape_cast %17 : vector<8xf32> to vector<8x1xf32>
    %19 = vector.broadcast %18 : vector<8x1xf32> to vector<8x8xf32>
    %20 = arith.subf %16, %19 : vector<8x8xf32>
    %21 = math.exp %20 : vector<8x8xf32>
    %cst_9 = arith.constant dense<0.000000e+00> : vector<8xf32>
    %22 = vector.multi_reduction <add>, %21, %cst_9 [1] : vector<8x8xf32> to vector<8xf32>
    %23 = vector.shape_cast %22 : vector<8xf32> to vector<8x1xf32>
    %24 = tpu.reciprocal %23 {approx = true} : vector<8x1xf32> -> vector<8x1xf32>
    %25 = vector.broadcast %24 : vector<8x1xf32> to vector<8x8xf32>
    %26 = arith.mulf %21, %25 : vector<8x8xf32>
    %cst_10 = arith.constant dense<0.000000e+00> : vector<8x8xf32>
    %27 = tpu.matmul %26, %15, %cst_10 {dimension_numbers = #tpu.dot_dimension_numbers<[1], [0], [0], [1], [0, 0, 1, 1], [], []>} : vector<8x8xf32>, vector<8x8xf32>, vector<8x8xf32> -> vector<8x8xf32>
    %28 = vector.extract_strided_slice %10 {offsets = [0, 8], sizes = [8, 8], strides = [1, 1]} : vector<8x32xf32> to vector<8x8xf32>
    %29 = vector.extract_strided_slice %11 {offsets = [0, 8], sizes = [8, 8], strides = [1, 1]} : vector<8x32xf32> to vector<8x8xf32>
    %30 = vector.extract_strided_slice %12 {offsets = [0, 8], sizes = [8, 8], strides = [1, 1]} : vector<8x32xf32> to vector<8x8xf32>
    %cst_11 = arith.constant dense<0.000000e+00> : vector<8x8xf32>
    %31 = tpu.matmul %28, %29, %cst_11 {dimension_numbers = #tpu.dot_dimension_numbers<[1], [1], [0], [0], [0, 0, 1, 0], [], []>} : vector<8x8xf32>, vector<8x8xf32>, vector<8x8xf32> -> vector<8x8xf32>
    %cst_12 = arith.constant dense<0xFF800000> : vector<8xf32>
    %32 = vector.multi_reduction <maximumf>, %31, %cst_12 [1] : vector<8x8xf32> to vector<8xf32>
    %33 = vector.shape_cast %32 : vector<8xf32> to vector<8x1xf32>
    %34 = vector.broadcast %33 : vector<8x1xf32> to vector<8x8xf32>
    %35 = arith.subf %31, %34 : vector<8x8xf32>
    %36 = math.exp %35 : vector<8x8xf32>
    %cst_13 = arith.constant dense<0.000000e+00> : vector<8xf32>
    %37 = vector.multi_reduction <add>, %36, %cst_13 [1] : vector<8x8xf32> to vector<8xf32>
    %38 = vector.shape_cast %37 : vector<8xf32> to vector<8x1xf32>
    %39 = tpu.reciprocal %38 {approx = true} : vector<8x1xf32> -> vector<8x1xf32>
    %40 = vector.broadcast %39 : vector<8x1xf32> to vector<8x8xf32>
    %41 = arith.mulf %36, %40 : vector<8x8xf32>
    %cst_14 = arith.constant dense<0.000000e+00> : vector<8x8xf32>
    %42 = tpu.matmul %41, %30, %cst_14 {dimension_numbers = #tpu.dot_dimension_numbers<[1], [0], [0], [1], [0, 0, 1, 1], [], []>} : vector<8x8xf32>, vector<8x8xf32>, vector<8x8xf32> -> vector<8x8xf32>
    %43 = vector.extract_strided_slice %10 {offsets = [0, 16], sizes = [8, 8], strides = [1, 1]} : vector<8x32xf32> to vector<8x8xf32>
    %44 = vector.extract_strided_slice %11 {offsets = [0, 16], sizes = [8, 8], strides = [1, 1]} : vector<8x32xf32> to vector<8x8xf32>
    %45 = vector.extract_strided_slice %12 {offsets = [0, 16], sizes = [8, 8], strides = [1, 1]} : vector<8x32xf32> to vector<8x8xf32>
    %cst_15 = arith.constant dense<0.000000e+00> : vector<8x8xf32>
    %46 = tpu.matmul %43, %44, %cst_15 {dimension_numbers = #tpu.dot_dimension_numbers<[1], [1], [0], [0], [0, 0, 1, 0], [], []>} : vector<8x8xf32>, vector<8x8xf32>, vector<8x8xf32> -> vector<8x8xf32>
    %cst_16 = arith.constant dense<0xFF800000> : vector<8xf32>
    %47 = vector.multi_reduction <maximumf>, %46, %cst_16 [1] : vector<8x8xf32> to vector<8xf32>
    %48 = vector.shape_cast %47 : vector<8xf32> to vector<8x1xf32>
    %49 = vector.broadcast %48 : vector<8x1xf32> to vector<8x8xf32>
    %50 = arith.subf %46, %49 : vector<8x8xf32>
    %51 = math.exp %50 : vector<8x8xf32>
    %cst_17 = arith.constant dense<0.000000e+00> : vector<8xf32>
    %52 = vector.multi_reduction <add>, %51, %cst_17 [1] : vector<8x8xf32> to vector<8xf32>
    %53 = vector.shape_cast %52 : vector<8xf32> to vector<8x1xf32>
    %54 = tpu.reciprocal %53 {approx = true} : vector<8x1xf32> -> vector<8x1xf32>
    %55 = vector.broadcast %54 : vector<8x1xf32> to vector<8x8xf32>
    %56 = arith.mulf %51, %55 : vector<8x8xf32>
    %cst_18 = arith.constant dense<0.000000e+00> : vector<8x8xf32>
    %57 = tpu.matmul %56, %45, %cst_18 {dimension_numbers = #tpu.dot_dimension_numbers<[1], [0], [0], [1], [0, 0, 1, 1], [], []>} : vector<8x8xf32>, vector<8x8xf32>, vector<8x8xf32> -> vector<8x8xf32>
    %58 = vector.extract_strided_slice %10 {offsets = [0, 24], sizes = [8, 8], strides = [1, 1]} : vector<8x32xf32> to vector<8x8xf32>
    %59 = vector.extract_strided_slice %11 {offsets = [0, 24], sizes = [8, 8], strides = [1, 1]} : vector<8x32xf32> to vector<8x8xf32>
    %60 = vector.extract_strided_slice %12 {offsets = [0, 24], sizes = [8, 8], strides = [1, 1]} : vector<8x32xf32> to vector<8x8xf32>
    %cst_19 = arith.constant dense<0.000000e+00> : vector<8x8xf32>
    %61 = tpu.matmul %58, %59, %cst_19 {dimension_numbers = #tpu.dot_dimension_numbers<[1], [1], [0], [0], [0, 0, 1, 0], [], []>} : vector<8x8xf32>, vector<8x8xf32>, vector<8x8xf32> -> vector<8x8xf32>
    %cst_20 = arith.constant dense<0xFF800000> : vector<8xf32>
    %62 = vector.multi_reduction <maximumf>, %61, %cst_20 [1] : vector<8x8xf32> to vector<8xf32>
    %63 = vector.shape_cast %62 : vector<8xf32> to vector<8x1xf32>
    %64 = vector.broadcast %63 : vector<8x1xf32> to vector<8x8xf32>
    %65 = arith.subf %61, %64 : vector<8x8xf32>
    %66 = math.exp %65 : vector<8x8xf32>
    %cst_21 = arith.constant dense<0.000000e+00> : vector<8xf32>
    %67 = vector.multi_reduction <add>, %66, %cst_21 [1] : vector<8x8xf32> to vector<8xf32>
    %68 = vector.shape_cast %67 : vector<8xf32> to vector<8x1xf32>
    %69 = tpu.reciprocal %68 {approx = true} : vector<8x1xf32> -> vector<8x1xf32>
    %70 = vector.broadcast %69 : vector<8x1xf32> to vector<8x8xf32>
    %71 = arith.mulf %66, %70 : vector<8x8xf32>
    %cst_22 = arith.constant dense<0.000000e+00> : vector<8x8xf32>
    %72 = tpu.matmul %71, %60, %cst_22 {dimension_numbers = #tpu.dot_dimension_numbers<[1], [0], [0], [1], [0, 0, 1, 1], [], []>} : vector<8x8xf32>, vector<8x8xf32>, vector<8x8xf32> -> vector<8x8xf32>
    %73 = tpu.concatenate %27, %42, %57, %72 in 1 : vector<8x8xf32>, vector<8x8xf32>, vector<8x8xf32>, vector<8x8xf32> -> vector<8x32xf32>
    %74 = arith.truncf %73 : vector<8x32xf32> to vector<8x32xbf16>
    %c0_23 = arith.constant 0 : index
    %c0_24 = arith.constant 0 : index
    %75 = vector.load %arg4[%c0_23, %c0_24] : memref<32x32xbf16, #tpu.memory_space<vmem>>, vector<32x32xbf16>
    %cst_25 = arith.constant dense<0.000000e+00> : vector<8x32xf32>
    %76 = tpu.matmul %74, %75, %cst_25 {dimension_numbers = #tpu.dot_dimension_numbers<[1], [0], [0], [1], [0, 0, 1, 1], [], []>} : vector<8x32xbf16>, vector<32x32xbf16>, vector<8x32xf32> -> vector<8x32xf32>
    %c0_26 = arith.constant 0 : index
    %c0_27 = arith.constant 0 : index
    %77 = vector.load %arg5[%c0_26, %c0_27] : memref<1x32xf32, #tpu.memory_space<vmem>>, vector<1x32xf32>
    %78 = vector.broadcast %77 : vector<1x32xf32> to vector<8x32xf32>
    %79 = arith.addf %76, %78 : vector<8x32xf32>
    %80 = arith.addf %1, %79 : vector<8x32xf32>
    %c0_28 = arith.constant 0 : index
    %c0_29 = arith.constant 0 : index
    %81 = vector.load %arg6[%c0_28, %c0_29] : memref<1x32xf32, #tpu.memory_space<vmem>>, vector<1x32xf32>
    %c0_30 = arith.constant 0 : index
    %c0_31 = arith.constant 0 : index
    %82 = vector.load %arg7[%c0_30, %c0_31] : memref<1x32xf32, #tpu.memory_space<vmem>>, vector<1x32xf32>
    %cst_32 = arith.constant dense<0.000000e+00> : vector<8xf32>
    %83 = vector.multi_reduction <add>, %80, %cst_32 [1] : vector<8x32xf32> to vector<8xf32>
    %84 = vector.shape_cast %83 : vector<8xf32> to vector<8x1xf32>
    %cst_33 = arith.constant 3.200000e+01 : f32
    %85 = vector.broadcast %cst_33 : f32 to vector<8x1xf32>
    %86 = arith.divf %84, %85 : vector<8x1xf32>
    %87 = vector.broadcast %86 : vector<8x1xf32> to vector<8x32xf32>
    %88 = arith.subf %80, %87 : vector<8x32xf32>
    %89 = arith.mulf %88, %88 : vector<8x32xf32>
    %cst_34 = arith.constant dense<0.000000e+00> : vector<8xf32>
    %90 = vector.multi_reduction <add>, %89, %cst_34 [1] : vector<8x32xf32> to vector<8xf32>
    %91 = vector.shape_cast %90 : vector<8xf32> to vector<8x1xf32>
    %cst_35 = arith.constant 3.200000e+01 : f32
    %92 = vector.broadcast %cst_35 : f32 to vector<8x1xf32>
    %93 = arith.divf %91, %92 : vector<8x1xf32>
    %cst_36 = arith.constant 9.99999974E-6 : f32
    %94 = vector.broadcast %cst_36 : f32 to vector<8x1xf32>
    %95 = arith.addf %93, %94 : vector<8x1xf32>
    %96 = math.rsqrt %95 : vector<8x1xf32>
    %97 = vector.broadcast %96 : vector<8x1xf32> to vector<8x32xf32>
    %98 = arith.mulf %88, %97 : vector<8x32xf32>
    %99 = vector.broadcast %81 : vector<1x32xf32> to vector<8x32xf32>
    %100 = arith.mulf %98, %99 : vector<8x32xf32>
    %101 = vector.broadcast %82 : vector<1x32xf32> to vector<8x32xf32>
    %102 = arith.addf %100, %101 : vector<8x32xf32>
    %103 = arith.truncf %102 : vector<8x32xf32> to vector<8x32xbf16>
    %c0_37 = arith.constant 0 : index
    %c0_38 = arith.constant 0 : index
    %104 = vector.load %arg8[%c0_37, %c0_38] : memref<32x2048xbf16, #tpu.memory_space<vmem>>, vector<32x2048xbf16>
    %cst_39 = arith.constant dense<0.000000e+00> : vector<8x2048xf32>
    %105 = tpu.matmul %103, %104, %cst_39 {dimension_numbers = #tpu.dot_dimension_numbers<[1], [0], [0], [1], [0, 0, 1, 1], [], []>} : vector<8x32xbf16>, vector<32x2048xbf16>, vector<8x2048xf32> -> vector<8x2048xf32>
    %c0_40 = arith.constant 0 : index
    %c0_41 = arith.constant 0 : index
    %106 = vector.load %arg9[%c0_40, %c0_41] : memref<1x2048xf32, #tpu.memory_space<vmem>>, vector<1x2048xf32>
    %107 = vector.broadcast %106 : vector<1x2048xf32> to vector<8x2048xf32>
    %108 = arith.addf %105, %107 : vector<8x2048xf32>
    %cst_42 = arith.constant 0.000000e+00 : f32
    %109 = vector.broadcast %cst_42 : f32 to vector<8x2048xf32>
    %110 = arith.maximumf %108, %109 : vector<8x2048xf32>
    %111 = arith.truncf %110 : vector<8x2048xf32> to vector<8x2048xbf16>
    %c0_43 = arith.constant 0 : index
    %c0_44 = arith.constant 0 : index
    %112 = vector.load %arg10[%c0_43, %c0_44] : memref<2048x32xbf16, #tpu.memory_space<vmem>>, vector<2048x32xbf16>
    %cst_45 = arith.constant dense<0.000000e+00> : vector<8x32xf32>
    %113 = tpu.matmul %111, %112, %cst_45 {dimension_numbers = #tpu.dot_dimension_numbers<[1], [0], [0], [1], [0, 0, 1, 1], [], []>} : vector<8x2048xbf16>, vector<2048x32xbf16>, vector<8x32xf32> -> vector<8x32xf32>
    %c0_46 = arith.constant 0 : index
    %c0_47 = arith.constant 0 : index
    %114 = vector.load %arg11[%c0_46, %c0_47] : memref<1x32xf32, #tpu.memory_space<vmem>>, vector<1x32xf32>
    %115 = vector.broadcast %114 : vector<1x32xf32> to vector<8x32xf32>
    %116 = arith.addf %113, %115 : vector<8x32xf32>
    %117 = arith.addf %102, %116 : vector<8x32xf32>
    %c0_48 = arith.constant 0 : index
    %c0_49 = arith.constant 0 : index
    %118 = vector.load %arg12[%c0_48, %c0_49] : memref<1x32xf32, #tpu.memory_space<vmem>>, vector<1x32xf32>
    %c0_50 = arith.constant 0 : index
    %c0_51 = arith.constant 0 : index
    %119 = vector.load %arg13[%c0_50, %c0_51] : memref<1x32xf32, #tpu.memory_space<vmem>>, vector<1x32xf32>
    %cst_52 = arith.constant dense<0.000000e+00> : vector<8xf32>
    %120 = vector.multi_reduction <add>, %117, %cst_52 [1] : vector<8x32xf32> to vector<8xf32>
    %121 = vector.shape_cast %120 : vector<8xf32> to vector<8x1xf32>
    %cst_53 = arith.constant 3.200000e+01 : f32
    %122 = vector.broadcast %cst_53 : f32 to vector<8x1xf32>
    %123 = arith.divf %121, %122 : vector<8x1xf32>
    %124 = vector.broadcast %123 : vector<8x1xf32> to vector<8x32xf32>
    %125 = arith.subf %117, %124 : vector<8x32xf32>
    %126 = arith.mulf %125, %125 : vector<8x32xf32>
    %cst_54 = arith.constant dense<0.000000e+00> : vector<8xf32>
    %127 = vector.multi_reduction <add>, %126, %cst_54 [1] : vector<8x32xf32> to vector<8xf32>
    %128 = vector.shape_cast %127 : vector<8xf32> to vector<8x1xf32>
    %cst_55 = arith.constant 3.200000e+01 : f32
    %129 = vector.broadcast %cst_55 : f32 to vector<8x1xf32>
    %130 = arith.divf %128, %129 : vector<8x1xf32>
    %cst_56 = arith.constant 9.99999974E-6 : f32
    %131 = vector.broadcast %cst_56 : f32 to vector<8x1xf32>
    %132 = arith.addf %130, %131 : vector<8x1xf32>
    %133 = math.rsqrt %132 : vector<8x1xf32>
    %134 = vector.broadcast %133 : vector<8x1xf32> to vector<8x32xf32>
    %135 = arith.mulf %125, %134 : vector<8x32xf32>
    %136 = vector.broadcast %118 : vector<1x32xf32> to vector<8x32xf32>
    %137 = arith.mulf %135, %136 : vector<8x32xf32>
    %138 = vector.broadcast %119 : vector<1x32xf32> to vector<8x32xf32>
    %139 = arith.addf %137, %138 : vector<8x32xf32>
    %c0_57 = arith.constant 0 : index
    %c0_58 = arith.constant 0 : index
    %c0_59 = arith.constant 0 : index
    %140 = vector.load %arg14[%c0_57, %c0_58, %c0_59] : memref<1x8x32xf32, #tpu.memory_space<vmem>>, vector<1x8x32xf32>
    %141 = vector.shape_cast %140 : vector<1x8x32xf32> to vector<8x32xf32>
    %142 = vector.shape_cast %139 : vector<8x32xf32> to vector<1x8x32xf32>
    tpu.vector_store %arg14[%c0_57, %c0_58, %c0_59], %142 {strides = array<i32>} : memref<1x8x32xf32, #tpu.memory_space<vmem>>, vector<1x8x32xf32>,
    return
  }
  func.func @transform_0(%arg0: i32) -> (i32, i32, i32) {
    %c0_i32 = arith.constant 0 : i32
    %c0_i32_0 = arith.constant 0 : i32
    %c0_i32_1 = arith.constant 0 : i32
    return %arg0, %c0_i32, %c0_i32_0 : i32, i32, i32
  }
  func.func @transform_1(%arg0: i32) -> (i32, i32) {
    %c0_i32 = arith.constant 0 : i32
    %c0_i32_0 = arith.constant 0 : i32
    %c0_i32_1 = arith.constant 0 : i32
    return %c0_i32, %c0_i32_0 : i32, i32
  }
  func.func @transform_2(%arg0: i32) -> (i32, i32) {
    %c0_i32 = arith.constant 0 : i32
    %c0_i32_0 = arith.constant 0 : i32
    %c0_i32_1 = arith.constant 0 : i32
    return %c0_i32, %c0_i32_0 : i32, i32
  }
  func.func @transform_3(%arg0: i32) -> (i32, i32) {
    %c0_i32 = arith.constant 0 : i32
    %c0_i32_0 = arith.constant 0 : i32
    %c0_i32_1 = arith.constant 0 : i32
    return %c0_i32, %c0_i32_0 : i32, i32
  }
  func.func @transform_4(%arg0: i32) -> (i32, i32) {
    %c0_i32 = arith.constant 0 : i32
    %c0_i32_0 = arith.constant 0 : i32
    %c0_i32_1 = arith.constant 0 : i32
    return %c0_i32, %c0_i32_0 : i32, i32
  }
  func.func @transform_5(%arg0: i32) -> (i32, i32) {
    %c0_i32 = arith.constant 0 : i32
    %c0_i32_0 = arith.constant 0 : i32
    %c0_i32_1 = arith.constant 0 : i32
    return %c0_i32, %c0_i32_0 : i32, i32
  }
  func.func @transform_6(%arg0: i32) -> (i32, i32) {
    %c0_i32 = arith.constant 0 : i32
    %c0_i32_0 = arith.constant 0 : i32
    %c0_i32_1 = arith.constant 0 : i32
    return %c0_i32, %c0_i32_0 : i32, i32
  }
  func.func @transform_7(%arg0: i32) -> (i32, i32) {
    %c0_i32 = arith.constant 0 : i32
    %c0_i32_0 = arith.constant 0 : i32
    %c0_i32_1 = arith.constant 0 : i32
    return %c0_i32, %c0_i32_0 : i32, i32
  }
  func.func @transform_8(%arg0: i32) -> (i32, i32) {
    %c0_i32 = arith.constant 0 : i32
    %c0_i32_0 = arith.constant 0 : i32
    %c0_i32_1 = arith.constant 0 : i32
    return %c0_i32, %c0_i32_0 : i32, i32
  }
  func.func @transform_9(%arg0: i32) -> (i32, i32) {
    %c0_i32 = arith.constant 0 : i32
    %c0_i32_0 = arith.constant 0 : i32
    %c0_i32_1 = arith.constant 0 : i32
    return %c0_i32, %c0_i32_0 : i32, i32
  }
  func.func @transform_10(%arg0: i32) -> (i32, i32) {
    %c0_i32 = arith.constant 0 : i32
    %c0_i32_0 = arith.constant 0 : i32
    %c0_i32_1 = arith.constant 0 : i32
    return %c0_i32, %c0_i32_0 : i32, i32
  }
  func.func @transform_11(%arg0: i32) -> (i32, i32) {
    %c0_i32 = arith.constant 0 : i32
    %c0_i32_0 = arith.constant 0 : i32
    %c0_i32_1 = arith.constant 0 : i32
    return %c0_i32, %c0_i32_0 : i32, i32
  }
  func.func @transform_12(%arg0: i32) -> (i32, i32) {
    %c0_i32 = arith.constant 0 : i32
    %c0_i32_0 = arith.constant 0 : i32
    %c0_i32_1 = arith.constant 0 : i32
    return %c0_i32, %c0_i32_0 : i32, i32
  }
  func.func @transform_13(%arg0: i32) -> (i32, i32, i32) {
    %c0_i32 = arith.constant 0 : i32
    %c0_i32_0 = arith.constant 0 : i32
    %c0_i32_1 = arith.constant 0 : i32
    return %arg0, %c0_i32, %c0_i32_0 : i32, i32, i32
  }
}

module attributes {stable_mosaic.version = 11 : i64} {
  func.func @_input_proj_kernel(%arg0: i32, %arg1: memref<1x8x16xf32, #tpu.memory_space<vmem>>, %arg2: memref<16x32xbf16, #tpu.memory_space<vmem>>, %arg3: memref<1x32xf32, #tpu.memory_space<vmem>>, %arg4: memref<1x8x32xf32, #tpu.memory_space<vmem>>) attributes {dimension_semantics = [#tpu.dimension_semantics<parallel>], iteration_bounds = array<i64: 2>, scalar_prefetch = 0 : i64, scratch_operands = 0 : i64, tpu.core_type = #tpu.core_type<tc>, window_params = [{transform_indices = @transform_0, window_bounds = array<i64: 1, 8, 16>}, {pipeline_mode = #tpu.pipeline_mode<synchronous>, transform_indices = @transform_1, window_bounds = array<i64: 16, 32>}, {pipeline_mode = #tpu.pipeline_mode<synchronous>, transform_indices = @transform_2, window_bounds = array<i64: 1, 32>}, {transform_indices = @transform_3, window_bounds = array<i64: 1, 8, 32>}]} {
    %c0 = arith.constant 0 : index
    %c0_0 = arith.constant 0 : index
    %c0_1 = arith.constant 0 : index
    %0 = vector.load %arg1[%c0, %c0_0, %c0_1] : memref<1x8x16xf32, #tpu.memory_space<vmem>>, vector<1x8x16xf32>
    %1 = vector.shape_cast %0 : vector<1x8x16xf32> to vector<8x16xf32>
    %2 = arith.truncf %1 : vector<8x16xf32> to vector<8x16xbf16>
    %c0_2 = arith.constant 0 : index
    %c0_3 = arith.constant 0 : index
    %3 = vector.load %arg2[%c0_2, %c0_3] : memref<16x32xbf16, #tpu.memory_space<vmem>>, vector<16x32xbf16>
    %cst = arith.constant dense<0.000000e+00> : vector<8x32xf32>
    %4 = tpu.matmul %2, %3, %cst {dimension_numbers = #tpu.dot_dimension_numbers<[1], [0], [0], [1], [0, 0, 1, 1], [], []>} : vector<8x16xbf16>, vector<16x32xbf16>, vector<8x32xf32> -> vector<8x32xf32>
    %c0_4 = arith.constant 0 : index
    %c0_5 = arith.constant 0 : index
    %5 = vector.load %arg3[%c0_4, %c0_5] : memref<1x32xf32, #tpu.memory_space<vmem>>, vector<1x32xf32>
    %6 = vector.broadcast %5 : vector<1x32xf32> to vector<8x32xf32>
    %7 = arith.addf %4, %6 : vector<8x32xf32>
    %c0_6 = arith.constant 0 : index
    %c0_7 = arith.constant 0 : index
    %c0_8 = arith.constant 0 : index
    %8 = vector.load %arg4[%c0_6, %c0_7, %c0_8] : memref<1x8x32xf32, #tpu.memory_space<vmem>>, vector<1x8x32xf32>
    %9 = vector.shape_cast %8 : vector<1x8x32xf32> to vector<8x32xf32>
    %10 = vector.shape_cast %7 : vector<8x32xf32> to vector<1x8x32xf32>
    tpu.vector_store %arg4[%c0_6, %c0_7, %c0_8], %10 {strides = array<i32>} : memref<1x8x32xf32, #tpu.memory_space<vmem>>, vector<1x8x32xf32>,
    return
  }
  func.func @transform_0(%arg0: i32) -> (i32, i32, i32) {
    %c0_i32 = arith.constant 0 : i32
    %c0_i32_0 = arith.constant 0 : i32
    %c0_i32_1 = arith.constant 0 : i32
    return %arg0, %c0_i32, %c0_i32_0 : i32, i32, i32
  }
  func.func @transform_1(%arg0: i32) -> (i32, i32) {
    %c0_i32 = arith.constant 0 : i32
    %c0_i32_0 = arith.constant 0 : i32
    %c0_i32_1 = arith.constant 0 : i32
    return %c0_i32, %c0_i32_0 : i32, i32
  }
  func.func @transform_2(%arg0: i32) -> (i32, i32) {
    %c0_i32 = arith.constant 0 : i32
    %c0_i32_0 = arith.constant 0 : i32
    %c0_i32_1 = arith.constant 0 : i32
    return %c0_i32, %c0_i32_0 : i32, i32
  }
  func.func @transform_3(%arg0: i32) -> (i32, i32, i32) {
    %c0_i32 = arith.constant 0 : i32
    %c0_i32_0 = arith.constant 0 : i32
    %c0_i32_1 = arith.constant 0 : i32
    return %arg0, %c0_i32, %c0_i32_0 : i32, i32, i32
  }
}

module attributes {stable_mosaic.version = 11 : i64} {
  func.func @_num_projection_kernel(%arg0: i32, %arg1: memref<1x4x32xf32, #tpu.memory_space<vmem>>, %arg2: memref<1x32xf32, #tpu.memory_space<vmem>>, %arg3: memref<1x32xf32, #tpu.memory_space<vmem>>, %arg4: memref<2x32xf32, #tpu.memory_space<vmem>>, %arg5: memref<32x96xbf16, #tpu.memory_space<vmem>>, %arg6: memref<1x96xf32, #tpu.memory_space<vmem>>, %arg7: memref<32x64xbf16, #tpu.memory_space<vmem>>, %arg8: memref<1x64xf32, #tpu.memory_space<vmem>>, %arg9: memref<32x32xbf16, #tpu.memory_space<vmem>>, %arg10: memref<1x32xf32, #tpu.memory_space<vmem>>, %arg11: memref<1x32xf32, #tpu.memory_space<vmem>>, %arg12: memref<1x32xf32, #tpu.memory_space<vmem>>, %arg13: memref<32x32xbf16, #tpu.memory_space<vmem>>, %arg14: memref<1x32xf32, #tpu.memory_space<vmem>>, %arg15: memref<32x32xbf16, #tpu.memory_space<vmem>>, %arg16: memref<1x32xf32, #tpu.memory_space<vmem>>, %arg17: memref<32x32xbf16, #tpu.memory_space<vmem>>, %arg18: memref<1x32xf32, #tpu.memory_space<vmem>>, %arg19: memref<1x32xf32, #tpu.memory_space<vmem>>, %arg20: memref<1x32xf32, #tpu.memory_space<vmem>>, %arg21: memref<1x4x32xf32, #tpu.memory_space<vmem>>) attributes {dimension_semantics = [#tpu.dimension_semantics<parallel>], iteration_bounds = array<i64: 2>, scalar_prefetch = 0 : i64, scratch_operands = 0 : i64, tpu.core_type = #tpu.core_type<tc>, window_params = [{transform_indices = @transform_0, window_bounds = array<i64: 1, 4, 32>}, {pipeline_mode = #tpu.pipeline_mode<synchronous>, transform_indices = @transform_1, window_bounds = array<i64: 1, 32>}, {pipeline_mode = #tpu.pipeline_mode<synchronous>, transform_indices = @transform_2, window_bounds = array<i64: 1, 32>}, {pipeline_mode = #tpu.pipeline_mode<synchronous>, transform_indices = @transform_3, window_bounds = array<i64: 2, 32>}, {pipeline_mode = #tpu.pipeline_mode<synchronous>, transform_indices = @transform_4, window_bounds = array<i64: 32, 96>}, {pipeline_mode = #tpu.pipeline_mode<synchronous>, transform_indices = @transform_5, window_bounds = array<i64: 1, 96>}, {pipeline_mode = #tpu.pipeline_mode<synchronous>, transform_indices = @transform_6, window_bounds = array<i64: 32, 64>}, {pipeline_mode = #tpu.pipeline_mode<synchronous>, transform_indices = @transform_7, window_bounds = array<i64: 1, 64>}, {pipeline_mode = #tpu.pipeline_mode<synchronous>, transform_indices = @transform_8, window_bounds = array<i64: 32, 32>}, {pipeline_mode = #tpu.pipeline_mode<synchronous>, transform_indices = @transform_9, window_bounds = array<i64: 1, 32>}, {pipeline_mode = #tpu.pipeline_mode<synchronous>, transform_indices = @transform_10, window_bounds = array<i64: 1, 32>}, {pipeline_mode = #tpu.pipeline_mode<synchronous>, transform_indices = @transform_11, window_bounds = array<i64: 1, 32>}, {pipeline_mode = #tpu.pipeline_mode<synchronous>, transform_indices = @transform_12, window_bounds = array<i64: 32, 32>}, {pipeline_mode = #tpu.pipeline_mode<synchronous>, transform_indices = @transform_13, window_bounds = array<i64: 1, 32>}, {pipeline_mode = #tpu.pipeline_mode<synchronous>, transform_indices = @transform_14, window_bounds = array<i64: 32, 32>}, {pipeline_mode = #tpu.pipeline_mode<synchronous>, transform_indices = @transform_15, window_bounds = array<i64: 1, 32>}, {pipeline_mode = #tpu.pipeline_mode<synchronous>, transform_indices = @transform_16, window_bounds = array<i64: 32, 32>}, {pipeline_mode = #tpu.pipeline_mode<synchronous>, transform_indices = @transform_17, window_bounds = array<i64: 1, 32>}, {pipeline_mode = #tpu.pipeline_mode<synchronous>, transform_indices = @transform_18, window_bounds = array<i64: 1, 32>}, {pipeline_mode = #tpu.pipeline_mode<synchronous>, transform_indices = @transform_19, window_bounds = array<i64: 1, 32>}, {transform_indices = @transform_20, window_bounds = array<i64: 1, 4, 32>}]} {
    %c0 = arith.constant 0 : index
    %c0_0 = arith.constant 0 : index
    %c0_1 = arith.constant 0 : index
    %0 = vector.load %arg1[%c0, %c0_0, %c0_1] : memref<1x4x32xf32, #tpu.memory_space<vmem>>, vector<1x4x32xf32>
    %1 = vector.shape_cast %0 : vector<1x4x32xf32> to vector<4x32xf32>
    %c0_2 = arith.constant 0 : index
    %c0_3 = arith.constant 0 : index
    %2 = vector.load %arg2[%c0_2, %c0_3] : memref<1x32xf32, #tpu.memory_space<vmem>>, vector<1x32xf32>
    %3 = vector.broadcast %2 : vector<1x32xf32> to vector<4x32xf32>
    %4 = arith.addf %1, %3 : vector<4x32xf32>
    %c0_4 = arith.constant 0 : index
    %c0_5 = arith.constant 0 : index
    %5 = vector.load %arg4[%c0_4, %c0_5] : memref<2x32xf32, #tpu.memory_space<vmem>>, vector<2x32xf32>
    %6 = vector.shape_cast %4 : vector<4x32xf32> to vector<4x1x32xf32>
    %7 = vector.shape_cast %5 : vector<2x32xf32> to vector<1x2x32xf32>
    %8 = vector.broadcast %6 : vector<4x1x32xf32> to vector<4x2x32xf32>
    %9 = vector.broadcast %7 : vector<1x2x32xf32> to vector<4x2x32xf32>
    %10 = arith.addf %8, %9 : vector<4x2x32xf32>
    %11 = vector.shape_cast %10 : vector<4x2x32xf32> to vector<8x32xf32>
    %c0_6 = arith.constant 0 : index
    %c0_7 = arith.constant 0 : index
    %12 = vector.load %arg3[%c0_6, %c0_7] : memref<1x32xf32, #tpu.memory_space<vmem>>, vector<1x32xf32>
    %13 = arith.truncf %12 : vector<1x32xf32> to vector<1x32xbf16>
    %c0_8 = arith.constant 0 : index
    %c0_9 = arith.constant 0 : index
    %14 = vector.load %arg5[%c0_8, %c0_9] : memref<32x96xbf16, #tpu.memory_space<vmem>>, vector<32x96xbf16>
    %cst = arith.constant dense<0.000000e+00> : vector<1x96xf32>
    %15 = tpu.matmul %13, %14, %cst {dimension_numbers = #tpu.dot_dimension_numbers<[1], [0], [0], [1], [0, 0, 1, 1], [], []>} : vector<1x32xbf16>, vector<32x96xbf16>, vector<1x96xf32> -> vector<1x96xf32>
    %c0_10 = arith.constant 0 : index
    %c0_11 = arith.constant 0 : index
    %16 = vector.load %arg6[%c0_10, %c0_11] : memref<1x96xf32, #tpu.memory_space<vmem>>, vector<1x96xf32>
    %17 = arith.addf %15, %16 : vector<1x96xf32>
    %18 = arith.truncf %11 : vector<8x32xf32> to vector<8x32xbf16>
    %c0_12 = arith.constant 0 : index
    %c0_13 = arith.constant 0 : index
    %19 = vector.load %arg7[%c0_12, %c0_13] : memref<32x64xbf16, #tpu.memory_space<vmem>>, vector<32x64xbf16>
    %cst_14 = arith.constant dense<0.000000e+00> : vector<8x64xf32>
    %20 = tpu.matmul %18, %19, %cst_14 {dimension_numbers = #tpu.dot_dimension_numbers<[1], [0], [0], [1], [0, 0, 1, 1], [], []>} : vector<8x32xbf16>, vector<32x64xbf16>, vector<8x64xf32> -> vector<8x64xf32>
    %c0_15 = arith.constant 0 : index
    %c0_16 = arith.constant 0 : index
    %21 = vector.load %arg8[%c0_15, %c0_16] : memref<1x64xf32, #tpu.memory_space<vmem>>, vector<1x64xf32>
    %22 = vector.broadcast %21 : vector<1x64xf32> to vector<8x64xf32>
    %23 = arith.addf %20, %22 : vector<8x64xf32>
    %24 = vector.extract_strided_slice %17 {offsets = [0, 0], sizes = [1, 32], strides = [1, 1]} : vector<1x96xf32> to vector<1x32xf32>
    %25 = vector.extract_strided_slice %23 {offsets = [0, 0], sizes = [8, 32], strides = [1, 1]} : vector<8x64xf32> to vector<8x32xf32>
    %26 = vector.broadcast %24 : vector<1x32xf32> to vector<8x32xf32>
    %27 = arith.addf %26, %25 : vector<8x32xf32>
    %28 = arith.negf %27 : vector<8x32xf32>
    %29 = math.exp %28 : vector<8x32xf32>
    %cst_17 = arith.constant 1.000000e+00 : f32
    %30 = vector.broadcast %cst_17 : f32 to vector<8x32xf32>
    %31 = arith.addf %30, %29 : vector<8x32xf32>
    %32 = arith.divf %30, %31 : vector<8x32xf32>
    %33 = vector.extract_strided_slice %17 {offsets = [0, 32], sizes = [1, 32], strides = [1, 1]} : vector<1x96xf32> to vector<1x32xf32>
    %34 = vector.extract_strided_slice %23 {offsets = [0, 32], sizes = [8, 32], strides = [1, 1]} : vector<8x64xf32> to vector<8x32xf32>
    %35 = vector.broadcast %33 : vector<1x32xf32> to vector<8x32xf32>
    %36 = arith.addf %35, %34 : vector<8x32xf32>
    %37 = arith.negf %36 : vector<8x32xf32>
    %38 = math.exp %37 : vector<8x32xf32>
    %cst_18 = arith.constant 1.000000e+00 : f32
    %39 = vector.broadcast %cst_18 : f32 to vector<8x32xf32>
    %40 = arith.addf %39, %38 : vector<8x32xf32>
    %41 = arith.divf %39, %40 : vector<8x32xf32>
    %42 = arith.mulf %11, %41 : vector<8x32xf32>
    %43 = arith.truncf %42 : vector<8x32xf32> to vector<8x32xbf16>
    %c0_19 = arith.constant 0 : index
    %c0_20 = arith.constant 0 : index
    %44 = vector.load %arg9[%c0_19, %c0_20] : memref<32x32xbf16, #tpu.memory_space<vmem>>, vector<32x32xbf16>
    %cst_21 = arith.constant dense<0.000000e+00> : vector<8x32xf32>
    %45 = tpu.matmul %43, %44, %cst_21 {dimension_numbers = #tpu.dot_dimension_numbers<[1], [0], [0], [1], [0, 0, 1, 1], [], []>} : vector<8x32xbf16>, vector<32x32xbf16>, vector<8x32xf32> -> vector<8x32xf32>
    %c0_22 = arith.constant 0 : index
    %c0_23 = arith.constant 0 : index
    %46 = vector.load %arg10[%c0_22, %c0_23] : memref<1x32xf32, #tpu.memory_space<vmem>>, vector<1x32xf32>
    %47 = vector.broadcast %46 : vector<1x32xf32> to vector<8x32xf32>
    %48 = arith.addf %45, %47 : vector<8x32xf32>
    %49 = vector.extract_strided_slice %17 {offsets = [0, 64], sizes = [1, 32], strides = [1, 1]} : vector<1x96xf32> to vector<1x32xf32>
    %50 = vector.broadcast %49 : vector<1x32xf32> to vector<8x32xf32>
    %51 = arith.addf %50, %48 : vector<8x32xf32>
    %52 = math.tanh %51 : vector<8x32xf32>
    %cst_24 = arith.constant 1.000000e+00 : f32
    %53 = vector.broadcast %cst_24 : f32 to vector<8x32xf32>
    %54 = arith.subf %53, %32 : vector<8x32xf32>
    %55 = arith.mulf %54, %11 : vector<8x32xf32>
    %56 = arith.mulf %32, %52 : vector<8x32xf32>
    %57 = arith.addf %55, %56 : vector<8x32xf32>
    %c0_25 = arith.constant 0 : index
    %c0_26 = arith.constant 0 : index
    %58 = vector.load %arg11[%c0_25, %c0_26] : memref<1x32xf32, #tpu.memory_space<vmem>>, vector<1x32xf32>
    %c0_27 = arith.constant 0 : index
    %c0_28 = arith.constant 0 : index
    %59 = vector.load %arg12[%c0_27, %c0_28] : memref<1x32xf32, #tpu.memory_space<vmem>>, vector<1x32xf32>
    %cst_29 = arith.constant dense<0.000000e+00> : vector<8xf32>
    %60 = vector.multi_reduction <add>, %57, %cst_29 [1] : vector<8x32xf32> to vector<8xf32>
    %61 = vector.shape_cast %60 : vector<8xf32> to vector<8x1xf32>
    %cst_30 = arith.constant 3.200000e+01 : f32
    %62 = vector.broadcast %cst_30 : f32 to vector<8x1xf32>
    %63 = arith.divf %61, %62 : vector<8x1xf32>
    %64 = vector.broadcast %63 : vector<8x1xf32> to vector<8x32xf32>
    %65 = arith.subf %57, %64 : vector<8x32xf32>
    %66 = arith.mulf %65, %65 : vector<8x32xf32>
    %cst_31 = arith.constant dense<0.000000e+00> : vector<8xf32>
    %67 = vector.multi_reduction <add>, %66, %cst_31 [1] : vector<8x32xf32> to vector<8xf32>
    %68 = vector.shape_cast %67 : vector<8xf32> to vector<8x1xf32>
    %cst_32 = arith.constant 3.200000e+01 : f32
    %69 = vector.broadcast %cst_32 : f32 to vector<8x1xf32>
    %70 = arith.divf %68, %69 : vector<8x1xf32>
    %cst_33 = arith.constant 9.99999996E-13 : f32
    %71 = vector.broadcast %cst_33 : f32 to vector<8x1xf32>
    %72 = arith.addf %70, %71 : vector<8x1xf32>
    %73 = math.rsqrt %72 : vector<8x1xf32>
    %74 = vector.broadcast %73 : vector<8x1xf32> to vector<8x32xf32>
    %75 = arith.mulf %65, %74 : vector<8x32xf32>
    %76 = vector.broadcast %58 : vector<1x32xf32> to vector<8x32xf32>
    %77 = arith.mulf %75, %76 : vector<8x32xf32>
    %78 = vector.broadcast %59 : vector<1x32xf32> to vector<8x32xf32>
    %79 = arith.addf %77, %78 : vector<8x32xf32>
    %80 = arith.truncf %79 : vector<8x32xf32> to vector<8x32xbf16>
    %c0_34 = arith.constant 0 : index
    %c0_35 = arith.constant 0 : index
    %81 = vector.load %arg13[%c0_34, %c0_35] : memref<32x32xbf16, #tpu.memory_space<vmem>>, vector<32x32xbf16>
    %cst_36 = arith.constant dense<0.000000e+00> : vector<8x32xf32>
    %82 = tpu.matmul %80, %81, %cst_36 {dimension_numbers = #tpu.dot_dimension_numbers<[1], [0], [0], [1], [0, 0, 1, 1], [], []>} : vector<8x32xbf16>, vector<32x32xbf16>, vector<8x32xf32> -> vector<8x32xf32>
    %c0_37 = arith.constant 0 : index
    %c0_38 = arith.constant 0 : index
    %83 = vector.load %arg14[%c0_37, %c0_38] : memref<1x32xf32, #tpu.memory_space<vmem>>, vector<1x32xf32>
    %84 = vector.broadcast %83 : vector<1x32xf32> to vector<8x32xf32>
    %85 = arith.addf %82, %84 : vector<8x32xf32>
    %cst_39 = arith.constant 0.176776692 : f32
    %86 = vector.broadcast %cst_39 : f32 to vector<8x32xf32>
    %87 = arith.mulf %85, %86 : vector<8x32xf32>
    %88 = arith.truncf %79 : vector<8x32xf32> to vector<8x32xbf16>
    %c0_40 = arith.constant 0 : index
    %c0_41 = arith.constant 0 : index
    %89 = vector.load %arg15[%c0_40, %c0_41] : memref<32x32xbf16, #tpu.memory_space<vmem>>, vector<32x32xbf16>
    %cst_42 = arith.constant dense<0.000000e+00> : vector<8x32xf32>
    %90 = tpu.matmul %88, %89, %cst_42 {dimension_numbers = #tpu.dot_dimension_numbers<[1], [0], [0], [1], [0, 0, 1, 1], [], []>} : vector<8x32xbf16>, vector<32x32xbf16>, vector<8x32xf32> -> vector<8x32xf32>
    %c0_43 = arith.constant 0 : index
    %c0_44 = arith.constant 0 : index
    %91 = vector.load %arg16[%c0_43, %c0_44] : memref<1x32xf32, #tpu.memory_space<vmem>>, vector<1x32xf32>
    %92 = vector.broadcast %91 : vector<1x32xf32> to vector<8x32xf32>
    %93 = arith.addf %90, %92 : vector<8x32xf32>
    %94 = arith.truncf %79 : vector<8x32xf32> to vector<8x32xbf16>
    %c0_45 = arith.constant 0 : index
    %c0_46 = arith.constant 0 : index
    %95 = vector.load %arg17[%c0_45, %c0_46] : memref<32x32xbf16, #tpu.memory_space<vmem>>, vector<32x32xbf16>
    %cst_47 = arith.constant dense<0.000000e+00> : vector<8x32xf32>
    %96 = tpu.matmul %94, %95, %cst_47 {dimension_numbers = #tpu.dot_dimension_numbers<[1], [0], [0], [1], [0, 0, 1, 1], [], []>} : vector<8x32xbf16>, vector<32x32xbf16>, vector<8x32xf32> -> vector<8x32xf32>
    %c0_48 = arith.constant 0 : index
    %c0_49 = arith.constant 0 : index
    %97 = vector.load %arg18[%c0_48, %c0_49] : memref<1x32xf32, #tpu.memory_space<vmem>>, vector<1x32xf32>
    %98 = vector.broadcast %97 : vector<1x32xf32> to vector<8x32xf32>
    %99 = arith.addf %96, %98 : vector<8x32xf32>
    %100 = vector.shape_cast %87 : vector<8x32xf32> to vector<4x2x32xf32>
    %101 = vector.shape_cast %93 : vector<8x32xf32> to vector<4x2x32xf32>
    %102 = vector.shape_cast %99 : vector<8x32xf32> to vector<4x2x32xf32>
    "tpu.trace_start"() <{level = 10 : i32, message = "spd,sqd->spq"}> : () -> ()
    %cst_50 = arith.constant dense<0.000000e+00> : vector<4x2x2xf32>
    %103 = tpu.matmul %100, %101, %cst_50 {dimension_numbers = #tpu.dot_dimension_numbers<[2], [2], [1], [1], [0, 0, 0, 1, 1, 1], [0], [0]>} : vector<4x2x32xf32>, vector<4x2x32xf32>, vector<4x2x2xf32> -> vector<4x2x2xf32>
    "tpu.trace_stop"() : () -> ()
    %cst_51 = arith.constant dense<0xFF800000> : vector<4x2xf32>
    %104 = vector.multi_reduction <maximumf>, %103, %cst_51 [2] : vector<4x2x2xf32> to vector<4x2xf32>
    %105 = vector.shape_cast %104 : vector<4x2xf32> to vector<4x2x1xf32>
    %106 = vector.broadcast %105 : vector<4x2x1xf32> to vector<4x2x2xf32>
    %107 = arith.subf %103, %106 : vector<4x2x2xf32>
    %108 = math.exp %107 : vector<4x2x2xf32>
    %cst_52 = arith.constant dense<0.000000e+00> : vector<4x2xf32>
    %109 = vector.multi_reduction <add>, %108, %cst_52 [2] : vector<4x2x2xf32> to vector<4x2xf32>
    %110 = vector.shape_cast %109 : vector<4x2xf32> to vector<4x2x1xf32>
    %111 = tpu.reciprocal %110 {approx = true} : vector<4x2x1xf32> -> vector<4x2x1xf32>
    %112 = vector.broadcast %111 : vector<4x2x1xf32> to vector<4x2x2xf32>
    %113 = arith.mulf %108, %112 : vector<4x2x2xf32>
    "tpu.trace_start"() <{level = 10 : i32, message = "spq,sqd->spd"}> : () -> ()
    %cst_53 = arith.constant dense<0.000000e+00> : vector<4x2x32xf32>
    %114 = tpu.matmul %113, %102, %cst_53 {dimension_numbers = #tpu.dot_dimension_numbers<[2], [1], [1], [2], [0, 0, 0, 1, 1, 2], [0], [0]>} : vector<4x2x2xf32>, vector<4x2x32xf32>, vector<4x2x32xf32> -> vector<4x2x32xf32>
    "tpu.trace_stop"() : () -> ()
    %cst_54 = arith.constant dense<0.000000e+00> : vector<4x32xf32>
    %115 = vector.multi_reduction <add>, %114, %cst_54 [1] : vector<4x2x32xf32> to vector<4x32xf32>
    %c0_55 = arith.constant 0 : index
    %c0_56 = arith.constant 0 : index
    %116 = vector.load %arg19[%c0_55, %c0_56] : memref<1x32xf32, #tpu.memory_space<vmem>>, vector<1x32xf32>
    %c0_57 = arith.constant 0 : index
    %c0_58 = arith.constant 0 : index
    %117 = vector.load %arg20[%c0_57, %c0_58] : memref<1x32xf32, #tpu.memory_space<vmem>>, vector<1x32xf32>
    %cst_59 = arith.constant dense<0.000000e+00> : vector<4xf32>
    %118 = vector.multi_reduction <add>, %115, %cst_59 [1] : vector<4x32xf32> to vector<4xf32>
    %119 = vector.shape_cast %118 : vector<4xf32> to vector<4x1xf32>
    %cst_60 = arith.constant 3.200000e+01 : f32
    %120 = vector.broadcast %cst_60 : f32 to vector<4x1xf32>
    %121 = arith.divf %119, %120 : vector<4x1xf32>
    %122 = vector.broadcast %121 : vector<4x1xf32> to vector<4x32xf32>
    %123 = arith.subf %115, %122 : vector<4x32xf32>
    %124 = arith.mulf %123, %123 : vector<4x32xf32>
    %cst_61 = arith.constant dense<0.000000e+00> : vector<4xf32>
    %125 = vector.multi_reduction <add>, %124, %cst_61 [1] : vector<4x32xf32> to vector<4xf32>
    %126 = vector.shape_cast %125 : vector<4xf32> to vector<4x1xf32>
    %cst_62 = arith.constant 3.200000e+01 : f32
    %127 = vector.broadcast %cst_62 : f32 to vector<4x1xf32>
    %128 = arith.divf %126, %127 : vector<4x1xf32>
    %cst_63 = arith.constant 9.99999996E-13 : f32
    %129 = vector.broadcast %cst_63 : f32 to vector<4x1xf32>
    %130 = arith.addf %128, %129 : vector<4x1xf32>
    %131 = math.rsqrt %130 : vector<4x1xf32>
    %132 = vector.broadcast %131 : vector<4x1xf32> to vector<4x32xf32>
    %133 = arith.mulf %123, %132 : vector<4x32xf32>
    %134 = vector.broadcast %116 : vector<1x32xf32> to vector<4x32xf32>
    %135 = arith.mulf %133, %134 : vector<4x32xf32>
    %136 = vector.broadcast %117 : vector<1x32xf32> to vector<4x32xf32>
    %137 = arith.addf %135, %136 : vector<4x32xf32>
    %c0_64 = arith.constant 0 : index
    %c0_65 = arith.constant 0 : index
    %c0_66 = arith.constant 0 : index
    %138 = vector.load %arg21[%c0_64, %c0_65, %c0_66] : memref<1x4x32xf32, #tpu.memory_space<vmem>>, vector<1x4x32xf32>
    %139 = vector.shape_cast %138 : vector<1x4x32xf32> to vector<4x32xf32>
    %140 = vector.shape_cast %137 : vector<4x32xf32> to vector<1x4x32xf32>
    tpu.vector_store %arg21[%c0_64, %c0_65, %c0_66], %140 {strides = array<i32>} : memref<1x4x32xf32, #tpu.memory_space<vmem>>, vector<1x4x32xf32>,
    return
  }
  func.func @transform_0(%arg0: i32) -> (i32, i32, i32) {
    %c0_i32 = arith.constant 0 : i32
    %c0_i32_0 = arith.constant 0 : i32
    %c0_i32_1 = arith.constant 0 : i32
    return %arg0, %c0_i32, %c0_i32_0 : i32, i32, i32
  }
  func.func @transform_1(%arg0: i32) -> (i32, i32) {
    %c0_i32 = arith.constant 0 : i32
    %c0_i32_0 = arith.constant 0 : i32
    %c0_i32_1 = arith.constant 0 : i32
    return %c0_i32, %c0_i32_0 : i32, i32
  }
  func.func @transform_2(%arg0: i32) -> (i32, i32) {
    %c0_i32 = arith.constant 0 : i32
    %c0_i32_0 = arith.constant 0 : i32
    %c0_i32_1 = arith.constant 0 : i32
    return %c0_i32, %c0_i32_0 : i32, i32
  }
  func.func @transform_3(%arg0: i32) -> (i32, i32) {
    %c0_i32 = arith.constant 0 : i32
    %c0_i32_0 = arith.constant 0 : i32
    %c0_i32_1 = arith.constant 0 : i32
    return %c0_i32, %c0_i32_0 : i32, i32
  }
  func.func @transform_4(%arg0: i32) -> (i32, i32) {
    %c0_i32 = arith.constant 0 : i32
    %c0_i32_0 = arith.constant 0 : i32
    %c0_i32_1 = arith.constant 0 : i32
    return %c0_i32, %c0_i32_0 : i32, i32
  }
  func.func @transform_5(%arg0: i32) -> (i32, i32) {
    %c0_i32 = arith.constant 0 : i32
    %c0_i32_0 = arith.constant 0 : i32
    %c0_i32_1 = arith.constant 0 : i32
    return %c0_i32, %c0_i32_0 : i32, i32
  }
  func.func @transform_6(%arg0: i32) -> (i32, i32) {
    %c0_i32 = arith.constant 0 : i32
    %c0_i32_0 = arith.constant 0 : i32
    %c0_i32_1 = arith.constant 0 : i32
    return %c0_i32, %c0_i32_0 : i32, i32
  }
  func.func @transform_7(%arg0: i32) -> (i32, i32) {
    %c0_i32 = arith.constant 0 : i32
    %c0_i32_0 = arith.constant 0 : i32
    %c0_i32_1 = arith.constant 0 : i32
    return %c0_i32, %c0_i32_0 : i32, i32
  }
  func.func @transform_8(%arg0: i32) -> (i32, i32) {
    %c0_i32 = arith.constant 0 : i32
    %c0_i32_0 = arith.constant 0 : i32
    %c0_i32_1 = arith.constant 0 : i32
    return %c0_i32, %c0_i32_0 : i32, i32
  }
  func.func @transform_9(%arg0: i32) -> (i32, i32) {
    %c0_i32 = arith.constant 0 : i32
    %c0_i32_0 = arith.constant 0 : i32
    %c0_i32_1 = arith.constant 0 : i32
    return %c0_i32, %c0_i32_0 : i32, i32
  }
  func.func @transform_10(%arg0: i32) -> (i32, i32) {
    %c0_i32 = arith.constant 0 : i32
    %c0_i32_0 = arith.constant 0 : i32
    %c0_i32_1 = arith.constant 0 : i32
    return %c0_i32, %c0_i32_0 : i32, i32
  }
  func.func @transform_11(%arg0: i32) -> (i32, i32) {
    %c0_i32 = arith.constant 0 : i32
    %c0_i32_0 = arith.constant 0 : i32
    %c0_i32_1 = arith.constant 0 : i32
    return %c0_i32, %c0_i32_0 : i32, i32
  }
  func.func @transform_12(%arg0: i32) -> (i32, i32) {
    %c0_i32 = arith.constant 0 : i32
    %c0_i32_0 = arith.constant 0 : i32
    %c0_i32_1 = arith.constant 0 : i32
    return %c0_i32, %c0_i32_0 : i32, i32
  }
  func.func @transform_13(%arg0: i32) -> (i32, i32) {
    %c0_i32 = arith.constant 0 : i32
    %c0_i32_0 = arith.constant 0 : i32
    %c0_i32_1 = arith.constant 0 : i32
    return %c0_i32, %c0_i32_0 : i32, i32
  }
  func.func @transform_14(%arg0: i32) -> (i32, i32) {
    %c0_i32 = arith.constant 0 : i32
    %c0_i32_0 = arith.constant 0 : i32
    %c0_i32_1 = arith.constant 0 : i32
    return %c0_i32, %c0_i32_0 : i32, i32
  }
  func.func @transform_15(%arg0: i32) -> (i32, i32) {
    %c0_i32 = arith.constant 0 : i32
    %c0_i32_0 = arith.constant 0 : i32
    %c0_i32_1 = arith.constant 0 : i32
    return %c0_i32, %c0_i32_0 : i32, i32
  }
  func.func @transform_16(%arg0: i32) -> (i32, i32) {
    %c0_i32 = arith.constant 0 : i32
    %c0_i32_0 = arith.constant 0 : i32
    %c0_i32_1 = arith.constant 0 : i32
    return %c0_i32, %c0_i32_0 : i32, i32
  }
  func.func @transform_17(%arg0: i32) -> (i32, i32) {
    %c0_i32 = arith.constant 0 : i32
    %c0_i32_0 = arith.constant 0 : i32
    %c0_i32_1 = arith.constant 0 : i32
    return %c0_i32, %c0_i32_0 : i32, i32
  }
  func.func @transform_18(%arg0: i32) -> (i32, i32) {
    %c0_i32 = arith.constant 0 : i32
    %c0_i32_0 = arith.constant 0 : i32
    %c0_i32_1 = arith.constant 0 : i32
    return %c0_i32, %c0_i32_0 : i32, i32
  }
  func.func @transform_19(%arg0: i32) -> (i32, i32) {
    %c0_i32 = arith.constant 0 : i32
    %c0_i32_0 = arith.constant 0 : i32
    %c0_i32_1 = arith.constant 0 : i32
    return %c0_i32, %c0_i32_0 : i32, i32
  }
  func.func @transform_20(%arg0: i32) -> (i32, i32, i32) {
    %c0_i32 = arith.constant 0 : i32
    %c0_i32_0 = arith.constant 0 : i32
    %c0_i32_1 = arith.constant 0 : i32
    return %arg0, %c0_i32, %c0_i32_0 : i32, i32, i32
  }
}

module attributes {stable_mosaic.version = 11 : i64} {
  func.func @_intersection_kernel(%arg0: i32, %arg1: memref<1x4x32xf32, #tpu.memory_space<vmem>>, %arg2: memref<1x4x32xf32, #tpu.memory_space<vmem>>, %arg3: memref<32x32xbf16, #tpu.memory_space<vmem>>, %arg4: memref<1x32xf32, #tpu.memory_space<vmem>>, %arg5: memref<1x32xf32, #tpu.memory_space<vmem>>, %arg6: memref<1x32xf32, #tpu.memory_space<vmem>>, %arg7: memref<32x32xbf16, #tpu.memory_space<vmem>>, %arg8: memref<1x32xf32, #tpu.memory_space<vmem>>, %arg9: memref<32x32xbf16, #tpu.memory_space<vmem>>, %arg10: memref<1x32xf32, #tpu.memory_space<vmem>>, %arg11: memref<1x1x32xf32, #tpu.memory_space<vmem>>) attributes {dimension_semantics = [#tpu.dimension_semantics<parallel>], iteration_bounds = array<i64: 2>, scalar_prefetch = 0 : i64, scratch_operands = 0 : i64, tpu.core_type = #tpu.core_type<tc>, window_params = [{transform_indices = @transform_0, window_bounds = array<i64: 1, 4, 32>}, {transform_indices = @transform_1, window_bounds = array<i64: 1, 4, 32>}, {pipeline_mode = #tpu.pipeline_mode<synchronous>, transform_indices = @transform_2, window_bounds = array<i64: 32, 32>}, {pipeline_mode = #tpu.pipeline_mode<synchronous>, transform_indices = @transform_3, window_bounds = array<i64: 1, 32>}, {pipeline_mode = #tpu.pipeline_mode<synchronous>, transform_indices = @transform_4, window_bounds = array<i64: 1, 32>}, {pipeline_mode = #tpu.pipeline_mode<synchronous>, transform_indices = @transform_5, window_bounds = array<i64: 1, 32>}, {pipeline_mode = #tpu.pipeline_mode<synchronous>, transform_indices = @transform_6, window_bounds = array<i64: 32, 32>}, {pipeline_mode = #tpu.pipeline_mode<synchronous>, transform_indices = @transform_7, window_bounds = array<i64: 1, 32>}, {pipeline_mode = #tpu.pipeline_mode<synchronous>, transform_indices = @transform_8, window_bounds = array<i64: 32, 32>}, {pipeline_mode = #tpu.pipeline_mode<synchronous>, transform_indices = @transform_9, window_bounds = array<i64: 1, 32>}, {transform_indices = @transform_10, window_bounds = array<i64: 1, 1, 32>}]} {
    %c0 = arith.constant 0 : index
    %c0_0 = arith.constant 0 : index
    %c0_1 = arith.constant 0 : index
    %0 = vector.load %arg1[%c0, %c0_0, %c0_1] : memref<1x4x32xf32, #tpu.memory_space<vmem>>, vector<1x4x32xf32>
    %1 = vector.shape_cast %0 : vector<1x4x32xf32> to vector<4x32xf32>
    %c0_2 = arith.constant 0 : index
    %c0_3 = arith.constant 0 : index
    %c0_4 = arith.constant 0 : index
    %2 = vector.load %arg2[%c0_2, %c0_3, %c0_4] : memref<1x4x32xf32, #tpu.memory_space<vmem>>, vector<1x4x32xf32>
    %3 = vector.shape_cast %2 : vector<1x4x32xf32> to vector<4x32xf32>
    %4 = tpu.concatenate %1, %3 in 0 : vector<4x32xf32>, vector<4x32xf32> -> vector<8x32xf32>
    %5 = arith.truncf %4 : vector<8x32xf32> to vector<8x32xbf16>
    %c0_5 = arith.constant 0 : index
    %c0_6 = arith.constant 0 : index
    %6 = vector.load %arg3[%c0_5, %c0_6] : memref<32x32xbf16, #tpu.memory_space<vmem>>, vector<32x32xbf16>
    %cst = arith.constant dense<0.000000e+00> : vector<8x32xf32>
    %7 = tpu.matmul %5, %6, %cst {dimension_numbers = #tpu.dot_dimension_numbers<[1], [0], [0], [1], [0, 0, 1, 1], [], []>} : vector<8x32xbf16>, vector<32x32xbf16>, vector<8x32xf32> -> vector<8x32xf32>
    %c0_7 = arith.constant 0 : index
    %c0_8 = arith.constant 0 : index
    %8 = vector.load %arg4[%c0_7, %c0_8] : memref<1x32xf32, #tpu.memory_space<vmem>>, vector<1x32xf32>
    %9 = vector.broadcast %8 : vector<1x32xf32> to vector<8x32xf32>
    %10 = arith.addf %7, %9 : vector<8x32xf32>
    %cst_9 = arith.constant 0.176776692 : f32
    %11 = vector.broadcast %cst_9 : f32 to vector<8x32xf32>
    %12 = arith.mulf %10, %11 : vector<8x32xf32>
    %cst_10 = arith.constant dense<0.000000e+00> : vector<8x8xf32>
    %13 = tpu.matmul %12, %10, %cst_10 {dimension_numbers = #tpu.dot_dimension_numbers<[1], [1], [0], [0], [0, 0, 1, 0], [], []>} : vector<8x32xf32>, vector<8x32xf32>, vector<8x8xf32> -> vector<8x8xf32>
    %cst_11 = arith.constant dense<0xFF800000> : vector<8xf32>
    %14 = vector.multi_reduction <maximumf>, %13, %cst_11 [1] : vector<8x8xf32> to vector<8xf32>
    %15 = vector.shape_cast %14 : vector<8xf32> to vector<8x1xf32>
    %16 = vector.broadcast %15 : vector<8x1xf32> to vector<8x8xf32>
    %17 = arith.subf %13, %16 : vector<8x8xf32>
    %18 = math.exp %17 : vector<8x8xf32>
    %cst_12 = arith.constant dense<0.000000e+00> : vector<8xf32>
    %19 = vector.multi_reduction <add>, %18, %cst_12 [1] : vector<8x8xf32> to vector<8xf32>
    %20 = vector.shape_cast %19 : vector<8xf32> to vector<8x1xf32>
    %21 = tpu.reciprocal %20 {approx = true} : vector<8x1xf32> -> vector<8x1xf32>
    %22 = vector.broadcast %21 : vector<8x1xf32> to vector<8x8xf32>
    %23 = arith.mulf %18, %22 : vector<8x8xf32>
    %cst_13 = arith.constant dense<0.000000e+00> : vector<8x32xf32>
    %24 = tpu.matmul %23, %10, %cst_13 {dimension_numbers = #tpu.dot_dimension_numbers<[1], [0], [0], [1], [0, 0, 1, 1], [], []>} : vector<8x8xf32>, vector<8x32xf32>, vector<8x32xf32> -> vector<8x32xf32>
    %c0_14 = arith.constant 0 : index
    %c0_15 = arith.constant 0 : index
    %25 = vector.load %arg5[%c0_14, %c0_15] : memref<1x32xf32, #tpu.memory_space<vmem>>, vector<1x32xf32>
    %c0_16 = arith.constant 0 : index
    %c0_17 = arith.constant 0 : index
    %26 = vector.load %arg6[%c0_16, %c0_17] : memref<1x32xf32, #tpu.memory_space<vmem>>, vector<1x32xf32>
    %cst_18 = arith.constant dense<0.000000e+00> : vector<8xf32>
    %27 = vector.multi_reduction <add>, %24, %cst_18 [1] : vector<8x32xf32> to vector<8xf32>
    %28 = vector.shape_cast %27 : vector<8xf32> to vector<8x1xf32>
    %cst_19 = arith.constant 3.200000e+01 : f32
    %29 = vector.broadcast %cst_19 : f32 to vector<8x1xf32>
    %30 = arith.divf %28, %29 : vector<8x1xf32>
    %31 = vector.broadcast %30 : vector<8x1xf32> to vector<8x32xf32>
    %32 = arith.subf %24, %31 : vector<8x32xf32>
    %33 = arith.mulf %32, %32 : vector<8x32xf32>
    %cst_20 = arith.constant dense<0.000000e+00> : vector<8xf32>
    %34 = vector.multi_reduction <add>, %33, %cst_20 [1] : vector<8x32xf32> to vector<8xf32>
    %35 = vector.shape_cast %34 : vector<8xf32> to vector<8x1xf32>
    %cst_21 = arith.constant 3.200000e+01 : f32
    %36 = vector.broadcast %cst_21 : f32 to vector<8x1xf32>
    %37 = arith.divf %35, %36 : vector<8x1xf32>
    %cst_22 = arith.constant 9.99999996E-13 : f32
    %38 = vector.broadcast %cst_22 : f32 to vector<8x1xf32>
    %39 = arith.addf %37, %38 : vector<8x1xf32>
    %40 = math.rsqrt %39 : vector<8x1xf32>
    %41 = vector.broadcast %40 : vector<8x1xf32> to vector<8x32xf32>
    %42 = arith.mulf %32, %41 : vector<8x32xf32>
    %43 = vector.broadcast %25 : vector<1x32xf32> to vector<8x32xf32>
    %44 = arith.mulf %42, %43 : vector<8x32xf32>
    %45 = vector.broadcast %26 : vector<1x32xf32> to vector<8x32xf32>
    %46 = arith.addf %44, %45 : vector<8x32xf32>
    %47 = arith.truncf %46 : vector<8x32xf32> to vector<8x32xbf16>
    %c0_23 = arith.constant 0 : index
    %c0_24 = arith.constant 0 : index
    %48 = vector.load %arg7[%c0_23, %c0_24] : memref<32x32xbf16, #tpu.memory_space<vmem>>, vector<32x32xbf16>
    %cst_25 = arith.constant dense<0.000000e+00> : vector<8x32xf32>
    %49 = tpu.matmul %47, %48, %cst_25 {dimension_numbers = #tpu.dot_dimension_numbers<[1], [0], [0], [1], [0, 0, 1, 1], [], []>} : vector<8x32xbf16>, vector<32x32xbf16>, vector<8x32xf32> -> vector<8x32xf32>
    %c0_26 = arith.constant 0 : index
    %c0_27 = arith.constant 0 : index
    %50 = vector.load %arg8[%c0_26, %c0_27] : memref<1x32xf32, #tpu.memory_space<vmem>>, vector<1x32xf32>
    %51 = vector.broadcast %50 : vector<1x32xf32> to vector<8x32xf32>
    %52 = arith.addf %49, %51 : vector<8x32xf32>
    %cst_28 = arith.constant 5.000000e-01 : f32
    %53 = vector.broadcast %cst_28 : f32 to vector<8x32xf32>
    %54 = arith.mulf %53, %52 : vector<8x32xf32>
    %cst_29 = arith.constant 0.707106769 : f32
    %55 = vector.broadcast %cst_29 : f32 to vector<8x32xf32>
    %56 = arith.mulf %52, %55 : vector<8x32xf32>
    %57 = math.erf %56 : vector<8x32xf32>
    %cst_30 = arith.constant 1.000000e+00 : f32
    %58 = vector.broadcast %cst_30 : f32 to vector<8x32xf32>
    %59 = arith.addf %58, %57 : vector<8x32xf32>
    %60 = arith.mulf %54, %59 : vector<8x32xf32>
    %61 = arith.truncf %60 : vector<8x32xf32> to vector<8x32xbf16>
    %c0_31 = arith.constant 0 : index
    %c0_32 = arith.constant 0 : index
    %62 = vector.load %arg9[%c0_31, %c0_32] : memref<32x32xbf16, #tpu.memory_space<vmem>>, vector<32x32xbf16>
    %cst_33 = arith.constant dense<0.000000e+00> : vector<8x32xf32>
    %63 = tpu.matmul %61, %62, %cst_33 {dimension_numbers = #tpu.dot_dimension_numbers<[1], [0], [0], [1], [0, 0, 1, 1], [], []>} : vector<8x32xbf16>, vector<32x32xbf16>, vector<8x32xf32> -> vector<8x32xf32>
    %c0_34 = arith.constant 0 : index
    %c0_35 = arith.constant 0 : index
    %64 = vector.load %arg10[%c0_34, %c0_35] : memref<1x32xf32, #tpu.memory_space<vmem>>, vector<1x32xf32>
    %65 = vector.broadcast %64 : vector<1x32xf32> to vector<8x32xf32>
    %66 = arith.addf %63, %65 : vector<8x32xf32>
    %67 = arith.addf %66, %46 : vector<8x32xf32>
    %c0_36 = arith.constant 0 : index
    %c0_37 = arith.constant 0 : index
    %68 = vector.load %arg5[%c0_36, %c0_37] : memref<1x32xf32, #tpu.memory_space<vmem>>, vector<1x32xf32>
    %c0_38 = arith.constant 0 : index
    %c0_39 = arith.constant 0 : index
    %69 = vector.load %arg6[%c0_38, %c0_39] : memref<1x32xf32, #tpu.memory_space<vmem>>, vector<1x32xf32>
    %cst_40 = arith.constant dense<0.000000e+00> : vector<8xf32>
    %70 = vector.multi_reduction <add>, %67, %cst_40 [1] : vector<8x32xf32> to vector<8xf32>
    %71 = vector.shape_cast %70 : vector<8xf32> to vector<8x1xf32>
    %cst_41 = arith.constant 3.200000e+01 : f32
    %72 = vector.broadcast %cst_41 : f32 to vector<8x1xf32>
    %73 = arith.divf %71, %72 : vector<8x1xf32>
    %74 = vector.broadcast %73 : vector<8x1xf32> to vector<8x32xf32>
    %75 = arith.subf %67, %74 : vector<8x32xf32>
    %76 = arith.mulf %75, %75 : vector<8x32xf32>
    %cst_42 = arith.constant dense<0.000000e+00> : vector<8xf32>
    %77 = vector.multi_reduction <add>, %76, %cst_42 [1] : vector<8x32xf32> to vector<8xf32>
    %78 = vector.shape_cast %77 : vector<8xf32> to vector<8x1xf32>
    %cst_43 = arith.constant 3.200000e+01 : f32
    %79 = vector.broadcast %cst_43 : f32 to vector<8x1xf32>
    %80 = arith.divf %78, %79 : vector<8x1xf32>
    %cst_44 = arith.constant 9.99999996E-13 : f32
    %81 = vector.broadcast %cst_44 : f32 to vector<8x1xf32>
    %82 = arith.addf %80, %81 : vector<8x1xf32>
    %83 = math.rsqrt %82 : vector<8x1xf32>
    %84 = vector.broadcast %83 : vector<8x1xf32> to vector<8x32xf32>
    %85 = arith.mulf %75, %84 : vector<8x32xf32>
    %86 = vector.broadcast %68 : vector<1x32xf32> to vector<8x32xf32>
    %87 = arith.mulf %85, %86 : vector<8x32xf32>
    %88 = vector.broadcast %69 : vector<1x32xf32> to vector<8x32xf32>
    %89 = arith.addf %87, %88 : vector<8x32xf32>
    %cst_45 = arith.constant dense<0.000000e+00> : vector<32xf32>
    %90 = vector.multi_reduction <add>, %89, %cst_45 [0] : vector<8x32xf32> to vector<32xf32>
    %91 = vector.shape_cast %90 : vector<32xf32> to vector<1x32xf32>
    %c0_46 = arith.constant 0 : index
    %c0_47 = arith.constant 0 : index
    %c0_48 = arith.constant 0 : index
    %92 = vector.load %arg11[%c0_46, %c0_47, %c0_48] : memref<1x1x32xf32, #tpu.memory_space<vmem>>, vector<1x1x32xf32>
    %93 = vector.shape_cast %92 : vector<1x1x32xf32> to vector<1x32xf32>
    %94 = vector.shape_cast %91 : vector<1x32xf32> to vector<1x1x32xf32>
    tpu.vector_store %arg11[%c0_46, %c0_47, %c0_48], %94 {strides = array<i32>} : memref<1x1x32xf32, #tpu.memory_space<vmem>>, vector<1x1x32xf32>,
    return
  }
  func.func @transform_0(%arg0: i32) -> (i32, i32, i32) {
    %c0_i32 = arith.constant 0 : i32
    %c0_i32_0 = arith.constant 0 : i32
    %c0_i32_1 = arith.constant 0 : i32
    return %arg0, %c0_i32, %c0_i32_0 : i32, i32, i32
  }
  func.func @transform_1(%arg0: i32) -> (i32, i32, i32) {
    %c0_i32 = arith.constant 0 : i32
    %c0_i32_0 = arith.constant 0 : i32
    %c0_i32_1 = arith.constant 0 : i32
    return %arg0, %c0_i32, %c0_i32_0 : i32, i32, i32
  }
  func.func @transform_2(%arg0: i32) -> (i32, i32) {
    %c0_i32 = arith.constant 0 : i32
    %c0_i32_0 = arith.constant 0 : i32
    %c0_i32_1 = arith.constant 0 : i32
    return %c0_i32, %c0_i32_0 : i32, i32
  }
  func.func @transform_3(%arg0: i32) -> (i32, i32) {
    %c0_i32 = arith.constant 0 : i32
    %c0_i32_0 = arith.constant 0 : i32
    %c0_i32_1 = arith.constant 0 : i32
    return %c0_i32, %c0_i32_0 : i32, i32
  }
  func.func @transform_4(%arg0: i32) -> (i32, i32) {
    %c0_i32 = arith.constant 0 : i32
    %c0_i32_0 = arith.constant 0 : i32
    %c0_i32_1 = arith.constant 0 : i32
    return %c0_i32, %c0_i32_0 : i32, i32
  }
  func.func @transform_5(%arg0: i32) -> (i32, i32) {
    %c0_i32 = arith.constant 0 : i32
    %c0_i32_0 = arith.constant 0 : i32
    %c0_i32_1 = arith.constant 0 : i32
    return %c0_i32, %c0_i32_0 : i32, i32
  }
  func.func @transform_6(%arg0: i32) -> (i32, i32) {
    %c0_i32 = arith.constant 0 : i32
    %c0_i32_0 = arith.constant 0 : i32
    %c0_i32_1 = arith.constant 0 : i32
    return %c0_i32, %c0_i32_0 : i32, i32
  }
  func.func @transform_7(%arg0: i32) -> (i32, i32) {
    %c0_i32 = arith.constant 0 : i32
    %c0_i32_0 = arith.constant 0 : i32
    %c0_i32_1 = arith.constant 0 : i32
    return %c0_i32, %c0_i32_0 : i32, i32
  }
  func.func @transform_8(%arg0: i32) -> (i32, i32) {
    %c0_i32 = arith.constant 0 : i32
    %c0_i32_0 = arith.constant 0 : i32
    %c0_i32_1 = arith.constant 0 : i32
    return %c0_i32, %c0_i32_0 : i32, i32
  }
  func.func @transform_9(%arg0: i32) -> (i32, i32) {
    %c0_i32 = arith.constant 0 : i32
    %c0_i32_0 = arith.constant 0 : i32
    %c0_i32_1 = arith.constant 0 : i32
    return %c0_i32, %c0_i32_0 : i32, i32
  }
  func.func @transform_10(%arg0: i32) -> (i32, i32, i32) {
    %c0_i32 = arith.constant 0 : i32
    %c0_i32_0 = arith.constant 0 : i32
    %c0_i32_1 = arith.constant 0 : i32
    return %arg0, %c0_i32, %c0_i32_0 : i32, i32, i32
  }
}

module attributes {stable_mosaic.version = 11 : i64} {
  func.func @_num_projection_kernel(%arg0: i32, %arg1: memref<1x4x32xf32, #tpu.memory_space<vmem>>, %arg2: memref<1x32xf32, #tpu.memory_space<vmem>>, %arg3: memref<1x32xf32, #tpu.memory_space<vmem>>, %arg4: memref<2x32xf32, #tpu.memory_space<vmem>>, %arg5: memref<32x96xbf16, #tpu.memory_space<vmem>>, %arg6: memref<1x96xf32, #tpu.memory_space<vmem>>, %arg7: memref<32x64xbf16, #tpu.memory_space<vmem>>, %arg8: memref<1x64xf32, #tpu.memory_space<vmem>>, %arg9: memref<32x32xbf16, #tpu.memory_space<vmem>>, %arg10: memref<1x32xf32, #tpu.memory_space<vmem>>, %arg11: memref<1x32xf32, #tpu.memory_space<vmem>>, %arg12: memref<1x32xf32, #tpu.memory_space<vmem>>, %arg13: memref<32x32xbf16, #tpu.memory_space<vmem>>, %arg14: memref<1x32xf32, #tpu.memory_space<vmem>>, %arg15: memref<32x32xbf16, #tpu.memory_space<vmem>>, %arg16: memref<1x32xf32, #tpu.memory_space<vmem>>, %arg17: memref<32x32xbf16, #tpu.memory_space<vmem>>, %arg18: memref<1x32xf32, #tpu.memory_space<vmem>>, %arg19: memref<1x32xf32, #tpu.memory_space<vmem>>, %arg20: memref<1x32xf32, #tpu.memory_space<vmem>>, %arg21: memref<1x4x32xf32, #tpu.memory_space<vmem>>) attributes {dimension_semantics = [#tpu.dimension_semantics<parallel>], iteration_bounds = array<i64: 2>, scalar_prefetch = 0 : i64, scratch_operands = 0 : i64, tpu.core_type = #tpu.core_type<tc>, window_params = [{transform_indices = @transform_0, window_bounds = array<i64: 1, 4, 32>}, {pipeline_mode = #tpu.pipeline_mode<synchronous>, transform_indices = @transform_1, window_bounds = array<i64: 1, 32>}, {pipeline_mode = #tpu.pipeline_mode<synchronous>, transform_indices = @transform_2, window_bounds = array<i64: 1, 32>}, {pipeline_mode = #tpu.pipeline_mode<synchronous>, transform_indices = @transform_3, window_bounds = array<i64: 2, 32>}, {pipeline_mode = #tpu.pipeline_mode<synchronous>, transform_indices = @transform_4, window_bounds = array<i64: 32, 96>}, {pipeline_mode = #tpu.pipeline_mode<synchronous>, transform_indices = @transform_5, window_bounds = array<i64: 1, 96>}, {pipeline_mode = #tpu.pipeline_mode<synchronous>, transform_indices = @transform_6, window_bounds = array<i64: 32, 64>}, {pipeline_mode = #tpu.pipeline_mode<synchronous>, transform_indices = @transform_7, window_bounds = array<i64: 1, 64>}, {pipeline_mode = #tpu.pipeline_mode<synchronous>, transform_indices = @transform_8, window_bounds = array<i64: 32, 32>}, {pipeline_mode = #tpu.pipeline_mode<synchronous>, transform_indices = @transform_9, window_bounds = array<i64: 1, 32>}, {pipeline_mode = #tpu.pipeline_mode<synchronous>, transform_indices = @transform_10, window_bounds = array<i64: 1, 32>}, {pipeline_mode = #tpu.pipeline_mode<synchronous>, transform_indices = @transform_11, window_bounds = array<i64: 1, 32>}, {pipeline_mode = #tpu.pipeline_mode<synchronous>, transform_indices = @transform_12, window_bounds = array<i64: 32, 32>}, {pipeline_mode = #tpu.pipeline_mode<synchronous>, transform_indices = @transform_13, window_bounds = array<i64: 1, 32>}, {pipeline_mode = #tpu.pipeline_mode<synchronous>, transform_indices = @transform_14, window_bounds = array<i64: 32, 32>}, {pipeline_mode = #tpu.pipeline_mode<synchronous>, transform_indices = @transform_15, window_bounds = array<i64: 1, 32>}, {pipeline_mode = #tpu.pipeline_mode<synchronous>, transform_indices = @transform_16, window_bounds = array<i64: 32, 32>}, {pipeline_mode = #tpu.pipeline_mode<synchronous>, transform_indices = @transform_17, window_bounds = array<i64: 1, 32>}, {pipeline_mode = #tpu.pipeline_mode<synchronous>, transform_indices = @transform_18, window_bounds = array<i64: 1, 32>}, {pipeline_mode = #tpu.pipeline_mode<synchronous>, transform_indices = @transform_19, window_bounds = array<i64: 1, 32>}, {transform_indices = @transform_20, window_bounds = array<i64: 1, 4, 32>}]} {
    %c0 = arith.constant 0 : index
    %c0_0 = arith.constant 0 : index
    %c0_1 = arith.constant 0 : index
    %0 = vector.load %arg1[%c0, %c0_0, %c0_1] : memref<1x4x32xf32, #tpu.memory_space<vmem>>, vector<1x4x32xf32>
    %1 = vector.shape_cast %0 : vector<1x4x32xf32> to vector<4x32xf32>
    %c0_2 = arith.constant 0 : index
    %c0_3 = arith.constant 0 : index
    %2 = vector.load %arg2[%c0_2, %c0_3] : memref<1x32xf32, #tpu.memory_space<vmem>>, vector<1x32xf32>
    %3 = vector.broadcast %2 : vector<1x32xf32> to vector<4x32xf32>
    %4 = arith.addf %1, %3 : vector<4x32xf32>
    %c0_4 = arith.constant 0 : index
    %c0_5 = arith.constant 0 : index
    %5 = vector.load %arg4[%c0_4, %c0_5] : memref<2x32xf32, #tpu.memory_space<vmem>>, vector<2x32xf32>
    %6 = vector.shape_cast %4 : vector<4x32xf32> to vector<4x1x32xf32>
    %7 = vector.shape_cast %5 : vector<2x32xf32> to vector<1x2x32xf32>
    %8 = vector.broadcast %6 : vector<4x1x32xf32> to vector<4x2x32xf32>
    %9 = vector.broadcast %7 : vector<1x2x32xf32> to vector<4x2x32xf32>
    %10 = arith.addf %8, %9 : vector<4x2x32xf32>
    %11 = vector.shape_cast %10 : vector<4x2x32xf32> to vector<8x32xf32>
    %c0_6 = arith.constant 0 : index
    %c0_7 = arith.constant 0 : index
    %12 = vector.load %arg3[%c0_6, %c0_7] : memref<1x32xf32, #tpu.memory_space<vmem>>, vector<1x32xf32>
    %13 = arith.truncf %12 : vector<1x32xf32> to vector<1x32xbf16>
    %c0_8 = arith.constant 0 : index
    %c0_9 = arith.constant 0 : index
    %14 = vector.load %arg5[%c0_8, %c0_9] : memref<32x96xbf16, #tpu.memory_space<vmem>>, vector<32x96xbf16>
    %cst = arith.constant dense<0.000000e+00> : vector<1x96xf32>
    %15 = tpu.matmul %13, %14, %cst {dimension_numbers = #tpu.dot_dimension_numbers<[1], [0], [0], [1], [0, 0, 1, 1], [], []>} : vector<1x32xbf16>, vector<32x96xbf16>, vector<1x96xf32> -> vector<1x96xf32>
    %c0_10 = arith.constant 0 : index
    %c0_11 = arith.constant 0 : index
    %16 = vector.load %arg6[%c0_10, %c0_11] : memref<1x96xf32, #tpu.memory_space<vmem>>, vector<1x96xf32>
    %17 = arith.addf %15, %16 : vector<1x96xf32>
    %18 = arith.truncf %11 : vector<8x32xf32> to vector<8x32xbf16>
    %c0_12 = arith.constant 0 : index
    %c0_13 = arith.constant 0 : index
    %19 = vector.load %arg7[%c0_12, %c0_13] : memref<32x64xbf16, #tpu.memory_space<vmem>>, vector<32x64xbf16>
    %cst_14 = arith.constant dense<0.000000e+00> : vector<8x64xf32>
    %20 = tpu.matmul %18, %19, %cst_14 {dimension_numbers = #tpu.dot_dimension_numbers<[1], [0], [0], [1], [0, 0, 1, 1], [], []>} : vector<8x32xbf16>, vector<32x64xbf16>, vector<8x64xf32> -> vector<8x64xf32>
    %c0_15 = arith.constant 0 : index
    %c0_16 = arith.constant 0 : index
    %21 = vector.load %arg8[%c0_15, %c0_16] : memref<1x64xf32, #tpu.memory_space<vmem>>, vector<1x64xf32>
    %22 = vector.broadcast %21 : vector<1x64xf32> to vector<8x64xf32>
    %23 = arith.addf %20, %22 : vector<8x64xf32>
    %24 = vector.extract_strided_slice %17 {offsets = [0, 0], sizes = [1, 32], strides = [1, 1]} : vector<1x96xf32> to vector<1x32xf32>
    %25 = vector.extract_strided_slice %23 {offsets = [0, 0], sizes = [8, 32], strides = [1, 1]} : vector<8x64xf32> to vector<8x32xf32>
    %26 = vector.broadcast %24 : vector<1x32xf32> to vector<8x32xf32>
    %27 = arith.addf %26, %25 : vector<8x32xf32>
    %28 = arith.negf %27 : vector<8x32xf32>
    %29 = math.exp %28 : vector<8x32xf32>
    %cst_17 = arith.constant 1.000000e+00 : f32
    %30 = vector.broadcast %cst_17 : f32 to vector<8x32xf32>
    %31 = arith.addf %30, %29 : vector<8x32xf32>
    %32 = arith.divf %30, %31 : vector<8x32xf32>
    %33 = vector.extract_strided_slice %17 {offsets = [0, 32], sizes = [1, 32], strides = [1, 1]} : vector<1x96xf32> to vector<1x32xf32>
    %34 = vector.extract_strided_slice %23 {offsets = [0, 32], sizes = [8, 32], strides = [1, 1]} : vector<8x64xf32> to vector<8x32xf32>
    %35 = vector.broadcast %33 : vector<1x32xf32> to vector<8x32xf32>
    %36 = arith.addf %35, %34 : vector<8x32xf32>
    %37 = arith.negf %36 : vector<8x32xf32>
    %38 = math.exp %37 : vector<8x32xf32>
    %cst_18 = arith.constant 1.000000e+00 : f32
    %39 = vector.broadcast %cst_18 : f32 to vector<8x32xf32>
    %40 = arith.addf %39, %38 : vector<8x32xf32>
    %41 = arith.divf %39, %40 : vector<8x32xf32>
    %42 = arith.mulf %11, %41 : vector<8x32xf32>
    %43 = arith.truncf %42 : vector<8x32xf32> to vector<8x32xbf16>
    %c0_19 = arith.constant 0 : index
    %c0_20 = arith.constant 0 : index
    %44 = vector.load %arg9[%c0_19, %c0_20] : memref<32x32xbf16, #tpu.memory_space<vmem>>, vector<32x32xbf16>
    %cst_21 = arith.constant dense<0.000000e+00> : vector<8x32xf32>
    %45 = tpu.matmul %43, %44, %cst_21 {dimension_numbers = #tpu.dot_dimension_numbers<[1], [0], [0], [1], [0, 0, 1, 1], [], []>} : vector<8x32xbf16>, vector<32x32xbf16>, vector<8x32xf32> -> vector<8x32xf32>
    %c0_22 = arith.constant 0 : index
    %c0_23 = arith.constant 0 : index
    %46 = vector.load %arg10[%c0_22, %c0_23] : memref<1x32xf32, #tpu.memory_space<vmem>>, vector<1x32xf32>
    %47 = vector.broadcast %46 : vector<1x32xf32> to vector<8x32xf32>
    %48 = arith.addf %45, %47 : vector<8x32xf32>
    %49 = vector.extract_strided_slice %17 {offsets = [0, 64], sizes = [1, 32], strides = [1, 1]} : vector<1x96xf32> to vector<1x32xf32>
    %50 = vector.broadcast %49 : vector<1x32xf32> to vector<8x32xf32>
    %51 = arith.addf %50, %48 : vector<8x32xf32>
    %52 = math.tanh %51 : vector<8x32xf32>
    %cst_24 = arith.constant 1.000000e+00 : f32
    %53 = vector.broadcast %cst_24 : f32 to vector<8x32xf32>
    %54 = arith.subf %53, %32 : vector<8x32xf32>
    %55 = arith.mulf %54, %11 : vector<8x32xf32>
    %56 = arith.mulf %32, %52 : vector<8x32xf32>
    %57 = arith.addf %55, %56 : vector<8x32xf32>
    %c0_25 = arith.constant 0 : index
    %c0_26 = arith.constant 0 : index
    %58 = vector.load %arg11[%c0_25, %c0_26] : memref<1x32xf32, #tpu.memory_space<vmem>>, vector<1x32xf32>
    %c0_27 = arith.constant 0 : index
    %c0_28 = arith.constant 0 : index
    %59 = vector.load %arg12[%c0_27, %c0_28] : memref<1x32xf32, #tpu.memory_space<vmem>>, vector<1x32xf32>
    %cst_29 = arith.constant dense<0.000000e+00> : vector<8xf32>
    %60 = vector.multi_reduction <add>, %57, %cst_29 [1] : vector<8x32xf32> to vector<8xf32>
    %61 = vector.shape_cast %60 : vector<8xf32> to vector<8x1xf32>
    %cst_30 = arith.constant 3.200000e+01 : f32
    %62 = vector.broadcast %cst_30 : f32 to vector<8x1xf32>
    %63 = arith.divf %61, %62 : vector<8x1xf32>
    %64 = vector.broadcast %63 : vector<8x1xf32> to vector<8x32xf32>
    %65 = arith.subf %57, %64 : vector<8x32xf32>
    %66 = arith.mulf %65, %65 : vector<8x32xf32>
    %cst_31 = arith.constant dense<0.000000e+00> : vector<8xf32>
    %67 = vector.multi_reduction <add>, %66, %cst_31 [1] : vector<8x32xf32> to vector<8xf32>
    %68 = vector.shape_cast %67 : vector<8xf32> to vector<8x1xf32>
    %cst_32 = arith.constant 3.200000e+01 : f32
    %69 = vector.broadcast %cst_32 : f32 to vector<8x1xf32>
    %70 = arith.divf %68, %69 : vector<8x1xf32>
    %cst_33 = arith.constant 9.99999996E-13 : f32
    %71 = vector.broadcast %cst_33 : f32 to vector<8x1xf32>
    %72 = arith.addf %70, %71 : vector<8x1xf32>
    %73 = math.rsqrt %72 : vector<8x1xf32>
    %74 = vector.broadcast %73 : vector<8x1xf32> to vector<8x32xf32>
    %75 = arith.mulf %65, %74 : vector<8x32xf32>
    %76 = vector.broadcast %58 : vector<1x32xf32> to vector<8x32xf32>
    %77 = arith.mulf %75, %76 : vector<8x32xf32>
    %78 = vector.broadcast %59 : vector<1x32xf32> to vector<8x32xf32>
    %79 = arith.addf %77, %78 : vector<8x32xf32>
    %80 = arith.truncf %79 : vector<8x32xf32> to vector<8x32xbf16>
    %c0_34 = arith.constant 0 : index
    %c0_35 = arith.constant 0 : index
    %81 = vector.load %arg13[%c0_34, %c0_35] : memref<32x32xbf16, #tpu.memory_space<vmem>>, vector<32x32xbf16>
    %cst_36 = arith.constant dense<0.000000e+00> : vector<8x32xf32>
    %82 = tpu.matmul %80, %81, %cst_36 {dimension_numbers = #tpu.dot_dimension_numbers<[1], [0], [0], [1], [0, 0, 1, 1], [], []>} : vector<8x32xbf16>, vector<32x32xbf16>, vector<8x32xf32> -> vector<8x32xf32>
    %c0_37 = arith.constant 0 : index
    %c0_38 = arith.constant 0 : index
    %83 = vector.load %arg14[%c0_37, %c0_38] : memref<1x32xf32, #tpu.memory_space<vmem>>, vector<1x32xf32>
    %84 = vector.broadcast %83 : vector<1x32xf32> to vector<8x32xf32>
    %85 = arith.addf %82, %84 : vector<8x32xf32>
    %cst_39 = arith.constant 0.176776692 : f32
    %86 = vector.broadcast %cst_39 : f32 to vector<8x32xf32>
    %87 = arith.mulf %85, %86 : vector<8x32xf32>
    %88 = arith.truncf %79 : vector<8x32xf32> to vector<8x32xbf16>
    %c0_40 = arith.constant 0 : index
    %c0_41 = arith.constant 0 : index
    %89 = vector.load %arg15[%c0_40, %c0_41] : memref<32x32xbf16, #tpu.memory_space<vmem>>, vector<32x32xbf16>
    %cst_42 = arith.constant dense<0.000000e+00> : vector<8x32xf32>
    %90 = tpu.matmul %88, %89, %cst_42 {dimension_numbers = #tpu.dot_dimension_numbers<[1], [0], [0], [1], [0, 0, 1, 1], [], []>} : vector<8x32xbf16>, vector<32x32xbf16>, vector<8x32xf32> -> vector<8x32xf32>
    %c0_43 = arith.constant 0 : index
    %c0_44 = arith.constant 0 : index
    %91 = vector.load %arg16[%c0_43, %c0_44] : memref<1x32xf32, #tpu.memory_space<vmem>>, vector<1x32xf32>
    %92 = vector.broadcast %91 : vector<1x32xf32> to vector<8x32xf32>
    %93 = arith.addf %90, %92 : vector<8x32xf32>
    %94 = arith.truncf %79 : vector<8x32xf32> to vector<8x32xbf16>
    %c0_45 = arith.constant 0 : index
    %c0_46 = arith.constant 0 : index
    %95 = vector.load %arg17[%c0_45, %c0_46] : memref<32x32xbf16, #tpu.memory_space<vmem>>, vector<32x32xbf16>
    %cst_47 = arith.constant dense<0.000000e+00> : vector<8x32xf32>
    %96 = tpu.matmul %94, %95, %cst_47 {dimension_numbers = #tpu.dot_dimension_numbers<[1], [0], [0], [1], [0, 0, 1, 1], [], []>} : vector<8x32xbf16>, vector<32x32xbf16>, vector<8x32xf32> -> vector<8x32xf32>
    %c0_48 = arith.constant 0 : index
    %c0_49 = arith.constant 0 : index
    %97 = vector.load %arg18[%c0_48, %c0_49] : memref<1x32xf32, #tpu.memory_space<vmem>>, vector<1x32xf32>
    %98 = vector.broadcast %97 : vector<1x32xf32> to vector<8x32xf32>
    %99 = arith.addf %96, %98 : vector<8x32xf32>
    %100 = vector.shape_cast %87 : vector<8x32xf32> to vector<4x2x32xf32>
    %101 = vector.shape_cast %93 : vector<8x32xf32> to vector<4x2x32xf32>
    %102 = vector.shape_cast %99 : vector<8x32xf32> to vector<4x2x32xf32>
    "tpu.trace_start"() <{level = 10 : i32, message = "spd,sqd->spq"}> : () -> ()
    %cst_50 = arith.constant dense<0.000000e+00> : vector<4x2x2xf32>
    %103 = tpu.matmul %100, %101, %cst_50 {dimension_numbers = #tpu.dot_dimension_numbers<[2], [2], [1], [1], [0, 0, 0, 1, 1, 1], [0], [0]>} : vector<4x2x32xf32>, vector<4x2x32xf32>, vector<4x2x2xf32> -> vector<4x2x2xf32>
    "tpu.trace_stop"() : () -> ()
    %cst_51 = arith.constant dense<0xFF800000> : vector<4x2xf32>
    %104 = vector.multi_reduction <maximumf>, %103, %cst_51 [2] : vector<4x2x2xf32> to vector<4x2xf32>
    %105 = vector.shape_cast %104 : vector<4x2xf32> to vector<4x2x1xf32>
    %106 = vector.broadcast %105 : vector<4x2x1xf32> to vector<4x2x2xf32>
    %107 = arith.subf %103, %106 : vector<4x2x2xf32>
    %108 = math.exp %107 : vector<4x2x2xf32>
    %cst_52 = arith.constant dense<0.000000e+00> : vector<4x2xf32>
    %109 = vector.multi_reduction <add>, %108, %cst_52 [2] : vector<4x2x2xf32> to vector<4x2xf32>
    %110 = vector.shape_cast %109 : vector<4x2xf32> to vector<4x2x1xf32>
    %111 = tpu.reciprocal %110 {approx = true} : vector<4x2x1xf32> -> vector<4x2x1xf32>
    %112 = vector.broadcast %111 : vector<4x2x1xf32> to vector<4x2x2xf32>
    %113 = arith.mulf %108, %112 : vector<4x2x2xf32>
    "tpu.trace_start"() <{level = 10 : i32, message = "spq,sqd->spd"}> : () -> ()
    %cst_53 = arith.constant dense<0.000000e+00> : vector<4x2x32xf32>
    %114 = tpu.matmul %113, %102, %cst_53 {dimension_numbers = #tpu.dot_dimension_numbers<[2], [1], [1], [2], [0, 0, 0, 1, 1, 2], [0], [0]>} : vector<4x2x2xf32>, vector<4x2x32xf32>, vector<4x2x32xf32> -> vector<4x2x32xf32>
    "tpu.trace_stop"() : () -> ()
    %cst_54 = arith.constant dense<0.000000e+00> : vector<4x32xf32>
    %115 = vector.multi_reduction <add>, %114, %cst_54 [1] : vector<4x2x32xf32> to vector<4x32xf32>
    %c0_55 = arith.constant 0 : index
    %c0_56 = arith.constant 0 : index
    %116 = vector.load %arg19[%c0_55, %c0_56] : memref<1x32xf32, #tpu.memory_space<vmem>>, vector<1x32xf32>
    %c0_57 = arith.constant 0 : index
    %c0_58 = arith.constant 0 : index
    %117 = vector.load %arg20[%c0_57, %c0_58] : memref<1x32xf32, #tpu.memory_space<vmem>>, vector<1x32xf32>
    %cst_59 = arith.constant dense<0.000000e+00> : vector<4xf32>
    %118 = vector.multi_reduction <add>, %115, %cst_59 [1] : vector<4x32xf32> to vector<4xf32>
    %119 = vector.shape_cast %118 : vector<4xf32> to vector<4x1xf32>
    %cst_60 = arith.constant 3.200000e+01 : f32
    %120 = vector.broadcast %cst_60 : f32 to vector<4x1xf32>
    %121 = arith.divf %119, %120 : vector<4x1xf32>
    %122 = vector.broadcast %121 : vector<4x1xf32> to vector<4x32xf32>
    %123 = arith.subf %115, %122 : vector<4x32xf32>
    %124 = arith.mulf %123, %123 : vector<4x32xf32>
    %cst_61 = arith.constant dense<0.000000e+00> : vector<4xf32>
    %125 = vector.multi_reduction <add>, %124, %cst_61 [1] : vector<4x32xf32> to vector<4xf32>
    %126 = vector.shape_cast %125 : vector<4xf32> to vector<4x1xf32>
    %cst_62 = arith.constant 3.200000e+01 : f32
    %127 = vector.broadcast %cst_62 : f32 to vector<4x1xf32>
    %128 = arith.divf %126, %127 : vector<4x1xf32>
    %cst_63 = arith.constant 9.99999996E-13 : f32
    %129 = vector.broadcast %cst_63 : f32 to vector<4x1xf32>
    %130 = arith.addf %128, %129 : vector<4x1xf32>
    %131 = math.rsqrt %130 : vector<4x1xf32>
    %132 = vector.broadcast %131 : vector<4x1xf32> to vector<4x32xf32>
    %133 = arith.mulf %123, %132 : vector<4x32xf32>
    %134 = vector.broadcast %116 : vector<1x32xf32> to vector<4x32xf32>
    %135 = arith.mulf %133, %134 : vector<4x32xf32>
    %136 = vector.broadcast %117 : vector<1x32xf32> to vector<4x32xf32>
    %137 = arith.addf %135, %136 : vector<4x32xf32>
    %c0_64 = arith.constant 0 : index
    %c0_65 = arith.constant 0 : index
    %c0_66 = arith.constant 0 : index
    %138 = vector.load %arg21[%c0_64, %c0_65, %c0_66] : memref<1x4x32xf32, #tpu.memory_space<vmem>>, vector<1x4x32xf32>
    %139 = vector.shape_cast %138 : vector<1x4x32xf32> to vector<4x32xf32>
    %140 = vector.shape_cast %137 : vector<4x32xf32> to vector<1x4x32xf32>
    tpu.vector_store %arg21[%c0_64, %c0_65, %c0_66], %140 {strides = array<i32>} : memref<1x4x32xf32, #tpu.memory_space<vmem>>, vector<1x4x32xf32>,
    return
  }
  func.func @transform_0(%arg0: i32) -> (i32, i32, i32) {
    %c0_i32 = arith.constant 0 : i32
    %c0_i32_0 = arith.constant 0 : i32
    %c0_i32_1 = arith.constant 0 : i32
    return %arg0, %c0_i32, %c0_i32_0 : i32, i32, i32
  }
  func.func @transform_1(%arg0: i32) -> (i32, i32) {
    %c0_i32 = arith.constant 0 : i32
    %c0_i32_0 = arith.constant 0 : i32
    %c0_i32_1 = arith.constant 0 : i32
    return %c0_i32, %c0_i32_0 : i32, i32
  }
  func.func @transform_2(%arg0: i32) -> (i32, i32) {
    %c0_i32 = arith.constant 0 : i32
    %c0_i32_0 = arith.constant 0 : i32
    %c0_i32_1 = arith.constant 0 : i32
    return %c0_i32, %c0_i32_0 : i32, i32
  }
  func.func @transform_3(%arg0: i32) -> (i32, i32) {
    %c0_i32 = arith.constant 0 : i32
    %c0_i32_0 = arith.constant 0 : i32
    %c0_i32_1 = arith.constant 0 : i32
    return %c0_i32, %c0_i32_0 : i32, i32
  }
  func.func @transform_4(%arg0: i32) -> (i32, i32) {
    %c0_i32 = arith.constant 0 : i32
    %c0_i32_0 = arith.constant 0 : i32
    %c0_i32_1 = arith.constant 0 : i32
    return %c0_i32, %c0_i32_0 : i32, i32
  }
  func.func @transform_5(%arg0: i32) -> (i32, i32) {
    %c0_i32 = arith.constant 0 : i32
    %c0_i32_0 = arith.constant 0 : i32
    %c0_i32_1 = arith.constant 0 : i32
    return %c0_i32, %c0_i32_0 : i32, i32
  }
  func.func @transform_6(%arg0: i32) -> (i32, i32) {
    %c0_i32 = arith.constant 0 : i32
    %c0_i32_0 = arith.constant 0 : i32
    %c0_i32_1 = arith.constant 0 : i32
    return %c0_i32, %c0_i32_0 : i32, i32
  }
  func.func @transform_7(%arg0: i32) -> (i32, i32) {
    %c0_i32 = arith.constant 0 : i32
    %c0_i32_0 = arith.constant 0 : i32
    %c0_i32_1 = arith.constant 0 : i32
    return %c0_i32, %c0_i32_0 : i32, i32
  }
  func.func @transform_8(%arg0: i32) -> (i32, i32) {
    %c0_i32 = arith.constant 0 : i32
    %c0_i32_0 = arith.constant 0 : i32
    %c0_i32_1 = arith.constant 0 : i32
    return %c0_i32, %c0_i32_0 : i32, i32
  }
  func.func @transform_9(%arg0: i32) -> (i32, i32) {
    %c0_i32 = arith.constant 0 : i32
    %c0_i32_0 = arith.constant 0 : i32
    %c0_i32_1 = arith.constant 0 : i32
    return %c0_i32, %c0_i32_0 : i32, i32
  }
  func.func @transform_10(%arg0: i32) -> (i32, i32) {
    %c0_i32 = arith.constant 0 : i32
    %c0_i32_0 = arith.constant 0 : i32
    %c0_i32_1 = arith.constant 0 : i32
    return %c0_i32, %c0_i32_0 : i32, i32
  }
  func.func @transform_11(%arg0: i32) -> (i32, i32) {
    %c0_i32 = arith.constant 0 : i32
    %c0_i32_0 = arith.constant 0 : i32
    %c0_i32_1 = arith.constant 0 : i32
    return %c0_i32, %c0_i32_0 : i32, i32
  }
  func.func @transform_12(%arg0: i32) -> (i32, i32) {
    %c0_i32 = arith.constant 0 : i32
    %c0_i32_0 = arith.constant 0 : i32
    %c0_i32_1 = arith.constant 0 : i32
    return %c0_i32, %c0_i32_0 : i32, i32
  }
  func.func @transform_13(%arg0: i32) -> (i32, i32) {
    %c0_i32 = arith.constant 0 : i32
    %c0_i32_0 = arith.constant 0 : i32
    %c0_i32_1 = arith.constant 0 : i32
    return %c0_i32, %c0_i32_0 : i32, i32
  }
  func.func @transform_14(%arg0: i32) -> (i32, i32) {
    %c0_i32 = arith.constant 0 : i32
    %c0_i32_0 = arith.constant 0 : i32
    %c0_i32_1 = arith.constant 0 : i32
    return %c0_i32, %c0_i32_0 : i32, i32
  }
  func.func @transform_15(%arg0: i32) -> (i32, i32) {
    %c0_i32 = arith.constant 0 : i32
    %c0_i32_0 = arith.constant 0 : i32
    %c0_i32_1 = arith.constant 0 : i32
    return %c0_i32, %c0_i32_0 : i32, i32
  }
  func.func @transform_16(%arg0: i32) -> (i32, i32) {
    %c0_i32 = arith.constant 0 : i32
    %c0_i32_0 = arith.constant 0 : i32
    %c0_i32_1 = arith.constant 0 : i32
    return %c0_i32, %c0_i32_0 : i32, i32
  }
  func.func @transform_17(%arg0: i32) -> (i32, i32) {
    %c0_i32 = arith.constant 0 : i32
    %c0_i32_0 = arith.constant 0 : i32
    %c0_i32_1 = arith.constant 0 : i32
    return %c0_i32, %c0_i32_0 : i32, i32
  }
  func.func @transform_18(%arg0: i32) -> (i32, i32) {
    %c0_i32 = arith.constant 0 : i32
    %c0_i32_0 = arith.constant 0 : i32
    %c0_i32_1 = arith.constant 0 : i32
    return %c0_i32, %c0_i32_0 : i32, i32
  }
  func.func @transform_19(%arg0: i32) -> (i32, i32) {
    %c0_i32 = arith.constant 0 : i32
    %c0_i32_0 = arith.constant 0 : i32
    %c0_i32_1 = arith.constant 0 : i32
    return %c0_i32, %c0_i32_0 : i32, i32
  }
  func.func @transform_20(%arg0: i32) -> (i32, i32, i32) {
    %c0_i32 = arith.constant 0 : i32
    %c0_i32_0 = arith.constant 0 : i32
    %c0_i32_1 = arith.constant 0 : i32
    return %arg0, %c0_i32, %c0_i32_0 : i32, i32, i32
  }
}

module attributes {stable_mosaic.version = 11 : i64} {
  func.func @_final_fc_kernel(%arg0: memref<2x32xf32, #tpu.memory_space<vmem>>, %arg1: memref<2x32xf32, #tpu.memory_space<vmem>>, %arg2: memref<32x8xbf16, #tpu.memory_space<vmem>>, %arg3: memref<1x8xf32, #tpu.memory_space<vmem>>, %arg4: memref<2x8xf32, #tpu.memory_space<vmem>>) attributes {dimension_semantics = [], scalar_prefetch = 0 : i64, scratch_operands = 0 : i64, tpu.core_type = #tpu.core_type<tc>} {
    %c0 = arith.constant 0 : index
    %c0_0 = arith.constant 0 : index
    %0 = vector.load %arg0[%c0, %c0_0] : memref<2x32xf32, #tpu.memory_space<vmem>>, vector<2x32xf32>
    %c0_1 = arith.constant 0 : index
    %c0_2 = arith.constant 0 : index
    %1 = vector.load %arg1[%c0_1, %c0_2] : memref<2x32xf32, #tpu.memory_space<vmem>>, vector<2x32xf32>
    %2 = arith.addf %0, %1 : vector<2x32xf32>
    %3 = arith.truncf %2 : vector<2x32xf32> to vector<2x32xbf16>
    %c0_3 = arith.constant 0 : index
    %c0_4 = arith.constant 0 : index
    %4 = vector.load %arg2[%c0_3, %c0_4] : memref<32x8xbf16, #tpu.memory_space<vmem>>, vector<32x8xbf16>
    %cst = arith.constant dense<0.000000e+00> : vector<2x8xf32>
    %5 = tpu.matmul %3, %4, %cst {dimension_numbers = #tpu.dot_dimension_numbers<[1], [0], [0], [1], [0, 0, 1, 1], [], []>} : vector<2x32xbf16>, vector<32x8xbf16>, vector<2x8xf32> -> vector<2x8xf32>
    %c0_5 = arith.constant 0 : index
    %c0_6 = arith.constant 0 : index
    %6 = vector.load %arg3[%c0_5, %c0_6] : memref<1x8xf32, #tpu.memory_space<vmem>>, vector<1x8xf32>
    %7 = vector.broadcast %6 : vector<1x8xf32> to vector<2x8xf32>
    %8 = arith.addf %5, %7 : vector<2x8xf32>
    %c0_7 = arith.constant 0 : index
    %c0_8 = arith.constant 0 : index
    %9 = vector.load %arg4[%c0_7, %c0_8] : memref<2x8xf32, #tpu.memory_space<vmem>>, vector<2x8xf32>
    tpu.vector_store %arg4[%c0_7, %c0_8], %8 {strides = array<i32>} : memref<2x8xf32, #tpu.memory_space<vmem>>, vector<2x8xf32>,
    return
  }
}

</mosaic_0001>

<llo_original>
// kernel: logical_transformer_forward.7
$region0: #{logical_transformer_forward.7}
  #allocation0 [shape = 'u32[]', space=smem, size = 0x4, offset = 0x4, fixed_abs, tag = 'smem constant byte address 0x4 - core index']
  #allocation1 [shape = 'u32[72,128]{1,0:T(1,128)}', space=vmem, size = 0x9000, scoped, tag = 'internal scratch']
  %s0 = inlined_call_operand.vmem [shape: f32[2,8,16], index: 0, kind: input, shape index: {}]
  %s1 = inlined_call_operand.vmem [shape: bf16[16,32], index: 1, kind: input, shape index: {}]
  %s2 = inlined_call_operand.vmem [shape: f32[1,32], index: 2, kind: input, shape index: {}]
  %s3 = inlined_call_operand.vmem [shape: f32[2,8,32], index: 3, kind: output, shape index: {}]
  %s4 = sld [smem:[#allocation0]]
  $region45: #{logical_transformer_forward.7} parent=0
    _
  %s6 = ssub.s32 1, %s4
  %s7 = scalar_select 0, %s6, %s4
  loop: start=0, step=1, limit=4
  $region2: #{logical_transformer_forward.7} parent=0 // loop_pre_header
    _
  $region3: #{logical_transformer_forward.7} parent=0 // loop_header
    %s9 = sphi 0, %s13
    %p10 = scmp.ge.s32.totalorder %s9, 4
    %s19 = sphi 0, %s21
    %s22 = sphi 0, %s19
    %s23 = sphi 0, %s22
    %s39 = sphi 0, %s23
    %s43 = sphi 0, %s43
    %s45 = sphi 0, %s43
    %s46 = sphi 0, %s45
    %s60 = sphi 0, %s46
    %s64 = sphi 0, %s64
    %s66 = sphi 0, %s64
    %s67 = sphi 0, %s66
    %s81 = sphi 0, %s67
    %s87 = sphi 0, %s89
    %s90 = sphi 0, %s87
    %s91 = sphi 0, %s90
    %s107 = sphi 0, %s91
  $region4: #{logical_transformer_forward.7} parent=0 // loop_header_branch
    %12 = sbr.rel (%p10) target = $region8
  $region5: #{logical_transformer_forward.7} parent=0 // loop_body
    %s14 = ssub.s32 %s9, 1
    %s15 = ssub.s32 %s9, 2
    %s16 = sadd.s32 %s9, 1
    %s17 = ssub.s32 %s9, %s16
    %p18 = scmp.eq.s32.totalorder %s17, 0
    %s20 = sadd.s32 %s19, 1
    %s21 = scalar_select %p18, %s19, %s20
    %p24 = pneg %p18
    %p25 = scmp.eq.s32.totalorder %s9, 1
    %p26 = por %p24, %p25
    %p27 = scmp.ne.s32.totalorder %s19, %s22
    %p28 = scmp.eq.s32.totalorder %s9, 0
    %p29 = por %p27, %p28
    %p30 = scmp.ne.s32.totalorder %s19, %s22
    %p31 = scmp.eq.s32.totalorder %s14, 1
    %p32 = por %p30, %p31
    %p33 = scmp.ne.s32.totalorder %s22, %s23
    %p34 = scmp.eq.s32.totalorder %s14, 0
    %p35 = por %p33, %p34
    %p36 = scmp.ne.s32.totalorder %s22, %s23
    %p37 = scmp.eq.s32.totalorder %s15, 1
    %p38 = por %p36, %p37
    %p40 = scmp.ne.s32.totalorder %s23, %s39
    %p41 = scmp.eq.s32.totalorder %s15, 0
    %p42 = por %p40, %p41
    %s44 = sadd.s32 %s43, 1
    %p47 = scmp.eq.s32.totalorder %s9, 1
    %p48 = scmp.ne.s32.totalorder %s43, %s45
    %p49 = scmp.eq.s32.totalorder %s9, 0
    %p50 = por %p48, %p49
    %p51 = scmp.ne.s32.totalorder %s43, %s45
    %p52 = scmp.eq.s32.totalorder %s14, 1
    %p53 = por %p51, %p52
    %p54 = scmp.ne.s32.totalorder %s45, %s46
    %p55 = scmp.eq.s32.totalorder %s14, 0
    %p56 = por %p54, %p55
    %p57 = scmp.ne.s32.totalorder %s45, %s46
    %p58 = scmp.eq.s32.totalorder %s15, 1
    %p59 = por %p57, %p58
    %p61 = scmp.ne.s32.totalorder %s46, %s60
    %p62 = scmp.eq.s32.totalorder %s15, 0
    %p63 = por %p61, %p62
    %s65 = sadd.s32 %s64, 1
    %p68 = scmp.eq.s32.totalorder %s9, 1
    %p69 = scmp.ne.s32.totalorder %s64, %s66
    %p70 = scmp.eq.s32.totalorder %s9, 0
    %p71 = por %p69, %p70
    %p72 = scmp.ne.s32.totalorder %s64, %s66
    %p73 = scmp.eq.s32.totalorder %s14, 1
    %p74 = por %p72, %p73
    %p75 = scmp.ne.s32.totalorder %s66, %s67
    %p76 = scmp.eq.s32.totalorder %s14, 0
    %p77 = por %p75, %p76
    %p78 = scmp.ne.s32.totalorder %s66, %s67
    %p79 = scmp.eq.s32.totalorder %s15, 1
    %p80 = por %p78, %p79
    %p82 = scmp.ne.s32.totalorder %s67, %s81
    %p83 = scmp.eq.s32.totalorder %s15, 0
    %p84 = por %p82, %p83
    %s85 = ssub.s32 %s9, %s16
    %p86 = scmp.eq.s32.totalorder %s85, 0
    %s88 = sadd.s32 %s87, 1
    %s89 = scalar_select %p86, %s87, %s88
    %p92 = pneg %p86
    %p93 = scmp.eq.s32.totalorder %s9, 1
    %p94 = por %p92, %p93
    %p95 = scmp.ne.s32.totalorder %s87, %s90
    %p96 = scmp.eq.s32.totalorder %s9, 0
    %p97 = por %p95, %p96
    %p98 = scmp.ne.s32.totalorder %s87, %s90
    %p99 = scmp.eq.s32.totalorder %s14, 1
    %p100 = por %p98, %p99
    %p101 = scmp.ne.s32.totalorder %s90, %s91
    %p102 = scmp.eq.s32.totalorder %s14, 0
    %p103 = por %p101, %p102
    %p104 = scmp.ne.s32.totalorder %s90, %s91
    %p105 = scmp.eq.s32.totalorder %s15, 1
    %p106 = por %p104, %p105
    %p108 = scmp.ne.s32.totalorder %s91, %s107
    %p109 = scmp.eq.s32.totalorder %s15, 0
    %p110 = por %p108, %p109
    %p111 = scmp.le.s32.totalorder 1, %s9
    %p112 = scmp.lt.s32.totalorder %s9, 3
    %p113 = pnand %p111, %p112
    %p114 = pneg %p113
    // Predicated region
    $region9: #{logical_transformer_forward.7} parent=5 // pred_check
      _
    $region10: #{logical_transformer_forward.7} parent=5 // pred_check_branch
      %116 = sbr.rel (%p113) target = $region12
    $region11: #{logical_transformer_forward.7} parent=5 // pred_region
      %s117 = ssub.s32 %s9, 1
      // Predicated region
      $region13: #{logical_transformer_forward.7} parent=11 // pred_check
        %p118 = pneg %p56
      $region14: #{logical_transformer_forward.7} parent=11 // pred_check_branch
        %120 = sbr.rel (%p118) target = $region16
      $region15: #{logical_transformer_forward.7} parent=11 // pred_region
        _
      $region16: #{logical_transformer_forward.7} parent=11 // pred_fallthru
        _
      // Predicated region
      $region17: #{logical_transformer_forward.7} parent=11 // pred_check
        %p121 = pneg %p77
      $region18: #{logical_transformer_forward.7} parent=11 // pred_check_branch
        %123 = sbr.rel (%p121) target = $region20
      $region19: #{logical_transformer_forward.7} parent=11 // pred_region
        _
      $region20: #{logical_transformer_forward.7} parent=11 // pred_fallthru
        _
    $region12: #{logical_transformer_forward.7} parent=5 // pred_fallthru
      _
    %p124 = scmp.lt.s32.totalorder %s9, 2
    // Predicated region
    $region21: #{logical_transformer_forward.7} parent=5 // pred_check
      %p125 = pneg %p124
    $region22: #{logical_transformer_forward.7} parent=5 // pred_check_branch
      %127 = sbr.rel (%p125) target = $region24
    $region23: #{logical_transformer_forward.7} parent=5 // pred_region
      // Predicated region
      $region25: #{logical_transformer_forward.7} parent=23 // pred_check
        %p128 = pneg %p29
      $region26: #{logical_transformer_forward.7} parent=23 // pred_check_branch
        %130 = sbr.rel (%p128) target = $region28
      $region27: #{logical_transformer_forward.7} parent=23 // pred_region
        %p131 = scmp.lt.s32.totalorder %s9, 1
        %s132 = scalar_select %p131, %s9, 1
        %s133 = smul.addr %s132, 8
        %s134 = scalar_lea.vmem %s0, %s133
      $region28: #{logical_transformer_forward.7} parent=23 // pred_fallthru
        _
    $region24: #{logical_transformer_forward.7} parent=5 // pred_fallthru
      _
    %p135 = scmp.le.s32.totalorder 1, %s9
    %p136 = scmp.lt.s32.totalorder %s9, 3
    %p137 = pnand %p135, %p136
    %p138 = pneg %p137
    // Predicated region
    $region29: #{logical_transformer_forward.7} parent=5 // pred_check
      _
    $region30: #{logical_transformer_forward.7} parent=5 // pred_check_branch
      %140 = sbr.rel (%p137) target = $region32
    $region31: #{logical_transformer_forward.7} parent=5 // pred_region
      %s141 = ssub.s32 %s9, 1
      %p142 = scmp.lt.s32.totalorder %s14, 1
      %s143 = scalar_select %p142, %s14, 1
      %s144 = smul.addr %s143, 8
      %s145 = scalar_lea.vmem %s0, %s144
      %p146 = pneg %p35
      %p147 = pneg %p32
      %p148 = pneg %p56
      %p149 = pneg %p53
      %p150 = pneg %p77
      %p151 = pneg %p74
      %p152 = pneg %p103
      %p153 = pneg %p100
      %p154 = scmp.lt.s32.totalorder %s14, 1
      %s155 = scalar_select %p154, %s14, 1
      %s156 = smul.addr %s155, 8
      %s157 = scalar_lea.vmem %s3, %s156
      %p158 = scmp.lt.s32.totalorder %s14, 1
      %s159 = scalar_select %p158, %s14, 1
      %s160 = smul.addr %s159, 8
      %s161 = scalar_lea.vmem %s0, %s160
      %p162 = scmp.lt.s32.totalorder %s14, 1
      %s163 = scalar_select %p162, %s14, 1
      %s164 = smul.addr %s163, 8
      %s165 = scalar_lea.vmem %s3, %s164
      %v167 = vld [vmem:[%s161] sm:$0xff]
      %v168 = vpack.c.bf16 %v167, %v167
      %v169 = vld [vmem:[%s1] sm:$0xf]
      %v170 = vld [vmem:[%s1 + $0x4] sm:$0xf]
      %v171 = vld [vmem:[%s2] sm:$0x1]
      %v173 = vperm.slane %v171, 0
      %v177 = vunpack.c.l.b16 %v169
      %v178 = vunpack.c.l.b16 %v170
      %v179 = vpack.c.b16 %v178, %v177
      %vm181 = vcmask 130048
      %v183 = vsel %vm181, %v168, 0
      %185 = vmatpush.bf16.msra.mxu0 0
      %186 = vmatpush.bf16.msra.mxu0 0
      %187 = vmatpush.bf16.msra.mxu0 0
      %188 = vmatpush.bf16.msra.mxu0 0
      %189 = vmatpush.bf16.msra.mxu0 0
      %190 = vmatpush.bf16.msra.mxu0 0
      %191 = vmatpush.bf16.msra.mxu0 0
      %192 = vmatpush.bf16.msra.mxu0 %v179
      %193 = vmatmul.bf16.gmra.mxu0 %v183
      %v194 = vpop.f32.mrf.mxu0
      %v195 = vadd.f32 %v173, %v194
      %v196 = vpop.f32.mrf.mxu0
      %197 = vdwg.mxu0
      %vm198 = vcmask 261120
      %199 = vst.msk [vmem:[%s165] sm:$0xff] %vm198, %v195
      %p200 = scmp.lt.s32.totalorder %s14, 1
      %s201 = scalar_select %p200, %s14, 1
      %s202 = smul.addr %s201, 8
      %s203 = scalar_lea.vmem %s3, %s202
      // Predicated region
      $region33: #{logical_transformer_forward.7} parent=31 // pred_check
        %p204 = pneg %p100
      $region34: #{logical_transformer_forward.7} parent=31 // pred_check_branch
        %206 = sbr.rel (%p204) target = $region36
      $region35: #{logical_transformer_forward.7} parent=31 // pred_region
        _
      $region36: #{logical_transformer_forward.7} parent=31 // pred_fallthru
        _
    $region32: #{logical_transformer_forward.7} parent=5 // pred_fallthru
      _
    %p207 = scmp.le.s32.totalorder 2, %s9
    // Predicated region
    $region37: #{logical_transformer_forward.7} parent=5 // pred_check
      %p208 = pneg %p207
    $region38: #{logical_transformer_forward.7} parent=5 // pred_check_branch
      %210 = sbr.rel (%p208) target = $region40
    $region39: #{logical_transformer_forward.7} parent=5 // pred_region
      %s211 = ssub.s32 %s9, 2
      // Predicated region
      $region41: #{logical_transformer_forward.7} parent=39 // pred_check
        %p212 = pneg %p106
      $region42: #{logical_transformer_forward.7} parent=39 // pred_check_branch
        %214 = sbr.rel (%p212) target = $region44
      $region43: #{logical_transformer_forward.7} parent=39 // pred_region
        %p215 = scmp.lt.s32.totalorder %s15, 1
        %s216 = scalar_select %p215, %s15, 1
        %s217 = smul.addr %s216, 8
        %s218 = scalar_lea.vmem %s3, %s217
      $region44: #{logical_transformer_forward.7} parent=39 // pred_fallthru
        _
    $region40: #{logical_transformer_forward.7} parent=5 // pred_fallthru
      _
  $region6: #{logical_transformer_forward.7} parent=0 // loop_footer
    %s13 = sadd.s32 1, %s9
  $region7: #{logical_transformer_forward.7} parent=0 // loop_footer_branch
    %8 = sbr.rel target = $region3
  $region8: #{logical_transformer_forward.7} parent=0 // loop_exit
    _

// kernel: logical_transformer_forward.8
$region0: #{logical_transformer_forward.8}
  #allocation0 [shape = 'u32[]', space=smem, size = 0x4, offset = 0x4, fixed_abs, tag = 'smem constant byte address 0x4 - core index']
  #allocation1 [shape = 'u32[72,128]{1,0:T(1,128)}', space=vmem, size = 0x9000, scoped, tag = 'internal scratch']
  %s0 = inlined_call_operand.vmem [shape: f32[2,8,32], index: 0, kind: input, shape index: {}]
  %s1 = inlined_call_operand.vmem [shape: bf16[32,96], index: 1, kind: input, shape index: {}]
  %s2 = inlined_call_operand.vmem [shape: f32[1,96], index: 2, kind: input, shape index: {}]
  %s3 = inlined_call_operand.vmem [shape: bf16[32,32], index: 3, kind: input, shape index: {}]
  %s4 = inlined_call_operand.vmem [shape: f32[1,32], index: 4, kind: input, shape index: {}]
  %s5 = inlined_call_operand.vmem [shape: f32[1,32], index: 5, kind: input, shape index: {}]
  %s6 = inlined_call_operand.vmem [shape: f32[1,32], index: 6, kind: input, shape index: {}]
  %s7 = inlined_call_operand.vmem [shape: bf16[32,2048], index: 7, kind: input, shape index: {}]
  %s8 = inlined_call_operand.vmem [shape: f32[1,2048], index: 8, kind: input, shape index: {}]
  %s9 = inlined_call_operand.vmem [shape: bf16[2048,32], index: 9, kind: input, shape index: {}]
  %s10 = inlined_call_operand.vmem [shape: f32[1,32], index: 10, kind: input, shape index: {}]
  %s11 = inlined_call_operand.vmem [shape: f32[1,32], index: 11, kind: input, shape index: {}]
  %s12 = inlined_call_operand.vmem [shape: f32[1,32], index: 12, kind: input, shape index: {}]
  %s13 = inlined_call_operand.vmem [shape: f32[2,8,32], index: 13, kind: output, shape index: {}]
  %s14 = sld [smem:[#allocation0]]
  $region85: #{logical_transformer_forward.8} parent=0
    _
  %s16 = ssub.s32 1, %s14
  %s17 = scalar_select 0, %s16, %s14
  loop: start=0, step=1, limit=4
  $region2: #{logical_transformer_forward.8} parent=0 // loop_pre_header
    _
  $region3: #{logical_transformer_forward.8} parent=0 // loop_header
    %s19 = sphi 0, %s23
    %p20 = scmp.ge.s32.totalorder %s19, 4
    %s29 = sphi 0, %s31
    %s32 = sphi 0, %s29
    %s33 = sphi 0, %s32
    %s49 = sphi 0, %s33
    %s53 = sphi 0, %s53
    %s55 = sphi 0, %s53
    %s56 = sphi 0, %s55
    %s70 = sphi 0, %s56
    %s74 = sphi 0, %s74
    %s76 = sphi 0, %s74
    %s77 = sphi 0, %s76
    %s91 = sphi 0, %s77
    %s95 = sphi 0, %s95
    %s97 = sphi 0, %s95
    %s98 = sphi 0, %s97
    %s112 = sphi 0, %s98
    %s116 = sphi 0, %s116
    %s118 = sphi 0, %s116
    %s119 = sphi 0, %s118
    %s133 = sphi 0, %s119
    %s137 = sphi 0, %s137
    %s139 = sphi 0, %s137
    %s140 = sphi 0, %s139
    %s154 = sphi 0, %s140
    %s158 = sphi 0, %s158
    %s160 = sphi 0, %s158
    %s161 = sphi 0, %s160
    %s175 = sphi 0, %s161
    %s179 = sphi 0, %s179
    %s181 = sphi 0, %s179
    %s182 = sphi 0, %s181
    %s196 = sphi 0, %s182
    %s200 = sphi 0, %s200
    %s202 = sphi 0, %s200
    %s203 = sphi 0, %s202
    %s217 = sphi 0, %s203
    %s221 = sphi 0, %s221
    %s223 = sphi 0, %s221
    %s224 = sphi 0, %s223
    %s238 = sphi 0, %s224
    %s242 = sphi 0, %s242
    %s244 = sphi 0, %s242
    %s245 = sphi 0, %s244
    %s259 = sphi 0, %s245
    %s263 = sphi 0, %s263
    %s265 = sphi 0, %s263
    %s266 = sphi 0, %s265
    %s280 = sphi 0, %s266
    %s284 = sphi 0, %s284
    %s286 = sphi 0, %s284
    %s287 = sphi 0, %s286
    %s301 = sphi 0, %s287
    %s307 = sphi 0, %s309
    %s310 = sphi 0, %s307
    %s311 = sphi 0, %s310
    %s327 = sphi 0, %s311
  $region4: #{logical_transformer_forward.8} parent=0 // loop_header_branch
    %22 = sbr.rel (%p20) target = $region8
  $region5: #{logical_transformer_forward.8} parent=0 // loop_body
    %s24 = ssub.s32 %s19, 1
    %s25 = ssub.s32 %s19, 2
    %s26 = sadd.s32 %s19, 1
    %s27 = ssub.s32 %s19, %s26
    %p28 = scmp.eq.s32.totalorder %s27, 0
    %s30 = sadd.s32 %s29, 1
    %s31 = scalar_select %p28, %s29, %s30
    %p34 = pneg %p28
    %p35 = scmp.eq.s32.totalorder %s19, 1
    %p36 = por %p34, %p35
    %p37 = scmp.ne.s32.totalorder %s29, %s32
    %p38 = scmp.eq.s32.totalorder %s19, 0
    %p39 = por %p37, %p38
    %p40 = scmp.ne.s32.totalorder %s29, %s32
    %p41 = scmp.eq.s32.totalorder %s24, 1
    %p42 = por %p40, %p41
    %p43 = scmp.ne.s32.totalorder %s32, %s33
    %p44 = scmp.eq.s32.totalorder %s24, 0
    %p45 = por %p43, %p44
    %p46 = scmp.ne.s32.totalorder %s32, %s33
    %p47 = scmp.eq.s32.totalorder %s25, 1
    %p48 = por %p46, %p47
    %p50 = scmp.ne.s32.totalorder %s33, %s49
    %p51 = scmp.eq.s32.totalorder %s25, 0
    %p52 = por %p50, %p51
    %s54 = sadd.s32 %s53, 1
    %p57 = scmp.eq.s32.totalorder %s19, 1
    %p58 = scmp.ne.s32.totalorder %s53, %s55
    %p59 = scmp.eq.s32.totalorder %s19, 0
    %p60 = por %p58, %p59
    %p61 = scmp.ne.s32.totalorder %s53, %s55
    %p62 = scmp.eq.s32.totalorder %s24, 1
    %p63 = por %p61, %p62
    %p64 = scmp.ne.s32.totalorder %s55, %s56
    %p65 = scmp.eq.s32.totalorder %s24, 0
    %p66 = por %p64, %p65
    %p67 = scmp.ne.s32.totalorder %s55, %s56
    %p68 = scmp.eq.s32.totalorder %s25, 1
    %p69 = por %p67, %p68
    %p71 = scmp.ne.s32.totalorder %s56, %s70
    %p72 = scmp.eq.s32.totalorder %s25, 0
    %p73 = por %p71, %p72
    %s75 = sadd.s32 %s74, 1
    %p78 = scmp.eq.s32.totalorder %s19, 1
    %p79 = scmp.ne.s32.totalorder %s74, %s76
    %p80 = scmp.eq.s32.totalorder %s19, 0
    %p81 = por %p79, %p80
    %p82 = scmp.ne.s32.totalorder %s74, %s76
    %p83 = scmp.eq.s32.totalorder %s24, 1
    %p84 = por %p82, %p83
    %p85 = scmp.ne.s32.totalorder %s76, %s77
    %p86 = scmp.eq.s32.totalorder %s24, 0
    %p87 = por %p85, %p86
    %p88 = scmp.ne.s32.totalorder %s76, %s77
    %p89 = scmp.eq.s32.totalorder %s25, 1
    %p90 = por %p88, %p89
    %p92 = scmp.ne.s32.totalorder %s77, %s91
    %p93 = scmp.eq.s32.totalorder %s25, 0
    %p94 = por %p92, %p93
    %s96 = sadd.s32 %s95, 1
    %p99 = scmp.eq.s32.totalorder %s19, 1
    %p100 = scmp.ne.s32.totalorder %s95, %s97
    %p101 = scmp.eq.s32.totalorder %s19, 0
    %p102 = por %p100, %p101
    %p103 = scmp.ne.s32.totalorder %s95, %s97
    %p104 = scmp.eq.s32.totalorder %s24, 1
    %p105 = por %p103, %p104
    %p106 = scmp.ne.s32.totalorder %s97, %s98
    %p107 = scmp.eq.s32.totalorder %s24, 0
    %p108 = por %p106, %p107
    %p109 = scmp.ne.s32.totalorder %s97, %s98
    %p110 = scmp.eq.s32.totalorder %s25, 1
    %p111 = por %p109, %p110
    %p113 = scmp.ne.s32.totalorder %s98, %s112
    %p114 = scmp.eq.s32.totalorder %s25, 0
    %p115 = por %p113, %p114
    %s117 = sadd.s32 %s116, 1
    %p120 = scmp.eq.s32.totalorder %s19, 1
    %p121 = scmp.ne.s32.totalorder %s116, %s118
    %p122 = scmp.eq.s32.totalorder %s19, 0
    %p123 = por %p121, %p122
    %p124 = scmp.ne.s32.totalorder %s116, %s118
    %p125 = scmp.eq.s32.totalorder %s24, 1
    %p126 = por %p124, %p125
    %p127 = scmp.ne.s32.totalorder %s118, %s119
    %p128 = scmp.eq.s32.totalorder %s24, 0
    %p129 = por %p127, %p128
    %p130 = scmp.ne.s32.totalorder %s118, %s119
    %p131 = scmp.eq.s32.totalorder %s25, 1
    %p132 = por %p130, %p131
    %p134 = scmp.ne.s32.totalorder %s119, %s133
    %p135 = scmp.eq.s32.totalorder %s25, 0
    %p136 = por %p134, %p135
    %s138 = sadd.s32 %s137, 1
    %p141 = scmp.eq.s32.totalorder %s19, 1
    %p142 = scmp.ne.s32.totalorder %s137, %s139
    %p143 = scmp.eq.s32.totalorder %s19, 0
    %p144 = por %p142, %p143
    %p145 = scmp.ne.s32.totalorder %s137, %s139
    %p146 = scmp.eq.s32.totalorder %s24, 1
    %p147 = por %p145, %p146
    %p148 = scmp.ne.s32.totalorder %s139, %s140
    %p149 = scmp.eq.s32.totalorder %s24, 0
    %p150 = por %p148, %p149
    %p151 = scmp.ne.s32.totalorder %s139, %s140
    %p152 = scmp.eq.s32.totalorder %s25, 1
    %p153 = por %p151, %p152
    %p155 = scmp.ne.s32.totalorder %s140, %s154
    %p156 = scmp.eq.s32.totalorder %s25, 0
    %p157 = por %p155, %p156
    %s159 = sadd.s32 %s158, 1
    %p162 = scmp.eq.s32.totalorder %s19, 1
    %p163 = scmp.ne.s32.totalorder %s158, %s160
    %p164 = scmp.eq.s32.totalorder %s19, 0
    %p165 = por %p163, %p164
    %p166 = scmp.ne.s32.totalorder %s158, %s160
    %p167 = scmp.eq.s32.totalorder %s24, 1
    %p168 = por %p166, %p167
    %p169 = scmp.ne.s32.totalorder %s160, %s161
    %p170 = scmp.eq.s32.totalorder %s24, 0
    %p171 = por %p169, %p170
    %p172 = scmp.ne.s32.totalorder %s160, %s161
    %p173 = scmp.eq.s32.totalorder %s25, 1
    %p174 = por %p172, %p173
    %p176 = scmp.ne.s32.totalorder %s161, %s175
    %p177 = scmp.eq.s32.totalorder %s25, 0
    %p178 = por %p176, %p177
    %s180 = sadd.s32 %s179, 1
    %p183 = scmp.eq.s32.totalorder %s19, 1
    %p184 = scmp.ne.s32.totalorder %s179, %s181
    %p185 = scmp.eq.s32.totalorder %s19, 0
    %p186 = por %p184, %p185
    %p187 = scmp.ne.s32.totalorder %s179, %s181
    %p188 = scmp.eq.s32.totalorder %s24, 1
    %p189 = por %p187, %p188
    %p190 = scmp.ne.s32.totalorder %s181, %s182
    %p191 = scmp.eq.s32.totalorder %s24, 0
    %p192 = por %p190, %p191
    %p193 = scmp.ne.s32.totalorder %s181, %s182
    %p194 = scmp.eq.s32.totalorder %s25, 1
    %p195 = por %p193, %p194
    %p197 = scmp.ne.s32.totalorder %s182, %s196
    %p198 = scmp.eq.s32.totalorder %s25, 0
    %p199 = por %p197, %p198
    %s201 = sadd.s32 %s200, 1
    %p204 = scmp.eq.s32.totalorder %s19, 1
    %p205 = scmp.ne.s32.totalorder %s200, %s202
    %p206 = scmp.eq.s32.totalorder %s19, 0
    %p207 = por %p205, %p206
    %p208 = scmp.ne.s32.totalorder %s200, %s202
    %p209 = scmp.eq.s32.totalorder %s24, 1
    %p210 = por %p208, %p209
    %p211 = scmp.ne.s32.totalorder %s202, %s203
    %p212 = scmp.eq.s32.totalorder %s24, 0
    %p213 = por %p211, %p212
    %p214 = scmp.ne.s32.totalorder %s202, %s203
    %p215 = scmp.eq.s32.totalorder %s25, 1
    %p216 = por %p214, %p215
    %p218 = scmp.ne.s32.totalorder %s203, %s217
    %p219 = scmp.eq.s32.totalorder %s25, 0
    %p220 = por %p218, %p219
    %s222 = sadd.s32 %s221, 1
    %p225 = scmp.eq.s32.totalorder %s19, 1
    %p226 = scmp.ne.s32.totalorder %s221, %s223
    %p227 = scmp.eq.s32.totalorder %s19, 0
    %p228 = por %p226, %p227
    %p229 = scmp.ne.s32.totalorder %s221, %s223
    %p230 = scmp.eq.s32.totalorder %s24, 1
    %p231 = por %p229, %p230
    %p232 = scmp.ne.s32.totalorder %s223, %s224
    %p233 = scmp.eq.s32.totalorder %s24, 0
    %p234 = por %p232, %p233
    %p235 = scmp.ne.s32.totalorder %s223, %s224
    %p236 = scmp.eq.s32.totalorder %s25, 1
    %p237 = por %p235, %p236
    %p239 = scmp.ne.s32.totalorder %s224, %s238
    %p240 = scmp.eq.s32.totalorder %s25, 0
    %p241 = por %p239, %p240
    %s243 = sadd.s32 %s242, 1
    %p246 = scmp.eq.s32.totalorder %s19, 1
    %p247 = scmp.ne.s32.totalorder %s242, %s244
    %p248 = scmp.eq.s32.totalorder %s19, 0
    %p249 = por %p247, %p248
    %p250 = scmp.ne.s32.totalorder %s242, %s244
    %p251 = scmp.eq.s32.totalorder %s24, 1
    %p252 = por %p250, %p251
    %p253 = scmp.ne.s32.totalorder %s244, %s245
    %p254 = scmp.eq.s32.totalorder %s24, 0
    %p255 = por %p253, %p254
    %p256 = scmp.ne.s32.totalorder %s244, %s245
    %p257 = scmp.eq.s32.totalorder %s25, 1
    %p258 = por %p256, %p257
    %p260 = scmp.ne.s32.totalorder %s245, %s259
    %p261 = scmp.eq.s32.totalorder %s25, 0
    %p262 = por %p260, %p261
    %s264 = sadd.s32 %s263, 1
    %p267 = scmp.eq.s32.totalorder %s19, 1
    %p268 = scmp.ne.s32.totalorder %s263, %s265
    %p269 = scmp.eq.s32.totalorder %s19, 0
    %p270 = por %p268, %p269
    %p271 = scmp.ne.s32.totalorder %s263, %s265
    %p272 = scmp.eq.s32.totalorder %s24, 1
    %p273 = por %p271, %p272
    %p274 = scmp.ne.s32.totalorder %s265, %s266
    %p275 = scmp.eq.s32.totalorder %s24, 0
    %p276 = por %p274, %p275
    %p277 = scmp.ne.s32.totalorder %s265, %s266
    %p278 = scmp.eq.s32.totalorder %s25, 1
    %p279 = por %p277, %p278
    %p281 = scmp.ne.s32.totalorder %s266, %s280
    %p282 = scmp.eq.s32.totalorder %s25, 0
    %p283 = por %p281, %p282
    %s285 = sadd.s32 %s284, 1
    %p288 = scmp.eq.s32.totalorder %s19, 1
    %p289 = scmp.ne.s32.totalorder %s284, %s286
    %p290 = scmp.eq.s32.totalorder %s19, 0
    %p291 = por %p289, %p290
    %p292 = scmp.ne.s32.totalorder %s284, %s286
    %p293 = scmp.eq.s32.totalorder %s24, 1
    %p294 = por %p292, %p293
    %p295 = scmp.ne.s32.totalorder %s286, %s287
    %p296 = scmp.eq.s32.totalorder %s24, 0
    %p297 = por %p295, %p296
    %p298 = scmp.ne.s32.totalorder %s286, %s287
    %p299 = scmp.eq.s32.totalorder %s25, 1
    %p300 = por %p298, %p299
    %p302 = scmp.ne.s32.totalorder %s287, %s301
    %p303 = scmp.eq.s32.totalorder %s25, 0
    %p304 = por %p302, %p303
    %s305 = ssub.s32 %s19, %s26
    %p306 = scmp.eq.s32.totalorder %s305, 0
    %s308 = sadd.s32 %s307, 1
    %s309 = scalar_select %p306, %s307, %s308
    %p312 = pneg %p306
    %p313 = scmp.eq.s32.totalorder %s19, 1
    %p314 = por %p312, %p313
    %p315 = scmp.ne.s32.totalorder %s307, %s310
    %p316 = scmp.eq.s32.totalorder %s19, 0
    %p317 = por %p315, %p316
    %p318 = scmp.ne.s32.totalorder %s307, %s310
    %p319 = scmp.eq.s32.totalorder %s24, 1
    %p320 = por %p318, %p319
    %p321 = scmp.ne.s32.totalorder %s310, %s311
    %p322 = scmp.eq.s32.totalorder %s24, 0
    %p323 = por %p321, %p322
    %p324 = scmp.ne.s32.totalorder %s310, %s311
    %p325 = scmp.eq.s32.totalorder %s25, 1
    %p326 = por %p324, %p325
    %p328 = scmp.ne.s32.totalorder %s311, %s327
    %p329 = scmp.eq.s32.totalorder %s25, 0
    %p330 = por %p328, %p329
    %p331 = scmp.le.s32.totalorder 1, %s19
    %p332 = scmp.lt.s32.totalorder %s19, 3
    %p333 = pnand %p331, %p332
    %p334 = pneg %p333
    // Predicated region
    $region9: #{logical_transformer_forward.8} parent=5 // pred_check
      _
    $region10: #{logical_transformer_forward.8} parent=5 // pred_check_branch
      %336 = sbr.rel (%p333) target = $region12
    $region11: #{logical_transformer_forward.8} parent=5 // pred_region
      %s337 = ssub.s32 %s19, 1
      // Predicated region
      $region13: #{logical_transformer_forward.8} parent=11 // pred_check
        %p338 = pneg %p66
      $region14: #{logical_transformer_forward.8} parent=11 // pred_check_branch
        %340 = sbr.rel (%p338) target = $region16
      $region15: #{logical_transformer_forward.8} parent=11 // pred_region
        _
      $region16: #{logical_transformer_forward.8} parent=11 // pred_fallthru
        _
      // Predicated region
      $region17: #{logical_transformer_forward.8} parent=11 // pred_check
        %p341 = pneg %p87
      $region18: #{logical_transformer_forward.8} parent=11 // pred_check_branch
        %343 = sbr.rel (%p341) target = $region20
      $region19: #{logical_transformer_forward.8} parent=11 // pred_region
        _
      $region20: #{logical_transformer_forward.8} parent=11 // pred_fallthru
        _
      // Predicated region
      $region21: #{logical_transformer_forward.8} parent=11 // pred_check
        %p344 = pneg %p108
      $region22: #{logical_transformer_forward.8} parent=11 // pred_check_branch
        %346 = sbr.rel (%p344) target = $region24
      $region23: #{logical_transformer_forward.8} parent=11 // pred_region
        _
      $region24: #{logical_transformer_forward.8} parent=11 // pred_fallthru
        _
      // Predicated region
      $region25: #{logical_transformer_forward.8} parent=11 // pred_check
        %p347 = pneg %p129
      $region26: #{logical_transformer_forward.8} parent=11 // pred_check_branch
        %349 = sbr.rel (%p347) target = $region28
      $region27: #{logical_transformer_forward.8} parent=11 // pred_region
        _
      $region28: #{logical_transformer_forward.8} parent=11 // pred_fallthru
        _
      // Predicated region
      $region29: #{logical_transformer_forward.8} parent=11 // pred_check
        %p350 = pneg %p150
      $region30: #{logical_transformer_forward.8} parent=11 // pred_check_branch
        %352 = sbr.rel (%p350) target = $region32
      $region31: #{logical_transformer_forward.8} parent=11 // pred_region
        _
      $region32: #{logical_transformer_forward.8} parent=11 // pred_fallthru
        _
      // Predicated region
      $region33: #{logical_transformer_forward.8} parent=11 // pred_check
        %p353 = pneg %p171
      $region34: #{logical_transformer_forward.8} parent=11 // pred_check_branch
        %355 = sbr.rel (%p353) target = $region36
      $region35: #{logical_transformer_forward.8} parent=11 // pred_region
        _
      $region36: #{logical_transformer_forward.8} parent=11 // pred_fallthru
        _
      // Predicated region
      $region37: #{logical_transformer_forward.8} parent=11 // pred_check
        %p356 = pneg %p192
      $region38: #{logical_transformer_forward.8} parent=11 // pred_check_branch
        %358 = sbr.rel (%p356) target = $region40
      $region39: #{logical_transformer_forward.8} parent=11 // pred_region
        _
      $region40: #{logical_transformer_forward.8} parent=11 // pred_fallthru
        _
      // Predicated region
      $region41: #{logical_transformer_forward.8} parent=11 // pred_check
        %p359 = pneg %p213
      $region42: #{logical_transformer_forward.8} parent=11 // pred_check_branch
        %361 = sbr.rel (%p359) target = $region44
      $region43: #{logical_transformer_forward.8} parent=11 // pred_region
        _
      $region44: #{logical_transformer_forward.8} parent=11 // pred_fallthru
        _
      // Predicated region
      $region45: #{logical_transformer_forward.8} parent=11 // pred_check
        %p362 = pneg %p234
      $region46: #{logical_transformer_forward.8} parent=11 // pred_check_branch
        %364 = sbr.rel (%p362) target = $region48
      $region47: #{logical_transformer_forward.8} parent=11 // pred_region
        _
      $region48: #{logical_transformer_forward.8} parent=11 // pred_fallthru
        _
      // Predicated region
      $region49: #{logical_transformer_forward.8} parent=11 // pred_check
        %p365 = pneg %p255
      $region50: #{logical_transformer_forward.8} parent=11 // pred_check_branch
        %367 = sbr.rel (%p365) target = $region52
      $region51: #{logical_transformer_forward.8} parent=11 // pred_region
        _
      $region52: #{logical_transformer_forward.8} parent=11 // pred_fallthru
        _
      // Predicated region
      $region53: #{logical_transformer_forward.8} parent=11 // pred_check
        %p368 = pneg %p276
      $region54: #{logical_transformer_forward.8} parent=11 // pred_check_branch
        %370 = sbr.rel (%p368) target = $region56
      $region55: #{logical_transformer_forward.8} parent=11 // pred_region
        _
      $region56: #{logical_transformer_forward.8} parent=11 // pred_fallthru
        _
      // Predicated region
      $region57: #{logical_transformer_forward.8} parent=11 // pred_check
        %p371 = pneg %p297
      $region58: #{logical_transformer_forward.8} parent=11 // pred_check_branch
        %373 = sbr.rel (%p371) target = $region60
      $region59: #{logical_transformer_forward.8} parent=11 // pred_region
        _
      $region60: #{logical_transformer_forward.8} parent=11 // pred_fallthru
        _
    $region12: #{logical_transformer_forward.8} parent=5 // pred_fallthru
      _
    %p374 = scmp.lt.s32.totalorder %s19, 2
    // Predicated region
    $region61: #{logical_transformer_forward.8} parent=5 // pred_check
      %p375 = pneg %p374
    $region62: #{logical_transformer_forward.8} parent=5 // pred_check_branch
      %377 = sbr.rel (%p375) target = $region64
    $region63: #{logical_transformer_forward.8} parent=5 // pred_region
      // Predicated region
      $region65: #{logical_transformer_forward.8} parent=63 // pred_check
        %p378 = pneg %p39
      $region66: #{logical_transformer_forward.8} parent=63 // pred_check_branch
        %380 = sbr.rel (%p378) target = $region68
      $region67: #{logical_transformer_forward.8} parent=63 // pred_region
        %p381 = scmp.lt.s32.totalorder %s19, 1
        %s382 = scalar_select %p381, %s19, 1
        %s383 = smul.addr %s382, 8
        %s384 = scalar_lea.vmem %s0, %s383
      $region68: #{logical_transformer_forward.8} parent=63 // pred_fallthru
        _
    $region64: #{logical_transformer_forward.8} parent=5 // pred_fallthru
      _
    %p385 = scmp.le.s32.totalorder 1, %s19
    %p386 = scmp.lt.s32.totalorder %s19, 3
    %p387 = pnand %p385, %p386
    %p388 = pneg %p387
    // Predicated region
    $region69: #{logical_transformer_forward.8} parent=5 // pred_check
      _
    $region70: #{logical_transformer_forward.8} parent=5 // pred_check_branch
      %390 = sbr.rel (%p387) target = $region72
    $region71: #{logical_transformer_forward.8} parent=5 // pred_region
      %s391 = ssub.s32 %s19, 1
      %p392 = scmp.lt.s32.totalorder %s24, 1
      %s393 = scalar_select %p392, %s24, 1
      %s394 = smul.addr %s393, 8
      %s395 = scalar_lea.vmem %s0, %s394
      %p396 = pneg %p45
      %p397 = pneg %p42
      %p398 = pneg %p66
      %p399 = pneg %p63
      %p400 = pneg %p87
      %p401 = pneg %p84
      %p402 = pneg %p108
      %p403 = pneg %p105
      %p404 = pneg %p129
      %p405 = pneg %p126
      %p406 = pneg %p150
      %p407 = pneg %p147
      %p408 = pneg %p171
      %p409 = pneg %p168
      %p410 = pneg %p192
      %p411 = pneg %p189
      %p412 = pneg %p213
      %p413 = pneg %p210
      %p414 = pneg %p234
      %p415 = pneg %p231
      %p416 = pneg %p255
      %p417 = pneg %p252
      %p418 = pneg %p276
      %p419 = pneg %p273
      %p420 = pneg %p297
      %p421 = pneg %p294
      %p422 = pneg %p323
      %p423 = pneg %p320
      %p424 = scmp.lt.s32.totalorder %s24, 1
      %s425 = scalar_select %p424, %s24, 1
      %s426 = smul.addr %s425, 8
      %s427 = scalar_lea.vmem %s13, %s426
      %p428 = scmp.lt.s32.totalorder %s24, 1
      %s429 = scalar_select %p428, %s24, 1
      %s430 = smul.addr %s429, 8
      %s431 = scalar_lea.vmem %s0, %s430
      %p432 = scmp.lt.s32.totalorder %s24, 1
      %s433 = scalar_select %p432, %s24, 1
      %s434 = smul.addr %s433, 8
      %s435 = scalar_lea.vmem %s13, %s434
      %v437 = vld [vmem:[%s431] sm:$0xff]
      %v438 = vpack.c.bf16 %v437, %v437
      %v439 = vld [vmem:[%s1] sm:$0xf]
      %v440 = vld [vmem:[%s1 + $0x4] sm:$0xf]
      %v441 = vld [vmem:[%s1 + $0x8] sm:$0xf]
      %v442 = vld [vmem:[%s1 + $0xc] sm:$0xf]
      %v443 = vld [vmem:[%s2] sm:$0x1]
      %v445 = vperm.slane %v443, 0
      %v451 = vunpack.c.l.b16 %v439
      %v452 = vunpack.c.l.b16 %v440
      %v453 = vunpack.c.l.b16 %v441
      %v454 = vunpack.c.l.b16 %v442
      %v455 = vpack.c.b16 %v452, %v451
      %v456 = vpack.c.b16 %v454, %v453
      %vm459 = vcmask 261120
      %v461 = vsel %vm459, %v438, 0
      %463 = vmatpush.bf16.msra.mxu0 0
      %464 = vmatpush.bf16.msra.mxu0 0
      %465 = vmatpush.bf16.msra.mxu0 0
      %466 = vmatpush.bf16.msra.mxu0 0
      %467 = vmatpush.bf16.msra.mxu0 0
      %468 = vmatpush.bf16.msra.mxu0 0
      %469 = vmatpush.bf16.msra.mxu0 %v456
      %470 = vmatpush.bf16.msra.mxu0 %v455
      %471 = vmatmul.bf16.gmra.mxu0 %v461
      %v472 = vpop.f32.mrf.mxu0
      %v473 = vadd.f32 %v445, %v472
      %v474 = vpop.f32.mrf.mxu0
      %475 = vdwg.mxu0
      %v476 = vmul.f32 %v473, 0.35355338
      %478 = vrot.lane.b32.xlu0 %v473, 96
      %v479 = vpop.permute.xlu0 %478
      %vm480 = vcmask 64512
      %v482 = vsel %vm480, %v476, 0
      %v484 = vsel %vm480, %v479, 0
      %486 = vmatpush.xpose.msra.mxu0 0.0
      %487 = vmatpush.xpose.msra.mxu0 0.0
      %488 = vmatpush.xpose.msra.mxu0 0.0
      %489 = vmatpush.xpose.msra.mxu0 0.0
      %490 = vmatpush.xpose.msra.mxu0 0.0
      %491 = vmatpush.xpose.msra.mxu0 0.0
      %492 = vmatpush.xpose.msra.mxu0 0.0
      %493 = vmatpush.xpose.msra.mxu0 0.0
      %494 = vmatpush.xpose.msra.mxu0 0.0
      %495 = vmatpush.xpose.msra.mxu0 0.0
      %496 = vmatpush.xpose.msra.mxu0 0.0
      %497 = vmatpush.xpose.msra.mxu0 0.0
      %498 = vmatpush.xpose.msra.mxu0 0.0
      %499 = vmatpush.xpose.msra.mxu0 0.0
      %500 = vmatpush.xpose.msra.mxu0 0.0
      %501 = vmatpush.xpose.msra.mxu0 %v484
      %502 = vmatmul.f32.gmra.mxu0 %v482
      %v503 = vpop.f32.mrf.mxu0
      %v504 = vadd.f32 0.0, %v503
      %505 = vdwg.mxu0
      %v506 = vsel %vm480, %v504, -inf
      %507 = vmax.xlane.f32.xlu0 %v506
      %v508 = vpop.xlane.xlu0 %507
      %v509 = vsub.f32 %v504, %v508
      %v510 = vmul.f32 %v509, 1.442695
      %v511 = vpow.pop %v510
      %v512 = vsel %vm480, %v511, 0.0
      %513 = vadd.xlane.f32.xlu0 %v512
      %v514 = vpop.xlane.xlu0 %513
      %v515 = vrcp.pop %v514
      %v516 = vmul.f32 %v511, %v515
      %517 = vrot.lane.b32.xlu0 %v473, 64
      %v518 = vpop.permute.xlu0 %517
      %v521 = vsel %vm480, %v516, 0
      %523 = vmatpush.msra.mxu0 0.0
      %524 = vmatpush.msra.mxu0 0.0
      %525 = vmatpush.msra.mxu0 0.0
      %526 = vmatpush.msra.mxu0 0.0
      %527 = vmatpush.msra.mxu0 0.0
      %528 = vmatpush.msra.mxu0 0.0
      %529 = vmatpush.msra.mxu0 0.0
      %530 = vmatpush.msra.mxu0 0.0
      %531 = vmatpush.msra.mxu0 0.0
      %532 = vmatpush.msra.mxu0 0.0
      %533 = vmatpush.msra.mxu0 0.0
      %534 = vmatpush.msra.mxu0 0.0
      %535 = vmatpush.msra.mxu0 0.0
      %536 = vmatpush.msra.mxu0 0.0
      %537 = vmatpush.msra.mxu0 0.0
      %538 = vmatpush.msra.mxu0 %v518
      %539 = vmatmul.f32.gmra.mxu0 %v521
      %v540 = vpop.f32.mrf.mxu0
      %v541 = vadd.f32 0.0, %v540
      %542 = vdwg.mxu0
      %543 = vrot.lane.b32.xlu0 %v476, 120
      %v544 = vpop.permute.xlu0 %543
      %545 = vrot.lane.b32.xlu0 %v473, 88
      %v546 = vpop.permute.xlu0 %545
      %v547 = vsel %vm480, %v544, 0
      %v549 = vsel %vm480, %v546, 0
      %551 = vmatpush.xpose.msra.mxu0 0.0
      %552 = vmatpush.xpose.msra.mxu0 0.0
      %553 = vmatpush.xpose.msra.mxu0 0.0
      %554 = vmatpush.xpose.msra.mxu0 0.0
      %555 = vmatpush.xpose.msra.mxu0 0.0
      %556 = vmatpush.xpose.msra.mxu0 0.0
      %557 = vmatpush.xpose.msra.mxu0 0.0
      %558 = vmatpush.xpose.msra.mxu0 0.0
      %559 = vmatpush.xpose.msra.mxu0 0.0
      %560 = vmatpush.xpose.msra.mxu0 0.0
      %561 = vmatpush.xpose.msra.mxu0 0.0
      %562 = vmatpush.xpose.msra.mxu0 0.0
      %563 = vmatpush.xpose.msra.mxu0 0.0
      %564 = vmatpush.xpose.msra.mxu0 0.0
      %565 = vmatpush.xpose.msra.mxu0 0.0
      %566 = vmatpush.xpose.msra.mxu0 %v549
      %567 = vmatmul.f32.gmra.mxu0 %v547
      %v568 = vpop.f32.mrf.mxu0
      %v569 = vadd.f32 0.0, %v568
      %570 = vdwg.mxu0
      %v571 = vsel %vm480, %v569, -inf
      %572 = vmax.xlane.f32.xlu0 %v571
      %v573 = vpop.xlane.xlu0 %572
      %v574 = vsub.f32 %v569, %v573
      %v575 = vmul.f32 %v574, 1.442695
      %v576 = vpow.pop %v575
      %v577 = vsel %vm480, %v576, 0.0
      %578 = vadd.xlane.f32.xlu0 %v577
      %v579 = vpop.xlane.xlu0 %578
      %v580 = vrcp.pop %v579
      %v581 = vmul.f32 %v576, %v580
      %582 = vrot.lane.b32.xlu0 %v473, 56
      %v583 = vpop.permute.xlu0 %582
      %v586 = vsel %vm480, %v581, 0
      %588 = vmatpush.msra.mxu0 0.0
      %589 = vmatpush.msra.mxu0 0.0
      %590 = vmatpush.msra.mxu0 0.0
      %591 = vmatpush.msra.mxu0 0.0
      %592 = vmatpush.msra.mxu0 0.0
      %593 = vmatpush.msra.mxu0 0.0
      %594 = vmatpush.msra.mxu0 0.0
      %595 = vmatpush.msra.mxu0 0.0
      %596 = vmatpush.msra.mxu0 0.0
      %597 = vmatpush.msra.mxu0 0.0
      %598 = vmatpush.msra.mxu0 0.0
      %599 = vmatpush.msra.mxu0 0.0
      %600 = vmatpush.msra.mxu0 0.0
      %601 = vmatpush.msra.mxu0 0.0
      %602 = vmatpush.msra.mxu0 0.0
      %603 = vmatpush.msra.mxu0 %v583
      %604 = vmatmul.f32.gmra.mxu0 %v586
      %v605 = vpop.f32.mrf.mxu0
      %v606 = vadd.f32 0.0, %v605
      %607 = vdwg.mxu0
      %608 = vrot.lane.b32.xlu0 %v476, 112
      %v609 = vpop.permute.xlu0 %608
      %610 = vrot.lane.b32.xlu0 %v473, 80
      %v611 = vpop.permute.xlu0 %610
      %v612 = vsel %vm480, %v609, 0
      %v614 = vsel %vm480, %v611, 0
      %616 = vmatpush.xpose.msra.mxu0 0.0
      %617 = vmatpush.xpose.msra.mxu0 0.0
      %618 = vmatpush.xpose.msra.mxu0 0.0
      %619 = vmatpush.xpose.msra.mxu0 0.0
      %620 = vmatpush.xpose.msra.mxu0 0.0
      %621 = vmatpush.xpose.msra.mxu0 0.0
      %622 = vmatpush.xpose.msra.mxu0 0.0
      %623 = vmatpush.xpose.msra.mxu0 0.0
      %624 = vmatpush.xpose.msra.mxu0 0.0
      %625 = vmatpush.xpose.msra.mxu0 0.0
      %626 = vmatpush.xpose.msra.mxu0 0.0
      %627 = vmatpush.xpose.msra.mxu0 0.0
      %628 = vmatpush.xpose.msra.mxu0 0.0
      %629 = vmatpush.xpose.msra.mxu0 0.0
      %630 = vmatpush.xpose.msra.mxu0 0.0
      %631 = vmatpush.xpose.msra.mxu0 %v614
      %632 = vmatmul.f32.gmra.mxu0 %v612
      %v633 = vpop.f32.mrf.mxu0
      %v634 = vadd.f32 0.0, %v633
      %635 = vdwg.mxu0
      %v636 = vsel %vm480, %v634, -inf
      %637 = vmax.xlane.f32.xlu0 %v636
      %v638 = vpop.xlane.xlu0 %637
      %v639 = vsub.f32 %v634, %v638
      %v640 = vmul.f32 %v639, 1.442695
      %v641 = vpow.pop %v640
      %v642 = vsel %vm480, %v641, 0.0
      %643 = vadd.xlane.f32.xlu0 %v642
      %v644 = vpop.xlane.xlu0 %643
      %v645 = vrcp.pop %v644
      %v646 = vmul.f32 %v641, %v645
      %647 = vrot.lane.b32.xlu0 %v473, 48
      %v648 = vpop.permute.xlu0 %647
      %v651 = vsel %vm480, %v646, 0
      %653 = vmatpush.msra.mxu0 0.0
      %654 = vmatpush.msra.mxu0 0.0
      %655 = vmatpush.msra.mxu0 0.0
      %656 = vmatpush.msra.mxu0 0.0
      %657 = vmatpush.msra.mxu0 0.0
      %658 = vmatpush.msra.mxu0 0.0
      %659 = vmatpush.msra.mxu0 0.0
      %660 = vmatpush.msra.mxu0 0.0
      %661 = vmatpush.msra.mxu0 0.0
      %662 = vmatpush.msra.mxu0 0.0
      %663 = vmatpush.msra.mxu0 0.0
      %664 = vmatpush.msra.mxu0 0.0
      %665 = vmatpush.msra.mxu0 0.0
      %666 = vmatpush.msra.mxu0 0.0
      %667 = vmatpush.msra.mxu0 0.0
      %668 = vmatpush.msra.mxu0 %v648
      %669 = vmatmul.f32.gmra.mxu0 %v651
      %v670 = vpop.f32.mrf.mxu0
      %v671 = vadd.f32 0.0, %v670
      %672 = vdwg.mxu0
      %673 = vrot.lane.b32.xlu0 %v476, 104
      %v674 = vpop.permute.xlu0 %673
      %675 = vrot.lane.b32.xlu0 %v473, 72
      %v676 = vpop.permute.xlu0 %675
      %v677 = vsel %vm480, %v674, 0
      %v679 = vsel %vm480, %v676, 0
      %681 = vmatpush.xpose.msra.mxu0 0.0
      %682 = vmatpush.xpose.msra.mxu0 0.0
      %683 = vmatpush.xpose.msra.mxu0 0.0
      %684 = vmatpush.xpose.msra.mxu0 0.0
      %685 = vmatpush.xpose.msra.mxu0 0.0
      %686 = vmatpush.xpose.msra.mxu0 0.0
      %687 = vmatpush.xpose.msra.mxu0 0.0
      %688 = vmatpush.xpose.msra.mxu0 0.0
      %689 = vmatpush.xpose.msra.mxu0 0.0
      %690 = vmatpush.xpose.msra.mxu0 0.0
      %691 = vmatpush.xpose.msra.mxu0 0.0
      %692 = vmatpush.xpose.msra.mxu0 0.0
      %693 = vmatpush.xpose.msra.mxu0 0.0
      %694 = vmatpush.xpose.msra.mxu0 0.0
      %695 = vmatpush.xpose.msra.mxu0 0.0
      %696 = vmatpush.xpose.msra.mxu0 %v679
      %697 = vmatmul.f32.gmra.mxu0 %v677
      %v698 = vpop.f32.mrf.mxu0
      %v699 = vadd.f32 0.0, %v698
      %700 = vdwg.mxu0
      %v701 = vsel %vm480, %v699, -inf
      %702 = vmax.xlane.f32.xlu0 %v701
      %v703 = vpop.xlane.xlu0 %702
      %v704 = vsub.f32 %v699, %v703
      %v705 = vmul.f32 %v704, 1.442695
      %v706 = vpow.pop %v705
      %v707 = vsel %vm480, %v706, 0.0
      %708 = vadd.xlane.f32.xlu0 %v707
      %v709 = vpop.xlane.xlu0 %708
      %v710 = vrcp.pop %v709
      %v711 = vmul.f32 %v706, %v710
      %712 = vrot.lane.b32.xlu0 %v473, 40
      %v713 = vpop.permute.xlu0 %712
      %v716 = vsel %vm480, %v711, 0
      %718 = vmatpush.msra.mxu0 0.0
      %719 = vmatpush.msra.mxu0 0.0
      %720 = vmatpush.msra.mxu0 0.0
      %721 = vmatpush.msra.mxu0 0.0
      %722 = vmatpush.msra.mxu0 0.0
      %723 = vmatpush.msra.mxu0 0.0
      %724 = vmatpush.msra.mxu0 0.0
      %725 = vmatpush.msra.mxu0 0.0
      %726 = vmatpush.msra.mxu0 0.0
      %727 = vmatpush.msra.mxu0 0.0
      %728 = vmatpush.msra.mxu0 0.0
      %729 = vmatpush.msra.mxu0 0.0
      %730 = vmatpush.msra.mxu0 0.0
      %731 = vmatpush.msra.mxu0 0.0
      %732 = vmatpush.msra.mxu0 0.0
      %733 = vmatpush.msra.mxu0 %v713
      %734 = vmatmul.f32.gmra.mxu0 %v716
      %v735 = vpop.f32.mrf.mxu0
      %v736 = vadd.f32 0.0, %v735
      %737 = vdwg.mxu0
      %739 = vrot.lane.b32.xlu0 %v606, 8
      %v740 = vpop.permute.xlu0 %739
      %743 = vrot.lane.b32.xlu0 %v671, 16
      %v744 = vpop.permute.xlu0 %743
      %747 = vrot.lane.b32.xlu0 %v736, 24
      %v748 = vpop.permute.xlu0 %747
      %v750 = vsel %vm480, %v541, %v740
      %vm751 = vcmask 130048
      %v752 = vsel %vm751, %v750, %v744
      %vm753 = vcmask 195584
      %v754 = vsel %vm753, %v752, %v748
      %v755 = vpack.c.bf16 %v754, %v754
      %v756 = vld [vmem:[%s3] sm:$0xf]
      %v757 = vld [vmem:[%s3 + $0x4] sm:$0xf]
      %v758 = vld [vmem:[%s3 + $0x8] sm:$0xf]
      %v759 = vld [vmem:[%s3 + $0xc] sm:$0xf]
      %v760 = vld [vmem:[%s4] sm:$0x1]
      %v762 = vperm.slane %v760, 0
      %v768 = vunpack.c.l.b16 %v756
      %v769 = vunpack.c.l.b16 %v757
      %v770 = vunpack.c.l.b16 %v758
      %v771 = vunpack.c.l.b16 %v759
      %v772 = vpack.c.b16 %v769, %v768
      %v773 = vpack.c.b16 %v771, %v770
      %v777 = vsel %vm459, %v755, 0
      %779 = vmatpush.bf16.msra.mxu0 0
      %780 = vmatpush.bf16.msra.mxu0 0
      %781 = vmatpush.bf16.msra.mxu0 0
      %782 = vmatpush.bf16.msra.mxu0 0
      %783 = vmatpush.bf16.msra.mxu0 0
      %784 = vmatpush.bf16.msra.mxu0 0
      %785 = vmatpush.bf16.msra.mxu0 %v773
      %786 = vmatpush.bf16.msra.mxu0 %v772
      %787 = vmatmul.bf16.gmra.mxu0 %v777
      %v788 = vpop.f32.mrf.mxu0
      %v789 = vadd.f32 %v762, %v788
      %v790 = vpop.f32.mrf.mxu0
      %791 = vdwg.mxu0
      %v792 = vadd.f32 %v437, %v789
      %v793 = vld [vmem:[%s5] sm:$0x1]
      %v794 = vld [vmem:[%s6] sm:$0x1]
      %v795 = vsel %vm459, %v792, 0.0
      %796 = vadd.xlane.f32.xlu0 %v795
      %v797 = vpop.xlane.xlu0 %796
      %v798 = vrcp.pop 32.0
      %v799 = vmul.f32 32.0, %v798
      %v800 = vsub.f32 1.0, %v799
      %v801 = vmul.f32 %v798, %v800
      %v802 = vadd.f32 %v798, %v801
      %vm803 = vweird.f32 %v798
      %v804 = vsel %vm803, %v798, %v802
      %v805 = vmul.f32 %v797, %v804
      %v806 = vsub.f32 %v792, %v805
      %v807 = vmul.f32 %v806, %v806
      %v808 = vsel %vm459, %v807, 0.0
      %809 = vadd.xlane.f32.xlu0 %v808
      %v810 = vpop.xlane.xlu0 %809
      %v811 = vmul.f32 %v810, %v804
      %v812 = vadd.f32 %v811, 1e-05
      %v813 = vrsqrt.pop %v812
      %v814 = vmul.f32 %v813, %v812
      %v815 = vmul.f32 %v814, %v813
      %v816 = vmul.f32 0.5, %v815
      %v817 = vsub.f32 1.5, %v816
      %v818 = vmul.f32 %v813, %v817
      %vm819 = vweird.f32 %v812
      %vm820 = vweird.f32 %v813
      %vm821 = vmor %vm819, %vm820
      %v822 = vsel %vm821, %v813, %v818
      %v823 = vmul.f32 %v806, %v822
      %v825 = vperm.slane %v793, 0
      %v827 = vmul.f32 %v823, %v825
      %v829 = vperm.slane %v794, 0
      %v831 = vadd.f32 %v827, %v829
      %v832 = vpack.c.bf16 %v831, %v831
      %v833 = vld [vmem:[%s7] sm:$0xff]
      %v834 = vld [vmem:[%s7 + $0x8] sm:$0xff]
      %v835 = vld [vmem:[%s7 + $0x10] sm:$0xff]
      %v836 = vld [vmem:[%s7 + $0x18] sm:$0xff]
      %v837 = vld [vmem:[%s7 + $0x20] sm:$0xff]
      %v838 = vld [vmem:[%s7 + $0x28] sm:$0xff]
      %v839 = vld [vmem:[%s7 + $0x30] sm:$0xff]
      %v840 = vld [vmem:[%s7 + $0x38] sm:$0xff]
      %v841 = vld [vmem:[%s7 + $0x40] sm:$0xff]
      %v842 = vld [vmem:[%s7 + $0x48] sm:$0xff]
      %v843 = vld [vmem:[%s7 + $0x50] sm:$0xff]
      %v844 = vld [vmem:[%s7 + $0x58] sm:$0xff]
      %v845 = vld [vmem:[%s7 + $0x60] sm:$0xff]
      %v846 = vld [vmem:[%s7 + $0x68] sm:$0xff]
      %v847 = vld [vmem:[%s7 + $0x70] sm:$0xff]
      %v848 = vld [vmem:[%s7 + $0x78] sm:$0xff]
      %v849 = vld [vmem:[%s7 + $0x80] sm:$0xff]
      %v850 = vld [vmem:[%s7 + $0x88] sm:$0xff]
      %v851 = vld [vmem:[%s7 + $0x90] sm:$0xff]
      %v852 = vld [vmem:[%s7 + $0x98] sm:$0xff]
      %v853 = vld [vmem:[%s7 + $0xa0] sm:$0xff]
      %v854 = vld [vmem:[%s7 + $0xa8] sm:$0xff]
      %v855 = vld [vmem:[%s7 + $0xb0] sm:$0xff]
      %v856 = vld [vmem:[%s7 + $0xb8] sm:$0xff]
      %v857 = vld [vmem:[%s7 + $0xc0] sm:$0xff]
      %v858 = vld [vmem:[%s7 + $0xc8] sm:$0xff]
      %v859 = vld [vmem:[%s7 + $0xd0] sm:$0xff]
      %v860 = vld [vmem:[%s7 + $0xd8] sm:$0xff]
      %v861 = vld [vmem:[%s7 + $0xe0] sm:$0xff]
      %v862 = vld [vmem:[%s7 + $0xe8] sm:$0xff]
      %v863 = vld [vmem:[%s7 + $0xf0] sm:$0xff]
      %v864 = vld [vmem:[%s7 + $0xf8] sm:$0xff]
      %v865 = vld [vmem:[%s8] sm:$0xff]
      %v866 = vld [vmem:[%s8 + $0x8] sm:$0xff]
      %v869 = vperm.slane %v865, 0
      %v870 = vperm.slane %v865, 1
      %v871 = vperm.slane %v865, 2
      %v872 = vperm.slane %v865, 3
      %v873 = vperm.slane %v865, 4
      %v874 = vperm.slane %v865, 5
      %v875 = vperm.slane %v865, 6
      %v876 = vperm.slane %v865, 7
      %v877 = vperm.slane %v866, 0
      %v878 = vperm.slane %v866, 1
      %v879 = vperm.slane %v866, 2
      %v880 = vperm.slane %v866, 3
      %v881 = vperm.slane %v866, 4
      %v882 = vperm.slane %v866, 5
      %v883 = vperm.slane %v866, 6
      %v884 = vperm.slane %v866, 7
      %v933 = vunpack.c.l.b16 %v833
      %v934 = vunpack.c.h.b16 %v833
      %v935 = vunpack.c.l.b16 %v834
      %v936 = vunpack.c.h.b16 %v834
      %v937 = vunpack.c.l.b16 %v835
      %v938 = vunpack.c.h.b16 %v835
      %v939 = vunpack.c.l.b16 %v836
      %v940 = vunpack.c.h.b16 %v836
      %v941 = vunpack.c.l.b16 %v837
      %v942 = vunpack.c.h.b16 %v837
      %v943 = vunpack.c.l.b16 %v838
      %v944 = vunpack.c.h.b16 %v838
      %v945 = vunpack.c.l.b16 %v839
      %v946 = vunpack.c.h.b16 %v839
      %v947 = vunpack.c.l.b16 %v840
      %v948 = vunpack.c.h.b16 %v840
      %v949 = vunpack.c.l.b16 %v841
      %v950 = vunpack.c.h.b16 %v841
      %v951 = vunpack.c.l.b16 %v842
      %v952 = vunpack.c.h.b16 %v842
      %v953 = vunpack.c.l.b16 %v843
      %v954 = vunpack.c.h.b16 %v843
      %v955 = vunpack.c.l.b16 %v844
      %v956 = vunpack.c.h.b16 %v844
      %v957 = vunpack.c.l.b16 %v845
      %v958 = vunpack.c.h.b16 %v845
      %v959 = vunpack.c.l.b16 %v846
      %v960 = vunpack.c.h.b16 %v846
      %v961 = vunpack.c.l.b16 %v847
      %v962 = vunpack.c.h.b16 %v847
      %v963 = vunpack.c.l.b16 %v848
      %v964 = vunpack.c.h.b16 %v848
      %v965 = vunpack.c.l.b16 %v849
      %v966 = vunpack.c.h.b16 %v849
      %v967 = vunpack.c.l.b16 %v850
      %v968 = vunpack.c.h.b16 %v850
      %v969 = vunpack.c.l.b16 %v851
      %v970 = vunpack.c.h.b16 %v851
      %v971 = vunpack.c.l.b16 %v852
      %v972 = vunpack.c.h.b16 %v852
      %v973 = vunpack.c.l.b16 %v853
      %v974 = vunpack.c.h.b16 %v853
      %v975 = vunpack.c.l.b16 %v854
      %v976 = vunpack.c.h.b16 %v854
      %v977 = vunpack.c.l.b16 %v855
      %v978 = vunpack.c.h.b16 %v855
      %v979 = vunpack.c.l.b16 %v856
      %v980 = vunpack.c.h.b16 %v856
      %v981 = vunpack.c.l.b16 %v857
      %v982 = vunpack.c.h.b16 %v857
      %v983 = vunpack.c.l.b16 %v858
      %v984 = vunpack.c.h.b16 %v858
      %v985 = vunpack.c.l.b16 %v859
      %v986 = vunpack.c.h.b16 %v859
      %v987 = vunpack.c.l.b16 %v860
      %v988 = vunpack.c.h.b16 %v860
      %v989 = vunpack.c.l.b16 %v861
      %v990 = vunpack.c.h.b16 %v861
      %v991 = vunpack.c.l.b16 %v862
      %v992 = vunpack.c.h.b16 %v862
      %v993 = vunpack.c.l.b16 %v863
      %v994 = vunpack.c.h.b16 %v863
      %v995 = vunpack.c.l.b16 %v864
      %v996 = vunpack.c.h.b16 %v864
      %v997 = vpack.c.b16 %v949, %v933
      %v998 = vpack.c.b16 %v950, %v934
      %v999 = vpack.c.b16 %v951, %v935
      %v1000 = vpack.c.b16 %v952, %v936
      %v1001 = vpack.c.b16 %v953, %v937
      %v1002 = vpack.c.b16 %v954, %v938
      %v1003 = vpack.c.b16 %v955, %v939
      %v1004 = vpack.c.b16 %v956, %v940
      %v1005 = vpack.c.b16 %v957, %v941
      %v1006 = vpack.c.b16 %v958, %v942
      %v1007 = vpack.c.b16 %v959, %v943
      %v1008 = vpack.c.b16 %v960, %v944
      %v1009 = vpack.c.b16 %v961, %v945
      %v1010 = vpack.c.b16 %v962, %v946
      %v1011 = vpack.c.b16 %v963, %v947
      %v1012 = vpack.c.b16 %v964, %v948
      %v1013 = vpack.c.b16 %v981, %v965
      %v1014 = vpack.c.b16 %v982, %v966
      %v1015 = vpack.c.b16 %v983, %v967
      %v1016 = vpack.c.b16 %v984, %v968
      %v1017 = vpack.c.b16 %v985, %v969
      %v1018 = vpack.c.b16 %v986, %v970
      %v1019 = vpack.c.b16 %v987, %v971
      %v1020 = vpack.c.b16 %v988, %v972
      %v1021 = vpack.c.b16 %v989, %v973
      %v1022 = vpack.c.b16 %v990, %v974
      %v1023 = vpack.c.b16 %v991, %v975
      %v1024 = vpack.c.b16 %v992, %v976
      %v1025 = vpack.c.b16 %v993, %v977
      %v1026 = vpack.c.b16 %v994, %v978
      %v1027 = vpack.c.b16 %v995, %v979
      %v1028 = vpack.c.b16 %v996, %v980
      %v1062 = vsel %vm459, %v832, 0
      %1064 = vmatpush.bf16.msra.mxu0 0
      %1065 = vmatpush.bf16.msra.mxu0 0
      %1066 = vmatpush.bf16.msra.mxu0 0
      %1067 = vmatpush.bf16.msra.mxu0 0
      %1068 = vmatpush.bf16.msra.mxu0 0
      %1069 = vmatpush.bf16.msra.mxu0 0
      %1070 = vmatpush.bf16.msra.mxu0 %v1013
      %1071 = vmatpush.bf16.msra.mxu0 %v997
      %1072 = vmatmul.bf16.gmra.mxu0 %v1062
      %v1073 = vpop.f32.mrf.mxu0
      %v1074 = vadd.f32 %v869, %v1073
      %v1075 = vpop.f32.mrf.mxu0
      %1076 = vdwg.mxu0
      %1077 = vmatpush.bf16.msra.mxu0 0
      %1078 = vmatpush.bf16.msra.mxu0 0
      %1079 = vmatpush.bf16.msra.mxu0 0
      %1080 = vmatpush.bf16.msra.mxu0 0
      %1081 = vmatpush.bf16.msra.mxu0 0
      %1082 = vmatpush.bf16.msra.mxu0 0
      %1083 = vmatpush.bf16.msra.mxu0 %v1014
      %1084 = vmatpush.bf16.msra.mxu0 %v998
      %1085 = vmatmul.bf16.gmra.mxu0 %v1062
      %v1086 = vpop.f32.mrf.mxu0
      %v1087 = vadd.f32 %v870, %v1086
      %v1088 = vpop.f32.mrf.mxu0
      %1089 = vdwg.mxu0
      %1090 = vmatpush.bf16.msra.mxu0 0
      %1091 = vmatpush.bf16.msra.mxu0 0
      %1092 = vmatpush.bf16.msra.mxu0 0
      %1093 = vmatpush.bf16.msra.mxu0 0
      %1094 = vmatpush.bf16.msra.mxu0 0
      %1095 = vmatpush.bf16.msra.mxu0 0
      %1096 = vmatpush.bf16.msra.mxu0 %v1015
      %1097 = vmatpush.bf16.msra.mxu0 %v999
      %1098 = vmatmul.bf16.gmra.mxu0 %v1062
      %v1099 = vpop.f32.mrf.mxu0
      %v1100 = vadd.f32 %v871, %v1099
      %v1101 = vpop.f32.mrf.mxu0
      %1102 = vdwg.mxu0
      %1103 = vmatpush.bf16.msra.mxu0 0
      %1104 = vmatpush.bf16.msra.mxu0 0
      %1105 = vmatpush.bf16.msra.mxu0 0
      %1106 = vmatpush.bf16.msra.mxu0 0
      %1107 = vmatpush.bf16.msra.mxu0 0
      %1108 = vmatpush.bf16.msra.mxu0 0
      %1109 = vmatpush.bf16.msra.mxu0 %v1016
      %1110 = vmatpush.bf16.msra.mxu0 %v1000
      %1111 = vmatmul.bf16.gmra.mxu0 %v1062
      %v1112 = vpop.f32.mrf.mxu0
      %v1113 = vadd.f32 %v872, %v1112
      %v1114 = vpop.f32.mrf.mxu0
      %1115 = vdwg.mxu0
      %1116 = vmatpush.bf16.msra.mxu0 0
      %1117 = vmatpush.bf16.msra.mxu0 0
      %1118 = vmatpush.bf16.msra.mxu0 0
      %1119 = vmatpush.bf16.msra.mxu0 0
      %1120 = vmatpush.bf16.msra.mxu0 0
      %1121 = vmatpush.bf16.msra.mxu0 0
      %1122 = vmatpush.bf16.msra.mxu0 %v1017
      %1123 = vmatpush.bf16.msra.mxu0 %v1001
      %1124 = vmatmul.bf16.gmra.mxu0 %v1062
      %v1125 = vpop.f32.mrf.mxu0
      %v1126 = vadd.f32 %v873, %v1125
      %v1127 = vpop.f32.mrf.mxu0
      %1128 = vdwg.mxu0
      %1129 = vmatpush.bf16.msra.mxu0 0
      %1130 = vmatpush.bf16.msra.mxu0 0
      %1131 = vmatpush.bf16.msra.mxu0 0
      %1132 = vmatpush.bf16.msra.mxu0 0
      %1133 = vmatpush.bf16.msra.mxu0 0
      %1134 = vmatpush.bf16.msra.mxu0 0
      %1135 = vmatpush.bf16.msra.mxu0 %v1018
      %1136 = vmatpush.bf16.msra.mxu0 %v1002
      %1137 = vmatmul.bf16.gmra.mxu0 %v1062
      %v1138 = vpop.f32.mrf.mxu0
      %v1139 = vadd.f32 %v874, %v1138
      %v1140 = vpop.f32.mrf.mxu0
      %1141 = vdwg.mxu0
      %1142 = vmatpush.bf16.msra.mxu0 0
      %1143 = vmatpush.bf16.msra.mxu0 0
      %1144 = vmatpush.bf16.msra.mxu0 0
      %1145 = vmatpush.bf16.msra.mxu0 0
      %1146 = vmatpush.bf16.msra.mxu0 0
      %1147 = vmatpush.bf16.msra.mxu0 0
      %1148 = vmatpush.bf16.msra.mxu0 %v1019
      %1149 = vmatpush.bf16.msra.mxu0 %v1003
      %1150 = vmatmul.bf16.gmra.mxu0 %v1062
      %v1151 = vpop.f32.mrf.mxu0
      %v1152 = vadd.f32 %v875, %v1151
      %v1153 = vpop.f32.mrf.mxu0
      %1154 = vdwg.mxu0
      %1155 = vmatpush.bf16.msra.mxu0 0
      %1156 = vmatpush.bf16.msra.mxu0 0
      %1157 = vmatpush.bf16.msra.mxu0 0
      %1158 = vmatpush.bf16.msra.mxu0 0
      %1159 = vmatpush.bf16.msra.mxu0 0
      %1160 = vmatpush.bf16.msra.mxu0 0
      %1161 = vmatpush.bf16.msra.mxu0 %v1020
      %1162 = vmatpush.bf16.msra.mxu0 %v1004
      %1163 = vmatmul.bf16.gmra.mxu0 %v1062
      %v1164 = vpop.f32.mrf.mxu0
      %v1165 = vadd.f32 %v876, %v1164
      %v1166 = vpop.f32.mrf.mxu0
      %1167 = vdwg.mxu0
      %1168 = vmatpush.bf16.msra.mxu0 0
      %1169 = vmatpush.bf16.msra.mxu0 0
      %1170 = vmatpush.bf16.msra.mxu0 0
      %1171 = vmatpush.bf16.msra.mxu0 0
      %1172 = vmatpush.bf16.msra.mxu0 0
      %1173 = vmatpush.bf16.msra.mxu0 0
      %1174 = vmatpush.bf16.msra.mxu0 %v1021
      %1175 = vmatpush.bf16.msra.mxu0 %v1005
      %1176 = vmatmul.bf16.gmra.mxu0 %v1062
      %v1177 = vpop.f32.mrf.mxu0
      %v1178 = vadd.f32 %v877, %v1177
      %v1179 = vpop.f32.mrf.mxu0
      %1180 = vdwg.mxu0
      %1181 = vmatpush.bf16.msra.mxu0 0
      %1182 = vmatpush.bf16.msra.mxu0 0
      %1183 = vmatpush.bf16.msra.mxu0 0
      %1184 = vmatpush.bf16.msra.mxu0 0
      %1185 = vmatpush.bf16.msra.mxu0 0
      %1186 = vmatpush.bf16.msra.mxu0 0
      %1187 = vmatpush.bf16.msra.mxu0 %v1022
      %1188 = vmatpush.bf16.msra.mxu0 %v1006
      %1189 = vmatmul.bf16.gmra.mxu0 %v1062
      %v1190 = vpop.f32.mrf.mxu0
      %v1191 = vadd.f32 %v878, %v1190
      %v1192 = vpop.f32.mrf.mxu0
      %1193 = vdwg.mxu0
      %1194 = vmatpush.bf16.msra.mxu0 0
      %1195 = vmatpush.bf16.msra.mxu0 0
      %1196 = vmatpush.bf16.msra.mxu0 0
      %1197 = vmatpush.bf16.msra.mxu0 0
      %1198 = vmatpush.bf16.msra.mxu0 0
      %1199 = vmatpush.bf16.msra.mxu0 0
      %1200 = vmatpush.bf16.msra.mxu0 %v1023
      %1201 = vmatpush.bf16.msra.mxu0 %v1007
      %1202 = vmatmul.bf16.gmra.mxu0 %v1062
      %v1203 = vpop.f32.mrf.mxu0
      %v1204 = vadd.f32 %v879, %v1203
      %v1205 = vpop.f32.mrf.mxu0
      %1206 = vdwg.mxu0
      %1207 = vmatpush.bf16.msra.mxu0 0
      %1208 = vmatpush.bf16.msra.mxu0 0
      %1209 = vmatpush.bf16.msra.mxu0 0
      %1210 = vmatpush.bf16.msra.mxu0 0
      %1211 = vmatpush.bf16.msra.mxu0 0
      %1212 = vmatpush.bf16.msra.mxu0 0
      %1213 = vmatpush.bf16.msra.mxu0 %v1024
      %1214 = vmatpush.bf16.msra.mxu0 %v1008
      %1215 = vmatmul.bf16.gmra.mxu0 %v1062
      %v1216 = vpop.f32.mrf.mxu0
      %v1217 = vadd.f32 %v880, %v1216
      %v1218 = vpop.f32.mrf.mxu0
      %1219 = vdwg.mxu0
      %1220 = vmatpush.bf16.msra.mxu0 0
      %1221 = vmatpush.bf16.msra.mxu0 0
      %1222 = vmatpush.bf16.msra.mxu0 0
      %1223 = vmatpush.bf16.msra.mxu0 0
      %1224 = vmatpush.bf16.msra.mxu0 0
      %1225 = vmatpush.bf16.msra.mxu0 0
      %1226 = vmatpush.bf16.msra.mxu0 %v1025
      %1227 = vmatpush.bf16.msra.mxu0 %v1009
      %1228 = vmatmul.bf16.gmra.mxu0 %v1062
      %v1229 = vpop.f32.mrf.mxu0
      %v1230 = vadd.f32 %v881, %v1229
      %v1231 = vpop.f32.mrf.mxu0
      %1232 = vdwg.mxu0
      %1233 = vmatpush.bf16.msra.mxu0 0
      %1234 = vmatpush.bf16.msra.mxu0 0
      %1235 = vmatpush.bf16.msra.mxu0 0
      %1236 = vmatpush.bf16.msra.mxu0 0
      %1237 = vmatpush.bf16.msra.mxu0 0
      %1238 = vmatpush.bf16.msra.mxu0 0
      %1239 = vmatpush.bf16.msra.mxu0 %v1026
      %1240 = vmatpush.bf16.msra.mxu0 %v1010
      %1241 = vmatmul.bf16.gmra.mxu0 %v1062
      %v1242 = vpop.f32.mrf.mxu0
      %v1243 = vadd.f32 %v882, %v1242
      %v1244 = vpop.f32.mrf.mxu0
      %1245 = vdwg.mxu0
      %1246 = vmatpush.bf16.msra.mxu0 0
      %1247 = vmatpush.bf16.msra.mxu0 0
      %1248 = vmatpush.bf16.msra.mxu0 0
      %1249 = vmatpush.bf16.msra.mxu0 0
      %1250 = vmatpush.bf16.msra.mxu0 0
      %1251 = vmatpush.bf16.msra.mxu0 0
      %1252 = vmatpush.bf16.msra.mxu0 %v1027
      %1253 = vmatpush.bf16.msra.mxu0 %v1011
      %1254 = vmatmul.bf16.gmra.mxu0 %v1062
      %v1255 = vpop.f32.mrf.mxu0
      %v1256 = vadd.f32 %v883, %v1255
      %v1257 = vpop.f32.mrf.mxu0
      %1258 = vdwg.mxu0
      %1259 = vmatpush.bf16.msra.mxu0 0
      %1260 = vmatpush.bf16.msra.mxu0 0
      %1261 = vmatpush.bf16.msra.mxu0 0
      %1262 = vmatpush.bf16.msra.mxu0 0
      %1263 = vmatpush.bf16.msra.mxu0 0
      %1264 = vmatpush.bf16.msra.mxu0 0
      %1265 = vmatpush.bf16.msra.mxu0 %v1028
      %1266 = vmatpush.bf16.msra.mxu0 %v1012
      %1267 = vmatmul.bf16.gmra.mxu0 %v1062
      %v1268 = vpop.f32.mrf.mxu0
      %v1269 = vadd.f32 %v884, %v1268
      %v1270 = vpop.f32.mrf.mxu0
      %1271 = vdwg.mxu0
      %v1272 = vmax.f32 %v1074, 0.0
      %v1273 = vmax.f32 %v1087, 0.0
      %v1274 = vmax.f32 %v1100, 0.0
      %v1275 = vmax.f32 %v1113, 0.0
      %v1276 = vmax.f32 %v1126, 0.0
      %v1277 = vmax.f32 %v1139, 0.0
      %v1278 = vmax.f32 %v1152, 0.0
      %v1279 = vmax.f32 %v1165, 0.0
      %v1280 = vmax.f32 %v1178, 0.0
      %v1281 = vmax.f32 %v1191, 0.0
      %v1282 = vmax.f32 %v1204, 0.0
      %v1283 = vmax.f32 %v1217, 0.0
      %v1284 = vmax.f32 %v1230, 0.0
      %v1285 = vmax.f32 %v1243, 0.0
      %v1286 = vmax.f32 %v1256, 0.0
      %v1287 = vmax.f32 %v1269, 0.0
      %v1288 = vpack.c.bf16 %v1272, %v1272
      %v1289 = vpack.c.bf16 %v1273, %v1273
      %v1290 = vpack.c.bf16 %v1274, %v1274
      %v1291 = vpack.c.bf16 %v1275, %v1275
      %v1292 = vpack.c.bf16 %v1276, %v1276
      %v1293 = vpack.c.bf16 %v1277, %v1277
      %v1294 = vpack.c.bf16 %v1278, %v1278
      %v1295 = vpack.c.bf16 %v1279, %v1279
      %v1296 = vpack.c.bf16 %v1280, %v1280
      %v1297 = vpack.c.bf16 %v1281, %v1281
      %v1298 = vpack.c.bf16 %v1282, %v1282
      %v1299 = vpack.c.bf16 %v1283, %v1283
      %v1300 = vpack.c.bf16 %v1284, %v1284
      %v1301 = vpack.c.bf16 %v1285, %v1285
      %v1302 = vpack.c.bf16 %v1286, %v1286
      %v1303 = vpack.c.bf16 %v1287, %v1287
      %v1304 = vld [vmem:[%s9] sm:$0xf]
      %v1305 = vld [vmem:[%s9 + $0x4] sm:$0xf]
      %v1306 = vld [vmem:[%s9 + $0x8] sm:$0xf]
      %v1307 = vld [vmem:[%s9 + $0xc] sm:$0xf]
      %v1308 = vld [vmem:[%s9 + $0x10] sm:$0xf]
      %v1309 = vld [vmem:[%s9 + $0x14] sm:$0xf]
      %v1310 = vld [vmem:[%s9 + $0x18] sm:$0xf]
      %v1311 = vld [vmem:[%s9 + $0x1c] sm:$0xf]
      %v1312 = vld [vmem:[%s9 + $0x20] sm:$0xf]
      %v1313 = vld [vmem:[%s9 + $0x24] sm:$0xf]
      %v1314 = vld [vmem:[%s9 + $0x28] sm:$0xf]
      %v1315 = vld [vmem:[%s9 + $0x2c] sm:$0xf]
      %v1316 = vld [vmem:[%s9 + $0x30] sm:$0xf]
      %v1317 = vld [vmem:[%s9 + $0x34] sm:$0xf]
      %v1318 = vld [vmem:[%s9 + $0x38] sm:$0xf]
      %v1319 = vld [vmem:[%s9 + $0x3c] sm:$0xf]
      %v1320 = vld [vmem:[%s9 + $0x40] sm:$0xf]
      %v1321 = vld [vmem:[%s9 + $0x44] sm:$0xf]
      %v1322 = vld [vmem:[%s9 + $0x48] sm:$0xf]
      %v1323 = vld [vmem:[%s9 + $0x4c] sm:$0xf]
      %v1324 = vld [vmem:[%s9 + $0x50] sm:$0xf]
      %v1325 = vld [vmem:[%s9 + $0x54] sm:$0xf]
      %v1326 = vld [vmem:[%s9 + $0x58] sm:$0xf]
      %v1327 = vld [vmem:[%s9 + $0x5c] sm:$0xf]
      %v1328 = vld [vmem:[%s9 + $0x60] sm:$0xf]
      %v1329 = vld [vmem:[%s9 + $0x64] sm:$0xf]
      %v1330 = vld [vmem:[%s9 + $0x68] sm:$0xf]
      %v1331 = vld [vmem:[%s9 + $0x6c] sm:$0xf]
      %v1332 = vld [vmem:[%s9 + $0x70] sm:$0xf]
      %v1333 = vld [vmem:[%s9 + $0x74] sm:$0xf]
      %v1334 = vld [vmem:[%s9 + $0x78] sm:$0xf]
      %v1335 = vld [vmem:[%s9 + $0x7c] sm:$0xf]
      %v1336 = vld [vmem:[%s9 + $0x80] sm:$0xf]
      %v1337 = vld [vmem:[%s9 + $0x84] sm:$0xf]
      %v1338 = vld [vmem:[%s9 + $0x88] sm:$0xf]
      %v1339 = vld [vmem:[%s9 + $0x8c] sm:$0xf]
      %v1340 = vld [vmem:[%s9 + $0x90] sm:$0xf]
      %v1341 = vld [vmem:[%s9 + $0x94] sm:$0xf]
      %v1342 = vld [vmem:[%s9 + $0x98] sm:$0xf]
      %v1343 = vld [vmem:[%s9 + $0x9c] sm:$0xf]
      %v1344 = vld [vmem:[%s9 + $0xa0] sm:$0xf]
      %v1345 = vld [vmem:[%s9 + $0xa4] sm:$0xf]
      %v1346 = vld [vmem:[%s9 + $0xa8] sm:$0xf]
      %v1347 = vld [vmem:[%s9 + $0xac] sm:$0xf]
      %v1348 = vld [vmem:[%s9 + $0xb0] sm:$0xf]
      %v1349 = vld [vmem:[%s9 + $0xb4] sm:$0xf]
      %v1350 = vld [vmem:[%s9 + $0xb8] sm:$0xf]
      %v1351 = vld [vmem:[%s9 + $0xbc] sm:$0xf]
      %v1352 = vld [vmem:[%s9 + $0xc0] sm:$0xf]
      %v1353 = vld [vmem:[%s9 + $0xc4] sm:$0xf]
      %v1354 = vld [vmem:[%s9 + $0xc8] sm:$0xf]
      %v1355 = vld [vmem:[%s9 + $0xcc] sm:$0xf]
      %v1356 = vld [vmem:[%s9 + $0xd0] sm:$0xf]
      %v1357 = vld [vmem:[%s9 + $0xd4] sm:$0xf]
      %v1358 = vld [vmem:[%s9 + $0xd8] sm:$0xf]
      %v1359 = vld [vmem:[%s9 + $0xdc] sm:$0xf]
      %v1360 = vld [vmem:[%s9 + $0xe0] sm:$0xf]
      %v1361 = vld [vmem:[%s9 + $0xe4] sm:$0xf]
      %v1362 = vld [vmem:[%s9 + $0xe8] sm:$0xf]
      %v1363 = vld [vmem:[%s9 + $0xec] sm:$0xf]
      %v1364 = vld [vmem:[%s9 + $0xf0] sm:$0xf]
      %v1365 = vld [vmem:[%s9 + $0xf4] sm:$0xf]
      %v1366 = vld [vmem:[%s9 + $0xf8] sm:$0xf]
      %v1367 = vld [vmem:[%s9 + $0xfc] sm:$0xf]
      %v1368 = vld [vmem:[%s9 + $0x100] sm:$0xf]
      %v1369 = vld [vmem:[%s9 + $0x104] sm:$0xf]
      %v1370 = vld [vmem:[%s9 + $0x108] sm:$0xf]
      %v1371 = vld [vmem:[%s9 + $0x10c] sm:$0xf]
      %v1372 = vld [vmem:[%s9 + $0x110] sm:$0xf]
      %v1373 = vld [vmem:[%s9 + $0x114] sm:$0xf]
      %v1374 = vld [vmem:[%s9 + $0x118] sm:$0xf]
      %v1375 = vld [vmem:[%s9 + $0x11c] sm:$0xf]
      %v1376 = vld [vmem:[%s9 + $0x120] sm:$0xf]
      %v1377 = vld [vmem:[%s9 + $0x124] sm:$0xf]
      %v1378 = vld [vmem:[%s9 + $0x128] sm:$0xf]
      %v1379 = vld [vmem:[%s9 + $0x12c] sm:$0xf]
      %v1380 = vld [vmem:[%s9 + $0x130] sm:$0xf]
      %v1381 = vld [vmem:[%s9 + $0x134] sm:$0xf]
      %v1382 = vld [vmem:[%s9 + $0x138] sm:$0xf]
      %v1383 = vld [vmem:[%s9 + $0x13c] sm:$0xf]
      %v1384 = vld [vmem:[%s9 + $0x140] sm:$0xf]
      %v1385 = vld [vmem:[%s9 + $0x144] sm:$0xf]
      %v1386 = vld [vmem:[%s9 + $0x148] sm:$0xf]
      %v1387 = vld [vmem:[%s9 + $0x14c] sm:$0xf]
      %v1388 = vld [vmem:[%s9 + $0x150] sm:$0xf]
      %v1389 = vld [vmem:[%s9 + $0x154] sm:$0xf]
      %v1390 = vld [vmem:[%s9 + $0x158] sm:$0xf]
      %v1391 = vld [vmem:[%s9 + $0x15c] sm:$0xf]
      %v1392 = vld [vmem:[%s9 + $0x160] sm:$0xf]
      %v1393 = vld [vmem:[%s9 + $0x164] sm:$0xf]
      %v1394 = vld [vmem:[%s9 + $0x168] sm:$0xf]
      %v1395 = vld [vmem:[%s9 + $0x16c] sm:$0xf]
      %v1396 = vld [vmem:[%s9 + $0x170] sm:$0xf]
      %v1397 = vld [vmem:[%s9 + $0x174] sm:$0xf]
      %v1398 = vld [vmem:[%s9 + $0x178] sm:$0xf]
      %v1399 = vld [vmem:[%s9 + $0x17c] sm:$0xf]
      %v1400 = vld [vmem:[%s9 + $0x180] sm:$0xf]
      %v1401 = vld [vmem:[%s9 + $0x184] sm:$0xf]
      %v1402 = vld [vmem:[%s9 + $0x188] sm:$0xf]
      %v1403 = vld [vmem:[%s9 + $0x18c] sm:$0xf]
      %v1404 = vld [vmem:[%s9 + $0x190] sm:$0xf]
      %v1405 = vld [vmem:[%s9 + $0x194] sm:$0xf]
      %v1406 = vld [vmem:[%s9 + $0x198] sm:$0xf]
      %v1407 = vld [vmem:[%s9 + $0x19c] sm:$0xf]
      %v1408 = vld [vmem:[%s9 + $0x1a0] sm:$0xf]
      %v1409 = vld [vmem:[%s9 + $0x1a4] sm:$0xf]
      %v1410 = vld [vmem:[%s9 + $0x1a8] sm:$0xf]
      %v1411 = vld [vmem:[%s9 + $0x1ac] sm:$0xf]
      %v1412 = vld [vmem:[%s9 + $0x1b0] sm:$0xf]
      %v1413 = vld [vmem:[%s9 + $0x1b4] sm:$0xf]
      %v1414 = vld [vmem:[%s9 + $0x1b8] sm:$0xf]
      %v1415 = vld [vmem:[%s9 + $0x1bc] sm:$0xf]
      %v1416 = vld [vmem:[%s9 + $0x1c0] sm:$0xf]
      %v1417 = vld [vmem:[%s9 + $0x1c4] sm:$0xf]
      %v1418 = vld [vmem:[%s9 + $0x1c8] sm:$0xf]
      %v1419 = vld [vmem:[%s9 + $0x1cc] sm:$0xf]
      %v1420 = vld [vmem:[%s9 + $0x1d0] sm:$0xf]
      %v1421 = vld [vmem:[%s9 + $0x1d4] sm:$0xf]
      %v1422 = vld [vmem:[%s9 + $0x1d8] sm:$0xf]
      %v1423 = vld [vmem:[%s9 + $0x1dc] sm:$0xf]
      %v1424 = vld [vmem:[%s9 + $0x1e0] sm:$0xf]
      %v1425 = vld [vmem:[%s9 + $0x1e4] sm:$0xf]
      %v1426 = vld [vmem:[%s9 + $0x1e8] sm:$0xf]
      %v1427 = vld [vmem:[%s9 + $0x1ec] sm:$0xf]
      %v1428 = vld [vmem:[%s9 + $0x1f0] sm:$0xf]
      %v1429 = vld [vmem:[%s9 + $0x1f4] sm:$0xf]
      %v1430 = vld [vmem:[%s9 + $0x1f8] sm:$0xf]
      %v1431 = vld [vmem:[%s9 + $0x1fc] sm:$0xf]
      %v1432 = vld [vmem:[%s9 + $0x200] sm:$0xf]
      %v1433 = vld [vmem:[%s9 + $0x204] sm:$0xf]
      %v1434 = vld [vmem:[%s9 + $0x208] sm:$0xf]
      %v1435 = vld [vmem:[%s9 + $0x20c] sm:$0xf]
      %v1436 = vld [vmem:[%s9 + $0x210] sm:$0xf]
      %v1437 = vld [vmem:[%s9 + $0x214] sm:$0xf]
      %v1438 = vld [vmem:[%s9 + $0x218] sm:$0xf]
      %v1439 = vld [vmem:[%s9 + $0x21c] sm:$0xf]
      %v1440 = vld [vmem:[%s9 + $0x220] sm:$0xf]
      %v1441 = vld [vmem:[%s9 + $0x224] sm:$0xf]
      %v1442 = vld [vmem:[%s9 + $0x228] sm:$0xf]
      %v1443 = vld [vmem:[%s9 + $0x22c] sm:$0xf]
      %v1444 = vld [vmem:[%s9 + $0x230] sm:$0xf]
      %v1445 = vld [vmem:[%s9 + $0x234] sm:$0xf]
      %v1446 = vld [vmem:[%s9 + $0x238] sm:$0xf]
      %v1447 = vld [vmem:[%s9 + $0x23c] sm:$0xf]
      %v1448 = vld [vmem:[%s9 + $0x240] sm:$0xf]
      %v1449 = vld [vmem:[%s9 + $0x244] sm:$0xf]
      %v1450 = vld [vmem:[%s9 + $0x248] sm:$0xf]
      %v1451 = vld [vmem:[%s9 + $0x24c] sm:$0xf]
      %v1452 = vld [vmem:[%s9 + $0x250] sm:$0xf]
      %v1453 = vld [vmem:[%s9 + $0x254] sm:$0xf]
      %v1454 = vld [vmem:[%s9 + $0x258] sm:$0xf]
      %v1455 = vld [vmem:[%s9 + $0x25c] sm:$0xf]
      %v1456 = vld [vmem:[%s9 + $0x260] sm:$0xf]
      %v1457 = vld [vmem:[%s9 + $0x264] sm:$0xf]
      %v1458 = vld [vmem:[%s9 + $0x268] sm:$0xf]
      %v1459 = vld [vmem:[%s9 + $0x26c] sm:$0xf]
      %v1460 = vld [vmem:[%s9 + $0x270] sm:$0xf]
      %v1461 = vld [vmem:[%s9 + $0x274] sm:$0xf]
      %v1462 = vld [vmem:[%s9 + $0x278] sm:$0xf]
      %v1463 = vld [vmem:[%s9 + $0x27c] sm:$0xf]
      %v1464 = vld [vmem:[%s9 + $0x280] sm:$0xf]
      %v1465 = vld [vmem:[%s9 + $0x284] sm:$0xf]
      %v1466 = vld [vmem:[%s9 + $0x288] sm:$0xf]
      %v1467 = vld [vmem:[%s9 + $0x28c] sm:$0xf]
      %v1468 = vld [vmem:[%s9 + $0x290] sm:$0xf]
      %v1469 = vld [vmem:[%s9 + $0x294] sm:$0xf]
      %v1470 = vld [vmem:[%s9 + $0x298] sm:$0xf]
      %v1471 = vld [vmem:[%s9 + $0x29c] sm:$0xf]
      %v1472 = vld [vmem:[%s9 + $0x2a0] sm:$0xf]
      %v1473 = vld [vmem:[%s9 + $0x2a4] sm:$0xf]
      %v1474 = vld [vmem:[%s9 + $0x2a8] sm:$0xf]
      %v1475 = vld [vmem:[%s9 + $0x2ac] sm:$0xf]
      %v1476 = vld [vmem:[%s9 + $0x2b0] sm:$0xf]
      %v1477 = vld [vmem:[%s9 + $0x2b4] sm:$0xf]
      %v1478 = vld [vmem:[%s9 + $0x2b8] sm:$0xf]
      %v1479 = vld [vmem:[%s9 + $0x2bc] sm:$0xf]
      %v1480 = vld [vmem:[%s9 + $0x2c0] sm:$0xf]
      %v1481 = vld [vmem:[%s9 + $0x2c4] sm:$0xf]
      %v1482 = vld [vmem:[%s9 + $0x2c8] sm:$0xf]
      %v1483 = vld [vmem:[%s9 + $0x2cc] sm:$0xf]
      %v1484 = vld [vmem:[%s9 + $0x2d0] sm:$0xf]
      %v1485 = vld [vmem:[%s9 + $0x2d4] sm:$0xf]
      %v1486 = vld [vmem:[%s9 + $0x2d8] sm:$0xf]
      %v1487 = vld [vmem:[%s9 + $0x2dc] sm:$0xf]
      %v1488 = vld [vmem:[%s9 + $0x2e0] sm:$0xf]
      %v1489 = vld [vmem:[%s9 + $0x2e4] sm:$0xf]
      %v1490 = vld [vmem:[%s9 + $0x2e8] sm:$0xf]
      %v1491 = vld [vmem:[%s9 + $0x2ec] sm:$0xf]
      %v1492 = vld [vmem:[%s9 + $0x2f0] sm:$0xf]
      %v1493 = vld [vmem:[%s9 + $0x2f4] sm:$0xf]
      %v1494 = vld [vmem:[%s9 + $0x2f8] sm:$0xf]
      %v1495 = vld [vmem:[%s9 + $0x2fc] sm:$0xf]
      %v1496 = vld [vmem:[%s9 + $0x300] sm:$0xf]
      %v1497 = vld [vmem:[%s9 + $0x304] sm:$0xf]
      %v1498 = vld [vmem:[%s9 + $0x308] sm:$0xf]
      %v1499 = vld [vmem:[%s9 + $0x30c] sm:$0xf]
      %v1500 = vld [vmem:[%s9 + $0x310] sm:$0xf]
      %v1501 = vld [vmem:[%s9 + $0x314] sm:$0xf]
      %v1502 = vld [vmem:[%s9 + $0x318] sm:$0xf]
      %v1503 = vld [vmem:[%s9 + $0x31c] sm:$0xf]
      %v1504 = vld [vmem:[%s9 + $0x320] sm:$0xf]
      %v1505 = vld [vmem:[%s9 + $0x324] sm:$0xf]
      %v1506 = vld [vmem:[%s9 + $0x328] sm:$0xf]
      %v1507 = vld [vmem:[%s9 + $0x32c] sm:$0xf]
      %v1508 = vld [vmem:[%s9 + $0x330] sm:$0xf]
      %v1509 = vld [vmem:[%s9 + $0x334] sm:$0xf]
      %v1510 = vld [vmem:[%s9 + $0x338] sm:$0xf]
      %v1511 = vld [vmem:[%s9 + $0x33c] sm:$0xf]
      %v1512 = vld [vmem:[%s9 + $0x340] sm:$0xf]
      %v1513 = vld [vmem:[%s9 + $0x344] sm:$0xf]
      %v1514 = vld [vmem:[%s9 + $0x348] sm:$0xf]
      %v1515 = vld [vmem:[%s9 + $0x34c] sm:$0xf]
      %v1516 = vld [vmem:[%s9 + $0x350] sm:$0xf]
      %v1517 = vld [vmem:[%s9 + $0x354] sm:$0xf]
      %v1518 = vld [vmem:[%s9 + $0x358] sm:$0xf]
      %v1519 = vld [vmem:[%s9 + $0x35c] sm:$0xf]
      %v1520 = vld [vmem:[%s9 + $0x360] sm:$0xf]
      %v1521 = vld [vmem:[%s9 + $0x364] sm:$0xf]
      %v1522 = vld [vmem:[%s9 + $0x368] sm:$0xf]
      %v1523 = vld [vmem:[%s9 + $0x36c] sm:$0xf]
      %v1524 = vld [vmem:[%s9 + $0x370] sm:$0xf]
      %v1525 = vld [vmem:[%s9 + $0x374] sm:$0xf]
      %v1526 = vld [vmem:[%s9 + $0x378] sm:$0xf]
      %v1527 = vld [vmem:[%s9 + $0x37c] sm:$0xf]
      %v1528 = vld [vmem:[%s9 + $0x380] sm:$0xf]
      %v1529 = vld [vmem:[%s9 + $0x384] sm:$0xf]
      %v1530 = vld [vmem:[%s9 + $0x388] sm:$0xf]
      %v1531 = vld [vmem:[%s9 + $0x38c] sm:$0xf]
      %v1532 = vld [vmem:[%s9 + $0x390] sm:$0xf]
      %v1533 = vld [vmem:[%s9 + $0x394] sm:$0xf]
      %v1534 = vld [vmem:[%s9 + $0x398] sm:$0xf]
      %v1535 = vld [vmem:[%s9 + $0x39c] sm:$0xf]
      %v1536 = vld [vmem:[%s9 + $0x3a0] sm:$0xf]
      %v1537 = vld [vmem:[%s9 + $0x3a4] sm:$0xf]
      %v1538 = vld [vmem:[%s9 + $0x3a8] sm:$0xf]
      %v1539 = vld [vmem:[%s9 + $0x3ac] sm:$0xf]
      %v1540 = vld [vmem:[%s9 + $0x3b0] sm:$0xf]
      %v1541 = vld [vmem:[%s9 + $0x3b4] sm:$0xf]
      %v1542 = vld [vmem:[%s9 + $0x3b8] sm:$0xf]
      %v1543 = vld [vmem:[%s9 + $0x3bc] sm:$0xf]
      %v1544 = vld [vmem:[%s9 + $0x3c0] sm:$0xf]
      %v1545 = vld [vmem:[%s9 + $0x3c4] sm:$0xf]
      %v1546 = vld [vmem:[%s9 + $0x3c8] sm:$0xf]
      %v1547 = vld [vmem:[%s9 + $0x3cc] sm:$0xf]
      %v1548 = vld [vmem:[%s9 + $0x3d0] sm:$0xf]
      %v1549 = vld [vmem:[%s9 + $0x3d4] sm:$0xf]
      %v1550 = vld [vmem:[%s9 + $0x3d8] sm:$0xf]
      %v1551 = vld [vmem:[%s9 + $0x3dc] sm:$0xf]
      %v1552 = vld [vmem:[%s9 + $0x3e0] sm:$0xf]
      %v1553 = vld [vmem:[%s9 + $0x3e4] sm:$0xf]
      %v1554 = vld [vmem:[%s9 + $0x3e8] sm:$0xf]
      %v1555 = vld [vmem:[%s9 + $0x3ec] sm:$0xf]
      %v1556 = vld [vmem:[%s9 + $0x3f0] sm:$0xf]
      %v1557 = vld [vmem:[%s9 + $0x3f4] sm:$0xf]
      %v1558 = vld [vmem:[%s9 + $0x3f8] sm:$0xf]
      %v1559 = vld [vmem:[%s9 + $0x3fc] sm:$0xf]
      %v1560 = vld [vmem:[%s10] sm:$0x1]
      %v1562 = vperm.slane %v1560, 0
      %v1820 = vunpack.c.l.b16 %v1304
      %v1821 = vunpack.c.l.b16 %v1305
      %v1822 = vunpack.c.l.b16 %v1306
      %v1823 = vunpack.c.l.b16 %v1307
      %v1824 = vunpack.c.l.b16 %v1308
      %v1825 = vunpack.c.l.b16 %v1309
      %v1826 = vunpack.c.l.b16 %v1310
      %v1827 = vunpack.c.l.b16 %v1311
      %v1828 = vunpack.c.l.b16 %v1312
      %v1829 = vunpack.c.l.b16 %v1313
      %v1830 = vunpack.c.l.b16 %v1314
      %v1831 = vunpack.c.l.b16 %v1315
      %v1832 = vunpack.c.l.b16 %v1316
      %v1833 = vunpack.c.l.b16 %v1317
      %v1834 = vunpack.c.l.b16 %v1318
      %v1835 = vunpack.c.l.b16 %v1319
      %v1836 = vunpack.c.l.b16 %v1320
      %v1837 = vunpack.c.l.b16 %v1321
      %v1838 = vunpack.c.l.b16 %v1322
      %v1839 = vunpack.c.l.b16 %v1323
      %v1840 = vunpack.c.l.b16 %v1324
      %v1841 = vunpack.c.l.b16 %v1325
      %v1842 = vunpack.c.l.b16 %v1326
      %v1843 = vunpack.c.l.b16 %v1327
      %v1844 = vunpack.c.l.b16 %v1328
      %v1845 = vunpack.c.l.b16 %v1329
      %v1846 = vunpack.c.l.b16 %v1330
      %v1847 = vunpack.c.l.b16 %v1331
      %v1848 = vunpack.c.l.b16 %v1332
      %v1849 = vunpack.c.l.b16 %v1333
      %v1850 = vunpack.c.l.b16 %v1334
      %v1851 = vunpack.c.l.b16 %v1335
      %v1852 = vunpack.c.l.b16 %v1336
      %v1853 = vunpack.c.l.b16 %v1337
      %v1854 = vunpack.c.l.b16 %v1338
      %v1855 = vunpack.c.l.b16 %v1339
      %v1856 = vunpack.c.l.b16 %v1340
      %v1857 = vunpack.c.l.b16 %v1341
      %v1858 = vunpack.c.l.b16 %v1342
      %v1859 = vunpack.c.l.b16 %v1343
      %v1860 = vunpack.c.l.b16 %v1344
      %v1861 = vunpack.c.l.b16 %v1345
      %v1862 = vunpack.c.l.b16 %v1346
      %v1863 = vunpack.c.l.b16 %v1347
      %v1864 = vunpack.c.l.b16 %v1348
      %v1865 = vunpack.c.l.b16 %v1349
      %v1866 = vunpack.c.l.b16 %v1350
      %v1867 = vunpack.c.l.b16 %v1351
      %v1868 = vunpack.c.l.b16 %v1352
      %v1869 = vunpack.c.l.b16 %v1353
      %v1870 = vunpack.c.l.b16 %v1354
      %v1871 = vunpack.c.l.b16 %v1355
      %v1872 = vunpack.c.l.b16 %v1356
      %v1873 = vunpack.c.l.b16 %v1357
      %v1874 = vunpack.c.l.b16 %v1358
      %v1875 = vunpack.c.l.b16 %v1359
      %v1876 = vunpack.c.l.b16 %v1360
      %v1877 = vunpack.c.l.b16 %v1361
      %v1878 = vunpack.c.l.b16 %v1362
      %v1879 = vunpack.c.l.b16 %v1363
      %v1880 = vunpack.c.l.b16 %v1364
      %v1881 = vunpack.c.l.b16 %v1365
      %v1882 = vunpack.c.l.b16 %v1366
      %v1883 = vunpack.c.l.b16 %v1367
      %v1884 = vunpack.c.l.b16 %v1368
      %v1885 = vunpack.c.l.b16 %v1369
      %v1886 = vunpack.c.l.b16 %v1370
      %v1887 = vunpack.c.l.b16 %v1371
      %v1888 = vunpack.c.l.b16 %v1372
      %v1889 = vunpack.c.l.b16 %v1373
      %v1890 = vunpack.c.l.b16 %v1374
      %v1891 = vunpack.c.l.b16 %v1375
      %v1892 = vunpack.c.l.b16 %v1376
      %v1893 = vunpack.c.l.b16 %v1377
      %v1894 = vunpack.c.l.b16 %v1378
      %v1895 = vunpack.c.l.b16 %v1379
      %v1896 = vunpack.c.l.b16 %v1380
      %v1897 = vunpack.c.l.b16 %v1381
      %v1898 = vunpack.c.l.b16 %v1382
      %v1899 = vunpack.c.l.b16 %v1383
      %v1900 = vunpack.c.l.b16 %v1384
      %v1901 = vunpack.c.l.b16 %v1385
      %v1902 = vunpack.c.l.b16 %v1386
      %v1903 = vunpack.c.l.b16 %v1387
      %v1904 = vunpack.c.l.b16 %v1388
      %v1905 = vunpack.c.l.b16 %v1389
      %v1906 = vunpack.c.l.b16 %v1390
      %v1907 = vunpack.c.l.b16 %v1391
      %v1908 = vunpack.c.l.b16 %v1392
      %v1909 = vunpack.c.l.b16 %v1393
      %v1910 = vunpack.c.l.b16 %v1394
      %v1911 = vunpack.c.l.b16 %v1395
      %v1912 = vunpack.c.l.b16 %v1396
      %v1913 = vunpack.c.l.b16 %v1397
      %v1914 = vunpack.c.l.b16 %v1398
      %v1915 = vunpack.c.l.b16 %v1399
      %v1916 = vunpack.c.l.b16 %v1400
      %v1917 = vunpack.c.l.b16 %v1401
      %v1918 = vunpack.c.l.b16 %v1402
      %v1919 = vunpack.c.l.b16 %v1403
      %v1920 = vunpack.c.l.b16 %v1404
      %v1921 = vunpack.c.l.b16 %v1405
      %v1922 = vunpack.c.l.b16 %v1406
      %v1923 = vunpack.c.l.b16 %v1407
      %v1924 = vunpack.c.l.b16 %v1408
      %v1925 = vunpack.c.l.b16 %v1409
      %v1926 = vunpack.c.l.b16 %v1410
      %v1927 = vunpack.c.l.b16 %v1411
      %v1928 = vunpack.c.l.b16 %v1412
      %v1929 = vunpack.c.l.b16 %v1413
      %v1930 = vunpack.c.l.b16 %v1414
      %v1931 = vunpack.c.l.b16 %v1415
      %v1932 = vunpack.c.l.b16 %v1416
      %v1933 = vunpack.c.l.b16 %v1417
      %v1934 = vunpack.c.l.b16 %v1418
      %v1935 = vunpack.c.l.b16 %v1419
      %v1936 = vunpack.c.l.b16 %v1420
      %v1937 = vunpack.c.l.b16 %v1421
      %v1938 = vunpack.c.l.b16 %v1422
      %v1939 = vunpack.c.l.b16 %v1423
      %v1940 = vunpack.c.l.b16 %v1424
      %v1941 = vunpack.c.l.b16 %v1425
      %v1942 = vunpack.c.l.b16 %v1426
      %v1943 = vunpack.c.l.b16 %v1427
      %v1944 = vunpack.c.l.b16 %v1428
      %v1945 = vunpack.c.l.b16 %v1429
      %v1946 = vunpack.c.l.b16 %v1430
      %v1947 = vunpack.c.l.b16 %v1431
      %v1948 = vunpack.c.l.b16 %v1432
      %v1949 = vunpack.c.l.b16 %v1433
      %v1950 = vunpack.c.l.b16 %v1434
      %v1951 = vunpack.c.l.b16 %v1435
      %v1952 = vunpack.c.l.b16 %v1436
      %v1953 = vunpack.c.l.b16 %v1437
      %v1954 = vunpack.c.l.b16 %v1438
      %v1955 = vunpack.c.l.b16 %v1439
      %v1956 = vunpack.c.l.b16 %v1440
      %v1957 = vunpack.c.l.b16 %v1441
      %v1958 = vunpack.c.l.b16 %v1442
      %v1959 = vunpack.c.l.b16 %v1443
      %v1960 = vunpack.c.l.b16 %v1444
      %v1961 = vunpack.c.l.b16 %v1445
      %v1962 = vunpack.c.l.b16 %v1446
      %v1963 = vunpack.c.l.b16 %v1447
      %v1964 = vunpack.c.l.b16 %v1448
      %v1965 = vunpack.c.l.b16 %v1449
      %v1966 = vunpack.c.l.b16 %v1450
      %v1967 = vunpack.c.l.b16 %v1451
      %v1968 = vunpack.c.l.b16 %v1452
      %v1969 = vunpack.c.l.b16 %v1453
      %v1970 = vunpack.c.l.b16 %v1454
      %v1971 = vunpack.c.l.b16 %v1455
      %v1972 = vunpack.c.l.b16 %v1456
      %v1973 = vunpack.c.l.b16 %v1457
      %v1974 = vunpack.c.l.b16 %v1458
      %v1975 = vunpack.c.l.b16 %v1459
      %v1976 = vunpack.c.l.b16 %v1460
      %v1977 = vunpack.c.l.b16 %v1461
      %v1978 = vunpack.c.l.b16 %v1462
      %v1979 = vunpack.c.l.b16 %v1463
      %v1980 = vunpack.c.l.b16 %v1464
      %v1981 = vunpack.c.l.b16 %v1465
      %v1982 = vunpack.c.l.b16 %v1466
      %v1983 = vunpack.c.l.b16 %v1467
      %v1984 = vunpack.c.l.b16 %v1468
      %v1985 = vunpack.c.l.b16 %v1469
      %v1986 = vunpack.c.l.b16 %v1470
      %v1987 = vunpack.c.l.b16 %v1471
      %v1988 = vunpack.c.l.b16 %v1472
      %v1989 = vunpack.c.l.b16 %v1473
      %v1990 = vunpack.c.l.b16 %v1474
      %v1991 = vunpack.c.l.b16 %v1475
      %v1992 = vunpack.c.l.b16 %v1476
      %v1993 = vunpack.c.l.b16 %v1477
      %v1994 = vunpack.c.l.b16 %v1478
      %v1995 = vunpack.c.l.b16 %v1479
      %v1996 = vunpack.c.l.b16 %v1480
      %v1997 = vunpack.c.l.b16 %v1481
      %v1998 = vunpack.c.l.b16 %v1482
      %v1999 = vunpack.c.l.b16 %v1483
      %v2000 = vunpack.c.l.b16 %v1484
      %v2001 = vunpack.c.l.b16 %v1485
      %v2002 = vunpack.c.l.b16 %v1486
      %v2003 = vunpack.c.l.b16 %v1487
      %v2004 = vunpack.c.l.b16 %v1488
      %v2005 = vunpack.c.l.b16 %v1489
      %v2006 = vunpack.c.l.b16 %v1490
      %v2007 = vunpack.c.l.b16 %v1491
      %v2008 = vunpack.c.l.b16 %v1492
      %v2009 = vunpack.c.l.b16 %v1493
      %v2010 = vunpack.c.l.b16 %v1494
      %v2011 = vunpack.c.l.b16 %v1495
      %v2012 = vunpack.c.l.b16 %v1496
      %v2013 = vunpack.c.l.b16 %v1497
      %v2014 = vunpack.c.l.b16 %v1498
      %v2015 = vunpack.c.l.b16 %v1499
      %v2016 = vunpack.c.l.b16 %v1500
      %v2017 = vunpack.c.l.b16 %v1501
      %v2018 = vunpack.c.l.b16 %v1502
      %v2019 = vunpack.c.l.b16 %v1503
      %v2020 = vunpack.c.l.b16 %v1504
      %v2021 = vunpack.c.l.b16 %v1505
      %v2022 = vunpack.c.l.b16 %v1506
      %v2023 = vunpack.c.l.b16 %v1507
      %v2024 = vunpack.c.l.b16 %v1508
      %v2025 = vunpack.c.l.b16 %v1509
      %v2026 = vunpack.c.l.b16 %v1510
      %v2027 = vunpack.c.l.b16 %v1511
      %v2028 = vunpack.c.l.b16 %v1512
      %v2029 = vunpack.c.l.b16 %v1513
      %v2030 = vunpack.c.l.b16 %v1514
      %v2031 = vunpack.c.l.b16 %v1515
      %v2032 = vunpack.c.l.b16 %v1516
      %v2033 = vunpack.c.l.b16 %v1517
      %v2034 = vunpack.c.l.b16 %v1518
      %v2035 = vunpack.c.l.b16 %v1519
      %v2036 = vunpack.c.l.b16 %v1520
      %v2037 = vunpack.c.l.b16 %v1521
      %v2038 = vunpack.c.l.b16 %v1522
      %v2039 = vunpack.c.l.b16 %v1523
      %v2040 = vunpack.c.l.b16 %v1524
      %v2041 = vunpack.c.l.b16 %v1525
      %v2042 = vunpack.c.l.b16 %v1526
      %v2043 = vunpack.c.l.b16 %v1527
      %v2044 = vunpack.c.l.b16 %v1528
      %v2045 = vunpack.c.l.b16 %v1529
      %v2046 = vunpack.c.l.b16 %v1530
      %v2047 = vunpack.c.l.b16 %v1531
      %v2048 = vunpack.c.l.b16 %v1532
      %v2049 = vunpack.c.l.b16 %v1533
      %v2050 = vunpack.c.l.b16 %v1534
      %v2051 = vunpack.c.l.b16 %v1535
      %v2052 = vunpack.c.l.b16 %v1536
      %v2053 = vunpack.c.l.b16 %v1537
      %v2054 = vunpack.c.l.b16 %v1538
      %v2055 = vunpack.c.l.b16 %v1539
      %v2056 = vunpack.c.l.b16 %v1540
      %v2057 = vunpack.c.l.b16 %v1541
      %v2058 = vunpack.c.l.b16 %v1542
      %v2059 = vunpack.c.l.b16 %v1543
      %v2060 = vunpack.c.l.b16 %v1544
      %v2061 = vunpack.c.l.b16 %v1545
      %v2062 = vunpack.c.l.b16 %v1546
      %v2063 = vunpack.c.l.b16 %v1547
      %v2064 = vunpack.c.l.b16 %v1548
      %v2065 = vunpack.c.l.b16 %v1549
      %v2066 = vunpack.c.l.b16 %v1550
      %v2067 = vunpack.c.l.b16 %v1551
      %v2068 = vunpack.c.l.b16 %v1552
      %v2069 = vunpack.c.l.b16 %v1553
      %v2070 = vunpack.c.l.b16 %v1554
      %v2071 = vunpack.c.l.b16 %v1555
      %v2072 = vunpack.c.l.b16 %v1556
      %v2073 = vunpack.c.l.b16 %v1557
      %v2074 = vunpack.c.l.b16 %v1558
      %v2075 = vunpack.c.l.b16 %v1559
      %v2076 = vpack.c.b16 %v1821, %v1820
      %v2077 = vpack.c.b16 %v1823, %v1822
      %v2078 = vpack.c.b16 %v1825, %v1824
      %v2079 = vpack.c.b16 %v1827, %v1826
      %v2080 = vpack.c.b16 %v1829, %v1828
      %v2081 = vpack.c.b16 %v1831, %v1830
      %v2082 = vpack.c.b16 %v1833, %v1832
      %v2083 = vpack.c.b16 %v1835, %v1834
      %v2084 = vpack.c.b16 %v1837, %v1836
      %v2085 = vpack.c.b16 %v1839, %v1838
      %v2086 = vpack.c.b16 %v1841, %v1840
      %v2087 = vpack.c.b16 %v1843, %v1842
      %v2088 = vpack.c.b16 %v1845, %v1844
      %v2089 = vpack.c.b16 %v1847, %v1846
      %v2090 = vpack.c.b16 %v1849, %v1848
      %v2091 = vpack.c.b16 %v1851, %v1850
      %v2092 = vpack.c.b16 %v1853, %v1852
      %v2093 = vpack.c.b16 %v1855, %v1854
      %v2094 = vpack.c.b16 %v1857, %v1856
      %v2095 = vpack.c.b16 %v1859, %v1858
      %v2096 = vpack.c.b16 %v1861, %v1860
      %v2097 = vpack.c.b16 %v1863, %v1862
      %v2098 = vpack.c.b16 %v1865, %v1864
      %v2099 = vpack.c.b16 %v1867, %v1866
      %v2100 = vpack.c.b16 %v1869, %v1868
      %v2101 = vpack.c.b16 %v1871, %v1870
      %v2102 = vpack.c.b16 %v1873, %v1872
      %v2103 = vpack.c.b16 %v1875, %v1874
      %v2104 = vpack.c.b16 %v1877, %v1876
      %v2105 = vpack.c.b16 %v1879, %v1878
      %v2106 = vpack.c.b16 %v1881, %v1880
      %v2107 = vpack.c.b16 %v1883, %v1882
      %v2108 = vpack.c.b16 %v1885, %v1884
      %v2109 = vpack.c.b16 %v1887, %v1886
      %v2110 = vpack.c.b16 %v1889, %v1888
      %v2111 = vpack.c.b16 %v1891, %v1890
      %v2112 = vpack.c.b16 %v1893, %v1892
      %v2113 = vpack.c.b16 %v1895, %v1894
      %v2114 = vpack.c.b16 %v1897, %v1896
      %v2115 = vpack.c.b16 %v1899, %v1898
      %v2116 = vpack.c.b16 %v1901, %v1900
      %v2117 = vpack.c.b16 %v1903, %v1902
      %v2118 = vpack.c.b16 %v1905, %v1904
      %v2119 = vpack.c.b16 %v1907, %v1906
      %v2120 = vpack.c.b16 %v1909, %v1908
      %v2121 = vpack.c.b16 %v1911, %v1910
      %v2122 = vpack.c.b16 %v1913, %v1912
      %v2123 = vpack.c.b16 %v1915, %v1914
      %v2124 = vpack.c.b16 %v1917, %v1916
      %v2125 = vpack.c.b16 %v1919, %v1918
      %v2126 = vpack.c.b16 %v1921, %v1920
      %v2127 = vpack.c.b16 %v1923, %v1922
      %v2128 = vpack.c.b16 %v1925, %v1924
      %v2129 = vpack.c.b16 %v1927, %v1926
      %v2130 = vpack.c.b16 %v1929, %v1928
      %v2131 = vpack.c.b16 %v1931, %v1930
      %v2132 = vpack.c.b16 %v1933, %v1932
      %v2133 = vpack.c.b16 %v1935, %v1934
      %v2134 = vpack.c.b16 %v1937, %v1936
      %v2135 = vpack.c.b16 %v1939, %v1938
      %v2136 = vpack.c.b16 %v1941, %v1940
      %v2137 = vpack.c.b16 %v1943, %v1942
      %v2138 = vpack.c.b16 %v1945, %v1944
      %v2139 = vpack.c.b16 %v1947, %v1946
      %v2140 = vpack.c.b16 %v1949, %v1948
      %v2141 = vpack.c.b16 %v1951, %v1950
      %v2142 = vpack.c.b16 %v1953, %v1952
      %v2143 = vpack.c.b16 %v1955, %v1954
      %v2144 = vpack.c.b16 %v1957, %v1956
      %v2145 = vpack.c.b16 %v1959, %v1958
      %v2146 = vpack.c.b16 %v1961, %v1960
      %v2147 = vpack.c.b16 %v1963, %v1962
      %v2148 = vpack.c.b16 %v1965, %v1964
      %v2149 = vpack.c.b16 %v1967, %v1966
      %v2150 = vpack.c.b16 %v1969, %v1968
      %v2151 = vpack.c.b16 %v1971, %v1970
      %v2152 = vpack.c.b16 %v1973, %v1972
      %v2153 = vpack.c.b16 %v1975, %v1974
      %v2154 = vpack.c.b16 %v1977, %v1976
      %v2155 = vpack.c.b16 %v1979, %v1978
      %v2156 = vpack.c.b16 %v1981, %v1980
      %v2157 = vpack.c.b16 %v1983, %v1982
      %v2158 = vpack.c.b16 %v1985, %v1984
      %v2159 = vpack.c.b16 %v1987, %v1986
      %v2160 = vpack.c.b16 %v1989, %v1988
      %v2161 = vpack.c.b16 %v1991, %v1990
      %v2162 = vpack.c.b16 %v1993, %v1992
      %v2163 = vpack.c.b16 %v1995, %v1994
      %v2164 = vpack.c.b16 %v1997, %v1996
      %v2165 = vpack.c.b16 %v1999, %v1998
      %v2166 = vpack.c.b16 %v2001, %v2000
      %v2167 = vpack.c.b16 %v2003, %v2002
      %v2168 = vpack.c.b16 %v2005, %v2004
      %v2169 = vpack.c.b16 %v2007, %v2006
      %v2170 = vpack.c.b16 %v2009, %v2008
      %v2171 = vpack.c.b16 %v2011, %v2010
      %v2172 = vpack.c.b16 %v2013, %v2012
      %v2173 = vpack.c.b16 %v2015, %v2014
      %v2174 = vpack.c.b16 %v2017, %v2016
      %v2175 = vpack.c.b16 %v2019, %v2018
      %v2176 = vpack.c.b16 %v2021, %v2020
      %v2177 = vpack.c.b16 %v2023, %v2022
      %v2178 = vpack.c.b16 %v2025, %v2024
      %v2179 = vpack.c.b16 %v2027, %v2026
      %v2180 = vpack.c.b16 %v2029, %v2028
      %v2181 = vpack.c.b16 %v2031, %v2030
      %v2182 = vpack.c.b16 %v2033, %v2032
      %v2183 = vpack.c.b16 %v2035, %v2034
      %v2184 = vpack.c.b16 %v2037, %v2036
      %v2185 = vpack.c.b16 %v2039, %v2038
      %v2186 = vpack.c.b16 %v2041, %v2040
      %v2187 = vpack.c.b16 %v2043, %v2042
      %v2188 = vpack.c.b16 %v2045, %v2044
      %v2189 = vpack.c.b16 %v2047, %v2046
      %v2190 = vpack.c.b16 %v2049, %v2048
      %v2191 = vpack.c.b16 %v2051, %v2050
      %v2192 = vpack.c.b16 %v2053, %v2052
      %v2193 = vpack.c.b16 %v2055, %v2054
      %v2194 = vpack.c.b16 %v2057, %v2056
      %v2195 = vpack.c.b16 %v2059, %v2058
      %v2196 = vpack.c.b16 %v2061, %v2060
      %v2197 = vpack.c.b16 %v2063, %v2062
      %v2198 = vpack.c.b16 %v2065, %v2064
      %v2199 = vpack.c.b16 %v2067, %v2066
      %v2200 = vpack.c.b16 %v2069, %v2068
      %v2201 = vpack.c.b16 %v2071, %v2070
      %v2202 = vpack.c.b16 %v2073, %v2072
      %v2203 = vpack.c.b16 %v2075, %v2074
      %2332 = vmatpush.bf16.msra.mxu0 %v2083
      %2333 = vmatpush.bf16.msra.mxu0 %v2082
      %2334 = vmatpush.bf16.msra.mxu0 %v2081
      %2335 = vmatpush.bf16.msra.mxu0 %v2080
      %2336 = vmatpush.bf16.msra.mxu0 %v2079
      %2337 = vmatpush.bf16.msra.mxu0 %v2078
      %2338 = vmatpush.bf16.msra.mxu0 %v2077
      %2339 = vmatpush.bf16.msra.mxu0 %v2076
      %2340 = vmatmul.bf16.gmra.mxu0 %v1288
      %v2341 = vpop.f32.mrf.mxu0
      %v2342 = vadd.f32 %v1562, %v2341
      %v2343 = vpop.f32.mrf.mxu0
      %2344 = vdwg.mxu0
      %2345 = vmatpush.bf16.msra.mxu0 %v2091
      %2346 = vmatpush.bf16.msra.mxu0 %v2090
      %2347 = vmatpush.bf16.msra.mxu0 %v2089
      %2348 = vmatpush.bf16.msra.mxu0 %v2088
      %2349 = vmatpush.bf16.msra.mxu0 %v2087
      %2350 = vmatpush.bf16.msra.mxu0 %v2086
      %2351 = vmatpush.bf16.msra.mxu0 %v2085
      %2352 = vmatpush.bf16.msra.mxu0 %v2084
      %2353 = vmatmul.bf16.gmra.mxu0 %v1289
      %v2354 = vpop.f32.mrf.mxu0
      %v2355 = vadd.f32 %v2342, %v2354
      %v2356 = vpop.f32.mrf.mxu0
      %2357 = vdwg.mxu0
      %2358 = vmatpush.bf16.msra.mxu0 %v2099
      %2359 = vmatpush.bf16.msra.mxu0 %v2098
      %2360 = vmatpush.bf16.msra.mxu0 %v2097
      %2361 = vmatpush.bf16.msra.mxu0 %v2096
      %2362 = vmatpush.bf16.msra.mxu0 %v2095
      %2363 = vmatpush.bf16.msra.mxu0 %v2094
      %2364 = vmatpush.bf16.msra.mxu0 %v2093
      %2365 = vmatpush.bf16.msra.mxu0 %v2092
      %2366 = vmatmul.bf16.gmra.mxu0 %v1290
      %v2367 = vpop.f32.mrf.mxu0
      %v2368 = vadd.f32 %v2355, %v2367
      %v2369 = vpop.f32.mrf.mxu0
      %2370 = vdwg.mxu0
      %2371 = vmatpush.bf16.msra.mxu0 %v2107
      %2372 = vmatpush.bf16.msra.mxu0 %v2106
      %2373 = vmatpush.bf16.msra.mxu0 %v2105
      %2374 = vmatpush.bf16.msra.mxu0 %v2104
      %2375 = vmatpush.bf16.msra.mxu0 %v2103
      %2376 = vmatpush.bf16.msra.mxu0 %v2102
      %2377 = vmatpush.bf16.msra.mxu0 %v2101
      %2378 = vmatpush.bf16.msra.mxu0 %v2100
      %2379 = vmatmul.bf16.gmra.mxu0 %v1291
      %v2380 = vpop.f32.mrf.mxu0
      %v2381 = vadd.f32 %v2368, %v2380
      %v2382 = vpop.f32.mrf.mxu0
      %2383 = vdwg.mxu0
      %2384 = vmatpush.bf16.msra.mxu0 %v2115
      %2385 = vmatpush.bf16.msra.mxu0 %v2114
      %2386 = vmatpush.bf16.msra.mxu0 %v2113
      %2387 = vmatpush.bf16.msra.mxu0 %v2112
      %2388 = vmatpush.bf16.msra.mxu0 %v2111
      %2389 = vmatpush.bf16.msra.mxu0 %v2110
      %2390 = vmatpush.bf16.msra.mxu0 %v2109
      %2391 = vmatpush.bf16.msra.mxu0 %v2108
      %2392 = vmatmul.bf16.gmra.mxu0 %v1292
      %v2393 = vpop.f32.mrf.mxu0
      %v2394 = vadd.f32 %v2381, %v2393
      %v2395 = vpop.f32.mrf.mxu0
      %2396 = vdwg.mxu0
      %2397 = vmatpush.bf16.msra.mxu0 %v2123
      %2398 = vmatpush.bf16.msra.mxu0 %v2122
      %2399 = vmatpush.bf16.msra.mxu0 %v2121
      %2400 = vmatpush.bf16.msra.mxu0 %v2120
      %2401 = vmatpush.bf16.msra.mxu0 %v2119
      %2402 = vmatpush.bf16.msra.mxu0 %v2118
      %2403 = vmatpush.bf16.msra.mxu0 %v2117
      %2404 = vmatpush.bf16.msra.mxu0 %v2116
      %2405 = vmatmul.bf16.gmra.mxu0 %v1293
      %v2406 = vpop.f32.mrf.mxu0
      %v2407 = vadd.f32 %v2394, %v2406
      %v2408 = vpop.f32.mrf.mxu0
      %2409 = vdwg.mxu0
      %2410 = vmatpush.bf16.msra.mxu0 %v2131
      %2411 = vmatpush.bf16.msra.mxu0 %v2130
      %2412 = vmatpush.bf16.msra.mxu0 %v2129
      %2413 = vmatpush.bf16.msra.mxu0 %v2128
      %2414 = vmatpush.bf16.msra.mxu0 %v2127
      %2415 = vmatpush.bf16.msra.mxu0 %v2126
      %2416 = vmatpush.bf16.msra.mxu0 %v2125
      %2417 = vmatpush.bf16.msra.mxu0 %v2124
      %2418 = vmatmul.bf16.gmra.mxu0 %v1294
      %v2419 = vpop.f32.mrf.mxu0
      %v2420 = vadd.f32 %v2407, %v2419
      %v2421 = vpop.f32.mrf.mxu0
      %2422 = vdwg.mxu0
      %2423 = vmatpush.bf16.msra.mxu0 %v2139
      %2424 = vmatpush.bf16.msra.mxu0 %v2138
      %2425 = vmatpush.bf16.msra.mxu0 %v2137
      %2426 = vmatpush.bf16.msra.mxu0 %v2136
      %2427 = vmatpush.bf16.msra.mxu0 %v2135
      %2428 = vmatpush.bf16.msra.mxu0 %v2134
      %2429 = vmatpush.bf16.msra.mxu0 %v2133
      %2430 = vmatpush.bf16.msra.mxu0 %v2132
      %2431 = vmatmul.bf16.gmra.mxu0 %v1295
      %v2432 = vpop.f32.mrf.mxu0
      %v2433 = vadd.f32 %v2420, %v2432
      %v2434 = vpop.f32.mrf.mxu0
      %2435 = vdwg.mxu0
      %2436 = vmatpush.bf16.msra.mxu0 %v2147
      %2437 = vmatpush.bf16.msra.mxu0 %v2146
      %2438 = vmatpush.bf16.msra.mxu0 %v2145
      %2439 = vmatpush.bf16.msra.mxu0 %v2144
      %2440 = vmatpush.bf16.msra.mxu0 %v2143
      %2441 = vmatpush.bf16.msra.mxu0 %v2142
      %2442 = vmatpush.bf16.msra.mxu0 %v2141
      %2443 = vmatpush.bf16.msra.mxu0 %v2140
      %2444 = vmatmul.bf16.gmra.mxu0 %v1296
      %v2445 = vpop.f32.mrf.mxu0
      %v2446 = vadd.f32 %v2433, %v2445
      %v2447 = vpop.f32.mrf.mxu0
      %2448 = vdwg.mxu0
      %2449 = vmatpush.bf16.msra.mxu0 %v2155
      %2450 = vmatpush.bf16.msra.mxu0 %v2154
      %2451 = vmatpush.bf16.msra.mxu0 %v2153
      %2452 = vmatpush.bf16.msra.mxu0 %v2152
      %2453 = vmatpush.bf16.msra.mxu0 %v2151
      %2454 = vmatpush.bf16.msra.mxu0 %v2150
      %2455 = vmatpush.bf16.msra.mxu0 %v2149
      %2456 = vmatpush.bf16.msra.mxu0 %v2148
      %2457 = vmatmul.bf16.gmra.mxu0 %v1297
      %v2458 = vpop.f32.mrf.mxu0
      %v2459 = vadd.f32 %v2446, %v2458
      %v2460 = vpop.f32.mrf.mxu0
      %2461 = vdwg.mxu0
      %2462 = vmatpush.bf16.msra.mxu0 %v2163
      %2463 = vmatpush.bf16.msra.mxu0 %v2162
      %2464 = vmatpush.bf16.msra.mxu0 %v2161
      %2465 = vmatpush.bf16.msra.mxu0 %v2160
      %2466 = vmatpush.bf16.msra.mxu0 %v2159
      %2467 = vmatpush.bf16.msra.mxu0 %v2158
      %2468 = vmatpush.bf16.msra.mxu0 %v2157
      %2469 = vmatpush.bf16.msra.mxu0 %v2156
      %2470 = vmatmul.bf16.gmra.mxu0 %v1298
      %v2471 = vpop.f32.mrf.mxu0
      %v2472 = vadd.f32 %v2459, %v2471
      %v2473 = vpop.f32.mrf.mxu0
      %2474 = vdwg.mxu0
      %2475 = vmatpush.bf16.msra.mxu0 %v2171
      %2476 = vmatpush.bf16.msra.mxu0 %v2170
      %2477 = vmatpush.bf16.msra.mxu0 %v2169
      %2478 = vmatpush.bf16.msra.mxu0 %v2168
      %2479 = vmatpush.bf16.msra.mxu0 %v2167
      %2480 = vmatpush.bf16.msra.mxu0 %v2166
      %2481 = vmatpush.bf16.msra.mxu0 %v2165
      %2482 = vmatpush.bf16.msra.mxu0 %v2164
      %2483 = vmatmul.bf16.gmra.mxu0 %v1299
      %v2484 = vpop.f32.mrf.mxu0
      %v2485 = vadd.f32 %v2472, %v2484
      %v2486 = vpop.f32.mrf.mxu0
      %2487 = vdwg.mxu0
      %2488 = vmatpush.bf16.msra.mxu0 %v2179
      %2489 = vmatpush.bf16.msra.mxu0 %v2178
      %2490 = vmatpush.bf16.msra.mxu0 %v2177
      %2491 = vmatpush.bf16.msra.mxu0 %v2176
      %2492 = vmatpush.bf16.msra.mxu0 %v2175
      %2493 = vmatpush.bf16.msra.mxu0 %v2174
      %2494 = vmatpush.bf16.msra.mxu0 %v2173
      %2495 = vmatpush.bf16.msra.mxu0 %v2172
      %2496 = vmatmul.bf16.gmra.mxu0 %v1300
      %v2497 = vpop.f32.mrf.mxu0
      %v2498 = vadd.f32 %v2485, %v2497
      %v2499 = vpop.f32.mrf.mxu0
      %2500 = vdwg.mxu0
      %2501 = vmatpush.bf16.msra.mxu0 %v2187
      %2502 = vmatpush.bf16.msra.mxu0 %v2186
      %2503 = vmatpush.bf16.msra.mxu0 %v2185
      %2504 = vmatpush.bf16.msra.mxu0 %v2184
      %2505 = vmatpush.bf16.msra.mxu0 %v2183
      %2506 = vmatpush.bf16.msra.mxu0 %v2182
      %2507 = vmatpush.bf16.msra.mxu0 %v2181
      %2508 = vmatpush.bf16.msra.mxu0 %v2180
      %2509 = vmatmul.bf16.gmra.mxu0 %v1301
      %v2510 = vpop.f32.mrf.mxu0
      %v2511 = vadd.f32 %v2498, %v2510
      %v2512 = vpop.f32.mrf.mxu0
      %2513 = vdwg.mxu0
      %2514 = vmatpush.bf16.msra.mxu0 %v2195
      %2515 = vmatpush.bf16.msra.mxu0 %v2194
      %2516 = vmatpush.bf16.msra.mxu0 %v2193
      %2517 = vmatpush.bf16.msra.mxu0 %v2192
      %2518 = vmatpush.bf16.msra.mxu0 %v2191
      %2519 = vmatpush.bf16.msra.mxu0 %v2190
      %2520 = vmatpush.bf16.msra.mxu0 %v2189
      %2521 = vmatpush.bf16.msra.mxu0 %v2188
      %2522 = vmatmul.bf16.gmra.mxu0 %v1302
      %v2523 = vpop.f32.mrf.mxu0
      %v2524 = vadd.f32 %v2511, %v2523
      %v2525 = vpop.f32.mrf.mxu0
      %2526 = vdwg.mxu0
      %2527 = vmatpush.bf16.msra.mxu0 %v2203
      %2528 = vmatpush.bf16.msra.mxu0 %v2202
      %2529 = vmatpush.bf16.msra.mxu0 %v2201
      %2530 = vmatpush.bf16.msra.mxu0 %v2200
      %2531 = vmatpush.bf16.msra.mxu0 %v2199
      %2532 = vmatpush.bf16.msra.mxu0 %v2198
      %2533 = vmatpush.bf16.msra.mxu0 %v2197
      %2534 = vmatpush.bf16.msra.mxu0 %v2196
      %2535 = vmatmul.bf16.gmra.mxu0 %v1303
      %v2536 = vpop.f32.mrf.mxu0
      %v2537 = vadd.f32 %v2524, %v2536
      %v2538 = vpop.f32.mrf.mxu0
      %2539 = vdwg.mxu0
      %v2540 = vadd.f32 %v831, %v2537
      %v2541 = vld [vmem:[%s11] sm:$0x1]
      %v2542 = vld [vmem:[%s12] sm:$0x1]
      %v2543 = vsel %vm459, %v2540, 0.0
      %2544 = vadd.xlane.f32.xlu0 %v2543
      %v2545 = vpop.xlane.xlu0 %2544
      %v2546 = vmul.f32 %v2545, %v804
      %v2547 = vsub.f32 %v2540, %v2546
      %v2548 = vmul.f32 %v2547, %v2547
      %v2549 = vsel %vm459, %v2548, 0.0
      %2550 = vadd.xlane.f32.xlu0 %v2549
      %v2551 = vpop.xlane.xlu0 %2550
      %v2552 = vmul.f32 %v2551, %v804
      %v2553 = vadd.f32 %v2552, 1e-05
      %v2554 = vrsqrt.pop %v2553
      %v2555 = vmul.f32 %v2554, %v2553
      %v2556 = vmul.f32 %v2555, %v2554
      %v2557 = vmul.f32 0.5, %v2556
      %v2558 = vsub.f32 1.5, %v2557
      %v2559 = vmul.f32 %v2554, %v2558
      %vm2560 = vweird.f32 %v2553
      %vm2561 = vweird.f32 %v2554
      %vm2562 = vmor %vm2560, %vm2561
      %v2563 = vsel %vm2562, %v2554, %v2559
      %v2564 = vmul.f32 %v2547, %v2563
      %v2566 = vperm.slane %v2541, 0
      %v2568 = vmul.f32 %v2564, %v2566
      %v2570 = vperm.slane %v2542, 0
      %v2572 = vadd.f32 %v2568, %v2570
      %2573 = vst.msk [vmem:[%s435] sm:$0xff] %vm459, %v2572
      %p2574 = scmp.lt.s32.totalorder %s24, 1
      %s2575 = scalar_select %p2574, %s24, 1
      %s2576 = smul.addr %s2575, 8
      %s2577 = scalar_lea.vmem %s13, %s2576
      // Predicated region
      $region73: #{logical_transformer_forward.8} parent=71 // pred_check
        %p2578 = pneg %p320
      $region74: #{logical_transformer_forward.8} parent=71 // pred_check_branch
        %2580 = sbr.rel (%p2578) target = $region76
      $region75: #{logical_transformer_forward.8} parent=71 // pred_region
        _
      $region76: #{logical_transformer_forward.8} parent=71 // pred_fallthru
        _
    $region72: #{logical_transformer_forward.8} parent=5 // pred_fallthru
      _
    %p2581 = scmp.le.s32.totalorder 2, %s19
    // Predicated region
    $region77: #{logical_transformer_forward.8} parent=5 // pred_check
      %p2582 = pneg %p2581
    $region78: #{logical_transformer_forward.8} parent=5 // pred_check_branch
      %2584 = sbr.rel (%p2582) target = $region80
    $region79: #{logical_transformer_forward.8} parent=5 // pred_region
      %s2585 = ssub.s32 %s19, 2
      // Predicated region
      $region81: #{logical_transformer_forward.8} parent=79 // pred_check
        %p2586 = pneg %p326
      $region82: #{logical_transformer_forward.8} parent=79 // pred_check_branch
        %2588 = sbr.rel (%p2586) target = $region84
      $region83: #{logical_transformer_forward.8} parent=79 // pred_region
        %p2589 = scmp.lt.s32.totalorder %s25, 1
        %s2590 = scalar_select %p2589, %s25, 1
        %s2591 = smul.addr %s2590, 8
        %s2592 = scalar_lea.vmem %s13, %s2591
      $region84: #{logical_transformer_forward.8} parent=79 // pred_fallthru
        _
    $region80: #{logical_transformer_forward.8} parent=5 // pred_fallthru
      _
  $region6: #{logical_transformer_forward.8} parent=0 // loop_footer
    %s23 = sadd.s32 1, %s19
  $region7: #{logical_transformer_forward.8} parent=0 // loop_footer_branch
    %18 = sbr.rel target = $region3
  $region8: #{logical_transformer_forward.8} parent=0 // loop_exit
    _

// kernel: logical_transformer_forward.12
$region0: #{logical_transformer_forward.12}
  #allocation0 [shape = 'u32[]', space=smem, size = 0x4, offset = 0x4, fixed_abs, tag = 'smem constant byte address 0x4 - core index']
  #allocation1 [shape = 'u32[72,128]{1,0:T(1,128)}', space=vmem, size = 0x9000, scoped, tag = 'internal scratch']
  %s0 = inlined_call_operand.vmem [shape: f32[2,4,32], index: 0, kind: input, shape index: {}]
  %s1 = inlined_call_operand.vmem [shape: f32[2,4,32], index: 1, kind: input, shape index: {}]
  %s2 = inlined_call_operand.vmem [shape: bf16[32,32], index: 2, kind: input, shape index: {}]
  %s3 = inlined_call_operand.vmem [shape: f32[1,32], index: 3, kind: input, shape index: {}]
  %s4 = inlined_call_operand.hbm [shape: f32[1,32], index: 4, kind: input, shape index: {}]
  %s5 = inlined_call_operand.hbm [shape: f32[1,32], index: 5, kind: input, shape index: {}]
  %s6 = inlined_call_operand.vmem [shape: bf16[32,32], index: 6, kind: input, shape index: {}]
  %s7 = inlined_call_operand.hbm [shape: f32[1,32], index: 7, kind: input, shape index: {}]
  %s8 = inlined_call_operand.vmem [shape: bf16[32,32], index: 8, kind: input, shape index: {}]
  %s9 = inlined_call_operand.hbm [shape: f32[1,32], index: 9, kind: input, shape index: {}]
  %s10 = inlined_call_operand.vmem [shape: f32[2,1,32], index: 10, kind: output, shape index: {}]
  %s11 = sld [smem:[#allocation0]]
  $region89: #{logical_transformer_forward.12} parent=0
    _
  %s13 = ssub.s32 1, %s11
  %s14 = scalar_select 0, %s13, %s11
  $region1: #{logical_transformer_forward.12} parent=0
    #allocation2 [shape = 'u8[512]{0}', space=vmem, size = 0x400, scoped, tag = 'input window, operand 4, single buffered']
    #allocation3 [shape = 's32[2]{0}', space=sflag, size = 0x8, scoped, tag = 'scoped memory for logical_transformer_forward.12']
    #allocation4 [shape = 'u8[512]{0}', space=vmem, size = 0x400, scoped, tag = 'input window, operand 5, single buffered']
    #allocation5 [shape = 's32[1]{0}', space=sflag, size = 0x4, scoped, tag = 'scoped memory for logical_transformer_forward.12']
    #allocation6 [shape = 'u8[512]{0}', space=vmem, size = 0x400, scoped, tag = 'input window, operand 7, single buffered']
    #allocation7 [shape = 'u8[512]{0}', space=vmem, size = 0x400, scoped, tag = 'input window, operand 9, single buffered']
    #allocation8 [shape = 's32[1]{0}', space=sflag, size = 0x4, scoped, tag = 'scoped memory for logical_transformer_forward.12']
    %15 = vsyncpa [#allocation3], 0
    %16 = vsyncpa [#allocation5], 0
    %17 = vsyncpa [#allocation8], 0
    loop: start=0, step=1, limit=4
    $region2: #{logical_transformer_forward.12} parent=1 // loop_pre_header
      _
    $region3: #{logical_transformer_forward.12} parent=1 // loop_header
      %s19 = sphi 0, %s23
      %p20 = scmp.ge.s32.totalorder %s19, 4
      %s29 = sphi 0, %s31
      %s32 = sphi 0, %s29
      %s33 = sphi 0, %s32
      %s49 = sphi 0, %s33
      %s55 = sphi 0, %s57
      %s58 = sphi 0, %s55
      %s59 = sphi 0, %s58
      %s75 = sphi 0, %s59
      %s79 = sphi 0, %s79
      %s81 = sphi 0, %s79
      %s82 = sphi 0, %s81
      %s96 = sphi 0, %s82
      %s100 = sphi 0, %s100
      %s102 = sphi 0, %s100
      %s103 = sphi 0, %s102
      %s117 = sphi 0, %s103
      %s121 = sphi 0, %s121
      %s123 = sphi 0, %s121
      %s124 = sphi 0, %s123
      %s138 = sphi 0, %s124
      %s142 = sphi 0, %s142
      %s144 = sphi 0, %s142
      %s145 = sphi 0, %s144
      %s159 = sphi 0, %s145
      %s163 = sphi 0, %s163
      %s165 = sphi 0, %s163
      %s166 = sphi 0, %s165
      %s180 = sphi 0, %s166
      %s184 = sphi 0, %s184
      %s186 = sphi 0, %s184
      %s187 = sphi 0, %s186
      %s201 = sphi 0, %s187
      %s205 = sphi 0, %s205
      %s207 = sphi 0, %s205
      %s208 = sphi 0, %s207
      %s222 = sphi 0, %s208
      %s226 = sphi 0, %s226
      %s228 = sphi 0, %s226
      %s229 = sphi 0, %s228
      %s243 = sphi 0, %s229
      %s249 = sphi 0, %s251
      %s252 = sphi 0, %s249
      %s253 = sphi 0, %s252
      %s269 = sphi 0, %s253
    $region4: #{logical_transformer_forward.12} parent=1 // loop_header_branch
      %22 = sbr.rel (%p20) target = $region8
    $region5: #{logical_transformer_forward.12} parent=1 // loop_body
      %s24 = ssub.s32 %s19, 1
      %s25 = ssub.s32 %s19, 2
      %s26 = sadd.s32 %s19, 1
      %s27 = ssub.s32 %s19, %s26
      %p28 = scmp.eq.s32.totalorder %s27, 0
      %s30 = sadd.s32 %s29, 1
      %s31 = scalar_select %p28, %s29, %s30
      %p34 = pneg %p28
      %p35 = scmp.eq.s32.totalorder %s19, 1
      %p36 = por %p34, %p35
      %p37 = scmp.ne.s32.totalorder %s29, %s32
      %p38 = scmp.eq.s32.totalorder %s19, 0
      %p39 = por %p37, %p38
      %p40 = scmp.ne.s32.totalorder %s29, %s32
      %p41 = scmp.eq.s32.totalorder %s24, 1
      %p42 = por %p40, %p41
      %p43 = scmp.ne.s32.totalorder %s32, %s33
      %p44 = scmp.eq.s32.totalorder %s24, 0
      %p45 = por %p43, %p44
      %p46 = scmp.ne.s32.totalorder %s32, %s33
      %p47 = scmp.eq.s32.totalorder %s25, 1
      %p48 = por %p46, %p47
      %p50 = scmp.ne.s32.totalorder %s33, %s49
      %p51 = scmp.eq.s32.totalorder %s25, 0
      %p52 = por %p50, %p51
      %s53 = ssub.s32 %s19, %s26
      %p54 = scmp.eq.s32.totalorder %s53, 0
      %s56 = sadd.s32 %s55, 1
      %s57 = scalar_select %p54, %s55, %s56
      %p60 = pneg %p54
      %p61 = scmp.eq.s32.totalorder %s19, 1
      %p62 = por %p60, %p61
      %p63 = scmp.ne.s32.totalorder %s55, %s58
      %p64 = scmp.eq.s32.totalorder %s19, 0
      %p65 = por %p63, %p64
      %p66 = scmp.ne.s32.totalorder %s55, %s58
      %p67 = scmp.eq.s32.totalorder %s24, 1
      %p68 = por %p66, %p67
      %p69 = scmp.ne.s32.totalorder %s58, %s59
      %p70 = scmp.eq.s32.totalorder %s24, 0
      %p71 = por %p69, %p70
      %p72 = scmp.ne.s32.totalorder %s58, %s59
      %p73 = scmp.eq.s32.totalorder %s25, 1
      %p74 = por %p72, %p73
      %p76 = scmp.ne.s32.totalorder %s59, %s75
      %p77 = scmp.eq.s32.totalorder %s25, 0
      %p78 = por %p76, %p77
      %s80 = sadd.s32 %s79, 1
      %p83 = scmp.eq.s32.totalorder %s19, 1
      %p84 = scmp.ne.s32.totalorder %s79, %s81
      %p85 = scmp.eq.s32.totalorder %s19, 0
      %p86 = por %p84, %p85
      %p87 = scmp.ne.s32.totalorder %s79, %s81
      %p88 = scmp.eq.s32.totalorder %s24, 1
      %p89 = por %p87, %p88
      %p90 = scmp.ne.s32.totalorder %s81, %s82
      %p91 = scmp.eq.s32.totalorder %s24, 0
      %p92 = por %p90, %p91
      %p93 = scmp.ne.s32.totalorder %s81, %s82
      %p94 = scmp.eq.s32.totalorder %s25, 1
      %p95 = por %p93, %p94
      %p97 = scmp.ne.s32.totalorder %s82, %s96
      %p98 = scmp.eq.s32.totalorder %s25, 0
      %p99 = por %p97, %p98
      %s101 = sadd.s32 %s100, 1
      %p104 = scmp.eq.s32.totalorder %s19, 1
      %p105 = scmp.ne.s32.totalorder %s100, %s102
      %p106 = scmp.eq.s32.totalorder %s19, 0
      %p107 = por %p105, %p106
      %p108 = scmp.ne.s32.totalorder %s100, %s102
      %p109 = scmp.eq.s32.totalorder %s24, 1
      %p110 = por %p108, %p109
      %p111 = scmp.ne.s32.totalorder %s102, %s103
      %p112 = scmp.eq.s32.totalorder %s24, 0
      %p113 = por %p111, %p112
      %p114 = scmp.ne.s32.totalorder %s102, %s103
      %p115 = scmp.eq.s32.totalorder %s25, 1
      %p116 = por %p114, %p115
      %p118 = scmp.ne.s32.totalorder %s103, %s117
      %p119 = scmp.eq.s32.totalorder %s25, 0
      %p120 = por %p118, %p119
      %s122 = sadd.s32 %s121, 1
      %p125 = scmp.eq.s32.totalorder %s19, 1
      %p126 = scmp.ne.s32.totalorder %s121, %s123
      %p127 = scmp.eq.s32.totalorder %s19, 0
      %p128 = por %p126, %p127
      %p129 = scmp.ne.s32.totalorder %s121, %s123
      %p130 = scmp.eq.s32.totalorder %s24, 1
      %p131 = por %p129, %p130
      %p132 = scmp.ne.s32.totalorder %s123, %s124
      %p133 = scmp.eq.s32.totalorder %s24, 0
      %p134 = por %p132, %p133
      %p135 = scmp.ne.s32.totalorder %s123, %s124
      %p136 = scmp.eq.s32.totalorder %s25, 1
      %p137 = por %p135, %p136
      %p139 = scmp.ne.s32.totalorder %s124, %s138
      %p140 = scmp.eq.s32.totalorder %s25, 0
      %p141 = por %p139, %p140
      %s143 = sadd.s32 %s142, 1
      %p146 = scmp.eq.s32.totalorder %s19, 1
      %p147 = scmp.ne.s32.totalorder %s142, %s144
      %p148 = scmp.eq.s32.totalorder %s19, 0
      %p149 = por %p147, %p148
      %p150 = scmp.ne.s32.totalorder %s142, %s144
      %p151 = scmp.eq.s32.totalorder %s24, 1
      %p152 = por %p150, %p151
      %p153 = scmp.ne.s32.totalorder %s144, %s145
      %p154 = scmp.eq.s32.totalorder %s24, 0
      %p155 = por %p153, %p154
      %p156 = scmp.ne.s32.totalorder %s144, %s145
      %p157 = scmp.eq.s32.totalorder %s25, 1
      %p158 = por %p156, %p157
      %p160 = scmp.ne.s32.totalorder %s145, %s159
      %p161 = scmp.eq.s32.totalorder %s25, 0
      %p162 = por %p160, %p161
      %s164 = sadd.s32 %s163, 1
      %p167 = scmp.eq.s32.totalorder %s19, 1
      %p168 = scmp.ne.s32.totalorder %s163, %s165
      %p169 = scmp.eq.s32.totalorder %s19, 0
      %p170 = por %p168, %p169
      %p171 = scmp.ne.s32.totalorder %s163, %s165
      %p172 = scmp.eq.s32.totalorder %s24, 1
      %p173 = por %p171, %p172
      %p174 = scmp.ne.s32.totalorder %s165, %s166
      %p175 = scmp.eq.s32.totalorder %s24, 0
      %p176 = por %p174, %p175
      %p177 = scmp.ne.s32.totalorder %s165, %s166
      %p178 = scmp.eq.s32.totalorder %s25, 1
      %p179 = por %p177, %p178
      %p181 = scmp.ne.s32.totalorder %s166, %s180
      %p182 = scmp.eq.s32.totalorder %s25, 0
      %p183 = por %p181, %p182
      %s185 = sadd.s32 %s184, 1
      %p188 = scmp.eq.s32.totalorder %s19, 1
      %p189 = scmp.ne.s32.totalorder %s184, %s186
      %p190 = scmp.eq.s32.totalorder %s19, 0
      %p191 = por %p189, %p190
      %p192 = scmp.ne.s32.totalorder %s184, %s186
      %p193 = scmp.eq.s32.totalorder %s24, 1
      %p194 = por %p192, %p193
      %p195 = scmp.ne.s32.totalorder %s186, %s187
      %p196 = scmp.eq.s32.totalorder %s24, 0
      %p197 = por %p195, %p196
      %p198 = scmp.ne.s32.totalorder %s186, %s187
      %p199 = scmp.eq.s32.totalorder %s25, 1
      %p200 = por %p198, %p199
      %p202 = scmp.ne.s32.totalorder %s187, %s201
      %p203 = scmp.eq.s32.totalorder %s25, 0
      %p204 = por %p202, %p203
      %s206 = sadd.s32 %s205, 1
      %p209 = scmp.eq.s32.totalorder %s19, 1
      %p210 = scmp.ne.s32.totalorder %s205, %s207
      %p211 = scmp.eq.s32.totalorder %s19, 0
      %p212 = por %p210, %p211
      %p213 = scmp.ne.s32.totalorder %s205, %s207
      %p214 = scmp.eq.s32.totalorder %s24, 1
      %p215 = por %p213, %p214
      %p216 = scmp.ne.s32.totalorder %s207, %s208
      %p217 = scmp.eq.s32.totalorder %s24, 0
      %p218 = por %p216, %p217
      %p219 = scmp.ne.s32.totalorder %s207, %s208
      %p220 = scmp.eq.s32.totalorder %s25, 1
      %p221 = por %p219, %p220
      %p223 = scmp.ne.s32.totalorder %s208, %s222
      %p224 = scmp.eq.s32.totalorder %s25, 0
      %p225 = por %p223, %p224
      %s227 = sadd.s32 %s226, 1
      %p230 = scmp.eq.s32.totalorder %s19, 1
      %p231 = scmp.ne.s32.totalorder %s226, %s228
      %p232 = scmp.eq.s32.totalorder %s19, 0
      %p233 = por %p231, %p232
      %p234 = scmp.ne.s32.totalorder %s226, %s228
      %p235 = scmp.eq.s32.totalorder %s24, 1
      %p236 = por %p234, %p235
      %p237 = scmp.ne.s32.totalorder %s228, %s229
      %p238 = scmp.eq.s32.totalorder %s24, 0
      %p239 = por %p237, %p238
      %p240 = scmp.ne.s32.totalorder %s228, %s229
      %p241 = scmp.eq.s32.totalorder %s25, 1
      %p242 = por %p240, %p241
      %p244 = scmp.ne.s32.totalorder %s229, %s243
      %p245 = scmp.eq.s32.totalorder %s25, 0
      %p246 = por %p244, %p245
      %s247 = ssub.s32 %s19, %s26
      %p248 = scmp.eq.s32.totalorder %s247, 0
      %s250 = sadd.s32 %s249, 1
      %s251 = scalar_select %p248, %s249, %s250
      %p254 = pneg %p248
      %p255 = scmp.eq.s32.totalorder %s19, 1
      %p256 = por %p254, %p255
      %p257 = scmp.ne.s32.totalorder %s249, %s252
      %p258 = scmp.eq.s32.totalorder %s19, 0
      %p259 = por %p257, %p258
      %p260 = scmp.ne.s32.totalorder %s249, %s252
      %p261 = scmp.eq.s32.totalorder %s24, 1
      %p262 = por %p260, %p261
      %p263 = scmp.ne.s32.totalorder %s252, %s253
      %p264 = scmp.eq.s32.totalorder %s24, 0
      %p265 = por %p263, %p264
      %p266 = scmp.ne.s32.totalorder %s252, %s253
      %p267 = scmp.eq.s32.totalorder %s25, 1
      %p268 = por %p266, %p267
      %p270 = scmp.ne.s32.totalorder %s253, %s269
      %p271 = scmp.eq.s32.totalorder %s25, 0
      %p272 = por %p270, %p271
      %p273 = scmp.le.s32.totalorder 1, %s19
      %p274 = scmp.lt.s32.totalorder %s19, 3
      %p275 = pnand %p273, %p274
      %p276 = pneg %p275
      // Predicated region
      $region9: #{logical_transformer_forward.12} parent=5 // pred_check
        _
      $region10: #{logical_transformer_forward.12} parent=5 // pred_check_branch
        %278 = sbr.rel (%p275) target = $region12
      $region11: #{logical_transformer_forward.12} parent=5 // pred_region
        %s279 = ssub.s32 %s19, 1
        // Predicated region
        $region13: #{logical_transformer_forward.12} parent=11 // pred_check
          %p280 = pneg %p92
        $region14: #{logical_transformer_forward.12} parent=11 // pred_check_branch
          %282 = sbr.rel (%p280) target = $region16
        $region15: #{logical_transformer_forward.12} parent=11 // pred_region
          _
        $region16: #{logical_transformer_forward.12} parent=11 // pred_fallthru
          _
        // Predicated region
        $region17: #{logical_transformer_forward.12} parent=11 // pred_check
          %p283 = pneg %p113
        $region18: #{logical_transformer_forward.12} parent=11 // pred_check_branch
          %285 = sbr.rel (%p283) target = $region20
        $region19: #{logical_transformer_forward.12} parent=11 // pred_region
          _
        $region20: #{logical_transformer_forward.12} parent=11 // pred_fallthru
          _
        // Predicated region
        $region21: #{logical_transformer_forward.12} parent=11 // pred_check
          %p286 = pneg %p134
        $region22: #{logical_transformer_forward.12} parent=11 // pred_check_branch
          %288 = sbr.rel (%p286) target = $region24
        $region23: #{logical_transformer_forward.12} parent=11 // pred_region
          %290 = vsyncadd [#allocation3], 0
          %s292 = sshll.u32 %s4, 4
          %s293 = int_to_ptr.hbm [resolvable:$true] %s292
          %s294 = sshll.u32 [#allocation2], 4
          %s295 = int_to_ptr.vmem [resolvable:$true] %s294
          %297 = dma.hbm_to_vmem [thread:$0]  %s293, 16, %s295, [#allocation3]
        $region24: #{logical_transformer_forward.12} parent=11 // pred_fallthru
          _
        // Predicated region
        $region25: #{logical_transformer_forward.12} parent=11 // pred_check
          %p298 = pneg %p155
        $region26: #{logical_transformer_forward.12} parent=11 // pred_check_branch
          %300 = sbr.rel (%p298) target = $region28
        $region27: #{logical_transformer_forward.12} parent=11 // pred_region
          %302 = vsyncadd [#allocation5], 0
          %s304 = sshll.u32 %s5, 4
          %s305 = int_to_ptr.hbm [resolvable:$true] %s304
          %s306 = sshll.u32 [#allocation4], 4
          %s307 = int_to_ptr.vmem [resolvable:$true] %s306
          %309 = dma.hbm_to_vmem [thread:$0]  %s305, 16, %s307, [#allocation5]
        $region28: #{logical_transformer_forward.12} parent=11 // pred_fallthru
          _
        // Predicated region
        $region29: #{logical_transformer_forward.12} parent=11 // pred_check
          %p310 = pneg %p176
        $region30: #{logical_transformer_forward.12} parent=11 // pred_check_branch
          %312 = sbr.rel (%p310) target = $region32
        $region31: #{logical_transformer_forward.12} parent=11 // pred_region
          _
        $region32: #{logical_transformer_forward.12} parent=11 // pred_fallthru
          _
        // Predicated region
        $region33: #{logical_transformer_forward.12} parent=11 // pred_check
          %p313 = pneg %p197
        $region34: #{logical_transformer_forward.12} parent=11 // pred_check_branch
          %315 = sbr.rel (%p313) target = $region36
        $region35: #{logical_transformer_forward.12} parent=11 // pred_region
          %317 = vsyncadd [#allocation5], 0
          %s319 = sshll.u32 %s7, 4
          %s320 = int_to_ptr.hbm [resolvable:$true] %s319
          %s321 = sshll.u32 [#allocation6], 4
          %s322 = int_to_ptr.vmem [resolvable:$true] %s321
          %324 = dma.hbm_to_vmem [thread:$0]  %s320, 16, %s322, [#allocation5]
        $region36: #{logical_transformer_forward.12} parent=11 // pred_fallthru
          _
        // Predicated region
        $region37: #{logical_transformer_forward.12} parent=11 // pred_check
          %p325 = pneg %p218
        $region38: #{logical_transformer_forward.12} parent=11 // pred_check_branch
          %327 = sbr.rel (%p325) target = $region40
        $region39: #{logical_transformer_forward.12} parent=11 // pred_region
          _
        $region40: #{logical_transformer_forward.12} parent=11 // pred_fallthru
          _
        // Predicated region
        $region41: #{logical_transformer_forward.12} parent=11 // pred_check
          %p328 = pneg %p239
        $region42: #{logical_transformer_forward.12} parent=11 // pred_check_branch
          %330 = sbr.rel (%p328) target = $region44
        $region43: #{logical_transformer_forward.12} parent=11 // pred_region
          %332 = vsyncadd [#allocation8], 0
          %s334 = sshll.u32 %s9, 4
          %s335 = int_to_ptr.hbm [resolvable:$true] %s334
          %s336 = sshll.u32 [#allocation7], 4
          %s337 = int_to_ptr.vmem [resolvable:$true] %s336
          %339 = dma.hbm_to_vmem [thread:$0]  %s335, 16, %s337, [#allocation8]
        $region44: #{logical_transformer_forward.12} parent=11 // pred_fallthru
          _
      $region12: #{logical_transformer_forward.12} parent=5 // pred_fallthru
        _
      %p340 = scmp.lt.s32.totalorder %s19, 2
      // Predicated region
      $region45: #{logical_transformer_forward.12} parent=5 // pred_check
        %p341 = pneg %p340
      $region46: #{logical_transformer_forward.12} parent=5 // pred_check_branch
        %343 = sbr.rel (%p341) target = $region48
      $region47: #{logical_transformer_forward.12} parent=5 // pred_region
        // Predicated region
        $region49: #{logical_transformer_forward.12} parent=47 // pred_check
          %p344 = pneg %p39
        $region50: #{logical_transformer_forward.12} parent=47 // pred_check_branch
          %346 = sbr.rel (%p344) target = $region52
        $region51: #{logical_transformer_forward.12} parent=47 // pred_region
          %p347 = scmp.lt.s32.totalorder %s19, 1
          %s348 = scalar_select %p347, %s19, 1
          %s349 = smul.addr %s348, 4
          %s350 = scalar_lea.vmem %s0, %s349
        $region52: #{logical_transformer_forward.12} parent=47 // pred_fallthru
          _
        // Predicated region
        $region53: #{logical_transformer_forward.12} parent=47 // pred_check
          %p351 = pneg %p65
        $region54: #{logical_transformer_forward.12} parent=47 // pred_check_branch
          %353 = sbr.rel (%p351) target = $region56
        $region55: #{logical_transformer_forward.12} parent=47 // pred_region
          %p354 = scmp.lt.s32.totalorder %s19, 1
          %s355 = scalar_select %p354, %s19, 1
          %s356 = smul.addr %s355, 4
          %s357 = scalar_lea.vmem %s1, %s356
        $region56: #{logical_transformer_forward.12} parent=47 // pred_fallthru
          _
      $region48: #{logical_transformer_forward.12} parent=5 // pred_fallthru
        _
      %p358 = scmp.le.s32.totalorder 1, %s19
      %p359 = scmp.lt.s32.totalorder %s19, 3
      %p360 = pnand %p358, %p359
      %p361 = pneg %p360
      // Predicated region
      $region57: #{logical_transformer_forward.12} parent=5 // pred_check
        _
      $region58: #{logical_transformer_forward.12} parent=5 // pred_check_branch
        %363 = sbr.rel (%p360) target = $region60
      $region59: #{logical_transformer_forward.12} parent=5 // pred_region
        %s364 = ssub.s32 %s19, 1
        // Predicated region
        $region61: #{logical_transformer_forward.12} parent=59 // pred_check
          %p365 = pneg %p134
        $region62: #{logical_transformer_forward.12} parent=59 // pred_check_branch
          %367 = sbr.rel (%p365) target = $region64
        $region63: #{logical_transformer_forward.12} parent=59 // pred_region
          %369 = dma.done [#allocation3], 16
        $region64: #{logical_transformer_forward.12} parent=59 // pred_fallthru
          _
        // Predicated region
        $region65: #{logical_transformer_forward.12} parent=59 // pred_check
          %p370 = pneg %p155
        $region66: #{logical_transformer_forward.12} parent=59 // pred_check_branch
          %372 = sbr.rel (%p370) target = $region68
        $region67: #{logical_transformer_forward.12} parent=59 // pred_region
          %374 = dma.done [#allocation5], 16
        $region68: #{logical_transformer_forward.12} parent=59 // pred_fallthru
          _
        // Predicated region
        $region69: #{logical_transformer_forward.12} parent=59 // pred_check
          %p375 = pneg %p197
        $region70: #{logical_transformer_forward.12} parent=59 // pred_check_branch
          %377 = sbr.rel (%p375) target = $region72
        $region71: #{logical_transformer_forward.12} parent=59 // pred_region
          %379 = dma.done [#allocation5], 16
        $region72: #{logical_transformer_forward.12} parent=59 // pred_fallthru
          _
        // Predicated region
        $region73: #{logical_transformer_forward.12} parent=59 // pred_check
          %p380 = pneg %p239
        $region74: #{logical_transformer_forward.12} parent=59 // pred_check_branch
          %382 = sbr.rel (%p380) target = $region76
        $region75: #{logical_transformer_forward.12} parent=59 // pred_region
          %384 = dma.done [#allocation8], 16
        $region76: #{logical_transformer_forward.12} parent=59 // pred_fallthru
          _
        %p385 = scmp.lt.s32.totalorder %s24, 1
        %s386 = scalar_select %p385, %s24, 1
        %s387 = smul.addr %s386, 4
        %s388 = scalar_lea.vmem %s0, %s387
        %p389 = pneg %p45
        %p390 = pneg %p42
        %p391 = scmp.lt.s32.totalorder %s24, 1
        %s392 = scalar_select %p391, %s24, 1
        %s393 = smul.addr %s392, 4
        %s394 = scalar_lea.vmem %s1, %s393
        %p395 = pneg %p71
        %p396 = pneg %p68
        %p397 = pneg %p92
        %p398 = pneg %p89
        %p399 = pneg %p113
        %p400 = pneg %p110
        %p401 = pneg %p134
        %p402 = pneg %p131
        %p403 = pneg %p155
        %p404 = pneg %p152
        %p405 = pneg %p176
        %p406 = pneg %p173
        %p407 = pneg %p197
        %p408 = pneg %p194
        %p409 = pneg %p218
        %p410 = pneg %p215
        %p411 = pneg %p239
        %p412 = pneg %p236
        %p413 = pneg %p265
        %p414 = pneg %p262
        %p415 = scmp.lt.s32.totalorder %s24, 1
        %s416 = scalar_select %p415, %s24, 1
        %s417 = scalar_lea.vmem %s10, %s416
        %p418 = scmp.lt.s32.totalorder %s24, 1
        %s419 = scalar_select %p418, %s24, 1
        %s420 = smul.addr %s419, 4
        %s421 = scalar_lea.vmem %s0, %s420
        %p422 = scmp.lt.s32.totalorder %s24, 1
        %s423 = scalar_select %p422, %s24, 1
        %s424 = smul.addr %s423, 4
        %s425 = scalar_lea.vmem %s1, %s424
        %p426 = scmp.lt.s32.totalorder %s24, 1
        %s427 = scalar_select %p426, %s24, 1
        %s428 = scalar_lea.vmem %s10, %s427
        %v430 = vld [vmem:[%s421] sm:$0xf]
        %v431 = vld [vmem:[%s425] sm:$0xf]
        %v433 = vrot.slane %v431, 4
        %vm435 = vcmask 1043456
        %v436 = vsel %vm435, %v430, %v433
        %v437 = vpack.c.bf16 %v436, %v436
        %v438 = vld [vmem:[%s2] sm:$0xf]
        %v439 = vld [vmem:[%s2 + $0x4] sm:$0xf]
        %v440 = vld [vmem:[%s2 + $0x8] sm:$0xf]
        %v441 = vld [vmem:[%s2 + $0xc] sm:$0xf]
        %v442 = vld [vmem:[%s3] sm:$0x1]
        %v444 = vperm.slane %v442, 0
        %v450 = vunpack.c.l.b16 %v438
        %v451 = vunpack.c.l.b16 %v439
        %v452 = vunpack.c.l.b16 %v440
        %v453 = vunpack.c.l.b16 %v441
        %v454 = vpack.c.b16 %v451, %v450
        %v455 = vpack.c.b16 %v453, %v452
        %vm458 = vcmask 261120
        %v460 = vsel %vm458, %v437, 0
        %462 = vmatpush.bf16.msra.mxu0 0
        %463 = vmatpush.bf16.msra.mxu0 0
        %464 = vmatpush.bf16.msra.mxu0 0
        %465 = vmatpush.bf16.msra.mxu0 0
        %466 = vmatpush.bf16.msra.mxu0 0
        %467 = vmatpush.bf16.msra.mxu0 0
        %468 = vmatpush.bf16.msra.mxu0 %v455
        %469 = vmatpush.bf16.msra.mxu0 %v454
        %470 = vmatmul.bf16.gmra.mxu0 %v460
        %v471 = vpop.f32.mrf.mxu0
        %v472 = vadd.f32 %v444, %v471
        %v473 = vpop.f32.mrf.mxu0
        %474 = vdwg.mxu0
        %v475 = vmul.f32 %v472, 0.17677669
        %v477 = vsel %vm458, %v475, 0
        %v480 = vsel %vm458, %v472, 0
        %482 = vmatpush.xpose.msra.mxu0 0.0
        %483 = vmatpush.xpose.msra.mxu0 0.0
        %484 = vmatpush.xpose.msra.mxu0 0.0
        %485 = vmatpush.xpose.msra.mxu0 0.0
        %486 = vmatpush.xpose.msra.mxu0 0.0
        %487 = vmatpush.xpose.msra.mxu0 0.0
        %488 = vmatpush.xpose.msra.mxu0 0.0
        %489 = vmatpush.xpose.msra.mxu0 0.0
        %490 = vmatpush.xpose.msra.mxu0 0.0
        %491 = vmatpush.xpose.msra.mxu0 0.0
        %492 = vmatpush.xpose.msra.mxu0 0.0
        %493 = vmatpush.xpose.msra.mxu0 0.0
        %494 = vmatpush.xpose.msra.mxu0 0.0
        %495 = vmatpush.xpose.msra.mxu0 0.0
        %496 = vmatpush.xpose.msra.mxu0 0.0
        %497 = vmatpush.xpose.msra.mxu0 %v480
        %498 = vmatmul.f32.gmra.mxu0 %v477
        %v499 = vpop.f32.mrf.mxu0
        %v500 = vadd.f32 0.0, %v499
        %501 = vdwg.mxu0
        %vm502 = vcmask 64512
        %v503 = vsel %vm502, %v500, -inf
        %504 = vmax.xlane.f32.xlu0 %v503
        %v505 = vpop.xlane.xlu0 %504
        %v506 = vsub.f32 %v500, %v505
        %v507 = vmul.f32 %v506, 1.442695
        %v508 = vpow.pop %v507
        %v509 = vsel %vm502, %v508, 0.0
        %510 = vadd.xlane.f32.xlu0 %v509
        %v511 = vpop.xlane.xlu0 %510
        %v512 = vrcp.pop %v511
        %v513 = vmul.f32 %v508, %v512
        %v515 = vsel %vm502, %v513, 0
        %517 = vmatpush.msra.mxu0 0.0
        %518 = vmatpush.msra.mxu0 0.0
        %519 = vmatpush.msra.mxu0 0.0
        %520 = vmatpush.msra.mxu0 0.0
        %521 = vmatpush.msra.mxu0 0.0
        %522 = vmatpush.msra.mxu0 0.0
        %523 = vmatpush.msra.mxu0 0.0
        %524 = vmatpush.msra.mxu0 0.0
        %525 = vmatpush.msra.mxu0 0.0
        %526 = vmatpush.msra.mxu0 0.0
        %527 = vmatpush.msra.mxu0 0.0
        %528 = vmatpush.msra.mxu0 0.0
        %529 = vmatpush.msra.mxu0 0.0
        %530 = vmatpush.msra.mxu0 0.0
        %531 = vmatpush.msra.mxu0 0.0
        %532 = vmatpush.msra.mxu0 %v472
        %533 = vmatmul.f32.gmra.mxu0 %v515
        %v534 = vpop.f32.mrf.mxu0
        %v535 = vadd.f32 0.0, %v534
        %536 = vdwg.mxu0
        %v537 = vld [vmem:[#allocation2] sm:$0x1]
        %v538 = vld [vmem:[#allocation4] sm:$0x1]
        %v539 = vsel %vm458, %v535, 0.0
        %540 = vadd.xlane.f32.xlu0 %v539
        %v541 = vpop.xlane.xlu0 %540
        %v542 = vrcp.pop 32.0
        %v543 = vmul.f32 32.0, %v542
        %v544 = vsub.f32 1.0, %v543
        %v545 = vmul.f32 %v542, %v544
        %v546 = vadd.f32 %v542, %v545
        %vm547 = vweird.f32 %v542
        %v548 = vsel %vm547, %v542, %v546
        %v549 = vmul.f32 %v541, %v548
        %v550 = vsub.f32 %v535, %v549
        %v551 = vmul.f32 %v550, %v550
        %v552 = vsel %vm458, %v551, 0.0
        %553 = vadd.xlane.f32.xlu0 %v552
        %v554 = vpop.xlane.xlu0 %553
        %v555 = vmul.f32 %v554, %v548
        %v556 = vadd.f32 %v555, 1e-12
        %v557 = vrsqrt.pop %v556
        %v558 = vmul.f32 %v557, %v556
        %v559 = vmul.f32 %v558, %v557
        %v560 = vmul.f32 0.5, %v559
        %v561 = vsub.f32 1.5, %v560
        %v562 = vmul.f32 %v557, %v561
        %vm563 = vweird.f32 %v556
        %vm564 = vweird.f32 %v557
        %vm565 = vmor %vm563, %vm564
        %v566 = vsel %vm565, %v557, %v562
        %v567 = vmul.f32 %v550, %v566
        %v569 = vperm.slane %v537, 0
        %v571 = vmul.f32 %v567, %v569
        %v573 = vperm.slane %v538, 0
        %v575 = vadd.f32 %v571, %v573
        %v576 = vpack.c.bf16 %v575, %v575
        %v577 = vld [vmem:[%s6] sm:$0xf]
        %v578 = vld [vmem:[%s6 + $0x4] sm:$0xf]
        %v579 = vld [vmem:[%s6 + $0x8] sm:$0xf]
        %v580 = vld [vmem:[%s6 + $0xc] sm:$0xf]
        %v581 = vld [vmem:[#allocation6] sm:$0x1]
        %v583 = vperm.slane %v581, 0
        %v589 = vunpack.c.l.b16 %v577
        %v590 = vunpack.c.l.b16 %v578
        %v591 = vunpack.c.l.b16 %v579
        %v592 = vunpack.c.l.b16 %v580
        %v593 = vpack.c.b16 %v590, %v589
        %v594 = vpack.c.b16 %v592, %v591
        %v598 = vsel %vm458, %v576, 0
        %600 = vmatpush.bf16.msra.mxu0 0
        %601 = vmatpush.bf16.msra.mxu0 0
        %602 = vmatpush.bf16.msra.mxu0 0
        %603 = vmatpush.bf16.msra.mxu0 0
        %604 = vmatpush.bf16.msra.mxu0 0
        %605 = vmatpush.bf16.msra.mxu0 0
        %606 = vmatpush.bf16.msra.mxu0 %v594
        %607 = vmatpush.bf16.msra.mxu0 %v593
        %608 = vmatmul.bf16.gmra.mxu0 %v598
        %v609 = vpop.f32.mrf.mxu0
        %v610 = vadd.f32 %v583, %v609
        %v611 = vpop.f32.mrf.mxu0
        %612 = vdwg.mxu0
        %v613 = vmul.f32 %v610, 0.5
        %v614 = vmul.f32 %v610, 0.70710677
        %v615 = vmul.f32 %v614, %v614
        %v616 = vmin.f32 16.0, %v615
        %v617 = vmul.f32 %v616, 2.1237322e-06
        %v618 = vadd.f32 %v617, 0.00028619796
        %v619 = vmul.f32 %v616, %v618
        %v620 = vadd.f32 %v619, 0.0036580483
        %v621 = vmul.f32 %v616, %v620
        %v622 = vadd.f32 %v621, 0.05243302
        %v623 = vmul.f32 %v616, %v622
        %v624 = vadd.f32 %v623, 0.18741608
        %v625 = vmul.f32 %v616, %v624
        %v626 = vadd.f32 %v625, 1.1283791
        %v627 = vmul.f32 %v614, %v626
        %v628 = vmul.f32 %v616, 3.8918573e-05
        %v629 = vadd.f32 %v628, 0.001143296
        %v630 = vmul.f32 %v616, %v629
        %v631 = vadd.f32 %v630, 0.014752088
        %v632 = vmul.f32 %v616, %v631
        %v633 = vadd.f32 %v632, 0.112945676
        %v634 = vmul.f32 %v616, %v633
        %v635 = vadd.f32 %v634, 0.4994258
        %v636 = vmul.f32 %v616, %v635
        %v637 = vadd.f32 %v636, 1.0
        %v638 = vrcp.pop %v637
        %v639 = vmul.f32 %v637, %v638
        %v640 = vsub.f32 1.0, %v639
        %v641 = vmul.f32 %v638, %v640
        %v642 = vadd.f32 %v638, %v641
        %vm643 = vweird.f32 %v637
        %vm644 = vweird.f32 %v638
        %vm645 = vmor %vm643, %vm644
        %v646 = vsel %vm645, %v638, %v642
        %v647 = vand.u32 2147483647, %v637
        %vm648 = vcmp.eq.f32.partialorder %v647, 8.507059e+37
        %v649 = vand.u32 %v637, 2147483648
        %v650 = vor.u32 1.1754944e-38, %v649
        %v651 = vsel %vm648, %v650, %v646
        %v652 = vmul.f32 %v627, %v651
        %v653 = vmin.f32 %v652, 1.0
        %v654 = vmax.f32 %v653, -1.0
        %v655 = vadd.f32 %v654, 1.0
        %v656 = vmul.f32 %v613, %v655
        %v657 = vpack.c.bf16 %v656, %v656
        %v658 = vld [vmem:[%s8] sm:$0xf]
        %v659 = vld [vmem:[%s8 + $0x4] sm:$0xf]
        %v660 = vld [vmem:[%s8 + $0x8] sm:$0xf]
        %v661 = vld [vmem:[%s8 + $0xc] sm:$0xf]
        %v662 = vld [vmem:[#allocation7] sm:$0x1]
        %v664 = vperm.slane %v662, 0
        %v670 = vunpack.c.l.b16 %v658
        %v671 = vunpack.c.l.b16 %v659
        %v672 = vunpack.c.l.b16 %v660
        %v673 = vunpack.c.l.b16 %v661
        %v674 = vpack.c.b16 %v671, %v670
        %v675 = vpack.c.b16 %v673, %v672
        %v679 = vsel %vm458, %v657, 0
        %681 = vmatpush.bf16.msra.mxu0 0
        %682 = vmatpush.bf16.msra.mxu0 0
        %683 = vmatpush.bf16.msra.mxu0 0
        %684 = vmatpush.bf16.msra.mxu0 0
        %685 = vmatpush.bf16.msra.mxu0 0
        %686 = vmatpush.bf16.msra.mxu0 0
        %687 = vmatpush.bf16.msra.mxu0 %v675
        %688 = vmatpush.bf16.msra.mxu0 %v674
        %689 = vmatmul.bf16.gmra.mxu0 %v679
        %v690 = vpop.f32.mrf.mxu0
        %v691 = vadd.f32 %v664, %v690
        %v692 = vpop.f32.mrf.mxu0
        %693 = vdwg.mxu0
        %v694 = vadd.f32 %v691, %v575
        %v695 = vsel %vm458, %v694, 0.0
        %696 = vadd.xlane.f32.xlu0 %v695
        %v697 = vpop.xlane.xlu0 %696
        %v698 = vmul.f32 %v697, %v548
        %v699 = vsub.f32 %v694, %v698
        %v700 = vmul.f32 %v699, %v699
        %v701 = vsel %vm458, %v700, 0.0
        %702 = vadd.xlane.f32.xlu0 %v701
        %v703 = vpop.xlane.xlu0 %702
        %v704 = vmul.f32 %v703, %v548
        %v705 = vadd.f32 %v704, 1e-12
        %v706 = vrsqrt.pop %v705
        %v707 = vmul.f32 %v706, %v705
        %v708 = vmul.f32 %v707, %v706
        %v709 = vmul.f32 0.5, %v708
        %v710 = vsub.f32 1.5, %v709
        %v711 = vmul.f32 %v706, %v710
        %vm712 = vweird.f32 %v705
        %vm713 = vweird.f32 %v706
        %vm714 = vmor %vm712, %vm713
        %v715 = vsel %vm714, %v706, %v711
        %v716 = vmul.f32 %v699, %v715
        %v717 = vmul.f32 %v716, %v569
        %v718 = vadd.f32 %v717, %v573
        %v719 = vsel %vm458, %v718, 0.0
        %v720 = vrot.slane %v719, 4
        %v721 = vadd.f32 %v719, %v720
        %v722 = vrot.slane %v721, 2
        %v723 = vadd.f32 %v721, %v722
        %v724 = vrot.slane %v723, 1
        %v725 = vadd.f32 %v723, %v724
        %vm726 = vcmask 253952
        %727 = vst.msk [vmem:[%s428] sm:$0x1] %vm726, %v725
        %p728 = scmp.lt.s32.totalorder %s24, 1
        %s729 = scalar_select %p728, %s24, 1
        %s730 = scalar_lea.vmem %s10, %s729
        // Predicated region
        $region77: #{logical_transformer_forward.12} parent=59 // pred_check
          %p731 = pneg %p262
        $region78: #{logical_transformer_forward.12} parent=59 // pred_check_branch
          %733 = sbr.rel (%p731) target = $region80
        $region79: #{logical_transformer_forward.12} parent=59 // pred_region
          _
        $region80: #{logical_transformer_forward.12} parent=59 // pred_fallthru
          _
      $region60: #{logical_transformer_forward.12} parent=5 // pred_fallthru
        _
      %p734 = scmp.le.s32.totalorder 2, %s19
      // Predicated region
      $region81: #{logical_transformer_forward.12} parent=5 // pred_check
        %p735 = pneg %p734
      $region82: #{logical_transformer_forward.12} parent=5 // pred_check_branch
        %737 = sbr.rel (%p735) target = $region84
      $region83: #{logical_transformer_forward.12} parent=5 // pred_region
        %s738 = ssub.s32 %s19, 2
        // Predicated region
        $region85: #{logical_transformer_forward.12} parent=83 // pred_check
          %p739 = pneg %p268
        $region86: #{logical_transformer_forward.12} parent=83 // pred_check_branch
          %741 = sbr.rel (%p739) target = $region88
        $region87: #{logical_transformer_forward.12} parent=83 // pred_region
          %p742 = scmp.lt.s32.totalorder %s25, 1
          %s743 = scalar_select %p742, %s25, 1
          %s744 = scalar_lea.vmem %s10, %s743
        $region88: #{logical_transformer_forward.12} parent=83 // pred_fallthru
          _
      $region84: #{logical_transformer_forward.12} parent=5 // pred_fallthru
        _
    $region6: #{logical_transformer_forward.12} parent=1 // loop_footer
      %s23 = sadd.s32 1, %s19
    $region7: #{logical_transformer_forward.12} parent=1 // loop_footer_branch
      %18 = sbr.rel target = $region3
    $region8: #{logical_transformer_forward.12} parent=1 // loop_exit
      _
    %745 = vsyncpa [#allocation3], 1
    %s746 = scalar_lea.sflag [#allocation3], 1
    %747 = vsyncpa %s746, 1
    %748 = vsyncpa [#allocation5], 1
    %749 = vsyncpa [#allocation8], 1

// kernel: logical_transformer_forward.10
$region0: #{logical_transformer_forward.10}
  #allocation0 [shape = 'u32[]', space=smem, size = 0x4, offset = 0x4, fixed_abs, tag = 'smem constant byte address 0x4 - core index']
  #allocation1 [shape = 'u32[72,128]{1,0:T(1,128)}', space=vmem, size = 0x9000, scoped, tag = 'internal scratch']
  %s0 = inlined_call_operand.vmem [shape: f32[2,4,32], index: 0, kind: input, shape index: {}]
  %s1 = inlined_call_operand.vmem [shape: f32[1,32], index: 1, kind: input, shape index: {}]
  %s2 = inlined_call_operand.vmem [shape: f32[1,32], index: 2, kind: input, shape index: {}]
  %s3 = inlined_call_operand.vmem [shape: f32[2,32], index: 3, kind: input, shape index: {}]
  %s4 = inlined_call_operand.vmem [shape: bf16[32,96], index: 4, kind: input, shape index: {}]
  %s5 = inlined_call_operand.vmem [shape: f32[1,96], index: 5, kind: input, shape index: {}]
  %s6 = inlined_call_operand.vmem [shape: bf16[32,64], index: 6, kind: input, shape index: {}]
  %s7 = inlined_call_operand.vmem [shape: f32[1,64], index: 7, kind: input, shape index: {}]
  %s8 = inlined_call_operand.vmem [shape: bf16[32,32], index: 8, kind: input, shape index: {}]
  %s9 = inlined_call_operand.hbm [shape: f32[1,32], index: 9, kind: input, shape index: {}]
  %s10 = inlined_call_operand.hbm [shape: f32[1,32], index: 10, kind: input, shape index: {}]
  %s11 = inlined_call_operand.hbm [shape: f32[1,32], index: 11, kind: input, shape index: {}]
  %s12 = inlined_call_operand.vmem [shape: bf16[32,32], index: 12, kind: input, shape index: {}]
  %s13 = inlined_call_operand.hbm [shape: f32[1,32], index: 13, kind: input, shape index: {}]
  %s14 = inlined_call_operand.vmem [shape: bf16[32,32], index: 14, kind: input, shape index: {}]
  %s15 = inlined_call_operand.hbm [shape: f32[1,32], index: 15, kind: input, shape index: {}]
  %s16 = inlined_call_operand.vmem [shape: bf16[32,32], index: 16, kind: input, shape index: {}]
  %s17 = inlined_call_operand.hbm [shape: f32[1,32], index: 17, kind: input, shape index: {}]
  %s18 = inlined_call_operand.hbm [shape: f32[1,32], index: 18, kind: input, shape index: {}]
  %s19 = inlined_call_operand.hbm [shape: f32[1,32], index: 19, kind: input, shape index: {}]
  %s20 = inlined_call_operand.vmem [shape: f32[2,4,32], index: 20, kind: output, shape index: {}]
  %s21 = sld [smem:[#allocation0]]
  $region145: #{logical_transformer_forward.10} parent=0
    _
  %s23 = ssub.s32 1, %s21
  %s24 = scalar_select 0, %s23, %s21
  $region1: #{logical_transformer_forward.10} parent=0
    #allocation2 [shape = 'u8[512]{0}', space=vmem, size = 0x400, scoped, tag = 'input window, operand 9, single buffered']
    #allocation3 [shape = 's32[2]{0}', space=sflag, size = 0x8, scoped, tag = 'scoped memory for logical_transformer_forward.10']
    #allocation4 [shape = 'u8[512]{0}', space=vmem, size = 0x400, scoped, tag = 'input window, operand 10, single buffered']
    #allocation5 [shape = 's32[1]{0}', space=sflag, size = 0x4, scoped, tag = 'scoped memory for logical_transformer_forward.10']
    #allocation6 [shape = 'u8[512]{0}', space=vmem, size = 0x400, scoped, tag = 'input window, operand 11, single buffered']
    #allocation7 [shape = 'u8[512]{0}', space=vmem, size = 0x400, scoped, tag = 'input window, operand 13, single buffered']
    #allocation8 [shape = 's32[1]{0}', space=sflag, size = 0x4, scoped, tag = 'scoped memory for logical_transformer_forward.10']
    #allocation9 [shape = 'u8[512]{0}', space=vmem, size = 0x400, scoped, tag = 'input window, operand 15, single buffered']
    #allocation10 [shape = 'u8[512]{0}', space=vmem, size = 0x400, scoped, tag = 'input window, operand 17, single buffered']
    #allocation11 [shape = 's32[1]{0}', space=sflag, size = 0x4, scoped, tag = 'scoped memory for logical_transformer_forward.10']
    #allocation12 [shape = 'u8[512]{0}', space=vmem, size = 0x400, scoped, tag = 'input window, operand 18, single buffered']
    #allocation13 [shape = 'u8[512]{0}', space=vmem, size = 0x400, scoped, tag = 'input window, operand 19, single buffered']
    #allocation14 [shape = 's32[1]{0}', space=sflag, size = 0x4, scoped, tag = 'scoped memory for logical_transformer_forward.10']
    %25 = vsyncpa [#allocation3], 0
    %26 = vsyncpa [#allocation5], 0
    %27 = vsyncpa [#allocation8], 0
    %28 = vsyncpa [#allocation11], 0
    %29 = vsyncpa [#allocation14], 0
    loop: start=0, step=1, limit=4
    $region2: #{logical_transformer_forward.10} parent=1 // loop_pre_header
      _
    $region3: #{logical_transformer_forward.10} parent=1 // loop_header
      %s31 = sphi 0, %s35
      %p32 = scmp.ge.s32.totalorder %s31, 4
      %s41 = sphi 0, %s43
      %s44 = sphi 0, %s41
      %s45 = sphi 0, %s44
      %s61 = sphi 0, %s45
      %s65 = sphi 0, %s65
      %s67 = sphi 0, %s65
      %s68 = sphi 0, %s67
      %s82 = sphi 0, %s68
      %s86 = sphi 0, %s86
      %s88 = sphi 0, %s86
      %s89 = sphi 0, %s88
      %s103 = sphi 0, %s89
      %s107 = sphi 0, %s107
      %s109 = sphi 0, %s107
      %s110 = sphi 0, %s109
      %s124 = sphi 0, %s110
      %s128 = sphi 0, %s128
      %s130 = sphi 0, %s128
      %s131 = sphi 0, %s130
      %s145 = sphi 0, %s131
      %s149 = sphi 0, %s149
      %s151 = sphi 0, %s149
      %s152 = sphi 0, %s151
      %s166 = sphi 0, %s152
      %s170 = sphi 0, %s170
      %s172 = sphi 0, %s170
      %s173 = sphi 0, %s172
      %s187 = sphi 0, %s173
      %s191 = sphi 0, %s191
      %s193 = sphi 0, %s191
      %s194 = sphi 0, %s193
      %s208 = sphi 0, %s194
      %s212 = sphi 0, %s212
      %s214 = sphi 0, %s212
      %s215 = sphi 0, %s214
      %s229 = sphi 0, %s215
      %s233 = sphi 0, %s233
      %s235 = sphi 0, %s233
      %s236 = sphi 0, %s235
      %s250 = sphi 0, %s236
      %s254 = sphi 0, %s254
      %s256 = sphi 0, %s254
      %s257 = sphi 0, %s256
      %s271 = sphi 0, %s257
      %s275 = sphi 0, %s275
      %s277 = sphi 0, %s275
      %s278 = sphi 0, %s277
      %s292 = sphi 0, %s278
      %s296 = sphi 0, %s296
      %s298 = sphi 0, %s296
      %s299 = sphi 0, %s298
      %s313 = sphi 0, %s299
      %s317 = sphi 0, %s317
      %s319 = sphi 0, %s317
      %s320 = sphi 0, %s319
      %s334 = sphi 0, %s320
      %s338 = sphi 0, %s338
      %s340 = sphi 0, %s338
      %s341 = sphi 0, %s340
      %s355 = sphi 0, %s341
      %s359 = sphi 0, %s359
      %s361 = sphi 0, %s359
      %s362 = sphi 0, %s361
      %s376 = sphi 0, %s362
      %s380 = sphi 0, %s380
      %s382 = sphi 0, %s380
      %s383 = sphi 0, %s382
      %s397 = sphi 0, %s383
      %s401 = sphi 0, %s401
      %s403 = sphi 0, %s401
      %s404 = sphi 0, %s403
      %s418 = sphi 0, %s404
      %s422 = sphi 0, %s422
      %s424 = sphi 0, %s422
      %s425 = sphi 0, %s424
      %s439 = sphi 0, %s425
      %s443 = sphi 0, %s443
      %s445 = sphi 0, %s443
      %s446 = sphi 0, %s445
      %s460 = sphi 0, %s446
      %s466 = sphi 0, %s468
      %s469 = sphi 0, %s466
      %s470 = sphi 0, %s469
      %s486 = sphi 0, %s470
    $region4: #{logical_transformer_forward.10} parent=1 // loop_header_branch
      %34 = sbr.rel (%p32) target = $region8
    $region5: #{logical_transformer_forward.10} parent=1 // loop_body
      %s36 = ssub.s32 %s31, 1
      %s37 = ssub.s32 %s31, 2
      %s38 = sadd.s32 %s31, 1
      %s39 = ssub.s32 %s31, %s38
      %p40 = scmp.eq.s32.totalorder %s39, 0
      %s42 = sadd.s32 %s41, 1
      %s43 = scalar_select %p40, %s41, %s42
      %p46 = pneg %p40
      %p47 = scmp.eq.s32.totalorder %s31, 1
      %p48 = por %p46, %p47
      %p49 = scmp.ne.s32.totalorder %s41, %s44
      %p50 = scmp.eq.s32.totalorder %s31, 0
      %p51 = por %p49, %p50
      %p52 = scmp.ne.s32.totalorder %s41, %s44
      %p53 = scmp.eq.s32.totalorder %s36, 1
      %p54 = por %p52, %p53
      %p55 = scmp.ne.s32.totalorder %s44, %s45
      %p56 = scmp.eq.s32.totalorder %s36, 0
      %p57 = por %p55, %p56
      %p58 = scmp.ne.s32.totalorder %s44, %s45
      %p59 = scmp.eq.s32.totalorder %s37, 1
      %p60 = por %p58, %p59
      %p62 = scmp.ne.s32.totalorder %s45, %s61
      %p63 = scmp.eq.s32.totalorder %s37, 0
      %p64 = por %p62, %p63
      %s66 = sadd.s32 %s65, 1
      %p69 = scmp.eq.s32.totalorder %s31, 1
      %p70 = scmp.ne.s32.totalorder %s65, %s67
      %p71 = scmp.eq.s32.totalorder %s31, 0
      %p72 = por %p70, %p71
      %p73 = scmp.ne.s32.totalorder %s65, %s67
      %p74 = scmp.eq.s32.totalorder %s36, 1
      %p75 = por %p73, %p74
      %p76 = scmp.ne.s32.totalorder %s67, %s68
      %p77 = scmp.eq.s32.totalorder %s36, 0
      %p78 = por %p76, %p77
      %p79 = scmp.ne.s32.totalorder %s67, %s68
      %p80 = scmp.eq.s32.totalorder %s37, 1
      %p81 = por %p79, %p80
      %p83 = scmp.ne.s32.totalorder %s68, %s82
      %p84 = scmp.eq.s32.totalorder %s37, 0
      %p85 = por %p83, %p84
      %s87 = sadd.s32 %s86, 1
      %p90 = scmp.eq.s32.totalorder %s31, 1
      %p91 = scmp.ne.s32.totalorder %s86, %s88
      %p92 = scmp.eq.s32.totalorder %s31, 0
      %p93 = por %p91, %p92
      %p94 = scmp.ne.s32.totalorder %s86, %s88
      %p95 = scmp.eq.s32.totalorder %s36, 1
      %p96 = por %p94, %p95
      %p97 = scmp.ne.s32.totalorder %s88, %s89
      %p98 = scmp.eq.s32.totalorder %s36, 0
      %p99 = por %p97, %p98
      %p100 = scmp.ne.s32.totalorder %s88, %s89
      %p101 = scmp.eq.s32.totalorder %s37, 1
      %p102 = por %p100, %p101
      %p104 = scmp.ne.s32.totalorder %s89, %s103
      %p105 = scmp.eq.s32.totalorder %s37, 0
      %p106 = por %p104, %p105
      %s108 = sadd.s32 %s107, 1
      %p111 = scmp.eq.s32.totalorder %s31, 1
      %p112 = scmp.ne.s32.totalorder %s107, %s109
      %p113 = scmp.eq.s32.totalorder %s31, 0
      %p114 = por %p112, %p113
      %p115 = scmp.ne.s32.totalorder %s107, %s109
      %p116 = scmp.eq.s32.totalorder %s36, 1
      %p117 = por %p115, %p116
      %p118 = scmp.ne.s32.totalorder %s109, %s110
      %p119 = scmp.eq.s32.totalorder %s36, 0
      %p120 = por %p118, %p119
      %p121 = scmp.ne.s32.totalorder %s109, %s110
      %p122 = scmp.eq.s32.totalorder %s37, 1
      %p123 = por %p121, %p122
      %p125 = scmp.ne.s32.totalorder %s110, %s124
      %p126 = scmp.eq.s32.totalorder %s37, 0
      %p127 = por %p125, %p126
      %s129 = sadd.s32 %s128, 1
      %p132 = scmp.eq.s32.totalorder %s31, 1
      %p133 = scmp.ne.s32.totalorder %s128, %s130
      %p134 = scmp.eq.s32.totalorder %s31, 0
      %p135 = por %p133, %p134
      %p136 = scmp.ne.s32.totalorder %s128, %s130
      %p137 = scmp.eq.s32.totalorder %s36, 1
      %p138 = por %p136, %p137
      %p139 = scmp.ne.s32.totalorder %s130, %s131
      %p140 = scmp.eq.s32.totalorder %s36, 0
      %p141 = por %p139, %p140
      %p142 = scmp.ne.s32.totalorder %s130, %s131
      %p143 = scmp.eq.s32.totalorder %s37, 1
      %p144 = por %p142, %p143
      %p146 = scmp.ne.s32.totalorder %s131, %s145
      %p147 = scmp.eq.s32.totalorder %s37, 0
      %p148 = por %p146, %p147
      %s150 = sadd.s32 %s149, 1
      %p153 = scmp.eq.s32.totalorder %s31, 1
      %p154 = scmp.ne.s32.totalorder %s149, %s151
      %p155 = scmp.eq.s32.totalorder %s31, 0
      %p156 = por %p154, %p155
      %p157 = scmp.ne.s32.totalorder %s149, %s151
      %p158 = scmp.eq.s32.totalorder %s36, 1
      %p159 = por %p157, %p158
      %p160 = scmp.ne.s32.totalorder %s151, %s152
      %p161 = scmp.eq.s32.totalorder %s36, 0
      %p162 = por %p160, %p161
      %p163 = scmp.ne.s32.totalorder %s151, %s152
      %p164 = scmp.eq.s32.totalorder %s37, 1
      %p165 = por %p163, %p164
      %p167 = scmp.ne.s32.totalorder %s152, %s166
      %p168 = scmp.eq.s32.totalorder %s37, 0
      %p169 = por %p167, %p168
      %s171 = sadd.s32 %s170, 1
      %p174 = scmp.eq.s32.totalorder %s31, 1
      %p175 = scmp.ne.s32.totalorder %s170, %s172
      %p176 = scmp.eq.s32.totalorder %s31, 0
      %p177 = por %p175, %p176
      %p178 = scmp.ne.s32.totalorder %s170, %s172
      %p179 = scmp.eq.s32.totalorder %s36, 1
      %p180 = por %p178, %p179
      %p181 = scmp.ne.s32.totalorder %s172, %s173
      %p182 = scmp.eq.s32.totalorder %s36, 0
      %p183 = por %p181, %p182
      %p184 = scmp.ne.s32.totalorder %s172, %s173
      %p185 = scmp.eq.s32.totalorder %s37, 1
      %p186 = por %p184, %p185
      %p188 = scmp.ne.s32.totalorder %s173, %s187
      %p189 = scmp.eq.s32.totalorder %s37, 0
      %p190 = por %p188, %p189
      %s192 = sadd.s32 %s191, 1
      %p195 = scmp.eq.s32.totalorder %s31, 1
      %p196 = scmp.ne.s32.totalorder %s191, %s193
      %p197 = scmp.eq.s32.totalorder %s31, 0
      %p198 = por %p196, %p197
      %p199 = scmp.ne.s32.totalorder %s191, %s193
      %p200 = scmp.eq.s32.totalorder %s36, 1
      %p201 = por %p199, %p200
      %p202 = scmp.ne.s32.totalorder %s193, %s194
      %p203 = scmp.eq.s32.totalorder %s36, 0
      %p204 = por %p202, %p203
      %p205 = scmp.ne.s32.totalorder %s193, %s194
      %p206 = scmp.eq.s32.totalorder %s37, 1
      %p207 = por %p205, %p206
      %p209 = scmp.ne.s32.totalorder %s194, %s208
      %p210 = scmp.eq.s32.totalorder %s37, 0
      %p211 = por %p209, %p210
      %s213 = sadd.s32 %s212, 1
      %p216 = scmp.eq.s32.totalorder %s31, 1
      %p217 = scmp.ne.s32.totalorder %s212, %s214
      %p218 = scmp.eq.s32.totalorder %s31, 0
      %p219 = por %p217, %p218
      %p220 = scmp.ne.s32.totalorder %s212, %s214
      %p221 = scmp.eq.s32.totalorder %s36, 1
      %p222 = por %p220, %p221
      %p223 = scmp.ne.s32.totalorder %s214, %s215
      %p224 = scmp.eq.s32.totalorder %s36, 0
      %p225 = por %p223, %p224
      %p226 = scmp.ne.s32.totalorder %s214, %s215
      %p227 = scmp.eq.s32.totalorder %s37, 1
      %p228 = por %p226, %p227
      %p230 = scmp.ne.s32.totalorder %s215, %s229
      %p231 = scmp.eq.s32.totalorder %s37, 0
      %p232 = por %p230, %p231
      %s234 = sadd.s32 %s233, 1
      %p237 = scmp.eq.s32.totalorder %s31, 1
      %p238 = scmp.ne.s32.totalorder %s233, %s235
      %p239 = scmp.eq.s32.totalorder %s31, 0
      %p240 = por %p238, %p239
      %p241 = scmp.ne.s32.totalorder %s233, %s235
      %p242 = scmp.eq.s32.totalorder %s36, 1
      %p243 = por %p241, %p242
      %p244 = scmp.ne.s32.totalorder %s235, %s236
      %p245 = scmp.eq.s32.totalorder %s36, 0
      %p246 = por %p244, %p245
      %p247 = scmp.ne.s32.totalorder %s235, %s236
      %p248 = scmp.eq.s32.totalorder %s37, 1
      %p249 = por %p247, %p248
      %p251 = scmp.ne.s32.totalorder %s236, %s250
      %p252 = scmp.eq.s32.totalorder %s37, 0
      %p253 = por %p251, %p252
      %s255 = sadd.s32 %s254, 1
      %p258 = scmp.eq.s32.totalorder %s31, 1
      %p259 = scmp.ne.s32.totalorder %s254, %s256
      %p260 = scmp.eq.s32.totalorder %s31, 0
      %p261 = por %p259, %p260
      %p262 = scmp.ne.s32.totalorder %s254, %s256
      %p263 = scmp.eq.s32.totalorder %s36, 1
      %p264 = por %p262, %p263
      %p265 = scmp.ne.s32.totalorder %s256, %s257
      %p266 = scmp.eq.s32.totalorder %s36, 0
      %p267 = por %p265, %p266
      %p268 = scmp.ne.s32.totalorder %s256, %s257
      %p269 = scmp.eq.s32.totalorder %s37, 1
      %p270 = por %p268, %p269
      %p272 = scmp.ne.s32.totalorder %s257, %s271
      %p273 = scmp.eq.s32.totalorder %s37, 0
      %p274 = por %p272, %p273
      %s276 = sadd.s32 %s275, 1
      %p279 = scmp.eq.s32.totalorder %s31, 1
      %p280 = scmp.ne.s32.totalorder %s275, %s277
      %p281 = scmp.eq.s32.totalorder %s31, 0
      %p282 = por %p280, %p281
      %p283 = scmp.ne.s32.totalorder %s275, %s277
      %p284 = scmp.eq.s32.totalorder %s36, 1
      %p285 = por %p283, %p284
      %p286 = scmp.ne.s32.totalorder %s277, %s278
      %p287 = scmp.eq.s32.totalorder %s36, 0
      %p288 = por %p286, %p287
      %p289 = scmp.ne.s32.totalorder %s277, %s278
      %p290 = scmp.eq.s32.totalorder %s37, 1
      %p291 = por %p289, %p290
      %p293 = scmp.ne.s32.totalorder %s278, %s292
      %p294 = scmp.eq.s32.totalorder %s37, 0
      %p295 = por %p293, %p294
      %s297 = sadd.s32 %s296, 1
      %p300 = scmp.eq.s32.totalorder %s31, 1
      %p301 = scmp.ne.s32.totalorder %s296, %s298
      %p302 = scmp.eq.s32.totalorder %s31, 0
      %p303 = por %p301, %p302
      %p304 = scmp.ne.s32.totalorder %s296, %s298
      %p305 = scmp.eq.s32.totalorder %s36, 1
      %p306 = por %p304, %p305
      %p307 = scmp.ne.s32.totalorder %s298, %s299
      %p308 = scmp.eq.s32.totalorder %s36, 0
      %p309 = por %p307, %p308
      %p310 = scmp.ne.s32.totalorder %s298, %s299
      %p311 = scmp.eq.s32.totalorder %s37, 1
      %p312 = por %p310, %p311
      %p314 = scmp.ne.s32.totalorder %s299, %s313
      %p315 = scmp.eq.s32.totalorder %s37, 0
      %p316 = por %p314, %p315
      %s318 = sadd.s32 %s317, 1
      %p321 = scmp.eq.s32.totalorder %s31, 1
      %p322 = scmp.ne.s32.totalorder %s317, %s319
      %p323 = scmp.eq.s32.totalorder %s31, 0
      %p324 = por %p322, %p323
      %p325 = scmp.ne.s32.totalorder %s317, %s319
      %p326 = scmp.eq.s32.totalorder %s36, 1
      %p327 = por %p325, %p326
      %p328 = scmp.ne.s32.totalorder %s319, %s320
      %p329 = scmp.eq.s32.totalorder %s36, 0
      %p330 = por %p328, %p329
      %p331 = scmp.ne.s32.totalorder %s319, %s320
      %p332 = scmp.eq.s32.totalorder %s37, 1
      %p333 = por %p331, %p332
      %p335 = scmp.ne.s32.totalorder %s320, %s334
      %p336 = scmp.eq.s32.totalorder %s37, 0
      %p337 = por %p335, %p336
      %s339 = sadd.s32 %s338, 1
      %p342 = scmp.eq.s32.totalorder %s31, 1
      %p343 = scmp.ne.s32.totalorder %s338, %s340
      %p344 = scmp.eq.s32.totalorder %s31, 0
      %p345 = por %p343, %p344
      %p346 = scmp.ne.s32.totalorder %s338, %s340
      %p347 = scmp.eq.s32.totalorder %s36, 1
      %p348 = por %p346, %p347
      %p349 = scmp.ne.s32.totalorder %s340, %s341
      %p350 = scmp.eq.s32.totalorder %s36, 0
      %p351 = por %p349, %p350
      %p352 = scmp.ne.s32.totalorder %s340, %s341
      %p353 = scmp.eq.s32.totalorder %s37, 1
      %p354 = por %p352, %p353
      %p356 = scmp.ne.s32.totalorder %s341, %s355
      %p357 = scmp.eq.s32.totalorder %s37, 0
      %p358 = por %p356, %p357
      %s360 = sadd.s32 %s359, 1
      %p363 = scmp.eq.s32.totalorder %s31, 1
      %p364 = scmp.ne.s32.totalorder %s359, %s361
      %p365 = scmp.eq.s32.totalorder %s31, 0
      %p366 = por %p364, %p365
      %p367 = scmp.ne.s32.totalorder %s359, %s361
      %p368 = scmp.eq.s32.totalorder %s36, 1
      %p369 = por %p367, %p368
      %p370 = scmp.ne.s32.totalorder %s361, %s362
      %p371 = scmp.eq.s32.totalorder %s36, 0
      %p372 = por %p370, %p371
      %p373 = scmp.ne.s32.totalorder %s361, %s362
      %p374 = scmp.eq.s32.totalorder %s37, 1
      %p375 = por %p373, %p374
      %p377 = scmp.ne.s32.totalorder %s362, %s376
      %p378 = scmp.eq.s32.totalorder %s37, 0
      %p379 = por %p377, %p378
      %s381 = sadd.s32 %s380, 1
      %p384 = scmp.eq.s32.totalorder %s31, 1
      %p385 = scmp.ne.s32.totalorder %s380, %s382
      %p386 = scmp.eq.s32.totalorder %s31, 0
      %p387 = por %p385, %p386
      %p388 = scmp.ne.s32.totalorder %s380, %s382
      %p389 = scmp.eq.s32.totalorder %s36, 1
      %p390 = por %p388, %p389
      %p391 = scmp.ne.s32.totalorder %s382, %s383
      %p392 = scmp.eq.s32.totalorder %s36, 0
      %p393 = por %p391, %p392
      %p394 = scmp.ne.s32.totalorder %s382, %s383
      %p395 = scmp.eq.s32.totalorder %s37, 1
      %p396 = por %p394, %p395
      %p398 = scmp.ne.s32.totalorder %s383, %s397
      %p399 = scmp.eq.s32.totalorder %s37, 0
      %p400 = por %p398, %p399
      %s402 = sadd.s32 %s401, 1
      %p405 = scmp.eq.s32.totalorder %s31, 1
      %p406 = scmp.ne.s32.totalorder %s401, %s403
      %p407 = scmp.eq.s32.totalorder %s31, 0
      %p408 = por %p406, %p407
      %p409 = scmp.ne.s32.totalorder %s401, %s403
      %p410 = scmp.eq.s32.totalorder %s36, 1
      %p411 = por %p409, %p410
      %p412 = scmp.ne.s32.totalorder %s403, %s404
      %p413 = scmp.eq.s32.totalorder %s36, 0
      %p414 = por %p412, %p413
      %p415 = scmp.ne.s32.totalorder %s403, %s404
      %p416 = scmp.eq.s32.totalorder %s37, 1
      %p417 = por %p415, %p416
      %p419 = scmp.ne.s32.totalorder %s404, %s418
      %p420 = scmp.eq.s32.totalorder %s37, 0
      %p421 = por %p419, %p420
      %s423 = sadd.s32 %s422, 1
      %p426 = scmp.eq.s32.totalorder %s31, 1
      %p427 = scmp.ne.s32.totalorder %s422, %s424
      %p428 = scmp.eq.s32.totalorder %s31, 0
      %p429 = por %p427, %p428
      %p430 = scmp.ne.s32.totalorder %s422, %s424
      %p431 = scmp.eq.s32.totalorder %s36, 1
      %p432 = por %p430, %p431
      %p433 = scmp.ne.s32.totalorder %s424, %s425
      %p434 = scmp.eq.s32.totalorder %s36, 0
      %p435 = por %p433, %p434
      %p436 = scmp.ne.s32.totalorder %s424, %s425
      %p437 = scmp.eq.s32.totalorder %s37, 1
      %p438 = por %p436, %p437
      %p440 = scmp.ne.s32.totalorder %s425, %s439
      %p441 = scmp.eq.s32.totalorder %s37, 0
      %p442 = por %p440, %p441
      %s444 = sadd.s32 %s443, 1
      %p447 = scmp.eq.s32.totalorder %s31, 1
      %p448 = scmp.ne.s32.totalorder %s443, %s445
      %p449 = scmp.eq.s32.totalorder %s31, 0
      %p450 = por %p448, %p449
      %p451 = scmp.ne.s32.totalorder %s443, %s445
      %p452 = scmp.eq.s32.totalorder %s36, 1
      %p453 = por %p451, %p452
      %p454 = scmp.ne.s32.totalorder %s445, %s446
      %p455 = scmp.eq.s32.totalorder %s36, 0
      %p456 = por %p454, %p455
      %p457 = scmp.ne.s32.totalorder %s445, %s446
      %p458 = scmp.eq.s32.totalorder %s37, 1
      %p459 = por %p457, %p458
      %p461 = scmp.ne.s32.totalorder %s446, %s460
      %p462 = scmp.eq.s32.totalorder %s37, 0
      %p463 = por %p461, %p462
      %s464 = ssub.s32 %s31, %s38
      %p465 = scmp.eq.s32.totalorder %s464, 0
      %s467 = sadd.s32 %s466, 1
      %s468 = scalar_select %p465, %s466, %s467
      %p471 = pneg %p465
      %p472 = scmp.eq.s32.totalorder %s31, 1
      %p473 = por %p471, %p472
      %p474 = scmp.ne.s32.totalorder %s466, %s469
      %p475 = scmp.eq.s32.totalorder %s31, 0
      %p476 = por %p474, %p475
      %p477 = scmp.ne.s32.totalorder %s466, %s469
      %p478 = scmp.eq.s32.totalorder %s36, 1
      %p479 = por %p477, %p478
      %p480 = scmp.ne.s32.totalorder %s469, %s470
      %p481 = scmp.eq.s32.totalorder %s36, 0
      %p482 = por %p480, %p481
      %p483 = scmp.ne.s32.totalorder %s469, %s470
      %p484 = scmp.eq.s32.totalorder %s37, 1
      %p485 = por %p483, %p484
      %p487 = scmp.ne.s32.totalorder %s470, %s486
      %p488 = scmp.eq.s32.totalorder %s37, 0
      %p489 = por %p487, %p488
      %p490 = scmp.le.s32.totalorder 1, %s31
      %p491 = scmp.lt.s32.totalorder %s31, 3
      %p492 = pnand %p490, %p491
      %p493 = pneg %p492
      // Predicated region
      $region9: #{logical_transformer_forward.10} parent=5 // pred_check
        _
      $region10: #{logical_transformer_forward.10} parent=5 // pred_check_branch
        %495 = sbr.rel (%p492) target = $region12
      $region11: #{logical_transformer_forward.10} parent=5 // pred_region
        %s496 = ssub.s32 %s31, 1
        // Predicated region
        $region13: #{logical_transformer_forward.10} parent=11 // pred_check
          %p497 = pneg %p78
        $region14: #{logical_transformer_forward.10} parent=11 // pred_check_branch
          %499 = sbr.rel (%p497) target = $region16
        $region15: #{logical_transformer_forward.10} parent=11 // pred_region
          _
        $region16: #{logical_transformer_forward.10} parent=11 // pred_fallthru
          _
        // Predicated region
        $region17: #{logical_transformer_forward.10} parent=11 // pred_check
          %p500 = pneg %p99
        $region18: #{logical_transformer_forward.10} parent=11 // pred_check_branch
          %502 = sbr.rel (%p500) target = $region20
        $region19: #{logical_transformer_forward.10} parent=11 // pred_region
          _
        $region20: #{logical_transformer_forward.10} parent=11 // pred_fallthru
          _
        // Predicated region
        $region21: #{logical_transformer_forward.10} parent=11 // pred_check
          %p503 = pneg %p120
        $region22: #{logical_transformer_forward.10} parent=11 // pred_check_branch
          %505 = sbr.rel (%p503) target = $region24
        $region23: #{logical_transformer_forward.10} parent=11 // pred_region
          _
        $region24: #{logical_transformer_forward.10} parent=11 // pred_fallthru
          _
        // Predicated region
        $region25: #{logical_transformer_forward.10} parent=11 // pred_check
          %p506 = pneg %p141
        $region26: #{logical_transformer_forward.10} parent=11 // pred_check_branch
          %508 = sbr.rel (%p506) target = $region28
        $region27: #{logical_transformer_forward.10} parent=11 // pred_region
          _
        $region28: #{logical_transformer_forward.10} parent=11 // pred_fallthru
          _
        // Predicated region
        $region29: #{logical_transformer_forward.10} parent=11 // pred_check
          %p509 = pneg %p162
        $region30: #{logical_transformer_forward.10} parent=11 // pred_check_branch
          %511 = sbr.rel (%p509) target = $region32
        $region31: #{logical_transformer_forward.10} parent=11 // pred_region
          _
        $region32: #{logical_transformer_forward.10} parent=11 // pred_fallthru
          _
        // Predicated region
        $region33: #{logical_transformer_forward.10} parent=11 // pred_check
          %p512 = pneg %p183
        $region34: #{logical_transformer_forward.10} parent=11 // pred_check_branch
          %514 = sbr.rel (%p512) target = $region36
        $region35: #{logical_transformer_forward.10} parent=11 // pred_region
          _
        $region36: #{logical_transformer_forward.10} parent=11 // pred_fallthru
          _
        // Predicated region
        $region37: #{logical_transformer_forward.10} parent=11 // pred_check
          %p515 = pneg %p204
        $region38: #{logical_transformer_forward.10} parent=11 // pred_check_branch
          %517 = sbr.rel (%p515) target = $region40
        $region39: #{logical_transformer_forward.10} parent=11 // pred_region
          _
        $region40: #{logical_transformer_forward.10} parent=11 // pred_fallthru
          _
        // Predicated region
        $region41: #{logical_transformer_forward.10} parent=11 // pred_check
          %p518 = pneg %p225
        $region42: #{logical_transformer_forward.10} parent=11 // pred_check_branch
          %520 = sbr.rel (%p518) target = $region44
        $region43: #{logical_transformer_forward.10} parent=11 // pred_region
          _
        $region44: #{logical_transformer_forward.10} parent=11 // pred_fallthru
          _
        // Predicated region
        $region45: #{logical_transformer_forward.10} parent=11 // pred_check
          %p521 = pneg %p246
        $region46: #{logical_transformer_forward.10} parent=11 // pred_check_branch
          %523 = sbr.rel (%p521) target = $region48
        $region47: #{logical_transformer_forward.10} parent=11 // pred_region
          %525 = vsyncadd [#allocation3], 0
          %s527 = sshll.u32 %s9, 4
          %s528 = int_to_ptr.hbm [resolvable:$true] %s527
          %s529 = sshll.u32 [#allocation2], 4
          %s530 = int_to_ptr.vmem [resolvable:$true] %s529
          %532 = dma.hbm_to_vmem [thread:$0]  %s528, 16, %s530, [#allocation3]
        $region48: #{logical_transformer_forward.10} parent=11 // pred_fallthru
          _
        // Predicated region
        $region49: #{logical_transformer_forward.10} parent=11 // pred_check
          %p533 = pneg %p267
        $region50: #{logical_transformer_forward.10} parent=11 // pred_check_branch
          %535 = sbr.rel (%p533) target = $region52
        $region51: #{logical_transformer_forward.10} parent=11 // pred_region
          %537 = vsyncadd [#allocation5], 0
          %s539 = sshll.u32 %s10, 4
          %s540 = int_to_ptr.hbm [resolvable:$true] %s539
          %s541 = sshll.u32 [#allocation4], 4
          %s542 = int_to_ptr.vmem [resolvable:$true] %s541
          %544 = dma.hbm_to_vmem [thread:$0]  %s540, 16, %s542, [#allocation5]
        $region52: #{logical_transformer_forward.10} parent=11 // pred_fallthru
          _
        // Predicated region
        $region53: #{logical_transformer_forward.10} parent=11 // pred_check
          %p545 = pneg %p288
        $region54: #{logical_transformer_forward.10} parent=11 // pred_check_branch
          %547 = sbr.rel (%p545) target = $region56
        $region55: #{logical_transformer_forward.10} parent=11 // pred_region
          %549 = vsyncadd [#allocation5], 0
          %s551 = sshll.u32 %s11, 4
          %s552 = int_to_ptr.hbm [resolvable:$true] %s551
          %s553 = sshll.u32 [#allocation6], 4
          %s554 = int_to_ptr.vmem [resolvable:$true] %s553
          %556 = dma.hbm_to_vmem [thread:$0]  %s552, 16, %s554, [#allocation5]
        $region56: #{logical_transformer_forward.10} parent=11 // pred_fallthru
          _
        // Predicated region
        $region57: #{logical_transformer_forward.10} parent=11 // pred_check
          %p557 = pneg %p309
        $region58: #{logical_transformer_forward.10} parent=11 // pred_check_branch
          %559 = sbr.rel (%p557) target = $region60
        $region59: #{logical_transformer_forward.10} parent=11 // pred_region
          _
        $region60: #{logical_transformer_forward.10} parent=11 // pred_fallthru
          _
        // Predicated region
        $region61: #{logical_transformer_forward.10} parent=11 // pred_check
          %p560 = pneg %p330
        $region62: #{logical_transformer_forward.10} parent=11 // pred_check_branch
          %562 = sbr.rel (%p560) target = $region64
        $region63: #{logical_transformer_forward.10} parent=11 // pred_region
          %564 = vsyncadd [#allocation8], 0
          %s566 = sshll.u32 %s13, 4
          %s567 = int_to_ptr.hbm [resolvable:$true] %s566
          %s568 = sshll.u32 [#allocation7], 4
          %s569 = int_to_ptr.vmem [resolvable:$true] %s568
          %571 = dma.hbm_to_vmem [thread:$0]  %s567, 16, %s569, [#allocation8]
        $region64: #{logical_transformer_forward.10} parent=11 // pred_fallthru
          _
        // Predicated region
        $region65: #{logical_transformer_forward.10} parent=11 // pred_check
          %p572 = pneg %p351
        $region66: #{logical_transformer_forward.10} parent=11 // pred_check_branch
          %574 = sbr.rel (%p572) target = $region68
        $region67: #{logical_transformer_forward.10} parent=11 // pred_region
          _
        $region68: #{logical_transformer_forward.10} parent=11 // pred_fallthru
          _
        // Predicated region
        $region69: #{logical_transformer_forward.10} parent=11 // pred_check
          %p575 = pneg %p372
        $region70: #{logical_transformer_forward.10} parent=11 // pred_check_branch
          %577 = sbr.rel (%p575) target = $region72
        $region71: #{logical_transformer_forward.10} parent=11 // pred_region
          %579 = vsyncadd [#allocation8], 0
          %s581 = sshll.u32 %s15, 4
          %s582 = int_to_ptr.hbm [resolvable:$true] %s581
          %s583 = sshll.u32 [#allocation9], 4
          %s584 = int_to_ptr.vmem [resolvable:$true] %s583
          %586 = dma.hbm_to_vmem [thread:$0]  %s582, 16, %s584, [#allocation8]
        $region72: #{logical_transformer_forward.10} parent=11 // pred_fallthru
          _
        // Predicated region
        $region73: #{logical_transformer_forward.10} parent=11 // pred_check
          %p587 = pneg %p393
        $region74: #{logical_transformer_forward.10} parent=11 // pred_check_branch
          %589 = sbr.rel (%p587) target = $region76
        $region75: #{logical_transformer_forward.10} parent=11 // pred_region
          _
        $region76: #{logical_transformer_forward.10} parent=11 // pred_fallthru
          _
        // Predicated region
        $region77: #{logical_transformer_forward.10} parent=11 // pred_check
          %p590 = pneg %p414
        $region78: #{logical_transformer_forward.10} parent=11 // pred_check_branch
          %592 = sbr.rel (%p590) target = $region80
        $region79: #{logical_transformer_forward.10} parent=11 // pred_region
          %594 = vsyncadd [#allocation11], 0
          %s596 = sshll.u32 %s17, 4
          %s597 = int_to_ptr.hbm [resolvable:$true] %s596
          %s598 = sshll.u32 [#allocation10], 4
          %s599 = int_to_ptr.vmem [resolvable:$true] %s598
          %601 = dma.hbm_to_vmem [thread:$0]  %s597, 16, %s599, [#allocation11]
        $region80: #{logical_transformer_forward.10} parent=11 // pred_fallthru
          _
        // Predicated region
        $region81: #{logical_transformer_forward.10} parent=11 // pred_check
          %p602 = pneg %p435
        $region82: #{logical_transformer_forward.10} parent=11 // pred_check_branch
          %604 = sbr.rel (%p602) target = $region84
        $region83: #{logical_transformer_forward.10} parent=11 // pred_region
          %606 = vsyncadd [#allocation11], 0
          %s608 = sshll.u32 %s18, 4
          %s609 = int_to_ptr.hbm [resolvable:$true] %s608
          %s610 = sshll.u32 [#allocation12], 4
          %s611 = int_to_ptr.vmem [resolvable:$true] %s610
          %613 = dma.hbm_to_vmem [thread:$0]  %s609, 16, %s611, [#allocation11]
        $region84: #{logical_transformer_forward.10} parent=11 // pred_fallthru
          _
        // Predicated region
        $region85: #{logical_transformer_forward.10} parent=11 // pred_check
          %p614 = pneg %p456
        $region86: #{logical_transformer_forward.10} parent=11 // pred_check_branch
          %616 = sbr.rel (%p614) target = $region88
        $region87: #{logical_transformer_forward.10} parent=11 // pred_region
          %618 = vsyncadd [#allocation14], 0
          %s620 = sshll.u32 %s19, 4
          %s621 = int_to_ptr.hbm [resolvable:$true] %s620
          %s622 = sshll.u32 [#allocation13], 4
          %s623 = int_to_ptr.vmem [resolvable:$true] %s622
          %625 = dma.hbm_to_vmem [thread:$0]  %s621, 16, %s623, [#allocation14]
        $region88: #{logical_transformer_forward.10} parent=11 // pred_fallthru
          _
      $region12: #{logical_transformer_forward.10} parent=5 // pred_fallthru
        _
      %p626 = scmp.lt.s32.totalorder %s31, 2
      // Predicated region
      $region89: #{logical_transformer_forward.10} parent=5 // pred_check
        %p627 = pneg %p626
      $region90: #{logical_transformer_forward.10} parent=5 // pred_check_branch
        %629 = sbr.rel (%p627) target = $region92
      $region91: #{logical_transformer_forward.10} parent=5 // pred_region
        // Predicated region
        $region93: #{logical_transformer_forward.10} parent=91 // pred_check
          %p630 = pneg %p51
        $region94: #{logical_transformer_forward.10} parent=91 // pred_check_branch
          %632 = sbr.rel (%p630) target = $region96
        $region95: #{logical_transformer_forward.10} parent=91 // pred_region
          %p633 = scmp.lt.s32.totalorder %s31, 1
          %s634 = scalar_select %p633, %s31, 1
          %s635 = smul.addr %s634, 4
          %s636 = scalar_lea.vmem %s0, %s635
        $region96: #{logical_transformer_forward.10} parent=91 // pred_fallthru
          _
      $region92: #{logical_transformer_forward.10} parent=5 // pred_fallthru
        _
      %p637 = scmp.le.s32.totalorder 1, %s31
      %p638 = scmp.lt.s32.totalorder %s31, 3
      %p639 = pnand %p637, %p638
      %p640 = pneg %p639
      // Predicated region
      $region97: #{logical_transformer_forward.10} parent=5 // pred_check
        _
      $region98: #{logical_transformer_forward.10} parent=5 // pred_check_branch
        %642 = sbr.rel (%p639) target = $region100
      $region99: #{logical_transformer_forward.10} parent=5 // pred_region
        %s643 = ssub.s32 %s31, 1
        // Predicated region
        $region101: #{logical_transformer_forward.10} parent=99 // pred_check
          %p644 = pneg %p246
        $region102: #{logical_transformer_forward.10} parent=99 // pred_check_branch
          %646 = sbr.rel (%p644) target = $region104
        $region103: #{logical_transformer_forward.10} parent=99 // pred_region
          %648 = dma.done [#allocation3], 16
        $region104: #{logical_transformer_forward.10} parent=99 // pred_fallthru
          _
        // Predicated region
        $region105: #{logical_transformer_forward.10} parent=99 // pred_check
          %p649 = pneg %p267
        $region106: #{logical_transformer_forward.10} parent=99 // pred_check_branch
          %651 = sbr.rel (%p649) target = $region108
        $region107: #{logical_transformer_forward.10} parent=99 // pred_region
          %653 = dma.done [#allocation5], 16
        $region108: #{logical_transformer_forward.10} parent=99 // pred_fallthru
          _
        // Predicated region
        $region109: #{logical_transformer_forward.10} parent=99 // pred_check
          %p654 = pneg %p288
        $region110: #{logical_transformer_forward.10} parent=99 // pred_check_branch
          %656 = sbr.rel (%p654) target = $region112
        $region111: #{logical_transformer_forward.10} parent=99 // pred_region
          %658 = dma.done [#allocation5], 16
        $region112: #{logical_transformer_forward.10} parent=99 // pred_fallthru
          _
        // Predicated region
        $region113: #{logical_transformer_forward.10} parent=99 // pred_check
          %p659 = pneg %p330
        $region114: #{logical_transformer_forward.10} parent=99 // pred_check_branch
          %661 = sbr.rel (%p659) target = $region116
        $region115: #{logical_transformer_forward.10} parent=99 // pred_region
          %663 = dma.done [#allocation8], 16
        $region116: #{logical_transformer_forward.10} parent=99 // pred_fallthru
          _
        // Predicated region
        $region117: #{logical_transformer_forward.10} parent=99 // pred_check
          %p664 = pneg %p372
        $region118: #{logical_transformer_forward.10} parent=99 // pred_check_branch
          %666 = sbr.rel (%p664) target = $region120
        $region119: #{logical_transformer_forward.10} parent=99 // pred_region
          %668 = dma.done [#allocation8], 16
        $region120: #{logical_transformer_forward.10} parent=99 // pred_fallthru
          _
        // Predicated region
        $region121: #{logical_transformer_forward.10} parent=99 // pred_check
          %p669 = pneg %p414
        $region122: #{logical_transformer_forward.10} parent=99 // pred_check_branch
          %671 = sbr.rel (%p669) target = $region124
        $region123: #{logical_transformer_forward.10} parent=99 // pred_region
          %673 = dma.done [#allocation11], 16
        $region124: #{logical_transformer_forward.10} parent=99 // pred_fallthru
          _
        // Predicated region
        $region125: #{logical_transformer_forward.10} parent=99 // pred_check
          %p674 = pneg %p435
        $region126: #{logical_transformer_forward.10} parent=99 // pred_check_branch
          %676 = sbr.rel (%p674) target = $region128
        $region127: #{logical_transformer_forward.10} parent=99 // pred_region
          %678 = dma.done [#allocation11], 16
        $region128: #{logical_transformer_forward.10} parent=99 // pred_fallthru
          _
        // Predicated region
        $region129: #{logical_transformer_forward.10} parent=99 // pred_check
          %p679 = pneg %p456
        $region130: #{logical_transformer_forward.10} parent=99 // pred_check_branch
          %681 = sbr.rel (%p679) target = $region132
        $region131: #{logical_transformer_forward.10} parent=99 // pred_region
          %683 = dma.done [#allocation14], 16
        $region132: #{logical_transformer_forward.10} parent=99 // pred_fallthru
          _
        %p684 = scmp.lt.s32.totalorder %s36, 1
        %s685 = scalar_select %p684, %s36, 1
        %s686 = smul.addr %s685, 4
        %s687 = scalar_lea.vmem %s0, %s686
        %p688 = pneg %p57
        %p689 = pneg %p54
        %p690 = pneg %p78
        %p691 = pneg %p75
        %p692 = pneg %p99
        %p693 = pneg %p96
        %p694 = pneg %p120
        %p695 = pneg %p117
        %p696 = pneg %p141
        %p697 = pneg %p138
        %p698 = pneg %p162
        %p699 = pneg %p159
        %p700 = pneg %p183
        %p701 = pneg %p180
        %p702 = pneg %p204
        %p703 = pneg %p201
        %p704 = pneg %p225
        %p705 = pneg %p222
        %p706 = pneg %p246
        %p707 = pneg %p243
        %p708 = pneg %p267
        %p709 = pneg %p264
        %p710 = pneg %p288
        %p711 = pneg %p285
        %p712 = pneg %p309
        %p713 = pneg %p306
        %p714 = pneg %p330
        %p715 = pneg %p327
        %p716 = pneg %p351
        %p717 = pneg %p348
        %p718 = pneg %p372
        %p719 = pneg %p369
        %p720 = pneg %p393
        %p721 = pneg %p390
        %p722 = pneg %p414
        %p723 = pneg %p411
        %p724 = pneg %p435
        %p725 = pneg %p432
        %p726 = pneg %p456
        %p727 = pneg %p453
        %p728 = pneg %p482
        %p729 = pneg %p479
        %p730 = scmp.lt.s32.totalorder %s36, 1
        %s731 = scalar_select %p730, %s36, 1
        %s732 = smul.addr %s731, 4
        %s733 = scalar_lea.vmem %s20, %s732
        %p734 = scmp.lt.s32.totalorder %s36, 1
        %s735 = scalar_select %p734, %s36, 1
        %s736 = smul.addr %s735, 4
        %s737 = scalar_lea.vmem %s0, %s736
        %p738 = scmp.lt.s32.totalorder %s36, 1
        %s739 = scalar_select %p738, %s36, 1
        %s740 = smul.addr %s739, 4
        %s741 = scalar_lea.vmem %s20, %s740
        %v743 = vld [vmem:[%s737] sm:$0xf]
        %v744 = vld [vmem:[%s1] sm:$0x1]
        %v746 = vperm.slane %v744, 0
        %v748 = vadd.f32 %v743, %v746
        %v749 = vld [vmem:[%s3] sm:$0x3]
        %v751 = vrot.slane %v748, 1
        %v752 = vrot.slane %v748, 2
        %v753 = vrot.slane %v748, 3
        %v754 = vperm.slane %v748, 0
        %v755 = vperm.slane %v751, 0
        %v756 = vperm.slane %v752, 0
        %v757 = vperm.slane %v753, 0
        %v762 = vadd.f32 %v754, %v749
        %v763 = vadd.f32 %v755, %v749
        %v764 = vadd.f32 %v756, %v749
        %v765 = vadd.f32 %v757, %v749
        %v766 = vld [vmem:[%s2] sm:$0x1]
        %v767 = vpack.c.bf16 %v766, %v766
        %v768 = vld [vmem:[%s4] sm:$0xf]
        %v769 = vld [vmem:[%s4 + $0x4] sm:$0xf]
        %v770 = vld [vmem:[%s4 + $0x8] sm:$0xf]
        %v771 = vld [vmem:[%s4 + $0xc] sm:$0xf]
        %v772 = vld [vmem:[%s5] sm:$0x1]
        %v777 = vunpack.c.l.b16 %v768
        %v778 = vunpack.c.l.b16 %v769
        %v779 = vunpack.c.l.b16 %v770
        %v780 = vunpack.c.l.b16 %v771
        %v781 = vpack.c.b16 %v778, %v777
        %v782 = vpack.c.b16 %v780, %v779
        %vm785 = vcmask 261120
        %v787 = vsel %vm785, %v767, 0
        %789 = vmatpush.bf16.msra.mxu0 0
        %790 = vmatpush.bf16.msra.mxu0 0
        %791 = vmatpush.bf16.msra.mxu0 0
        %792 = vmatpush.bf16.msra.mxu0 0
        %793 = vmatpush.bf16.msra.mxu0 0
        %794 = vmatpush.bf16.msra.mxu0 0
        %795 = vmatpush.bf16.msra.mxu0 %v782
        %796 = vmatpush.bf16.msra.mxu0 %v781
        %797 = vmatmul.bf16.gmra.mxu0 %v787
        %v798 = vpop.f32.mrf.mxu0
        %v799 = vadd.f32 %v772, %v798
        %v800 = vpop.f32.mrf.mxu0
        %801 = vdwg.mxu0
        %806 = vst [vmem:[#allocation1] ss:$4 sm:$0xff] %v762
        %s807 = scalar_lea.vmem [#allocation1], 1
        %808 = vst [vmem:[%s807] ss:$4 sm:$0xff] %v763
        %s809 = scalar_lea.vmem [#allocation1], 2
        %810 = vst [vmem:[%s809] ss:$4 sm:$0xff] %v764
        %s811 = scalar_lea.vmem [#allocation1], 3
        %812 = vst [vmem:[%s811] ss:$4 sm:$0xff] %v765
        %v813 = vld.sshfl [vmem:[#allocation1] sm:$0xff pattern:$0x73625140]
        %v815 = vpack.c.bf16 %v813, %v813
        %v816 = vld [vmem:[%s6] sm:$0xf]
        %v817 = vld [vmem:[%s6 + $0x4] sm:$0xf]
        %v818 = vld [vmem:[%s6 + $0x8] sm:$0xf]
        %v819 = vld [vmem:[%s6 + $0xc] sm:$0xf]
        %v820 = vld [vmem:[%s7] sm:$0x1]
        %v822 = vperm.slane %v820, 0
        %v828 = vunpack.c.l.b16 %v816
        %v829 = vunpack.c.l.b16 %v817
        %v830 = vunpack.c.l.b16 %v818
        %v831 = vunpack.c.l.b16 %v819
        %v832 = vpack.c.b16 %v829, %v828
        %v833 = vpack.c.b16 %v831, %v830
        %v837 = vsel %vm785, %v815, 0
        %839 = vmatpush.bf16.msra.mxu0 0
        %840 = vmatpush.bf16.msra.mxu0 0
        %841 = vmatpush.bf16.msra.mxu0 0
        %842 = vmatpush.bf16.msra.mxu0 0
        %843 = vmatpush.bf16.msra.mxu0 0
        %844 = vmatpush.bf16.msra.mxu0 0
        %845 = vmatpush.bf16.msra.mxu0 %v833
        %846 = vmatpush.bf16.msra.mxu0 %v832
        %847 = vmatmul.bf16.gmra.mxu0 %v837
        %v848 = vpop.f32.mrf.mxu0
        %v849 = vadd.f32 %v822, %v848
        %v850 = vpop.f32.mrf.mxu0
        %851 = vdwg.mxu0
        %v852 = vperm.slane %v799, 0
        %v853 = vadd.f32 %v852, %v849
        %v854 = vxor.u32 %v853, 2147483648
        %v855 = vmul.f32 %v854, 1.442695
        %v856 = vpow.pop %v855
        %v857 = vadd.f32 %v856, 1.0
        %v858 = vrcp.pop %v857
        %v859 = vmul.f32 %v857, %v858
        %v860 = vsub.f32 1.0, %v859
        %v861 = vmul.f32 %v858, %v860
        %v862 = vadd.f32 %v858, %v861
        %vm863 = vweird.f32 %v857
        %vm864 = vweird.f32 %v858
        %vm865 = vmor %vm863, %vm864
        %v866 = vsel %vm865, %v858, %v862
        %v867 = vand.u32 2147483647, %v857
        %vm868 = vcmp.eq.f32.partialorder %v867, 8.507059e+37
        %v869 = vand.u32 %v857, 2147483648
        %v870 = vor.u32 1.1754944e-38, %v869
        %v871 = vsel %vm868, %v870, %v866
        %v872 = vmul.f32 1.0, %v871
        %v874 = vrot.slane %v872, 2
        %v875 = vrot.slane %v872, 4
        %v876 = vrot.slane %v872, 6
        %877 = vrot.lane.b32.xlu0 %v872, 96
        %v878 = vpop.permute.xlu0 %877
        %879 = vrot.lane.b32.xlu0 %v874, 96
        %v880 = vpop.permute.xlu0 %879
        %881 = vrot.lane.b32.xlu0 %v875, 96
        %v882 = vpop.permute.xlu0 %881
        %883 = vrot.lane.b32.xlu0 %v876, 96
        %v884 = vpop.permute.xlu0 %883
        %v889 = vmul.f32 %v762, %v878
        %v890 = vmul.f32 %v763, %v880
        %v891 = vmul.f32 %v764, %v882
        %v892 = vmul.f32 %v765, %v884
        %897 = vst [vmem:[#allocation1] ss:$4 sm:$0xff] %v889
        %s898 = scalar_lea.vmem [#allocation1], 1
        %899 = vst [vmem:[%s898] ss:$4 sm:$0xff] %v890
        %s900 = scalar_lea.vmem [#allocation1], 2
        %901 = vst [vmem:[%s900] ss:$4 sm:$0xff] %v891
        %s902 = scalar_lea.vmem [#allocation1], 3
        %903 = vst [vmem:[%s902] ss:$4 sm:$0xff] %v892
        %v904 = vld.sshfl [vmem:[#allocation1] sm:$0xff pattern:$0x73625140]
        %v906 = vpack.c.bf16 %v904, %v904
        %v907 = vld [vmem:[%s8] sm:$0xf]
        %v908 = vld [vmem:[%s8 + $0x4] sm:$0xf]
        %v909 = vld [vmem:[%s8 + $0x8] sm:$0xf]
        %v910 = vld [vmem:[%s8 + $0xc] sm:$0xf]
        %v911 = vld [vmem:[#allocation2] sm:$0x1]
        %v913 = vperm.slane %v911, 0
        %v919 = vunpack.c.l.b16 %v907
        %v920 = vunpack.c.l.b16 %v908
        %v921 = vunpack.c.l.b16 %v909
        %v922 = vunpack.c.l.b16 %v910
        %v923 = vpack.c.b16 %v920, %v919
        %v924 = vpack.c.b16 %v922, %v921
        %v928 = vsel %vm785, %v906, 0
        %930 = vmatpush.bf16.msra.mxu0 0
        %931 = vmatpush.bf16.msra.mxu0 0
        %932 = vmatpush.bf16.msra.mxu0 0
        %933 = vmatpush.bf16.msra.mxu0 0
        %934 = vmatpush.bf16.msra.mxu0 0
        %935 = vmatpush.bf16.msra.mxu0 0
        %936 = vmatpush.bf16.msra.mxu0 %v924
        %937 = vmatpush.bf16.msra.mxu0 %v923
        %938 = vmatmul.bf16.gmra.mxu0 %v928
        %v939 = vpop.f32.mrf.mxu0
        %v940 = vadd.f32 %v913, %v939
        %v941 = vpop.f32.mrf.mxu0
        %942 = vdwg.mxu0
        %944 = vrot.lane.b32.xlu0 %v940, 64
        %v945 = vpop.permute.xlu0 %944
        %v947 = vadd.f32 %v852, %v945
        %v948 = vtanh.pop %v947
        %v949 = vsub.f32 1.0, %v872
        %950 = vst [vmem:[#allocation1] ss:$4 sm:$0xff] %v762
        %s951 = scalar_lea.vmem [#allocation1], 1
        %952 = vst [vmem:[%s951] ss:$4 sm:$0xff] %v763
        %s953 = scalar_lea.vmem [#allocation1], 2
        %954 = vst [vmem:[%s953] ss:$4 sm:$0xff] %v764
        %s955 = scalar_lea.vmem [#allocation1], 3
        %956 = vst [vmem:[%s955] ss:$4 sm:$0xff] %v765
        %v957 = vld.sshfl [vmem:[#allocation1] sm:$0xff pattern:$0x73625140]
        %v959 = vmul.f32 %v949, %v957
        %961 = vrot.lane.b32.xlu0 %v948, 64
        %v962 = vpop.permute.xlu0 %961
        %v964 = vmul.f32 %v872, %v962
        %v965 = vadd.f32 %v959, %v964
        %v966 = vld [vmem:[#allocation4] sm:$0x1]
        %v967 = vld [vmem:[#allocation6] sm:$0x1]
        %v968 = vsel %vm785, %v965, 0.0
        %969 = vadd.xlane.f32.xlu0 %v968
        %v970 = vpop.xlane.xlu0 %969
        %v971 = vrcp.pop 32.0
        %v972 = vmul.f32 32.0, %v971
        %v973 = vsub.f32 1.0, %v972
        %v974 = vmul.f32 %v971, %v973
        %v975 = vadd.f32 %v971, %v974
        %vm976 = vweird.f32 %v971
        %v977 = vsel %vm976, %v971, %v975
        %v978 = vmul.f32 %v970, %v977
        %v979 = vsub.f32 %v965, %v978
        %v980 = vmul.f32 %v979, %v979
        %v981 = vsel %vm785, %v980, 0.0
        %982 = vadd.xlane.f32.xlu0 %v981
        %v983 = vpop.xlane.xlu0 %982
        %v984 = vmul.f32 %v983, %v977
        %v985 = vadd.f32 %v984, 1e-12
        %v986 = vrsqrt.pop %v985
        %v987 = vmul.f32 %v986, %v985
        %v988 = vmul.f32 %v987, %v986
        %v989 = vmul.f32 0.5, %v988
        %v990 = vsub.f32 1.5, %v989
        %v991 = vmul.f32 %v986, %v990
        %vm992 = vweird.f32 %v985
        %vm993 = vweird.f32 %v986
        %vm994 = vmor %vm992, %vm993
        %v995 = vsel %vm994, %v986, %v991
        %v996 = vmul.f32 %v979, %v995
        %v998 = vperm.slane %v966, 0
        %v1000 = vmul.f32 %v996, %v998
        %v1002 = vperm.slane %v967, 0
        %v1004 = vadd.f32 %v1000, %v1002
        %v1005 = vpack.c.bf16 %v1004, %v1004
        %v1006 = vld [vmem:[%s12] sm:$0xf]
        %v1007 = vld [vmem:[%s12 + $0x4] sm:$0xf]
        %v1008 = vld [vmem:[%s12 + $0x8] sm:$0xf]
        %v1009 = vld [vmem:[%s12 + $0xc] sm:$0xf]
        %v1010 = vld [vmem:[#allocation7] sm:$0x1]
        %v1012 = vperm.slane %v1010, 0
        %v1018 = vunpack.c.l.b16 %v1006
        %v1019 = vunpack.c.l.b16 %v1007
        %v1020 = vunpack.c.l.b16 %v1008
        %v1021 = vunpack.c.l.b16 %v1009
        %v1022 = vpack.c.b16 %v1019, %v1018
        %v1023 = vpack.c.b16 %v1021, %v1020
        %v1027 = vsel %vm785, %v1005, 0
        %1029 = vmatpush.bf16.msra.mxu0 0
        %1030 = vmatpush.bf16.msra.mxu0 0
        %1031 = vmatpush.bf16.msra.mxu0 0
        %1032 = vmatpush.bf16.msra.mxu0 0
        %1033 = vmatpush.bf16.msra.mxu0 0
        %1034 = vmatpush.bf16.msra.mxu0 0
        %1035 = vmatpush.bf16.msra.mxu0 %v1023
        %1036 = vmatpush.bf16.msra.mxu0 %v1022
        %1037 = vmatmul.bf16.gmra.mxu0 %v1027
        %v1038 = vpop.f32.mrf.mxu0
        %v1039 = vadd.f32 %v1012, %v1038
        %v1040 = vpop.f32.mrf.mxu0
        %1041 = vdwg.mxu0
        %v1042 = vmul.f32 %v1039, 0.17677669
        %v1043 = vld [vmem:[%s14] sm:$0xf]
        %v1044 = vld [vmem:[%s14 + $0x4] sm:$0xf]
        %v1045 = vld [vmem:[%s14 + $0x8] sm:$0xf]
        %v1046 = vld [vmem:[%s14 + $0xc] sm:$0xf]
        %v1047 = vld [vmem:[#allocation9] sm:$0x1]
        %v1049 = vperm.slane %v1047, 0
        %v1055 = vunpack.c.l.b16 %v1043
        %v1056 = vunpack.c.l.b16 %v1044
        %v1057 = vunpack.c.l.b16 %v1045
        %v1058 = vunpack.c.l.b16 %v1046
        %v1059 = vpack.c.b16 %v1056, %v1055
        %v1060 = vpack.c.b16 %v1058, %v1057
        %1063 = vmatpush.bf16.msra.mxu0 0
        %1064 = vmatpush.bf16.msra.mxu0 0
        %1065 = vmatpush.bf16.msra.mxu0 0
        %1066 = vmatpush.bf16.msra.mxu0 0
        %1067 = vmatpush.bf16.msra.mxu0 0
        %1068 = vmatpush.bf16.msra.mxu0 0
        %1069 = vmatpush.bf16.msra.mxu0 %v1060
        %1070 = vmatpush.bf16.msra.mxu0 %v1059
        %1071 = vmatmul.bf16.gmra.mxu0 %v1027
        %v1072 = vpop.f32.mrf.mxu0
        %v1073 = vadd.f32 %v1049, %v1072
        %v1074 = vpop.f32.mrf.mxu0
        %1075 = vdwg.mxu0
        %v1076 = vld [vmem:[%s16] sm:$0xf]
        %v1077 = vld [vmem:[%s16 + $0x4] sm:$0xf]
        %v1078 = vld [vmem:[%s16 + $0x8] sm:$0xf]
        %v1079 = vld [vmem:[%s16 + $0xc] sm:$0xf]
        %v1080 = vld [vmem:[#allocation10] sm:$0x1]
        %v1082 = vperm.slane %v1080, 0
        %v1088 = vunpack.c.l.b16 %v1076
        %v1089 = vunpack.c.l.b16 %v1077
        %v1090 = vunpack.c.l.b16 %v1078
        %v1091 = vunpack.c.l.b16 %v1079
        %v1092 = vpack.c.b16 %v1089, %v1088
        %v1093 = vpack.c.b16 %v1091, %v1090
        %1096 = vmatpush.bf16.msra.mxu0 0
        %1097 = vmatpush.bf16.msra.mxu0 0
        %1098 = vmatpush.bf16.msra.mxu0 0
        %1099 = vmatpush.bf16.msra.mxu0 0
        %1100 = vmatpush.bf16.msra.mxu0 0
        %1101 = vmatpush.bf16.msra.mxu0 0
        %1102 = vmatpush.bf16.msra.mxu0 %v1093
        %1103 = vmatpush.bf16.msra.mxu0 %v1092
        %1104 = vmatmul.bf16.gmra.mxu0 %v1027
        %v1105 = vpop.f32.mrf.mxu0
        %v1106 = vadd.f32 %v1082, %v1105
        %v1107 = vpop.f32.mrf.mxu0
        %1108 = vdwg.mxu0
        %v1110 = vrot.slane %v1042, 2
        %v1111 = vrot.slane %v1042, 4
        %v1112 = vrot.slane %v1042, 6
        %v1114 = vrot.slane %v1073, 2
        %v1115 = vrot.slane %v1073, 4
        %v1116 = vrot.slane %v1073, 6
        %v1118 = vrot.slane %v1106, 2
        %v1119 = vrot.slane %v1106, 4
        %v1120 = vrot.slane %v1106, 6
        %v1121 = vsel %vm785, %v1042, 0
        %v1123 = vsel %vm785, %v1073, 0
        %1125 = vmatpush.xpose.msra.mxu0 0.0
        %1126 = vmatpush.xpose.msra.mxu0 0.0
        %1127 = vmatpush.xpose.msra.mxu0 0.0
        %1128 = vmatpush.xpose.msra.mxu0 0.0
        %1129 = vmatpush.xpose.msra.mxu0 0.0
        %1130 = vmatpush.xpose.msra.mxu0 0.0
        %1131 = vmatpush.xpose.msra.mxu0 0.0
        %1132 = vmatpush.xpose.msra.mxu0 0.0
        %1133 = vmatpush.xpose.msra.mxu0 0.0
        %1134 = vmatpush.xpose.msra.mxu0 0.0
        %1135 = vmatpush.xpose.msra.mxu0 0.0
        %1136 = vmatpush.xpose.msra.mxu0 0.0
        %1137 = vmatpush.xpose.msra.mxu0 0.0
        %1138 = vmatpush.xpose.msra.mxu0 0.0
        %1139 = vmatpush.xpose.msra.mxu0 0.0
        %1140 = vmatpush.xpose.msra.mxu0 %v1123
        %1141 = vmatmul.f32.gmra.mxu0 %v1121
        %v1142 = vpop.f32.mrf.mxu0
        %v1143 = vadd.f32 0.0, %v1142
        %1144 = vdwg.mxu0
        %v1145 = vsel %vm785, %v1110, 0
        %v1147 = vsel %vm785, %v1114, 0
        %1149 = vmatpush.xpose.msra.mxu0 0.0
        %1150 = vmatpush.xpose.msra.mxu0 0.0
        %1151 = vmatpush.xpose.msra.mxu0 0.0
        %1152 = vmatpush.xpose.msra.mxu0 0.0
        %1153 = vmatpush.xpose.msra.mxu0 0.0
        %1154 = vmatpush.xpose.msra.mxu0 0.0
        %1155 = vmatpush.xpose.msra.mxu0 0.0
        %1156 = vmatpush.xpose.msra.mxu0 0.0
        %1157 = vmatpush.xpose.msra.mxu0 0.0
        %1158 = vmatpush.xpose.msra.mxu0 0.0
        %1159 = vmatpush.xpose.msra.mxu0 0.0
        %1160 = vmatpush.xpose.msra.mxu0 0.0
        %1161 = vmatpush.xpose.msra.mxu0 0.0
        %1162 = vmatpush.xpose.msra.mxu0 0.0
        %1163 = vmatpush.xpose.msra.mxu0 0.0
        %1164 = vmatpush.xpose.msra.mxu0 %v1147
        %1165 = vmatmul.f32.gmra.mxu0 %v1145
        %v1166 = vpop.f32.mrf.mxu0
        %v1167 = vadd.f32 0.0, %v1166
        %1168 = vdwg.mxu0
        %v1169 = vsel %vm785, %v1111, 0
        %v1171 = vsel %vm785, %v1115, 0
        %1173 = vmatpush.xpose.msra.mxu0 0.0
        %1174 = vmatpush.xpose.msra.mxu0 0.0
        %1175 = vmatpush.xpose.msra.mxu0 0.0
        %1176 = vmatpush.xpose.msra.mxu0 0.0
        %1177 = vmatpush.xpose.msra.mxu0 0.0
        %1178 = vmatpush.xpose.msra.mxu0 0.0
        %1179 = vmatpush.xpose.msra.mxu0 0.0
        %1180 = vmatpush.xpose.msra.mxu0 0.0
        %1181 = vmatpush.xpose.msra.mxu0 0.0
        %1182 = vmatpush.xpose.msra.mxu0 0.0
        %1183 = vmatpush.xpose.msra.mxu0 0.0
        %1184 = vmatpush.xpose.msra.mxu0 0.0
        %1185 = vmatpush.xpose.msra.mxu0 0.0
        %1186 = vmatpush.xpose.msra.mxu0 0.0
        %1187 = vmatpush.xpose.msra.mxu0 0.0
        %1188 = vmatpush.xpose.msra.mxu0 %v1171
        %1189 = vmatmul.f32.gmra.mxu0 %v1169
        %v1190 = vpop.f32.mrf.mxu0
        %v1191 = vadd.f32 0.0, %v1190
        %1192 = vdwg.mxu0
        %v1193 = vsel %vm785, %v1112, 0
        %v1195 = vsel %vm785, %v1116, 0
        %1197 = vmatpush.xpose.msra.mxu0 0.0
        %1198 = vmatpush.xpose.msra.mxu0 0.0
        %1199 = vmatpush.xpose.msra.mxu0 0.0
        %1200 = vmatpush.xpose.msra.mxu0 0.0
        %1201 = vmatpush.xpose.msra.mxu0 0.0
        %1202 = vmatpush.xpose.msra.mxu0 0.0
        %1203 = vmatpush.xpose.msra.mxu0 0.0
        %1204 = vmatpush.xpose.msra.mxu0 0.0
        %1205 = vmatpush.xpose.msra.mxu0 0.0
        %1206 = vmatpush.xpose.msra.mxu0 0.0
        %1207 = vmatpush.xpose.msra.mxu0 0.0
        %1208 = vmatpush.xpose.msra.mxu0 0.0
        %1209 = vmatpush.xpose.msra.mxu0 0.0
        %1210 = vmatpush.xpose.msra.mxu0 0.0
        %1211 = vmatpush.xpose.msra.mxu0 0.0
        %1212 = vmatpush.xpose.msra.mxu0 %v1195
        %1213 = vmatmul.f32.gmra.mxu0 %v1193
        %v1214 = vpop.f32.mrf.mxu0
        %v1215 = vadd.f32 0.0, %v1214
        %1216 = vdwg.mxu0
        %vm1217 = vcmask 9216
        %v1218 = vsel %vm1217, %v1143, -inf
        %1219 = vmax.xlane.f32.xlu0 %v1218
        %v1220 = vpop.xlane.xlu0 %1219
        %v1221 = vsel %vm1217, %v1167, -inf
        %1222 = vmax.xlane.f32.xlu0 %v1221
        %v1223 = vpop.xlane.xlu0 %1222
        %v1224 = vsel %vm1217, %v1191, -inf
        %1225 = vmax.xlane.f32.xlu0 %v1224
        %v1226 = vpop.xlane.xlu0 %1225
        %v1227 = vsel %vm1217, %v1215, -inf
        %1228 = vmax.xlane.f32.xlu0 %v1227
        %v1229 = vpop.xlane.xlu0 %1228
        %v1230 = vsub.f32 %v1143, %v1220
        %v1231 = vsub.f32 %v1167, %v1223
        %v1232 = vsub.f32 %v1191, %v1226
        %v1233 = vsub.f32 %v1215, %v1229
        %v1234 = vmul.f32 %v1230, 1.442695
        %v1235 = vpow.pop %v1234
        %v1236 = vmul.f32 %v1231, 1.442695
        %v1237 = vpow.pop %v1236
        %v1238 = vmul.f32 %v1232, 1.442695
        %v1239 = vpow.pop %v1238
        %v1240 = vmul.f32 %v1233, 1.442695
        %v1241 = vpow.pop %v1240
        %v1242 = vsel %vm1217, %v1235, 0.0
        %1243 = vadd.xlane.f32.xlu0 %v1242
        %v1244 = vpop.xlane.xlu0 %1243
        %v1245 = vsel %vm1217, %v1237, 0.0
        %1246 = vadd.xlane.f32.xlu0 %v1245
        %v1247 = vpop.xlane.xlu0 %1246
        %v1248 = vsel %vm1217, %v1239, 0.0
        %1249 = vadd.xlane.f32.xlu0 %v1248
        %v1250 = vpop.xlane.xlu0 %1249
        %v1251 = vsel %vm1217, %v1241, 0.0
        %1252 = vadd.xlane.f32.xlu0 %v1251
        %v1253 = vpop.xlane.xlu0 %1252
        %v1254 = vrcp.pop %v1244
        %v1255 = vrcp.pop %v1247
        %v1256 = vrcp.pop %v1250
        %v1257 = vrcp.pop %v1253
        %v1258 = vmul.f32 %v1235, %v1254
        %v1259 = vmul.f32 %v1237, %v1255
        %v1260 = vmul.f32 %v1239, %v1256
        %v1261 = vmul.f32 %v1241, %v1257
        %vm1262 = vcmask 15360
        %v1264 = vsel %vm1262, %v1258, 0
        %vm1266 = vcmask 1041408
        %v1267 = vsel %vm1266, %v1106, 0
        %1269 = vmatpush.msra.mxu0 0.0
        %1270 = vmatpush.msra.mxu0 0.0
        %1271 = vmatpush.msra.mxu0 0.0
        %1272 = vmatpush.msra.mxu0 0.0
        %1273 = vmatpush.msra.mxu0 0.0
        %1274 = vmatpush.msra.mxu0 0.0
        %1275 = vmatpush.msra.mxu0 0.0
        %1276 = vmatpush.msra.mxu0 0.0
        %1277 = vmatpush.msra.mxu0 0.0
        %1278 = vmatpush.msra.mxu0 0.0
        %1279 = vmatpush.msra.mxu0 0.0
        %1280 = vmatpush.msra.mxu0 0.0
        %1281 = vmatpush.msra.mxu0 0.0
        %1282 = vmatpush.msra.mxu0 0.0
        %1283 = vmatpush.msra.mxu0 0.0
        %1284 = vmatpush.msra.mxu0 %v1267
        %1285 = vmatmul.f32.gmra.mxu0 %v1264
        %v1286 = vpop.f32.mrf.mxu0
        %v1287 = vadd.f32 0.0, %v1286
        %1288 = vdwg.mxu0
        %v1290 = vsel %vm1262, %v1259, 0
        %v1292 = vsel %vm1266, %v1118, 0
        %1294 = vmatpush.msra.mxu0 0.0
        %1295 = vmatpush.msra.mxu0 0.0
        %1296 = vmatpush.msra.mxu0 0.0
        %1297 = vmatpush.msra.mxu0 0.0
        %1298 = vmatpush.msra.mxu0 0.0
        %1299 = vmatpush.msra.mxu0 0.0
        %1300 = vmatpush.msra.mxu0 0.0
        %1301 = vmatpush.msra.mxu0 0.0
        %1302 = vmatpush.msra.mxu0 0.0
        %1303 = vmatpush.msra.mxu0 0.0
        %1304 = vmatpush.msra.mxu0 0.0
        %1305 = vmatpush.msra.mxu0 0.0
        %1306 = vmatpush.msra.mxu0 0.0
        %1307 = vmatpush.msra.mxu0 0.0
        %1308 = vmatpush.msra.mxu0 0.0
        %1309 = vmatpush.msra.mxu0 %v1292
        %1310 = vmatmul.f32.gmra.mxu0 %v1290
        %v1311 = vpop.f32.mrf.mxu0
        %v1312 = vadd.f32 0.0, %v1311
        %1313 = vdwg.mxu0
        %v1315 = vsel %vm1262, %v1260, 0
        %v1317 = vsel %vm1266, %v1119, 0
        %1319 = vmatpush.msra.mxu0 0.0
        %1320 = vmatpush.msra.mxu0 0.0
        %1321 = vmatpush.msra.mxu0 0.0
        %1322 = vmatpush.msra.mxu0 0.0
        %1323 = vmatpush.msra.mxu0 0.0
        %1324 = vmatpush.msra.mxu0 0.0
        %1325 = vmatpush.msra.mxu0 0.0
        %1326 = vmatpush.msra.mxu0 0.0
        %1327 = vmatpush.msra.mxu0 0.0
        %1328 = vmatpush.msra.mxu0 0.0
        %1329 = vmatpush.msra.mxu0 0.0
        %1330 = vmatpush.msra.mxu0 0.0
        %1331 = vmatpush.msra.mxu0 0.0
        %1332 = vmatpush.msra.mxu0 0.0
        %1333 = vmatpush.msra.mxu0 0.0
        %1334 = vmatpush.msra.mxu0 %v1317
        %1335 = vmatmul.f32.gmra.mxu0 %v1315
        %v1336 = vpop.f32.mrf.mxu0
        %v1337 = vadd.f32 0.0, %v1336
        %1338 = vdwg.mxu0
        %v1340 = vsel %vm1262, %v1261, 0
        %v1342 = vsel %vm1266, %v1120, 0
        %1344 = vmatpush.msra.mxu0 0.0
        %1345 = vmatpush.msra.mxu0 0.0
        %1346 = vmatpush.msra.mxu0 0.0
        %1347 = vmatpush.msra.mxu0 0.0
        %1348 = vmatpush.msra.mxu0 0.0
        %1349 = vmatpush.msra.mxu0 0.0
        %1350 = vmatpush.msra.mxu0 0.0
        %1351 = vmatpush.msra.mxu0 0.0
        %1352 = vmatpush.msra.mxu0 0.0
        %1353 = vmatpush.msra.mxu0 0.0
        %1354 = vmatpush.msra.mxu0 0.0
        %1355 = vmatpush.msra.mxu0 0.0
        %1356 = vmatpush.msra.mxu0 0.0
        %1357 = vmatpush.msra.mxu0 0.0
        %1358 = vmatpush.msra.mxu0 0.0
        %1359 = vmatpush.msra.mxu0 %v1342
        %1360 = vmatmul.f32.gmra.mxu0 %v1340
        %v1361 = vpop.f32.mrf.mxu0
        %v1362 = vadd.f32 0.0, %v1361
        %1363 = vdwg.mxu0
        %vm1364 = vcmask 254976
        %v1365 = vsel %vm1364, %v1287, 0.0
        %v1366 = vrot.slane %v1365, 4
        %v1367 = vadd.f32 %v1365, %v1366
        %v1368 = vrot.slane %v1367, 2
        %v1369 = vadd.f32 %v1367, %v1368
        %v1370 = vrot.slane %v1369, 1
        %v1371 = vadd.f32 %v1369, %v1370
        %v1372 = vsel %vm1364, %v1312, 0.0
        %v1373 = vrot.slane %v1372, 4
        %v1374 = vadd.f32 %v1372, %v1373
        %v1375 = vrot.slane %v1374, 2
        %v1376 = vadd.f32 %v1374, %v1375
        %v1377 = vrot.slane %v1376, 1
        %v1378 = vadd.f32 %v1376, %v1377
        %v1379 = vsel %vm1364, %v1337, 0.0
        %v1380 = vrot.slane %v1379, 4
        %v1381 = vadd.f32 %v1379, %v1380
        %v1382 = vrot.slane %v1381, 2
        %v1383 = vadd.f32 %v1381, %v1382
        %v1384 = vrot.slane %v1383, 1
        %v1385 = vadd.f32 %v1383, %v1384
        %v1386 = vsel %vm1364, %v1362, 0.0
        %v1387 = vrot.slane %v1386, 4
        %v1388 = vadd.f32 %v1386, %v1387
        %v1389 = vrot.slane %v1388, 2
        %v1390 = vadd.f32 %v1388, %v1389
        %v1391 = vrot.slane %v1390, 1
        %v1392 = vadd.f32 %v1390, %v1391
        %v1393 = vld [vmem:[#allocation12] sm:$0x1]
        %v1394 = vld [vmem:[#allocation13] sm:$0x1]
        %vm1399 = vcmask 1041409
        %v1400 = vsel %vm1399, %v1378, %v1371
        %vm1401 = vcmask 1042434
        %v1402 = vsel %vm1401, %v1385, %v1400
        %vm1403 = vcmask 1043459
        %v1404 = vsel %vm1403, %v1392, %v1402
        %vm1406 = vcmask 257024
        %v1407 = vsel %vm1406, %v1404, 0.0
        %1408 = vadd.xlane.f32.xlu0 %v1407
        %v1409 = vpop.xlane.xlu0 %1408
        %v1410 = vmul.f32 %v1409, %v977
        %v1412 = vrot.slane %v1410, 1
        %v1413 = vrot.slane %v1410, 2
        %v1414 = vrot.slane %v1410, 3
        %v1419 = vsub.f32 %v1371, %v1410
        %v1420 = vsub.f32 %v1378, %v1412
        %v1421 = vsub.f32 %v1385, %v1413
        %v1422 = vsub.f32 %v1392, %v1414
        %v1423 = vmul.f32 %v1419, %v1419
        %v1424 = vmul.f32 %v1420, %v1420
        %v1425 = vmul.f32 %v1421, %v1421
        %v1426 = vmul.f32 %v1422, %v1422
        %v1431 = vrot.slane %v1424, 7
        %v1432 = vsel %vm1399, %v1431, %v1423
        %v1433 = vrot.slane %v1425, 6
        %v1434 = vsel %vm1401, %v1433, %v1432
        %v1435 = vrot.slane %v1426, 5
        %v1436 = vsel %vm1403, %v1435, %v1434
        %v1438 = vsel %vm1406, %v1436, 0.0
        %1439 = vadd.xlane.f32.xlu0 %v1438
        %v1440 = vpop.xlane.xlu0 %1439
        %v1441 = vmul.f32 %v1440, %v977
        %v1442 = vadd.f32 %v1441, 1e-12
        %v1443 = vrsqrt.pop %v1442
        %v1444 = vmul.f32 %v1443, %v1442
        %v1445 = vmul.f32 %v1444, %v1443
        %v1446 = vmul.f32 0.5, %v1445
        %v1447 = vsub.f32 1.5, %v1446
        %v1448 = vmul.f32 %v1443, %v1447
        %vm1449 = vweird.f32 %v1442
        %vm1450 = vweird.f32 %v1443
        %vm1451 = vmor %vm1449, %vm1450
        %v1452 = vsel %vm1451, %v1443, %v1448
        %v1454 = vrot.slane %v1452, 1
        %v1455 = vrot.slane %v1452, 2
        %v1456 = vrot.slane %v1452, 3
        %v1461 = vmul.f32 %v1419, %v1452
        %v1462 = vmul.f32 %v1420, %v1454
        %v1463 = vmul.f32 %v1421, %v1455
        %v1464 = vmul.f32 %v1422, %v1456
        %v1466 = vperm.slane %v1393, 0
        %v1468 = vmul.f32 %v1461, %v1466
        %v1469 = vmul.f32 %v1462, %v1466
        %v1470 = vmul.f32 %v1463, %v1466
        %v1471 = vmul.f32 %v1464, %v1466
        %v1473 = vperm.slane %v1394, 0
        %v1475 = vadd.f32 %v1468, %v1473
        %v1476 = vadd.f32 %v1469, %v1473
        %v1477 = vadd.f32 %v1470, %v1473
        %v1478 = vadd.f32 %v1471, %v1473
        %v1483 = vrot.slane %v1476, 7
        %v1484 = vsel %vm1399, %v1483, %v1475
        %v1485 = vrot.slane %v1477, 6
        %v1486 = vsel %vm1401, %v1485, %v1484
        %v1487 = vrot.slane %v1478, 5
        %v1488 = vsel %vm1403, %v1487, %v1486
        %1490 = vst.msk [vmem:[%s741] sm:$0xf] %vm1406, %v1488
        %p1491 = scmp.lt.s32.totalorder %s36, 1
        %s1492 = scalar_select %p1491, %s36, 1
        %s1493 = smul.addr %s1492, 4
        %s1494 = scalar_lea.vmem %s20, %s1493
        // Predicated region
        $region133: #{logical_transformer_forward.10} parent=99 // pred_check
          %p1495 = pneg %p479
        $region134: #{logical_transformer_forward.10} parent=99 // pred_check_branch
          %1497 = sbr.rel (%p1495) target = $region136
        $region135: #{logical_transformer_forward.10} parent=99 // pred_region
          _
        $region136: #{logical_transformer_forward.10} parent=99 // pred_fallthru
          _
      $region100: #{logical_transformer_forward.10} parent=5 // pred_fallthru
        _
      %p1498 = scmp.le.s32.totalorder 2, %s31
      // Predicated region
      $region137: #{logical_transformer_forward.10} parent=5 // pred_check
        %p1499 = pneg %p1498
      $region138: #{logical_transformer_forward.10} parent=5 // pred_check_branch
        %1501 = sbr.rel (%p1499) target = $region140
      $region139: #{logical_transformer_forward.10} parent=5 // pred_region
        %s1502 = ssub.s32 %s31, 2
        // Predicated region
        $region141: #{logical_transformer_forward.10} parent=139 // pred_check
          %p1503 = pneg %p485
        $region142: #{logical_transformer_forward.10} parent=139 // pred_check_branch
          %1505 = sbr.rel (%p1503) target = $region144
        $region143: #{logical_transformer_forward.10} parent=139 // pred_region
          %p1506 = scmp.lt.s32.totalorder %s37, 1
          %s1507 = scalar_select %p1506, %s37, 1
          %s1508 = smul.addr %s1507, 4
          %s1509 = scalar_lea.vmem %s20, %s1508
        $region144: #{logical_transformer_forward.10} parent=139 // pred_fallthru
          _
      $region140: #{logical_transformer_forward.10} parent=5 // pred_fallthru
        _
    $region6: #{logical_transformer_forward.10} parent=1 // loop_footer
      %s35 = sadd.s32 1, %s31
    $region7: #{logical_transformer_forward.10} parent=1 // loop_footer_branch
      %30 = sbr.rel target = $region3
    $region8: #{logical_transformer_forward.10} parent=1 // loop_exit
      _
    %1510 = vsyncpa [#allocation3], 1
    %s1511 = scalar_lea.sflag [#allocation3], 1
    %1512 = vsyncpa %s1511, 1
    %1513 = vsyncpa [#allocation5], 1
    %1514 = vsyncpa [#allocation8], 1
    %1515 = vsyncpa [#allocation11], 1
    %1516 = vsyncpa [#allocation14], 1

// kernel: logical_transformer_forward.13
$region0: #{logical_transformer_forward.13}
  #allocation0 [shape = 'u32[]', space=smem, size = 0x4, offset = 0x4, fixed_abs, tag = 'smem constant byte address 0x4 - core index']
  #allocation1 [shape = 'u32[72,128]{1,0:T(1,128)}', space=vmem, size = 0x9000, scoped, tag = 'internal scratch']
  %s0 = inlined_call_operand.vmem [shape: f32[2,32], index: 0, kind: input, shape index: {}]
  %s1 = inlined_call_operand.vmem [shape: f32[2,32], index: 1, kind: input, shape index: {}]
  %s2 = inlined_call_operand.vmem [shape: bf16[32,8], index: 2, kind: input, shape index: {}]
  %s3 = inlined_call_operand.vmem [shape: f32[1,8], index: 3, kind: input, shape index: {}]
  %s4 = inlined_call_operand.hbm [shape: f32[2,8], index: 4, kind: output, shape index: {}]
  %s5 = sld [smem:[#allocation0]]
  $region26: #{logical_transformer_forward.13} parent=0
    _
  %s7 = ssub.s32 1, %s5
  %s8 = scalar_select 0, %s7, %s5
  $region1: #{logical_transformer_forward.13} parent=0
    #allocation2 [shape = 'u8[1024]{0}', space=vmem, size = 0x400, scoped, tag = 'output window, operand 0, single buffered']
    #allocation3 [shape = 's32[1]{0}', space=sflag, size = 0x4, scoped, tag = 'scoped memory for logical_transformer_forward.13']
    %9 = vsyncpa [#allocation3], 0
    // Predicated region
    $region2: #{logical_transformer_forward.13} parent=1 // pred_check
      _
    $region3: #{logical_transformer_forward.13} parent=1 // pred_check_branch
      %11 = sbr.rel (0) target = $region5
    $region4: #{logical_transformer_forward.13} parent=1 // pred_region
      _
    $region5: #{logical_transformer_forward.13} parent=1 // pred_fallthru
      _
    // Predicated region
    $region6: #{logical_transformer_forward.13} parent=1 // pred_check
      _
    $region7: #{logical_transformer_forward.13} parent=1 // pred_check_branch
      %13 = sbr.rel (0) target = $region9
    $region8: #{logical_transformer_forward.13} parent=1 // pred_region
      _
    $region9: #{logical_transformer_forward.13} parent=1 // pred_fallthru
      _
    // Predicated region
    $region10: #{logical_transformer_forward.13} parent=1 // pred_check
      _
    $region11: #{logical_transformer_forward.13} parent=1 // pred_check_branch
      %15 = sbr.rel (0) target = $region13
    $region12: #{logical_transformer_forward.13} parent=1 // pred_region
      _
    $region13: #{logical_transformer_forward.13} parent=1 // pred_fallthru
      _
    // Predicated region
    $region14: #{logical_transformer_forward.13} parent=1 // pred_check
      _
    $region15: #{logical_transformer_forward.13} parent=1 // pred_check_branch
      %17 = sbr.rel (0) target = $region17
    $region16: #{logical_transformer_forward.13} parent=1 // pred_region
      _
    $region17: #{logical_transformer_forward.13} parent=1 // pred_fallthru
      _
    %v19 = vld [vmem:[%s0] sm:$0x3]
    %v20 = vld [vmem:[%s1] sm:$0x3]
    %v21 = vadd.f32 %v19, %v20
    %v22 = vpack.c.bf16 %v21, %v21
    %v23 = vld [vmem:[%s2] sm:$0xf]
    %v24 = vld [vmem:[%s2 + $0x4] sm:$0xf]
    %v25 = vld [vmem:[%s2 + $0x8] sm:$0xf]
    %v26 = vld [vmem:[%s2 + $0xc] sm:$0xf]
    %v27 = vld [vmem:[%s3] sm:$0x1]
    %v29 = vperm.slane %v27, 0
    %v35 = vunpack.c.l.b16 %v23
    %v36 = vunpack.c.l.b16 %v24
    %v37 = vunpack.c.l.b16 %v25
    %v38 = vunpack.c.l.b16 %v26
    %v39 = vpack.c.b16 %v36, %v35
    %v40 = vpack.c.b16 %v38, %v37
    %vm43 = vcmask 261120
    %v45 = vsel %vm43, %v22, 0
    %47 = vmatpush.bf16.msra.mxu0 0
    %48 = vmatpush.bf16.msra.mxu0 0
    %49 = vmatpush.bf16.msra.mxu0 0
    %50 = vmatpush.bf16.msra.mxu0 0
    %51 = vmatpush.bf16.msra.mxu0 0
    %52 = vmatpush.bf16.msra.mxu0 0
    %53 = vmatpush.bf16.msra.mxu0 %v40
    %54 = vmatpush.bf16.msra.mxu0 %v39
    %55 = vmatmul.bf16.gmra.mxu0 %v45
    %v56 = vpop.f32.mrf.mxu0
    %v57 = vadd.f32 %v29, %v56
    %v58 = vpop.f32.mrf.mxu0
    %59 = vdwg.mxu0
    %vm60 = vcmask 58368
    %61 = vst.msk [vmem:[#allocation2] sm:$0x3] %vm60, %v57
    // Predicated region
    $region18: #{logical_transformer_forward.13} parent=1 // pred_check
      _
    $region19: #{logical_transformer_forward.13} parent=1 // pred_check_branch
      %63 = sbr.rel (0) target = $region21
    $region20: #{logical_transformer_forward.13} parent=1 // pred_region
      %65 = vsyncadd [#allocation3], 0
      %s67 = sshll.u32 [#allocation2], 4
      %s68 = int_to_ptr.vmem [resolvable:$true] %s67
      %s69 = sshll.u32 %s4, 4
      %s70 = int_to_ptr.hbm [resolvable:$true] %s69
      %72 = dma.vmem_to_hbm [thread:$0]  %s68, 32, %s70, [#allocation3]
    $region21: #{logical_transformer_forward.13} parent=1 // pred_fallthru
      _
    // Predicated region
    $region22: #{logical_transformer_forward.13} parent=1 // pred_check
      _
    $region23: #{logical_transformer_forward.13} parent=1 // pred_check_branch
      %74 = sbr.rel (0) target = $region25
    $region24: #{logical_transformer_forward.13} parent=1 // pred_region
      %76 = dma.done [#allocation3], 32
    $region25: #{logical_transformer_forward.13} parent=1 // pred_fallthru
      _
    %77 = vsyncpa [#allocation3], 1

// kernel: logical_transformer_forward.11
$region0: #{logical_transformer_forward.11}
  #allocation0 [shape = 'u32[]', space=smem, size = 0x4, offset = 0x4, fixed_abs, tag = 'smem constant byte address 0x4 - core index']
  #allocation1 [shape = 'u32[72,128]{1,0:T(1,128)}', space=vmem, size = 0x9000, scoped, tag = 'internal scratch']
  %s0 = inlined_call_operand.vmem [shape: f32[2,4,32], index: 0, kind: input, shape index: {}]
  %s1 = inlined_call_operand.vmem [shape: f32[1,32], index: 1, kind: input, shape index: {}]
  %s2 = inlined_call_operand.vmem [shape: f32[1,32], index: 2, kind: input, shape index: {}]
  %s3 = inlined_call_operand.vmem [shape: f32[2,32], index: 3, kind: input, shape index: {}]
  %s4 = inlined_call_operand.vmem [shape: bf16[32,96], index: 4, kind: input, shape index: {}]
  %s5 = inlined_call_operand.vmem [shape: f32[1,96], index: 5, kind: input, shape index: {}]
  %s6 = inlined_call_operand.vmem [shape: bf16[32,64], index: 6, kind: input, shape index: {}]
  %s7 = inlined_call_operand.vmem [shape: f32[1,64], index: 7, kind: input, shape index: {}]
  %s8 = inlined_call_operand.vmem [shape: bf16[32,32], index: 8, kind: input, shape index: {}]
  %s9 = inlined_call_operand.vmem [shape: f32[1,32], index: 9, kind: input, shape index: {}]
  %s10 = inlined_call_operand.hbm [shape: f32[1,32], index: 10, kind: input, shape index: {}]
  %s11 = inlined_call_operand.hbm [shape: f32[1,32], index: 11, kind: input, shape index: {}]
  %s12 = inlined_call_operand.vmem [shape: bf16[32,32], index: 12, kind: input, shape index: {}]
  %s13 = inlined_call_operand.hbm [shape: f32[1,32], index: 13, kind: input, shape index: {}]
  %s14 = inlined_call_operand.vmem [shape: bf16[32,32], index: 14, kind: input, shape index: {}]
  %s15 = inlined_call_operand.hbm [shape: f32[1,32], index: 15, kind: input, shape index: {}]
  %s16 = inlined_call_operand.vmem [shape: bf16[32,32], index: 16, kind: input, shape index: {}]
  %s17 = inlined_call_operand.hbm [shape: f32[1,32], index: 17, kind: input, shape index: {}]
  %s18 = inlined_call_operand.hbm [shape: f32[1,32], index: 18, kind: input, shape index: {}]
  %s19 = inlined_call_operand.hbm [shape: f32[1,32], index: 19, kind: input, shape index: {}]
  %s20 = inlined_call_operand.vmem [shape: f32[2,4,32], index: 20, kind: output, shape index: {}]
  %s21 = sld [smem:[#allocation0]]
  $region141: #{logical_transformer_forward.11} parent=0
    _
  %s23 = ssub.s32 1, %s21
  %s24 = scalar_select 0, %s23, %s21
  $region1: #{logical_transformer_forward.11} parent=0
    #allocation2 [shape = 'u8[512]{0}', space=vmem, size = 0x400, scoped, tag = 'input window, operand 10, single buffered']
    #allocation3 [shape = 's32[2]{0}', space=sflag, size = 0x8, scoped, tag = 'scoped memory for logical_transformer_forward.11']
    #allocation4 [shape = 'u8[512]{0}', space=vmem, size = 0x400, scoped, tag = 'input window, operand 11, single buffered']
    #allocation5 [shape = 's32[1]{0}', space=sflag, size = 0x4, scoped, tag = 'scoped memory for logical_transformer_forward.11']
    #allocation6 [shape = 'u8[512]{0}', space=vmem, size = 0x400, scoped, tag = 'input window, operand 13, single buffered']
    #allocation7 [shape = 'u8[512]{0}', space=vmem, size = 0x400, scoped, tag = 'input window, operand 15, single buffered']
    #allocation8 [shape = 's32[1]{0}', space=sflag, size = 0x4, scoped, tag = 'scoped memory for logical_transformer_forward.11']
    #allocation9 [shape = 'u8[512]{0}', space=vmem, size = 0x400, scoped, tag = 'input window, operand 17, single buffered']
    #allocation10 [shape = 'u8[512]{0}', space=vmem, size = 0x400, scoped, tag = 'input window, operand 18, single buffered']
    #allocation11 [shape = 's32[1]{0}', space=sflag, size = 0x4, scoped, tag = 'scoped memory for logical_transformer_forward.11']
    #allocation12 [shape = 'u8[512]{0}', space=vmem, size = 0x400, scoped, tag = 'input window, operand 19, single buffered']
    %25 = vsyncpa [#allocation3], 0
    %26 = vsyncpa [#allocation5], 0
    %27 = vsyncpa [#allocation8], 0
    %28 = vsyncpa [#allocation11], 0
    loop: start=0, step=1, limit=4
    $region2: #{logical_transformer_forward.11} parent=1 // loop_pre_header
      _
    $region3: #{logical_transformer_forward.11} parent=1 // loop_header
      %s30 = sphi 0, %s34
      %p31 = scmp.ge.s32.totalorder %s30, 4
      %s40 = sphi 0, %s42
      %s43 = sphi 0, %s40
      %s44 = sphi 0, %s43
      %s60 = sphi 0, %s44
      %s64 = sphi 0, %s64
      %s66 = sphi 0, %s64
      %s67 = sphi 0, %s66
      %s81 = sphi 0, %s67
      %s85 = sphi 0, %s85
      %s87 = sphi 0, %s85
      %s88 = sphi 0, %s87
      %s102 = sphi 0, %s88
      %s106 = sphi 0, %s106
      %s108 = sphi 0, %s106
      %s109 = sphi 0, %s108
      %s123 = sphi 0, %s109
      %s127 = sphi 0, %s127
      %s129 = sphi 0, %s127
      %s130 = sphi 0, %s129
      %s144 = sphi 0, %s130
      %s148 = sphi 0, %s148
      %s150 = sphi 0, %s148
      %s151 = sphi 0, %s150
      %s165 = sphi 0, %s151
      %s169 = sphi 0, %s169
      %s171 = sphi 0, %s169
      %s172 = sphi 0, %s171
      %s186 = sphi 0, %s172
      %s190 = sphi 0, %s190
      %s192 = sphi 0, %s190
      %s193 = sphi 0, %s192
      %s207 = sphi 0, %s193
      %s211 = sphi 0, %s211
      %s213 = sphi 0, %s211
      %s214 = sphi 0, %s213
      %s228 = sphi 0, %s214
      %s232 = sphi 0, %s232
      %s234 = sphi 0, %s232
      %s235 = sphi 0, %s234
      %s249 = sphi 0, %s235
      %s253 = sphi 0, %s253
      %s255 = sphi 0, %s253
      %s256 = sphi 0, %s255
      %s270 = sphi 0, %s256
      %s274 = sphi 0, %s274
      %s276 = sphi 0, %s274
      %s277 = sphi 0, %s276
      %s291 = sphi 0, %s277
      %s295 = sphi 0, %s295
      %s297 = sphi 0, %s295
      %s298 = sphi 0, %s297
      %s312 = sphi 0, %s298
      %s316 = sphi 0, %s316
      %s318 = sphi 0, %s316
      %s319 = sphi 0, %s318
      %s333 = sphi 0, %s319
      %s337 = sphi 0, %s337
      %s339 = sphi 0, %s337
      %s340 = sphi 0, %s339
      %s354 = sphi 0, %s340
      %s358 = sphi 0, %s358
      %s360 = sphi 0, %s358
      %s361 = sphi 0, %s360
      %s375 = sphi 0, %s361
      %s379 = sphi 0, %s379
      %s381 = sphi 0, %s379
      %s382 = sphi 0, %s381
      %s396 = sphi 0, %s382
      %s400 = sphi 0, %s400
      %s402 = sphi 0, %s400
      %s403 = sphi 0, %s402
      %s417 = sphi 0, %s403
      %s421 = sphi 0, %s421
      %s423 = sphi 0, %s421
      %s424 = sphi 0, %s423
      %s438 = sphi 0, %s424
      %s442 = sphi 0, %s442
      %s444 = sphi 0, %s442
      %s445 = sphi 0, %s444
      %s459 = sphi 0, %s445
      %s465 = sphi 0, %s467
      %s468 = sphi 0, %s465
      %s469 = sphi 0, %s468
      %s485 = sphi 0, %s469
    $region4: #{logical_transformer_forward.11} parent=1 // loop_header_branch
      %33 = sbr.rel (%p31) target = $region8
    $region5: #{logical_transformer_forward.11} parent=1 // loop_body
      %s35 = ssub.s32 %s30, 1
      %s36 = ssub.s32 %s30, 2
      %s37 = sadd.s32 %s30, 1
      %s38 = ssub.s32 %s30, %s37
      %p39 = scmp.eq.s32.totalorder %s38, 0
      %s41 = sadd.s32 %s40, 1
      %s42 = scalar_select %p39, %s40, %s41
      %p45 = pneg %p39
      %p46 = scmp.eq.s32.totalorder %s30, 1
      %p47 = por %p45, %p46
      %p48 = scmp.ne.s32.totalorder %s40, %s43
      %p49 = scmp.eq.s32.totalorder %s30, 0
      %p50 = por %p48, %p49
      %p51 = scmp.ne.s32.totalorder %s40, %s43
      %p52 = scmp.eq.s32.totalorder %s35, 1
      %p53 = por %p51, %p52
      %p54 = scmp.ne.s32.totalorder %s43, %s44
      %p55 = scmp.eq.s32.totalorder %s35, 0
      %p56 = por %p54, %p55
      %p57 = scmp.ne.s32.totalorder %s43, %s44
      %p58 = scmp.eq.s32.totalorder %s36, 1
      %p59 = por %p57, %p58
      %p61 = scmp.ne.s32.totalorder %s44, %s60
      %p62 = scmp.eq.s32.totalorder %s36, 0
      %p63 = por %p61, %p62
      %s65 = sadd.s32 %s64, 1
      %p68 = scmp.eq.s32.totalorder %s30, 1
      %p69 = scmp.ne.s32.totalorder %s64, %s66
      %p70 = scmp.eq.s32.totalorder %s30, 0
      %p71 = por %p69, %p70
      %p72 = scmp.ne.s32.totalorder %s64, %s66
      %p73 = scmp.eq.s32.totalorder %s35, 1
      %p74 = por %p72, %p73
      %p75 = scmp.ne.s32.totalorder %s66, %s67
      %p76 = scmp.eq.s32.totalorder %s35, 0
      %p77 = por %p75, %p76
      %p78 = scmp.ne.s32.totalorder %s66, %s67
      %p79 = scmp.eq.s32.totalorder %s36, 1
      %p80 = por %p78, %p79
      %p82 = scmp.ne.s32.totalorder %s67, %s81
      %p83 = scmp.eq.s32.totalorder %s36, 0
      %p84 = por %p82, %p83
      %s86 = sadd.s32 %s85, 1
      %p89 = scmp.eq.s32.totalorder %s30, 1
      %p90 = scmp.ne.s32.totalorder %s85, %s87
      %p91 = scmp.eq.s32.totalorder %s30, 0
      %p92 = por %p90, %p91
      %p93 = scmp.ne.s32.totalorder %s85, %s87
      %p94 = scmp.eq.s32.totalorder %s35, 1
      %p95 = por %p93, %p94
      %p96 = scmp.ne.s32.totalorder %s87, %s88
      %p97 = scmp.eq.s32.totalorder %s35, 0
      %p98 = por %p96, %p97
      %p99 = scmp.ne.s32.totalorder %s87, %s88
      %p100 = scmp.eq.s32.totalorder %s36, 1
      %p101 = por %p99, %p100
      %p103 = scmp.ne.s32.totalorder %s88, %s102
      %p104 = scmp.eq.s32.totalorder %s36, 0
      %p105 = por %p103, %p104
      %s107 = sadd.s32 %s106, 1
      %p110 = scmp.eq.s32.totalorder %s30, 1
      %p111 = scmp.ne.s32.totalorder %s106, %s108
      %p112 = scmp.eq.s32.totalorder %s30, 0
      %p113 = por %p111, %p112
      %p114 = scmp.ne.s32.totalorder %s106, %s108
      %p115 = scmp.eq.s32.totalorder %s35, 1
      %p116 = por %p114, %p115
      %p117 = scmp.ne.s32.totalorder %s108, %s109
      %p118 = scmp.eq.s32.totalorder %s35, 0
      %p119 = por %p117, %p118
      %p120 = scmp.ne.s32.totalorder %s108, %s109
      %p121 = scmp.eq.s32.totalorder %s36, 1
      %p122 = por %p120, %p121
      %p124 = scmp.ne.s32.totalorder %s109, %s123
      %p125 = scmp.eq.s32.totalorder %s36, 0
      %p126 = por %p124, %p125
      %s128 = sadd.s32 %s127, 1
      %p131 = scmp.eq.s32.totalorder %s30, 1
      %p132 = scmp.ne.s32.totalorder %s127, %s129
      %p133 = scmp.eq.s32.totalorder %s30, 0
      %p134 = por %p132, %p133
      %p135 = scmp.ne.s32.totalorder %s127, %s129
      %p136 = scmp.eq.s32.totalorder %s35, 1
      %p137 = por %p135, %p136
      %p138 = scmp.ne.s32.totalorder %s129, %s130
      %p139 = scmp.eq.s32.totalorder %s35, 0
      %p140 = por %p138, %p139
      %p141 = scmp.ne.s32.totalorder %s129, %s130
      %p142 = scmp.eq.s32.totalorder %s36, 1
      %p143 = por %p141, %p142
      %p145 = scmp.ne.s32.totalorder %s130, %s144
      %p146 = scmp.eq.s32.totalorder %s36, 0
      %p147 = por %p145, %p146
      %s149 = sadd.s32 %s148, 1
      %p152 = scmp.eq.s32.totalorder %s30, 1
      %p153 = scmp.ne.s32.totalorder %s148, %s150
      %p154 = scmp.eq.s32.totalorder %s30, 0
      %p155 = por %p153, %p154
      %p156 = scmp.ne.s32.totalorder %s148, %s150
      %p157 = scmp.eq.s32.totalorder %s35, 1
      %p158 = por %p156, %p157
      %p159 = scmp.ne.s32.totalorder %s150, %s151
      %p160 = scmp.eq.s32.totalorder %s35, 0
      %p161 = por %p159, %p160
      %p162 = scmp.ne.s32.totalorder %s150, %s151
      %p163 = scmp.eq.s32.totalorder %s36, 1
      %p164 = por %p162, %p163
      %p166 = scmp.ne.s32.totalorder %s151, %s165
      %p167 = scmp.eq.s32.totalorder %s36, 0
      %p168 = por %p166, %p167
      %s170 = sadd.s32 %s169, 1
      %p173 = scmp.eq.s32.totalorder %s30, 1
      %p174 = scmp.ne.s32.totalorder %s169, %s171
      %p175 = scmp.eq.s32.totalorder %s30, 0
      %p176 = por %p174, %p175
      %p177 = scmp.ne.s32.totalorder %s169, %s171
      %p178 = scmp.eq.s32.totalorder %s35, 1
      %p179 = por %p177, %p178
      %p180 = scmp.ne.s32.totalorder %s171, %s172
      %p181 = scmp.eq.s32.totalorder %s35, 0
      %p182 = por %p180, %p181
      %p183 = scmp.ne.s32.totalorder %s171, %s172
      %p184 = scmp.eq.s32.totalorder %s36, 1
      %p185 = por %p183, %p184
      %p187 = scmp.ne.s32.totalorder %s172, %s186
      %p188 = scmp.eq.s32.totalorder %s36, 0
      %p189 = por %p187, %p188
      %s191 = sadd.s32 %s190, 1
      %p194 = scmp.eq.s32.totalorder %s30, 1
      %p195 = scmp.ne.s32.totalorder %s190, %s192
      %p196 = scmp.eq.s32.totalorder %s30, 0
      %p197 = por %p195, %p196
      %p198 = scmp.ne.s32.totalorder %s190, %s192
      %p199 = scmp.eq.s32.totalorder %s35, 1
      %p200 = por %p198, %p199
      %p201 = scmp.ne.s32.totalorder %s192, %s193
      %p202 = scmp.eq.s32.totalorder %s35, 0
      %p203 = por %p201, %p202
      %p204 = scmp.ne.s32.totalorder %s192, %s193
      %p205 = scmp.eq.s32.totalorder %s36, 1
      %p206 = por %p204, %p205
      %p208 = scmp.ne.s32.totalorder %s193, %s207
      %p209 = scmp.eq.s32.totalorder %s36, 0
      %p210 = por %p208, %p209
      %s212 = sadd.s32 %s211, 1
      %p215 = scmp.eq.s32.totalorder %s30, 1
      %p216 = scmp.ne.s32.totalorder %s211, %s213
      %p217 = scmp.eq.s32.totalorder %s30, 0
      %p218 = por %p216, %p217
      %p219 = scmp.ne.s32.totalorder %s211, %s213
      %p220 = scmp.eq.s32.totalorder %s35, 1
      %p221 = por %p219, %p220
      %p222 = scmp.ne.s32.totalorder %s213, %s214
      %p223 = scmp.eq.s32.totalorder %s35, 0
      %p224 = por %p222, %p223
      %p225 = scmp.ne.s32.totalorder %s213, %s214
      %p226 = scmp.eq.s32.totalorder %s36, 1
      %p227 = por %p225, %p226
      %p229 = scmp.ne.s32.totalorder %s214, %s228
      %p230 = scmp.eq.s32.totalorder %s36, 0
      %p231 = por %p229, %p230
      %s233 = sadd.s32 %s232, 1
      %p236 = scmp.eq.s32.totalorder %s30, 1
      %p237 = scmp.ne.s32.totalorder %s232, %s234
      %p238 = scmp.eq.s32.totalorder %s30, 0
      %p239 = por %p237, %p238
      %p240 = scmp.ne.s32.totalorder %s232, %s234
      %p241 = scmp.eq.s32.totalorder %s35, 1
      %p242 = por %p240, %p241
      %p243 = scmp.ne.s32.totalorder %s234, %s235
      %p244 = scmp.eq.s32.totalorder %s35, 0
      %p245 = por %p243, %p244
      %p246 = scmp.ne.s32.totalorder %s234, %s235
      %p247 = scmp.eq.s32.totalorder %s36, 1
      %p248 = por %p246, %p247
      %p250 = scmp.ne.s32.totalorder %s235, %s249
      %p251 = scmp.eq.s32.totalorder %s36, 0
      %p252 = por %p250, %p251
      %s254 = sadd.s32 %s253, 1
      %p257 = scmp.eq.s32.totalorder %s30, 1
      %p258 = scmp.ne.s32.totalorder %s253, %s255
      %p259 = scmp.eq.s32.totalorder %s30, 0
      %p260 = por %p258, %p259
      %p261 = scmp.ne.s32.totalorder %s253, %s255
      %p262 = scmp.eq.s32.totalorder %s35, 1
      %p263 = por %p261, %p262
      %p264 = scmp.ne.s32.totalorder %s255, %s256
      %p265 = scmp.eq.s32.totalorder %s35, 0
      %p266 = por %p264, %p265
      %p267 = scmp.ne.s32.totalorder %s255, %s256
      %p268 = scmp.eq.s32.totalorder %s36, 1
      %p269 = por %p267, %p268
      %p271 = scmp.ne.s32.totalorder %s256, %s270
      %p272 = scmp.eq.s32.totalorder %s36, 0
      %p273 = por %p271, %p272
      %s275 = sadd.s32 %s274, 1
      %p278 = scmp.eq.s32.totalorder %s30, 1
      %p279 = scmp.ne.s32.totalorder %s274, %s276
      %p280 = scmp.eq.s32.totalorder %s30, 0
      %p281 = por %p279, %p280
      %p282 = scmp.ne.s32.totalorder %s274, %s276
      %p283 = scmp.eq.s32.totalorder %s35, 1
      %p284 = por %p282, %p283
      %p285 = scmp.ne.s32.totalorder %s276, %s277
      %p286 = scmp.eq.s32.totalorder %s35, 0
      %p287 = por %p285, %p286
      %p288 = scmp.ne.s32.totalorder %s276, %s277
      %p289 = scmp.eq.s32.totalorder %s36, 1
      %p290 = por %p288, %p289
      %p292 = scmp.ne.s32.totalorder %s277, %s291
      %p293 = scmp.eq.s32.totalorder %s36, 0
      %p294 = por %p292, %p293
      %s296 = sadd.s32 %s295, 1
      %p299 = scmp.eq.s32.totalorder %s30, 1
      %p300 = scmp.ne.s32.totalorder %s295, %s297
      %p301 = scmp.eq.s32.totalorder %s30, 0
      %p302 = por %p300, %p301
      %p303 = scmp.ne.s32.totalorder %s295, %s297
      %p304 = scmp.eq.s32.totalorder %s35, 1
      %p305 = por %p303, %p304
      %p306 = scmp.ne.s32.totalorder %s297, %s298
      %p307 = scmp.eq.s32.totalorder %s35, 0
      %p308 = por %p306, %p307
      %p309 = scmp.ne.s32.totalorder %s297, %s298
      %p310 = scmp.eq.s32.totalorder %s36, 1
      %p311 = por %p309, %p310
      %p313 = scmp.ne.s32.totalorder %s298, %s312
      %p314 = scmp.eq.s32.totalorder %s36, 0
      %p315 = por %p313, %p314
      %s317 = sadd.s32 %s316, 1
      %p320 = scmp.eq.s32.totalorder %s30, 1
      %p321 = scmp.ne.s32.totalorder %s316, %s318
      %p322 = scmp.eq.s32.totalorder %s30, 0
      %p323 = por %p321, %p322
      %p324 = scmp.ne.s32.totalorder %s316, %s318
      %p325 = scmp.eq.s32.totalorder %s35, 1
      %p326 = por %p324, %p325
      %p327 = scmp.ne.s32.totalorder %s318, %s319
      %p328 = scmp.eq.s32.totalorder %s35, 0
      %p329 = por %p327, %p328
      %p330 = scmp.ne.s32.totalorder %s318, %s319
      %p331 = scmp.eq.s32.totalorder %s36, 1
      %p332 = por %p330, %p331
      %p334 = scmp.ne.s32.totalorder %s319, %s333
      %p335 = scmp.eq.s32.totalorder %s36, 0
      %p336 = por %p334, %p335
      %s338 = sadd.s32 %s337, 1
      %p341 = scmp.eq.s32.totalorder %s30, 1
      %p342 = scmp.ne.s32.totalorder %s337, %s339
      %p343 = scmp.eq.s32.totalorder %s30, 0
      %p344 = por %p342, %p343
      %p345 = scmp.ne.s32.totalorder %s337, %s339
      %p346 = scmp.eq.s32.totalorder %s35, 1
      %p347 = por %p345, %p346
      %p348 = scmp.ne.s32.totalorder %s339, %s340
      %p349 = scmp.eq.s32.totalorder %s35, 0
      %p350 = por %p348, %p349
      %p351 = scmp.ne.s32.totalorder %s339, %s340
      %p352 = scmp.eq.s32.totalorder %s36, 1
      %p353 = por %p351, %p352
      %p355 = scmp.ne.s32.totalorder %s340, %s354
      %p356 = scmp.eq.s32.totalorder %s36, 0
      %p357 = por %p355, %p356
      %s359 = sadd.s32 %s358, 1
      %p362 = scmp.eq.s32.totalorder %s30, 1
      %p363 = scmp.ne.s32.totalorder %s358, %s360
      %p364 = scmp.eq.s32.totalorder %s30, 0
      %p365 = por %p363, %p364
      %p366 = scmp.ne.s32.totalorder %s358, %s360
      %p367 = scmp.eq.s32.totalorder %s35, 1
      %p368 = por %p366, %p367
      %p369 = scmp.ne.s32.totalorder %s360, %s361
      %p370 = scmp.eq.s32.totalorder %s35, 0
      %p371 = por %p369, %p370
      %p372 = scmp.ne.s32.totalorder %s360, %s361
      %p373 = scmp.eq.s32.totalorder %s36, 1
      %p374 = por %p372, %p373
      %p376 = scmp.ne.s32.totalorder %s361, %s375
      %p377 = scmp.eq.s32.totalorder %s36, 0
      %p378 = por %p376, %p377
      %s380 = sadd.s32 %s379, 1
      %p383 = scmp.eq.s32.totalorder %s30, 1
      %p384 = scmp.ne.s32.totalorder %s379, %s381
      %p385 = scmp.eq.s32.totalorder %s30, 0
      %p386 = por %p384, %p385
      %p387 = scmp.ne.s32.totalorder %s379, %s381
      %p388 = scmp.eq.s32.totalorder %s35, 1
      %p389 = por %p387, %p388
      %p390 = scmp.ne.s32.totalorder %s381, %s382
      %p391 = scmp.eq.s32.totalorder %s35, 0
      %p392 = por %p390, %p391
      %p393 = scmp.ne.s32.totalorder %s381, %s382
      %p394 = scmp.eq.s32.totalorder %s36, 1
      %p395 = por %p393, %p394
      %p397 = scmp.ne.s32.totalorder %s382, %s396
      %p398 = scmp.eq.s32.totalorder %s36, 0
      %p399 = por %p397, %p398
      %s401 = sadd.s32 %s400, 1
      %p404 = scmp.eq.s32.totalorder %s30, 1
      %p405 = scmp.ne.s32.totalorder %s400, %s402
      %p406 = scmp.eq.s32.totalorder %s30, 0
      %p407 = por %p405, %p406
      %p408 = scmp.ne.s32.totalorder %s400, %s402
      %p409 = scmp.eq.s32.totalorder %s35, 1
      %p410 = por %p408, %p409
      %p411 = scmp.ne.s32.totalorder %s402, %s403
      %p412 = scmp.eq.s32.totalorder %s35, 0
      %p413 = por %p411, %p412
      %p414 = scmp.ne.s32.totalorder %s402, %s403
      %p415 = scmp.eq.s32.totalorder %s36, 1
      %p416 = por %p414, %p415
      %p418 = scmp.ne.s32.totalorder %s403, %s417
      %p419 = scmp.eq.s32.totalorder %s36, 0
      %p420 = por %p418, %p419
      %s422 = sadd.s32 %s421, 1
      %p425 = scmp.eq.s32.totalorder %s30, 1
      %p426 = scmp.ne.s32.totalorder %s421, %s423
      %p427 = scmp.eq.s32.totalorder %s30, 0
      %p428 = por %p426, %p427
      %p429 = scmp.ne.s32.totalorder %s421, %s423
      %p430 = scmp.eq.s32.totalorder %s35, 1
      %p431 = por %p429, %p430
      %p432 = scmp.ne.s32.totalorder %s423, %s424
      %p433 = scmp.eq.s32.totalorder %s35, 0
      %p434 = por %p432, %p433
      %p435 = scmp.ne.s32.totalorder %s423, %s424
      %p436 = scmp.eq.s32.totalorder %s36, 1
      %p437 = por %p435, %p436
      %p439 = scmp.ne.s32.totalorder %s424, %s438
      %p440 = scmp.eq.s32.totalorder %s36, 0
      %p441 = por %p439, %p440
      %s443 = sadd.s32 %s442, 1
      %p446 = scmp.eq.s32.totalorder %s30, 1
      %p447 = scmp.ne.s32.totalorder %s442, %s444
      %p448 = scmp.eq.s32.totalorder %s30, 0
      %p449 = por %p447, %p448
      %p450 = scmp.ne.s32.totalorder %s442, %s444
      %p451 = scmp.eq.s32.totalorder %s35, 1
      %p452 = por %p450, %p451
      %p453 = scmp.ne.s32.totalorder %s444, %s445
      %p454 = scmp.eq.s32.totalorder %s35, 0
      %p455 = por %p453, %p454
      %p456 = scmp.ne.s32.totalorder %s444, %s445
      %p457 = scmp.eq.s32.totalorder %s36, 1
      %p458 = por %p456, %p457
      %p460 = scmp.ne.s32.totalorder %s445, %s459
      %p461 = scmp.eq.s32.totalorder %s36, 0
      %p462 = por %p460, %p461
      %s463 = ssub.s32 %s30, %s37
      %p464 = scmp.eq.s32.totalorder %s463, 0
      %s466 = sadd.s32 %s465, 1
      %s467 = scalar_select %p464, %s465, %s466
      %p470 = pneg %p464
      %p471 = scmp.eq.s32.totalorder %s30, 1
      %p472 = por %p470, %p471
      %p473 = scmp.ne.s32.totalorder %s465, %s468
      %p474 = scmp.eq.s32.totalorder %s30, 0
      %p475 = por %p473, %p474
      %p476 = scmp.ne.s32.totalorder %s465, %s468
      %p477 = scmp.eq.s32.totalorder %s35, 1
      %p478 = por %p476, %p477
      %p479 = scmp.ne.s32.totalorder %s468, %s469
      %p480 = scmp.eq.s32.totalorder %s35, 0
      %p481 = por %p479, %p480
      %p482 = scmp.ne.s32.totalorder %s468, %s469
      %p483 = scmp.eq.s32.totalorder %s36, 1
      %p484 = por %p482, %p483
      %p486 = scmp.ne.s32.totalorder %s469, %s485
      %p487 = scmp.eq.s32.totalorder %s36, 0
      %p488 = por %p486, %p487
      %p489 = scmp.le.s32.totalorder 1, %s30
      %p490 = scmp.lt.s32.totalorder %s30, 3
      %p491 = pnand %p489, %p490
      %p492 = pneg %p491
      // Predicated region
      $region9: #{logical_transformer_forward.11} parent=5 // pred_check
        _
      $region10: #{logical_transformer_forward.11} parent=5 // pred_check_branch
        %494 = sbr.rel (%p491) target = $region12
      $region11: #{logical_transformer_forward.11} parent=5 // pred_region
        %s495 = ssub.s32 %s30, 1
        // Predicated region
        $region13: #{logical_transformer_forward.11} parent=11 // pred_check
          %p496 = pneg %p77
        $region14: #{logical_transformer_forward.11} parent=11 // pred_check_branch
          %498 = sbr.rel (%p496) target = $region16
        $region15: #{logical_transformer_forward.11} parent=11 // pred_region
          _
        $region16: #{logical_transformer_forward.11} parent=11 // pred_fallthru
          _
        // Predicated region
        $region17: #{logical_transformer_forward.11} parent=11 // pred_check
          %p499 = pneg %p98
        $region18: #{logical_transformer_forward.11} parent=11 // pred_check_branch
          %501 = sbr.rel (%p499) target = $region20
        $region19: #{logical_transformer_forward.11} parent=11 // pred_region
          _
        $region20: #{logical_transformer_forward.11} parent=11 // pred_fallthru
          _
        // Predicated region
        $region21: #{logical_transformer_forward.11} parent=11 // pred_check
          %p502 = pneg %p119
        $region22: #{logical_transformer_forward.11} parent=11 // pred_check_branch
          %504 = sbr.rel (%p502) target = $region24
        $region23: #{logical_transformer_forward.11} parent=11 // pred_region
          _
        $region24: #{logical_transformer_forward.11} parent=11 // pred_fallthru
          _
        // Predicated region
        $region25: #{logical_transformer_forward.11} parent=11 // pred_check
          %p505 = pneg %p140
        $region26: #{logical_transformer_forward.11} parent=11 // pred_check_branch
          %507 = sbr.rel (%p505) target = $region28
        $region27: #{logical_transformer_forward.11} parent=11 // pred_region
          _
        $region28: #{logical_transformer_forward.11} parent=11 // pred_fallthru
          _
        // Predicated region
        $region29: #{logical_transformer_forward.11} parent=11 // pred_check
          %p508 = pneg %p161
        $region30: #{logical_transformer_forward.11} parent=11 // pred_check_branch
          %510 = sbr.rel (%p508) target = $region32
        $region31: #{logical_transformer_forward.11} parent=11 // pred_region
          _
        $region32: #{logical_transformer_forward.11} parent=11 // pred_fallthru
          _
        // Predicated region
        $region33: #{logical_transformer_forward.11} parent=11 // pred_check
          %p511 = pneg %p182
        $region34: #{logical_transformer_forward.11} parent=11 // pred_check_branch
          %513 = sbr.rel (%p511) target = $region36
        $region35: #{logical_transformer_forward.11} parent=11 // pred_region
          _
        $region36: #{logical_transformer_forward.11} parent=11 // pred_fallthru
          _
        // Predicated region
        $region37: #{logical_transformer_forward.11} parent=11 // pred_check
          %p514 = pneg %p203
        $region38: #{logical_transformer_forward.11} parent=11 // pred_check_branch
          %516 = sbr.rel (%p514) target = $region40
        $region39: #{logical_transformer_forward.11} parent=11 // pred_region
          _
        $region40: #{logical_transformer_forward.11} parent=11 // pred_fallthru
          _
        // Predicated region
        $region41: #{logical_transformer_forward.11} parent=11 // pred_check
          %p517 = pneg %p224
        $region42: #{logical_transformer_forward.11} parent=11 // pred_check_branch
          %519 = sbr.rel (%p517) target = $region44
        $region43: #{logical_transformer_forward.11} parent=11 // pred_region
          _
        $region44: #{logical_transformer_forward.11} parent=11 // pred_fallthru
          _
        // Predicated region
        $region45: #{logical_transformer_forward.11} parent=11 // pred_check
          %p520 = pneg %p245
        $region46: #{logical_transformer_forward.11} parent=11 // pred_check_branch
          %522 = sbr.rel (%p520) target = $region48
        $region47: #{logical_transformer_forward.11} parent=11 // pred_region
          _
        $region48: #{logical_transformer_forward.11} parent=11 // pred_fallthru
          _
        // Predicated region
        $region49: #{logical_transformer_forward.11} parent=11 // pred_check
          %p523 = pneg %p266
        $region50: #{logical_transformer_forward.11} parent=11 // pred_check_branch
          %525 = sbr.rel (%p523) target = $region52
        $region51: #{logical_transformer_forward.11} parent=11 // pred_region
          %527 = vsyncadd [#allocation3], 0
          %s529 = sshll.u32 %s10, 4
          %s530 = int_to_ptr.hbm [resolvable:$true] %s529
          %s531 = sshll.u32 [#allocation2], 4
          %s532 = int_to_ptr.vmem [resolvable:$true] %s531
          %534 = dma.hbm_to_vmem [thread:$0]  %s530, 16, %s532, [#allocation3]
        $region52: #{logical_transformer_forward.11} parent=11 // pred_fallthru
          _
        // Predicated region
        $region53: #{logical_transformer_forward.11} parent=11 // pred_check
          %p535 = pneg %p287
        $region54: #{logical_transformer_forward.11} parent=11 // pred_check_branch
          %537 = sbr.rel (%p535) target = $region56
        $region55: #{logical_transformer_forward.11} parent=11 // pred_region
          %539 = vsyncadd [#allocation5], 0
          %s541 = sshll.u32 %s11, 4
          %s542 = int_to_ptr.hbm [resolvable:$true] %s541
          %s543 = sshll.u32 [#allocation4], 4
          %s544 = int_to_ptr.vmem [resolvable:$true] %s543
          %546 = dma.hbm_to_vmem [thread:$0]  %s542, 16, %s544, [#allocation5]
        $region56: #{logical_transformer_forward.11} parent=11 // pred_fallthru
          _
        // Predicated region
        $region57: #{logical_transformer_forward.11} parent=11 // pred_check
          %p547 = pneg %p308
        $region58: #{logical_transformer_forward.11} parent=11 // pred_check_branch
          %549 = sbr.rel (%p547) target = $region60
        $region59: #{logical_transformer_forward.11} parent=11 // pred_region
          _
        $region60: #{logical_transformer_forward.11} parent=11 // pred_fallthru
          _
        // Predicated region
        $region61: #{logical_transformer_forward.11} parent=11 // pred_check
          %p550 = pneg %p329
        $region62: #{logical_transformer_forward.11} parent=11 // pred_check_branch
          %552 = sbr.rel (%p550) target = $region64
        $region63: #{logical_transformer_forward.11} parent=11 // pred_region
          %554 = vsyncadd [#allocation5], 0
          %s556 = sshll.u32 %s13, 4
          %s557 = int_to_ptr.hbm [resolvable:$true] %s556
          %s558 = sshll.u32 [#allocation6], 4
          %s559 = int_to_ptr.vmem [resolvable:$true] %s558
          %561 = dma.hbm_to_vmem [thread:$0]  %s557, 16, %s559, [#allocation5]
        $region64: #{logical_transformer_forward.11} parent=11 // pred_fallthru
          _
        // Predicated region
        $region65: #{logical_transformer_forward.11} parent=11 // pred_check
          %p562 = pneg %p350
        $region66: #{logical_transformer_forward.11} parent=11 // pred_check_branch
          %564 = sbr.rel (%p562) target = $region68
        $region67: #{logical_transformer_forward.11} parent=11 // pred_region
          _
        $region68: #{logical_transformer_forward.11} parent=11 // pred_fallthru
          _
        // Predicated region
        $region69: #{logical_transformer_forward.11} parent=11 // pred_check
          %p565 = pneg %p371
        $region70: #{logical_transformer_forward.11} parent=11 // pred_check_branch
          %567 = sbr.rel (%p565) target = $region72
        $region71: #{logical_transformer_forward.11} parent=11 // pred_region
          %569 = vsyncadd [#allocation8], 0
          %s571 = sshll.u32 %s15, 4
          %s572 = int_to_ptr.hbm [resolvable:$true] %s571
          %s573 = sshll.u32 [#allocation7], 4
          %s574 = int_to_ptr.vmem [resolvable:$true] %s573
          %576 = dma.hbm_to_vmem [thread:$0]  %s572, 16, %s574, [#allocation8]
        $region72: #{logical_transformer_forward.11} parent=11 // pred_fallthru
          _
        // Predicated region
        $region73: #{logical_transformer_forward.11} parent=11 // pred_check
          %p577 = pneg %p392
        $region74: #{logical_transformer_forward.11} parent=11 // pred_check_branch
          %579 = sbr.rel (%p577) target = $region76
        $region75: #{logical_transformer_forward.11} parent=11 // pred_region
          _
        $region76: #{logical_transformer_forward.11} parent=11 // pred_fallthru
          _
        // Predicated region
        $region77: #{logical_transformer_forward.11} parent=11 // pred_check
          %p580 = pneg %p413
        $region78: #{logical_transformer_forward.11} parent=11 // pred_check_branch
          %582 = sbr.rel (%p580) target = $region80
        $region79: #{logical_transformer_forward.11} parent=11 // pred_region
          %584 = vsyncadd [#allocation8], 0
          %s586 = sshll.u32 %s17, 4
          %s587 = int_to_ptr.hbm [resolvable:$true] %s586
          %s588 = sshll.u32 [#allocation9], 4
          %s589 = int_to_ptr.vmem [resolvable:$true] %s588
          %591 = dma.hbm_to_vmem [thread:$0]  %s587, 16, %s589, [#allocation8]
        $region80: #{logical_transformer_forward.11} parent=11 // pred_fallthru
          _
        // Predicated region
        $region81: #{logical_transformer_forward.11} parent=11 // pred_check
          %p592 = pneg %p434
        $region82: #{logical_transformer_forward.11} parent=11 // pred_check_branch
          %594 = sbr.rel (%p592) target = $region84
        $region83: #{logical_transformer_forward.11} parent=11 // pred_region
          %596 = vsyncadd [#allocation11], 0
          %s598 = sshll.u32 %s18, 4
          %s599 = int_to_ptr.hbm [resolvable:$true] %s598
          %s600 = sshll.u32 [#allocation10], 4
          %s601 = int_to_ptr.vmem [resolvable:$true] %s600
          %603 = dma.hbm_to_vmem [thread:$0]  %s599, 16, %s601, [#allocation11]
        $region84: #{logical_transformer_forward.11} parent=11 // pred_fallthru
          _
        // Predicated region
        $region85: #{logical_transformer_forward.11} parent=11 // pred_check
          %p604 = pneg %p455
        $region86: #{logical_transformer_forward.11} parent=11 // pred_check_branch
          %606 = sbr.rel (%p604) target = $region88
        $region87: #{logical_transformer_forward.11} parent=11 // pred_region
          %608 = vsyncadd [#allocation11], 0
          %s610 = sshll.u32 %s19, 4
          %s611 = int_to_ptr.hbm [resolvable:$true] %s610
          %s612 = sshll.u32 [#allocation12], 4
          %s613 = int_to_ptr.vmem [resolvable:$true] %s612
          %615 = dma.hbm_to_vmem [thread:$0]  %s611, 16, %s613, [#allocation11]
        $region88: #{logical_transformer_forward.11} parent=11 // pred_fallthru
          _
      $region12: #{logical_transformer_forward.11} parent=5 // pred_fallthru
        _
      %p616 = scmp.lt.s32.totalorder %s30, 2
      // Predicated region
      $region89: #{logical_transformer_forward.11} parent=5 // pred_check
        %p617 = pneg %p616
      $region90: #{logical_transformer_forward.11} parent=5 // pred_check_branch
        %619 = sbr.rel (%p617) target = $region92
      $region91: #{logical_transformer_forward.11} parent=5 // pred_region
        // Predicated region
        $region93: #{logical_transformer_forward.11} parent=91 // pred_check
          %p620 = pneg %p50
        $region94: #{logical_transformer_forward.11} parent=91 // pred_check_branch
          %622 = sbr.rel (%p620) target = $region96
        $region95: #{logical_transformer_forward.11} parent=91 // pred_region
          %p623 = scmp.lt.s32.totalorder %s30, 1
          %s624 = scalar_select %p623, %s30, 1
          %s625 = smul.addr %s624, 4
          %s626 = scalar_lea.vmem %s0, %s625
        $region96: #{logical_transformer_forward.11} parent=91 // pred_fallthru
          _
      $region92: #{logical_transformer_forward.11} parent=5 // pred_fallthru
        _
      %p627 = scmp.le.s32.totalorder 1, %s30
      %p628 = scmp.lt.s32.totalorder %s30, 3
      %p629 = pnand %p627, %p628
      %p630 = pneg %p629
      // Predicated region
      $region97: #{logical_transformer_forward.11} parent=5 // pred_check
        _
      $region98: #{logical_transformer_forward.11} parent=5 // pred_check_branch
        %632 = sbr.rel (%p629) target = $region100
      $region99: #{logical_transformer_forward.11} parent=5 // pred_region
        %s633 = ssub.s32 %s30, 1
        // Predicated region
        $region101: #{logical_transformer_forward.11} parent=99 // pred_check
          %p634 = pneg %p266
        $region102: #{logical_transformer_forward.11} parent=99 // pred_check_branch
          %636 = sbr.rel (%p634) target = $region104
        $region103: #{logical_transformer_forward.11} parent=99 // pred_region
          %638 = dma.done [#allocation3], 16
        $region104: #{logical_transformer_forward.11} parent=99 // pred_fallthru
          _
        // Predicated region
        $region105: #{logical_transformer_forward.11} parent=99 // pred_check
          %p639 = pneg %p287
        $region106: #{logical_transformer_forward.11} parent=99 // pred_check_branch
          %641 = sbr.rel (%p639) target = $region108
        $region107: #{logical_transformer_forward.11} parent=99 // pred_region
          %643 = dma.done [#allocation5], 16
        $region108: #{logical_transformer_forward.11} parent=99 // pred_fallthru
          _
        // Predicated region
        $region109: #{logical_transformer_forward.11} parent=99 // pred_check
          %p644 = pneg %p329
        $region110: #{logical_transformer_forward.11} parent=99 // pred_check_branch
          %646 = sbr.rel (%p644) target = $region112
        $region111: #{logical_transformer_forward.11} parent=99 // pred_region
          %648 = dma.done [#allocation5], 16
        $region112: #{logical_transformer_forward.11} parent=99 // pred_fallthru
          _
        // Predicated region
        $region113: #{logical_transformer_forward.11} parent=99 // pred_check
          %p649 = pneg %p371
        $region114: #{logical_transformer_forward.11} parent=99 // pred_check_branch
          %651 = sbr.rel (%p649) target = $region116
        $region115: #{logical_transformer_forward.11} parent=99 // pred_region
          %653 = dma.done [#allocation8], 16
        $region116: #{logical_transformer_forward.11} parent=99 // pred_fallthru
          _
        // Predicated region
        $region117: #{logical_transformer_forward.11} parent=99 // pred_check
          %p654 = pneg %p413
        $region118: #{logical_transformer_forward.11} parent=99 // pred_check_branch
          %656 = sbr.rel (%p654) target = $region120
        $region119: #{logical_transformer_forward.11} parent=99 // pred_region
          %658 = dma.done [#allocation8], 16
        $region120: #{logical_transformer_forward.11} parent=99 // pred_fallthru
          _
        // Predicated region
        $region121: #{logical_transformer_forward.11} parent=99 // pred_check
          %p659 = pneg %p434
        $region122: #{logical_transformer_forward.11} parent=99 // pred_check_branch
          %661 = sbr.rel (%p659) target = $region124
        $region123: #{logical_transformer_forward.11} parent=99 // pred_region
          %663 = dma.done [#allocation11], 16
        $region124: #{logical_transformer_forward.11} parent=99 // pred_fallthru
          _
        // Predicated region
        $region125: #{logical_transformer_forward.11} parent=99 // pred_check
          %p664 = pneg %p455
        $region126: #{logical_transformer_forward.11} parent=99 // pred_check_branch
          %666 = sbr.rel (%p664) target = $region128
        $region127: #{logical_transformer_forward.11} parent=99 // pred_region
          %668 = dma.done [#allocation11], 16
        $region128: #{logical_transformer_forward.11} parent=99 // pred_fallthru
          _
        %p669 = scmp.lt.s32.totalorder %s35, 1
        %s670 = scalar_select %p669, %s35, 1
        %s671 = smul.addr %s670, 4
        %s672 = scalar_lea.vmem %s0, %s671
        %p673 = pneg %p56
        %p674 = pneg %p53
        %p675 = pneg %p77
        %p676 = pneg %p74
        %p677 = pneg %p98
        %p678 = pneg %p95
        %p679 = pneg %p119
        %p680 = pneg %p116
        %p681 = pneg %p140
        %p682 = pneg %p137
        %p683 = pneg %p161
        %p684 = pneg %p158
        %p685 = pneg %p182
        %p686 = pneg %p179
        %p687 = pneg %p203
        %p688 = pneg %p200
        %p689 = pneg %p224
        %p690 = pneg %p221
        %p691 = pneg %p245
        %p692 = pneg %p242
        %p693 = pneg %p266
        %p694 = pneg %p263
        %p695 = pneg %p287
        %p696 = pneg %p284
        %p697 = pneg %p308
        %p698 = pneg %p305
        %p699 = pneg %p329
        %p700 = pneg %p326
        %p701 = pneg %p350
        %p702 = pneg %p347
        %p703 = pneg %p371
        %p704 = pneg %p368
        %p705 = pneg %p392
        %p706 = pneg %p389
        %p707 = pneg %p413
        %p708 = pneg %p410
        %p709 = pneg %p434
        %p710 = pneg %p431
        %p711 = pneg %p455
        %p712 = pneg %p452
        %p713 = pneg %p481
        %p714 = pneg %p478
        %p715 = scmp.lt.s32.totalorder %s35, 1
        %s716 = scalar_select %p715, %s35, 1
        %s717 = smul.addr %s716, 4
        %s718 = scalar_lea.vmem %s20, %s717
        %p719 = scmp.lt.s32.totalorder %s35, 1
        %s720 = scalar_select %p719, %s35, 1
        %s721 = smul.addr %s720, 4
        %s722 = scalar_lea.vmem %s0, %s721
        %p723 = scmp.lt.s32.totalorder %s35, 1
        %s724 = scalar_select %p723, %s35, 1
        %s725 = smul.addr %s724, 4
        %s726 = scalar_lea.vmem %s20, %s725
        %v728 = vld [vmem:[%s722] sm:$0xf]
        %v729 = vld [vmem:[%s1] sm:$0x1]
        %v731 = vperm.slane %v729, 0
        %v733 = vadd.f32 %v728, %v731
        %v734 = vld [vmem:[%s3] sm:$0x3]
        %v736 = vrot.slane %v733, 1
        %v737 = vrot.slane %v733, 2
        %v738 = vrot.slane %v733, 3
        %v739 = vperm.slane %v733, 0
        %v740 = vperm.slane %v736, 0
        %v741 = vperm.slane %v737, 0
        %v742 = vperm.slane %v738, 0
        %v747 = vadd.f32 %v739, %v734
        %v748 = vadd.f32 %v740, %v734
        %v749 = vadd.f32 %v741, %v734
        %v750 = vadd.f32 %v742, %v734
        %v751 = vld [vmem:[%s2] sm:$0x1]
        %v752 = vpack.c.bf16 %v751, %v751
        %v753 = vld [vmem:[%s4] sm:$0xf]
        %v754 = vld [vmem:[%s4 + $0x4] sm:$0xf]
        %v755 = vld [vmem:[%s4 + $0x8] sm:$0xf]
        %v756 = vld [vmem:[%s4 + $0xc] sm:$0xf]
        %v757 = vld [vmem:[%s5] sm:$0x1]
        %v762 = vunpack.c.l.b16 %v753
        %v763 = vunpack.c.l.b16 %v754
        %v764 = vunpack.c.l.b16 %v755
        %v765 = vunpack.c.l.b16 %v756
        %v766 = vpack.c.b16 %v763, %v762
        %v767 = vpack.c.b16 %v765, %v764
        %vm770 = vcmask 261120
        %v772 = vsel %vm770, %v752, 0
        %774 = vmatpush.bf16.msra.mxu0 0
        %775 = vmatpush.bf16.msra.mxu0 0
        %776 = vmatpush.bf16.msra.mxu0 0
        %777 = vmatpush.bf16.msra.mxu0 0
        %778 = vmatpush.bf16.msra.mxu0 0
        %779 = vmatpush.bf16.msra.mxu0 0
        %780 = vmatpush.bf16.msra.mxu0 %v767
        %781 = vmatpush.bf16.msra.mxu0 %v766
        %782 = vmatmul.bf16.gmra.mxu0 %v772
        %v783 = vpop.f32.mrf.mxu0
        %v784 = vadd.f32 %v757, %v783
        %v785 = vpop.f32.mrf.mxu0
        %786 = vdwg.mxu0
        %791 = vst [vmem:[#allocation1] ss:$4 sm:$0xff] %v747
        %s792 = scalar_lea.vmem [#allocation1], 1
        %793 = vst [vmem:[%s792] ss:$4 sm:$0xff] %v748
        %s794 = scalar_lea.vmem [#allocation1], 2
        %795 = vst [vmem:[%s794] ss:$4 sm:$0xff] %v749
        %s796 = scalar_lea.vmem [#allocation1], 3
        %797 = vst [vmem:[%s796] ss:$4 sm:$0xff] %v750
        %v798 = vld.sshfl [vmem:[#allocation1] sm:$0xff pattern:$0x73625140]
        %v800 = vpack.c.bf16 %v798, %v798
        %v801 = vld [vmem:[%s6] sm:$0xf]
        %v802 = vld [vmem:[%s6 + $0x4] sm:$0xf]
        %v803 = vld [vmem:[%s6 + $0x8] sm:$0xf]
        %v804 = vld [vmem:[%s6 + $0xc] sm:$0xf]
        %v805 = vld [vmem:[%s7] sm:$0x1]
        %v807 = vperm.slane %v805, 0
        %v813 = vunpack.c.l.b16 %v801
        %v814 = vunpack.c.l.b16 %v802
        %v815 = vunpack.c.l.b16 %v803
        %v816 = vunpack.c.l.b16 %v804
        %v817 = vpack.c.b16 %v814, %v813
        %v818 = vpack.c.b16 %v816, %v815
        %v822 = vsel %vm770, %v800, 0
        %824 = vmatpush.bf16.msra.mxu0 0
        %825 = vmatpush.bf16.msra.mxu0 0
        %826 = vmatpush.bf16.msra.mxu0 0
        %827 = vmatpush.bf16.msra.mxu0 0
        %828 = vmatpush.bf16.msra.mxu0 0
        %829 = vmatpush.bf16.msra.mxu0 0
        %830 = vmatpush.bf16.msra.mxu0 %v818
        %831 = vmatpush.bf16.msra.mxu0 %v817
        %832 = vmatmul.bf16.gmra.mxu0 %v822
        %v833 = vpop.f32.mrf.mxu0
        %v834 = vadd.f32 %v807, %v833
        %v835 = vpop.f32.mrf.mxu0
        %836 = vdwg.mxu0
        %v837 = vperm.slane %v784, 0
        %v838 = vadd.f32 %v837, %v834
        %v839 = vxor.u32 %v838, 2147483648
        %v840 = vmul.f32 %v839, 1.442695
        %v841 = vpow.pop %v840
        %v842 = vadd.f32 %v841, 1.0
        %v843 = vrcp.pop %v842
        %v844 = vmul.f32 %v842, %v843
        %v845 = vsub.f32 1.0, %v844
        %v846 = vmul.f32 %v843, %v845
        %v847 = vadd.f32 %v843, %v846
        %vm848 = vweird.f32 %v842
        %vm849 = vweird.f32 %v843
        %vm850 = vmor %vm848, %vm849
        %v851 = vsel %vm850, %v843, %v847
        %v852 = vand.u32 2147483647, %v842
        %vm853 = vcmp.eq.f32.partialorder %v852, 8.507059e+37
        %v854 = vand.u32 %v842, 2147483648
        %v855 = vor.u32 1.1754944e-38, %v854
        %v856 = vsel %vm853, %v855, %v851
        %v857 = vmul.f32 1.0, %v856
        %v859 = vrot.slane %v857, 2
        %v860 = vrot.slane %v857, 4
        %v861 = vrot.slane %v857, 6
        %862 = vrot.lane.b32.xlu0 %v857, 96
        %v863 = vpop.permute.xlu0 %862
        %864 = vrot.lane.b32.xlu0 %v859, 96
        %v865 = vpop.permute.xlu0 %864
        %866 = vrot.lane.b32.xlu0 %v860, 96
        %v867 = vpop.permute.xlu0 %866
        %868 = vrot.lane.b32.xlu0 %v861, 96
        %v869 = vpop.permute.xlu0 %868
        %v874 = vmul.f32 %v747, %v863
        %v875 = vmul.f32 %v748, %v865
        %v876 = vmul.f32 %v749, %v867
        %v877 = vmul.f32 %v750, %v869
        %882 = vst [vmem:[#allocation1] ss:$4 sm:$0xff] %v874
        %s883 = scalar_lea.vmem [#allocation1], 1
        %884 = vst [vmem:[%s883] ss:$4 sm:$0xff] %v875
        %s885 = scalar_lea.vmem [#allocation1], 2
        %886 = vst [vmem:[%s885] ss:$4 sm:$0xff] %v876
        %s887 = scalar_lea.vmem [#allocation1], 3
        %888 = vst [vmem:[%s887] ss:$4 sm:$0xff] %v877
        %v889 = vld.sshfl [vmem:[#allocation1] sm:$0xff pattern:$0x73625140]
        %v891 = vpack.c.bf16 %v889, %v889
        %v892 = vld [vmem:[%s8] sm:$0xf]
        %v893 = vld [vmem:[%s8 + $0x4] sm:$0xf]
        %v894 = vld [vmem:[%s8 + $0x8] sm:$0xf]
        %v895 = vld [vmem:[%s8 + $0xc] sm:$0xf]
        %v896 = vld [vmem:[%s9] sm:$0x1]
        %v898 = vperm.slane %v896, 0
        %v904 = vunpack.c.l.b16 %v892
        %v905 = vunpack.c.l.b16 %v893
        %v906 = vunpack.c.l.b16 %v894
        %v907 = vunpack.c.l.b16 %v895
        %v908 = vpack.c.b16 %v905, %v904
        %v909 = vpack.c.b16 %v907, %v906
        %v913 = vsel %vm770, %v891, 0
        %915 = vmatpush.bf16.msra.mxu0 0
        %916 = vmatpush.bf16.msra.mxu0 0
        %917 = vmatpush.bf16.msra.mxu0 0
        %918 = vmatpush.bf16.msra.mxu0 0
        %919 = vmatpush.bf16.msra.mxu0 0
        %920 = vmatpush.bf16.msra.mxu0 0
        %921 = vmatpush.bf16.msra.mxu0 %v909
        %922 = vmatpush.bf16.msra.mxu0 %v908
        %923 = vmatmul.bf16.gmra.mxu0 %v913
        %v924 = vpop.f32.mrf.mxu0
        %v925 = vadd.f32 %v898, %v924
        %v926 = vpop.f32.mrf.mxu0
        %927 = vdwg.mxu0
        %929 = vrot.lane.b32.xlu0 %v925, 64
        %v930 = vpop.permute.xlu0 %929
        %v932 = vadd.f32 %v837, %v930
        %v933 = vtanh.pop %v932
        %v934 = vsub.f32 1.0, %v857
        %935 = vst [vmem:[#allocation1] ss:$4 sm:$0xff] %v747
        %s936 = scalar_lea.vmem [#allocation1], 1
        %937 = vst [vmem:[%s936] ss:$4 sm:$0xff] %v748
        %s938 = scalar_lea.vmem [#allocation1], 2
        %939 = vst [vmem:[%s938] ss:$4 sm:$0xff] %v749
        %s940 = scalar_lea.vmem [#allocation1], 3
        %941 = vst [vmem:[%s940] ss:$4 sm:$0xff] %v750
        %v942 = vld.sshfl [vmem:[#allocation1] sm:$0xff pattern:$0x73625140]
        %v944 = vmul.f32 %v934, %v942
        %946 = vrot.lane.b32.xlu0 %v933, 64
        %v947 = vpop.permute.xlu0 %946
        %v949 = vmul.f32 %v857, %v947
        %v950 = vadd.f32 %v944, %v949
        %v951 = vld [vmem:[#allocation2] sm:$0x1]
        %v952 = vld [vmem:[#allocation4] sm:$0x1]
        %v953 = vsel %vm770, %v950, 0.0
        %954 = vadd.xlane.f32.xlu0 %v953
        %v955 = vpop.xlane.xlu0 %954
        %v956 = vrcp.pop 32.0
        %v957 = vmul.f32 32.0, %v956
        %v958 = vsub.f32 1.0, %v957
        %v959 = vmul.f32 %v956, %v958
        %v960 = vadd.f32 %v956, %v959
        %vm961 = vweird.f32 %v956
        %v962 = vsel %vm961, %v956, %v960
        %v963 = vmul.f32 %v955, %v962
        %v964 = vsub.f32 %v950, %v963
        %v965 = vmul.f32 %v964, %v964
        %v966 = vsel %vm770, %v965, 0.0
        %967 = vadd.xlane.f32.xlu0 %v966
        %v968 = vpop.xlane.xlu0 %967
        %v969 = vmul.f32 %v968, %v962
        %v970 = vadd.f32 %v969, 1e-12
        %v971 = vrsqrt.pop %v970
        %v972 = vmul.f32 %v971, %v970
        %v973 = vmul.f32 %v972, %v971
        %v974 = vmul.f32 0.5, %v973
        %v975 = vsub.f32 1.5, %v974
        %v976 = vmul.f32 %v971, %v975
        %vm977 = vweird.f32 %v970
        %vm978 = vweird.f32 %v971
        %vm979 = vmor %vm977, %vm978
        %v980 = vsel %vm979, %v971, %v976
        %v981 = vmul.f32 %v964, %v980
        %v983 = vperm.slane %v951, 0
        %v985 = vmul.f32 %v981, %v983
        %v987 = vperm.slane %v952, 0
        %v989 = vadd.f32 %v985, %v987
        %v990 = vpack.c.bf16 %v989, %v989
        %v991 = vld [vmem:[%s12] sm:$0xf]
        %v992 = vld [vmem:[%s12 + $0x4] sm:$0xf]
        %v993 = vld [vmem:[%s12 + $0x8] sm:$0xf]
        %v994 = vld [vmem:[%s12 + $0xc] sm:$0xf]
        %v995 = vld [vmem:[#allocation6] sm:$0x1]
        %v997 = vperm.slane %v995, 0
        %v1003 = vunpack.c.l.b16 %v991
        %v1004 = vunpack.c.l.b16 %v992
        %v1005 = vunpack.c.l.b16 %v993
        %v1006 = vunpack.c.l.b16 %v994
        %v1007 = vpack.c.b16 %v1004, %v1003
        %v1008 = vpack.c.b16 %v1006, %v1005
        %v1012 = vsel %vm770, %v990, 0
        %1014 = vmatpush.bf16.msra.mxu0 0
        %1015 = vmatpush.bf16.msra.mxu0 0
        %1016 = vmatpush.bf16.msra.mxu0 0
        %1017 = vmatpush.bf16.msra.mxu0 0
        %1018 = vmatpush.bf16.msra.mxu0 0
        %1019 = vmatpush.bf16.msra.mxu0 0
        %1020 = vmatpush.bf16.msra.mxu0 %v1008
        %1021 = vmatpush.bf16.msra.mxu0 %v1007
        %1022 = vmatmul.bf16.gmra.mxu0 %v1012
        %v1023 = vpop.f32.mrf.mxu0
        %v1024 = vadd.f32 %v997, %v1023
        %v1025 = vpop.f32.mrf.mxu0
        %1026 = vdwg.mxu0
        %v1027 = vmul.f32 %v1024, 0.17677669
        %v1028 = vld [vmem:[%s14] sm:$0xf]
        %v1029 = vld [vmem:[%s14 + $0x4] sm:$0xf]
        %v1030 = vld [vmem:[%s14 + $0x8] sm:$0xf]
        %v1031 = vld [vmem:[%s14 + $0xc] sm:$0xf]
        %v1032 = vld [vmem:[#allocation7] sm:$0x1]
        %v1034 = vperm.slane %v1032, 0
        %v1040 = vunpack.c.l.b16 %v1028
        %v1041 = vunpack.c.l.b16 %v1029
        %v1042 = vunpack.c.l.b16 %v1030
        %v1043 = vunpack.c.l.b16 %v1031
        %v1044 = vpack.c.b16 %v1041, %v1040
        %v1045 = vpack.c.b16 %v1043, %v1042
        %1048 = vmatpush.bf16.msra.mxu0 0
        %1049 = vmatpush.bf16.msra.mxu0 0
        %1050 = vmatpush.bf16.msra.mxu0 0
        %1051 = vmatpush.bf16.msra.mxu0 0
        %1052 = vmatpush.bf16.msra.mxu0 0
        %1053 = vmatpush.bf16.msra.mxu0 0
        %1054 = vmatpush.bf16.msra.mxu0 %v1045
        %1055 = vmatpush.bf16.msra.mxu0 %v1044
        %1056 = vmatmul.bf16.gmra.mxu0 %v1012
        %v1057 = vpop.f32.mrf.mxu0
        %v1058 = vadd.f32 %v1034, %v1057
        %v1059 = vpop.f32.mrf.mxu0
        %1060 = vdwg.mxu0
        %v1061 = vld [vmem:[%s16] sm:$0xf]
        %v1062 = vld [vmem:[%s16 + $0x4] sm:$0xf]
        %v1063 = vld [vmem:[%s16 + $0x8] sm:$0xf]
        %v1064 = vld [vmem:[%s16 + $0xc] sm:$0xf]
        %v1065 = vld [vmem:[#allocation9] sm:$0x1]
        %v1067 = vperm.slane %v1065, 0
        %v1073 = vunpack.c.l.b16 %v1061
        %v1074 = vunpack.c.l.b16 %v1062
        %v1075 = vunpack.c.l.b16 %v1063
        %v1076 = vunpack.c.l.b16 %v1064
        %v1077 = vpack.c.b16 %v1074, %v1073
        %v1078 = vpack.c.b16 %v1076, %v1075
        %1081 = vmatpush.bf16.msra.mxu0 0
        %1082 = vmatpush.bf16.msra.mxu0 0
        %1083 = vmatpush.bf16.msra.mxu0 0
        %1084 = vmatpush.bf16.msra.mxu0 0
        %1085 = vmatpush.bf16.msra.mxu0 0
        %1086 = vmatpush.bf16.msra.mxu0 0
        %1087 = vmatpush.bf16.msra.mxu0 %v1078
        %1088 = vmatpush.bf16.msra.mxu0 %v1077
        %1089 = vmatmul.bf16.gmra.mxu0 %v1012
        %v1090 = vpop.f32.mrf.mxu0
        %v1091 = vadd.f32 %v1067, %v1090
        %v1092 = vpop.f32.mrf.mxu0
        %1093 = vdwg.mxu0
        %v1095 = vrot.slane %v1027, 2
        %v1096 = vrot.slane %v1027, 4
        %v1097 = vrot.slane %v1027, 6
        %v1099 = vrot.slane %v1058, 2
        %v1100 = vrot.slane %v1058, 4
        %v1101 = vrot.slane %v1058, 6
        %v1103 = vrot.slane %v1091, 2
        %v1104 = vrot.slane %v1091, 4
        %v1105 = vrot.slane %v1091, 6
        %v1106 = vsel %vm770, %v1027, 0
        %v1108 = vsel %vm770, %v1058, 0
        %1110 = vmatpush.xpose.msra.mxu0 0.0
        %1111 = vmatpush.xpose.msra.mxu0 0.0
        %1112 = vmatpush.xpose.msra.mxu0 0.0
        %1113 = vmatpush.xpose.msra.mxu0 0.0
        %1114 = vmatpush.xpose.msra.mxu0 0.0
        %1115 = vmatpush.xpose.msra.mxu0 0.0
        %1116 = vmatpush.xpose.msra.mxu0 0.0
        %1117 = vmatpush.xpose.msra.mxu0 0.0
        %1118 = vmatpush.xpose.msra.mxu0 0.0
        %1119 = vmatpush.xpose.msra.mxu0 0.0
        %1120 = vmatpush.xpose.msra.mxu0 0.0
        %1121 = vmatpush.xpose.msra.mxu0 0.0
        %1122 = vmatpush.xpose.msra.mxu0 0.0
        %1123 = vmatpush.xpose.msra.mxu0 0.0
        %1124 = vmatpush.xpose.msra.mxu0 0.0
        %1125 = vmatpush.xpose.msra.mxu0 %v1108
        %1126 = vmatmul.f32.gmra.mxu0 %v1106
        %v1127 = vpop.f32.mrf.mxu0
        %v1128 = vadd.f32 0.0, %v1127
        %1129 = vdwg.mxu0
        %v1130 = vsel %vm770, %v1095, 0
        %v1132 = vsel %vm770, %v1099, 0
        %1134 = vmatpush.xpose.msra.mxu0 0.0
        %1135 = vmatpush.xpose.msra.mxu0 0.0
        %1136 = vmatpush.xpose.msra.mxu0 0.0
        %1137 = vmatpush.xpose.msra.mxu0 0.0
        %1138 = vmatpush.xpose.msra.mxu0 0.0
        %1139 = vmatpush.xpose.msra.mxu0 0.0
        %1140 = vmatpush.xpose.msra.mxu0 0.0
        %1141 = vmatpush.xpose.msra.mxu0 0.0
        %1142 = vmatpush.xpose.msra.mxu0 0.0
        %1143 = vmatpush.xpose.msra.mxu0 0.0
        %1144 = vmatpush.xpose.msra.mxu0 0.0
        %1145 = vmatpush.xpose.msra.mxu0 0.0
        %1146 = vmatpush.xpose.msra.mxu0 0.0
        %1147 = vmatpush.xpose.msra.mxu0 0.0
        %1148 = vmatpush.xpose.msra.mxu0 0.0
        %1149 = vmatpush.xpose.msra.mxu0 %v1132
        %1150 = vmatmul.f32.gmra.mxu0 %v1130
        %v1151 = vpop.f32.mrf.mxu0
        %v1152 = vadd.f32 0.0, %v1151
        %1153 = vdwg.mxu0
        %v1154 = vsel %vm770, %v1096, 0
        %v1156 = vsel %vm770, %v1100, 0
        %1158 = vmatpush.xpose.msra.mxu0 0.0
        %1159 = vmatpush.xpose.msra.mxu0 0.0
        %1160 = vmatpush.xpose.msra.mxu0 0.0
        %1161 = vmatpush.xpose.msra.mxu0 0.0
        %1162 = vmatpush.xpose.msra.mxu0 0.0
        %1163 = vmatpush.xpose.msra.mxu0 0.0
        %1164 = vmatpush.xpose.msra.mxu0 0.0
        %1165 = vmatpush.xpose.msra.mxu0 0.0
        %1166 = vmatpush.xpose.msra.mxu0 0.0
        %1167 = vmatpush.xpose.msra.mxu0 0.0
        %1168 = vmatpush.xpose.msra.mxu0 0.0
        %1169 = vmatpush.xpose.msra.mxu0 0.0
        %1170 = vmatpush.xpose.msra.mxu0 0.0
        %1171 = vmatpush.xpose.msra.mxu0 0.0
        %1172 = vmatpush.xpose.msra.mxu0 0.0
        %1173 = vmatpush.xpose.msra.mxu0 %v1156
        %1174 = vmatmul.f32.gmra.mxu0 %v1154
        %v1175 = vpop.f32.mrf.mxu0
        %v1176 = vadd.f32 0.0, %v1175
        %1177 = vdwg.mxu0
        %v1178 = vsel %vm770, %v1097, 0
        %v1180 = vsel %vm770, %v1101, 0
        %1182 = vmatpush.xpose.msra.mxu0 0.0
        %1183 = vmatpush.xpose.msra.mxu0 0.0
        %1184 = vmatpush.xpose.msra.mxu0 0.0
        %1185 = vmatpush.xpose.msra.mxu0 0.0
        %1186 = vmatpush.xpose.msra.mxu0 0.0
        %1187 = vmatpush.xpose.msra.mxu0 0.0
        %1188 = vmatpush.xpose.msra.mxu0 0.0
        %1189 = vmatpush.xpose.msra.mxu0 0.0
        %1190 = vmatpush.xpose.msra.mxu0 0.0
        %1191 = vmatpush.xpose.msra.mxu0 0.0
        %1192 = vmatpush.xpose.msra.mxu0 0.0
        %1193 = vmatpush.xpose.msra.mxu0 0.0
        %1194 = vmatpush.xpose.msra.mxu0 0.0
        %1195 = vmatpush.xpose.msra.mxu0 0.0
        %1196 = vmatpush.xpose.msra.mxu0 0.0
        %1197 = vmatpush.xpose.msra.mxu0 %v1180
        %1198 = vmatmul.f32.gmra.mxu0 %v1178
        %v1199 = vpop.f32.mrf.mxu0
        %v1200 = vadd.f32 0.0, %v1199
        %1201 = vdwg.mxu0
        %vm1202 = vcmask 9216
        %v1203 = vsel %vm1202, %v1128, -inf
        %1204 = vmax.xlane.f32.xlu0 %v1203
        %v1205 = vpop.xlane.xlu0 %1204
        %v1206 = vsel %vm1202, %v1152, -inf
        %1207 = vmax.xlane.f32.xlu0 %v1206
        %v1208 = vpop.xlane.xlu0 %1207
        %v1209 = vsel %vm1202, %v1176, -inf
        %1210 = vmax.xlane.f32.xlu0 %v1209
        %v1211 = vpop.xlane.xlu0 %1210
        %v1212 = vsel %vm1202, %v1200, -inf
        %1213 = vmax.xlane.f32.xlu0 %v1212
        %v1214 = vpop.xlane.xlu0 %1213
        %v1215 = vsub.f32 %v1128, %v1205
        %v1216 = vsub.f32 %v1152, %v1208
        %v1217 = vsub.f32 %v1176, %v1211
        %v1218 = vsub.f32 %v1200, %v1214
        %v1219 = vmul.f32 %v1215, 1.442695
        %v1220 = vpow.pop %v1219
        %v1221 = vmul.f32 %v1216, 1.442695
        %v1222 = vpow.pop %v1221
        %v1223 = vmul.f32 %v1217, 1.442695
        %v1224 = vpow.pop %v1223
        %v1225 = vmul.f32 %v1218, 1.442695
        %v1226 = vpow.pop %v1225
        %v1227 = vsel %vm1202, %v1220, 0.0
        %1228 = vadd.xlane.f32.xlu0 %v1227
        %v1229 = vpop.xlane.xlu0 %1228
        %v1230 = vsel %vm1202, %v1222, 0.0
        %1231 = vadd.xlane.f32.xlu0 %v1230
        %v1232 = vpop.xlane.xlu0 %1231
        %v1233 = vsel %vm1202, %v1224, 0.0
        %1234 = vadd.xlane.f32.xlu0 %v1233
        %v1235 = vpop.xlane.xlu0 %1234
        %v1236 = vsel %vm1202, %v1226, 0.0
        %1237 = vadd.xlane.f32.xlu0 %v1236
        %v1238 = vpop.xlane.xlu0 %1237
        %v1239 = vrcp.pop %v1229
        %v1240 = vrcp.pop %v1232
        %v1241 = vrcp.pop %v1235
        %v1242 = vrcp.pop %v1238
        %v1243 = vmul.f32 %v1220, %v1239
        %v1244 = vmul.f32 %v1222, %v1240
        %v1245 = vmul.f32 %v1224, %v1241
        %v1246 = vmul.f32 %v1226, %v1242
        %vm1247 = vcmask 15360
        %v1249 = vsel %vm1247, %v1243, 0
        %vm1251 = vcmask 1041408
        %v1252 = vsel %vm1251, %v1091, 0
        %1254 = vmatpush.msra.mxu0 0.0
        %1255 = vmatpush.msra.mxu0 0.0
        %1256 = vmatpush.msra.mxu0 0.0
        %1257 = vmatpush.msra.mxu0 0.0
        %1258 = vmatpush.msra.mxu0 0.0
        %1259 = vmatpush.msra.mxu0 0.0
        %1260 = vmatpush.msra.mxu0 0.0
        %1261 = vmatpush.msra.mxu0 0.0
        %1262 = vmatpush.msra.mxu0 0.0
        %1263 = vmatpush.msra.mxu0 0.0
        %1264 = vmatpush.msra.mxu0 0.0
        %1265 = vmatpush.msra.mxu0 0.0
        %1266 = vmatpush.msra.mxu0 0.0
        %1267 = vmatpush.msra.mxu0 0.0
        %1268 = vmatpush.msra.mxu0 0.0
        %1269 = vmatpush.msra.mxu0 %v1252
        %1270 = vmatmul.f32.gmra.mxu0 %v1249
        %v1271 = vpop.f32.mrf.mxu0
        %v1272 = vadd.f32 0.0, %v1271
        %1273 = vdwg.mxu0
        %v1275 = vsel %vm1247, %v1244, 0
        %v1277 = vsel %vm1251, %v1103, 0
        %1279 = vmatpush.msra.mxu0 0.0
        %1280 = vmatpush.msra.mxu0 0.0
        %1281 = vmatpush.msra.mxu0 0.0
        %1282 = vmatpush.msra.mxu0 0.0
        %1283 = vmatpush.msra.mxu0 0.0
        %1284 = vmatpush.msra.mxu0 0.0
        %1285 = vmatpush.msra.mxu0 0.0
        %1286 = vmatpush.msra.mxu0 0.0
        %1287 = vmatpush.msra.mxu0 0.0
        %1288 = vmatpush.msra.mxu0 0.0
        %1289 = vmatpush.msra.mxu0 0.0
        %1290 = vmatpush.msra.mxu0 0.0
        %1291 = vmatpush.msra.mxu0 0.0
        %1292 = vmatpush.msra.mxu0 0.0
        %1293 = vmatpush.msra.mxu0 0.0
        %1294 = vmatpush.msra.mxu0 %v1277
        %1295 = vmatmul.f32.gmra.mxu0 %v1275
        %v1296 = vpop.f32.mrf.mxu0
        %v1297 = vadd.f32 0.0, %v1296
        %1298 = vdwg.mxu0
        %v1300 = vsel %vm1247, %v1245, 0
        %v1302 = vsel %vm1251, %v1104, 0
        %1304 = vmatpush.msra.mxu0 0.0
        %1305 = vmatpush.msra.mxu0 0.0
        %1306 = vmatpush.msra.mxu0 0.0
        %1307 = vmatpush.msra.mxu0 0.0
        %1308 = vmatpush.msra.mxu0 0.0
        %1309 = vmatpush.msra.mxu0 0.0
        %1310 = vmatpush.msra.mxu0 0.0
        %1311 = vmatpush.msra.mxu0 0.0
        %1312 = vmatpush.msra.mxu0 0.0
        %1313 = vmatpush.msra.mxu0 0.0
        %1314 = vmatpush.msra.mxu0 0.0
        %1315 = vmatpush.msra.mxu0 0.0
        %1316 = vmatpush.msra.mxu0 0.0
        %1317 = vmatpush.msra.mxu0 0.0
        %1318 = vmatpush.msra.mxu0 0.0
        %1319 = vmatpush.msra.mxu0 %v1302
        %1320 = vmatmul.f32.gmra.mxu0 %v1300
        %v1321 = vpop.f32.mrf.mxu0
        %v1322 = vadd.f32 0.0, %v1321
        %1323 = vdwg.mxu0
        %v1325 = vsel %vm1247, %v1246, 0
        %v1327 = vsel %vm1251, %v1105, 0
        %1329 = vmatpush.msra.mxu0 0.0
        %1330 = vmatpush.msra.mxu0 0.0
        %1331 = vmatpush.msra.mxu0 0.0
        %1332 = vmatpush.msra.mxu0 0.0
        %1333 = vmatpush.msra.mxu0 0.0
        %1334 = vmatpush.msra.mxu0 0.0
        %1335 = vmatpush.msra.mxu0 0.0
        %1336 = vmatpush.msra.mxu0 0.0
        %1337 = vmatpush.msra.mxu0 0.0
        %1338 = vmatpush.msra.mxu0 0.0
        %1339 = vmatpush.msra.mxu0 0.0
        %1340 = vmatpush.msra.mxu0 0.0
        %1341 = vmatpush.msra.mxu0 0.0
        %1342 = vmatpush.msra.mxu0 0.0
        %1343 = vmatpush.msra.mxu0 0.0
        %1344 = vmatpush.msra.mxu0 %v1327
        %1345 = vmatmul.f32.gmra.mxu0 %v1325
        %v1346 = vpop.f32.mrf.mxu0
        %v1347 = vadd.f32 0.0, %v1346
        %1348 = vdwg.mxu0
        %vm1349 = vcmask 254976
        %v1350 = vsel %vm1349, %v1272, 0.0
        %v1351 = vrot.slane %v1350, 4
        %v1352 = vadd.f32 %v1350, %v1351
        %v1353 = vrot.slane %v1352, 2
        %v1354 = vadd.f32 %v1352, %v1353
        %v1355 = vrot.slane %v1354, 1
        %v1356 = vadd.f32 %v1354, %v1355
        %v1357 = vsel %vm1349, %v1297, 0.0
        %v1358 = vrot.slane %v1357, 4
        %v1359 = vadd.f32 %v1357, %v1358
        %v1360 = vrot.slane %v1359, 2
        %v1361 = vadd.f32 %v1359, %v1360
        %v1362 = vrot.slane %v1361, 1
        %v1363 = vadd.f32 %v1361, %v1362
        %v1364 = vsel %vm1349, %v1322, 0.0
        %v1365 = vrot.slane %v1364, 4
        %v1366 = vadd.f32 %v1364, %v1365
        %v1367 = vrot.slane %v1366, 2
        %v1368 = vadd.f32 %v1366, %v1367
        %v1369 = vrot.slane %v1368, 1
        %v1370 = vadd.f32 %v1368, %v1369
        %v1371 = vsel %vm1349, %v1347, 0.0
        %v1372 = vrot.slane %v1371, 4
        %v1373 = vadd.f32 %v1371, %v1372
        %v1374 = vrot.slane %v1373, 2
        %v1375 = vadd.f32 %v1373, %v1374
        %v1376 = vrot.slane %v1375, 1
        %v1377 = vadd.f32 %v1375, %v1376
        %v1378 = vld [vmem:[#allocation10] sm:$0x1]
        %v1379 = vld [vmem:[#allocation12] sm:$0x1]
        %vm1384 = vcmask 1041409
        %v1385 = vsel %vm1384, %v1363, %v1356
        %vm1386 = vcmask 1042434
        %v1387 = vsel %vm1386, %v1370, %v1385
        %vm1388 = vcmask 1043459
        %v1389 = vsel %vm1388, %v1377, %v1387
        %vm1391 = vcmask 257024
        %v1392 = vsel %vm1391, %v1389, 0.0
        %1393 = vadd.xlane.f32.xlu0 %v1392
        %v1394 = vpop.xlane.xlu0 %1393
        %v1395 = vmul.f32 %v1394, %v962
        %v1397 = vrot.slane %v1395, 1
        %v1398 = vrot.slane %v1395, 2
        %v1399 = vrot.slane %v1395, 3
        %v1404 = vsub.f32 %v1356, %v1395
        %v1405 = vsub.f32 %v1363, %v1397
        %v1406 = vsub.f32 %v1370, %v1398
        %v1407 = vsub.f32 %v1377, %v1399
        %v1408 = vmul.f32 %v1404, %v1404
        %v1409 = vmul.f32 %v1405, %v1405
        %v1410 = vmul.f32 %v1406, %v1406
        %v1411 = vmul.f32 %v1407, %v1407
        %v1416 = vrot.slane %v1409, 7
        %v1417 = vsel %vm1384, %v1416, %v1408
        %v1418 = vrot.slane %v1410, 6
        %v1419 = vsel %vm1386, %v1418, %v1417
        %v1420 = vrot.slane %v1411, 5
        %v1421 = vsel %vm1388, %v1420, %v1419
        %v1423 = vsel %vm1391, %v1421, 0.0
        %1424 = vadd.xlane.f32.xlu0 %v1423
        %v1425 = vpop.xlane.xlu0 %1424
        %v1426 = vmul.f32 %v1425, %v962
        %v1427 = vadd.f32 %v1426, 1e-12
        %v1428 = vrsqrt.pop %v1427
        %v1429 = vmul.f32 %v1428, %v1427
        %v1430 = vmul.f32 %v1429, %v1428
        %v1431 = vmul.f32 0.5, %v1430
        %v1432 = vsub.f32 1.5, %v1431
        %v1433 = vmul.f32 %v1428, %v1432
        %vm1434 = vweird.f32 %v1427
        %vm1435 = vweird.f32 %v1428
        %vm1436 = vmor %vm1434, %vm1435
        %v1437 = vsel %vm1436, %v1428, %v1433
        %v1439 = vrot.slane %v1437, 1
        %v1440 = vrot.slane %v1437, 2
        %v1441 = vrot.slane %v1437, 3
        %v1446 = vmul.f32 %v1404, %v1437
        %v1447 = vmul.f32 %v1405, %v1439
        %v1448 = vmul.f32 %v1406, %v1440
        %v1449 = vmul.f32 %v1407, %v1441
        %v1451 = vperm.slane %v1378, 0
        %v1453 = vmul.f32 %v1446, %v1451
        %v1454 = vmul.f32 %v1447, %v1451
        %v1455 = vmul.f32 %v1448, %v1451
        %v1456 = vmul.f32 %v1449, %v1451
        %v1458 = vperm.slane %v1379, 0
        %v1460 = vadd.f32 %v1453, %v1458
        %v1461 = vadd.f32 %v1454, %v1458
        %v1462 = vadd.f32 %v1455, %v1458
        %v1463 = vadd.f32 %v1456, %v1458
        %v1468 = vrot.slane %v1461, 7
        %v1469 = vsel %vm1384, %v1468, %v1460
        %v1470 = vrot.slane %v1462, 6
        %v1471 = vsel %vm1386, %v1470, %v1469
        %v1472 = vrot.slane %v1463, 5
        %v1473 = vsel %vm1388, %v1472, %v1471
        %1475 = vst.msk [vmem:[%s726] sm:$0xf] %vm1391, %v1473
        %p1476 = scmp.lt.s32.totalorder %s35, 1
        %s1477 = scalar_select %p1476, %s35, 1
        %s1478 = smul.addr %s1477, 4
        %s1479 = scalar_lea.vmem %s20, %s1478
        // Predicated region
        $region129: #{logical_transformer_forward.11} parent=99 // pred_check
          %p1480 = pneg %p478
        $region130: #{logical_transformer_forward.11} parent=99 // pred_check_branch
          %1482 = sbr.rel (%p1480) target = $region132
        $region131: #{logical_transformer_forward.11} parent=99 // pred_region
          _
        $region132: #{logical_transformer_forward.11} parent=99 // pred_fallthru
          _
      $region100: #{logical_transformer_forward.11} parent=5 // pred_fallthru
        _
      %p1483 = scmp.le.s32.totalorder 2, %s30
      // Predicated region
      $region133: #{logical_transformer_forward.11} parent=5 // pred_check
        %p1484 = pneg %p1483
      $region134: #{logical_transformer_forward.11} parent=5 // pred_check_branch
        %1486 = sbr.rel (%p1484) target = $region136
      $region135: #{logical_transformer_forward.11} parent=5 // pred_region
        %s1487 = ssub.s32 %s30, 2
        // Predicated region
        $region137: #{logical_transformer_forward.11} parent=135 // pred_check
          %p1488 = pneg %p484
        $region138: #{logical_transformer_forward.11} parent=135 // pred_check_branch
          %1490 = sbr.rel (%p1488) target = $region140
        $region139: #{logical_transformer_forward.11} parent=135 // pred_region
          %p1491 = scmp.lt.s32.totalorder %s36, 1
          %s1492 = scalar_select %p1491, %s36, 1
          %s1493 = smul.addr %s1492, 4
          %s1494 = scalar_lea.vmem %s20, %s1493
        $region140: #{logical_transformer_forward.11} parent=135 // pred_fallthru
          _
      $region136: #{logical_transformer_forward.11} parent=5 // pred_fallthru
        _
    $region6: #{logical_transformer_forward.11} parent=1 // loop_footer
      %s34 = sadd.s32 1, %s30
    $region7: #{logical_transformer_forward.11} parent=1 // loop_footer_branch
      %29 = sbr.rel target = $region3
    $region8: #{logical_transformer_forward.11} parent=1 // loop_exit
      _
    %1495 = vsyncpa [#allocation3], 1
    %s1496 = scalar_lea.sflag [#allocation3], 1
    %1497 = vsyncpa %s1496, 1
    %1498 = vsyncpa [#allocation5], 1
    %1499 = vsyncpa [#allocation8], 1
    %1500 = vsyncpa [#allocation11], 1

</llo_original>
